<compile_context>
chip_gen: v7x
topology: tpu7x:2x2x1
jax: 0.10.0
libtpu: 0.0.40
codegen_flags: <defaults>
</compile_context>

<pallas_src>
import functools
import math

import jax
import jax.numpy as jnp
import numpy as np
from jax.experimental import pallas as pl
from jax.experimental.pallas import tpu as pltpu


# ---------------------------------------------------------------------------
# Kernel
# ---------------------------------------------------------------------------
def clip_layer_kernel(
    x_ref,                      # (bt, S, D) fp32
    ln1_g_ref, ln1_b_ref,       # (1, D) fp32
    ln2_g_ref, ln2_b_ref,       # (1, D) fp32
    w_in_ref, b_in_ref,         # (D, 3D) bf16, (1, 3D) fp32
    w_out_ref, b_out_ref,       # (D, D)  bf16, (1, D)  fp32
    w1_ref, b1_ref,             # (D, 4D) bf16, (1, 4D) fp32
    w2_ref, b2_ref,             # (4D, D) bf16, (1, D)  fp32
    o_ref,                      # (bt, S, D) fp32
    *, n_head: int, hid_tile: int, gelu_bf16: bool,
):
    eps = jnp.float32(1e-5)
    bt, S, D = x_ref.shape
    H = n_head
    dh = D // H
    R = bt * S
    hidden = w1_ref.shape[1]

    # Flatten batch tile into rows (leading-dim merge only -> layout free).
    x = x_ref[...].reshape(R, D)

    def layer_norm(v, g, b):
        mu = jnp.mean(v, axis=-1, keepdims=True)
        var = jnp.mean((v - mu) ** 2, axis=-1, keepdims=True)
        return (v - mu) * jax.lax.rsqrt(var + eps) * g + b

    # ---- LayerNorm 1 (fp32) ----
    xn = layer_norm(x, ln1_g_ref[0], ln1_b_ref[0])

    # ---- QKV projection: bf16 operands, f32 accumulation ----
    qkv = jnp.dot(xn.astype(jnp.bfloat16), w_in_ref[...],
                  preferred_element_type=jnp.float32) + b_in_ref[0]   # (R, 3D)

    # Fold 1/sqrt(dh) into q (mask is -inf, so masking before/after the scale
    # is equivalent to the reference).
    inv_sqrt_dh = jnp.float32(1.0 / math.sqrt(dh))
    q_all = (qkv[:, 0 * D:1 * D] * inv_sqrt_dh).astype(jnp.bfloat16)
    k_all = qkv[:, 1 * D:2 * D].astype(jnp.bfloat16)
    v_all = qkv[:, 2 * D:3 * D].astype(jnp.bfloat16)

    # Causal mask shared across heads and batch (computed once, hoisted).
    qi = jax.lax.broadcasted_iota(jnp.int32, (S, S), 0)
    ki = jax.lax.broadcasted_iota(jnp.int32, (S, S), 1)
    causal = (ki > qi)[None, :, :]                      # (1, S, S)
    neg_inf = jnp.float32(-jnp.inf)

    # ---- Per-head attention; out-projection accumulated per head. ----
    # Each head contributes  softmax(q_h k_h^T) v_h @ w_out[h*dh:(h+1)*dh, :]
    # so no lane-axis concatenate of head outputs is needed.
    attn = jnp.zeros((R, D), jnp.float32) + b_out_ref[0]
    for h in range(H):
        lo = h * dh
        qh = q_all[:, lo:lo + dh].reshape(bt, S, dh)    # leading split: free
        kh = k_all[:, lo:lo + dh].reshape(bt, S, dh)
        vh = v_all[:, lo:lo + dh].reshape(bt, S, dh)

        s = jnp.einsum("bqd,bkd->bqk", qh, kh,
                       preferred_element_type=jnp.float32)           # (bt,S,S)
        s = jnp.where(causal, neg_inf, s)
        s = s - jnp.max(s, axis=-1, keepdims=True)
        p = jnp.exp(s)
        p = p * pl.reciprocal(jnp.sum(p, axis=-1, keepdims=True), approx=True)

        oh = jnp.einsum("bqk,bkd->bqd", p.astype(jnp.bfloat16), vh,
                        preferred_element_type=jnp.float32)          # (bt,S,dh)
        attn = attn + jnp.dot(oh.reshape(R, dh).astype(jnp.bfloat16),
                              w_out_ref[lo:lo + dh, :],
                              preferred_element_type=jnp.float32)

    # ---- residual 1 ----
    x1 = x + attn

    # ---- LayerNorm 2 + MLP with QuickGELU(1.782), chunked over hidden dim ----
    x2 = layer_norm(x1, ln2_g_ref[0], ln2_b_ref[0])
    x2b = x2.astype(jnp.bfloat16)

    mlp = jnp.zeros((R, D), jnp.float32) + b2_ref[0]
    n_chunks = hidden // hid_tile
    for c in range(n_chunks):
        lo = c * hid_tile
        hc = jnp.dot(x2b, w1_ref[:, lo:lo + hid_tile],
                     preferred_element_type=jnp.float32) + b1_ref[0, lo:lo + hid_tile]
        if gelu_bf16:
            # v6e/v7x: bf16 VPU/EUP -> gate in bf16 (halves elementwise cost).
            hb = hc.astype(jnp.bfloat16)
            act = hb * jax.nn.sigmoid(jnp.bfloat16(1.782) * hb)
        else:
            # v5e: no bf16 VPU/EUP -> keep the gate in fp32.
            act = (hc * jax.nn.sigmoid(jnp.float32(1.782) * hc)).astype(jnp.bfloat16)
        mlp = mlp + jnp.dot(act, w2_ref[lo:lo + hid_tile, :],
                            preferred_element_type=jnp.float32)

    # ---- residual 2 ----
    o_ref[...] = (x1 + mlp).reshape(bt, S, D)


# ---------------------------------------------------------------------------
# Generation-aware tiling / budget helpers
# ---------------------------------------------------------------------------
def _device_info():
    kind = ""
    try:
        kind = jax.devices()[0].device_kind.lower()
    except Exception:
        pass
    if "v7" in kind or "7x" in kind:
        # 64 MiB VMEM, 2 TensorCores, bf16 VPU/EUP.
        info = dict(vmem_budget=52 << 20, num_tc=2, bf16_gelu=True)
    elif "v6" in kind:
        # 128 MiB VMEM, 1 TensorCore, bf16 VPU/EUP.
        info = dict(vmem_budget=100 << 20, num_tc=1, bf16_gelu=True)
    elif "v5" in kind and ("lite" in kind or "5e" in kind):
        # v5e: 128 MiB VMEM, 1 TensorCore, no bf16 VPU/EUP.
        info = dict(vmem_budget=100 << 20, num_tc=1, bf16_gelu=False)
    elif "v5" in kind or "v4" in kind:
        # v5p / v4: megacore (2 TCs), 128 MiB VMEM per core.
        info = dict(vmem_budget=100 << 20, num_tc=2, bf16_gelu=False)
    else:
        info = dict(vmem_budget=48 << 20, num_tc=2, bf16_gelu=False)
    try:  # refine from the runtime if available
        cap = int(pltpu.get_tpu_info().vmem_capacity_bytes)
        info["vmem_budget"] = min(info["vmem_budget"], int(cap * 0.82))
    except Exception:
        pass
    return info


def _pick_hidden_tile(hidden, max_tile=1024):
    """Largest 128-multiple divisor of the MLP hidden dim, capped at max_tile."""
    if hidden <= max_tile:
        return hidden
    for t in range(max_tile, 127, -128):
        if hidden % t == 0:
            return t
    return hidden


def _pick_batch_tile(B, S, D, hid_tile, vmem_budget, num_tc):
    """Largest divisor of B whose tile footprint fits the VMEM budget.
    On 2-TC parts prefer an even number of tiles so both cores stay busy;
    on 1-TC parts just take the largest tile (grid steps are pure overhead)."""
    weight_bytes = 2 * 12 * D * D            # bf16 weights, single-buffered
    small_bytes = 4 * 16 * D
    avail = max(vmem_budget - weight_bytes - small_bytes, 4 << 20)

    def tile_bytes(bt):
        R = bt * S
        io = 2 * 2 * 4 * R * D                                   # x/out, 2-buffered
        attn_tmp = 4 * R * 3 * D + 2 * R * 3 * D + 12 * bt * S * S + 4 * R * D
        mlp_tmp = 6 * R * hid_tile + 4 * R * D
        return io + attn_tmp + mlp_tmp

    divisors = [d for d in range(B, 0, -1) if B % d == 0]
    fitting = [bt for bt in divisors if tile_bytes(bt) <= avail] or [1]
    if num_tc >= 2 and B >= 2:
        for bt in fitting:
            n = B // bt
            if n >= 2 and n % 2 == 0:
                return bt
        for bt in fitting:
            if B // bt >= 2:
                return bt
    return fitting[0]


# ---------------------------------------------------------------------------
# Wrapper
# ---------------------------------------------------------------------------
def prepare_params(params):
    """Cast the matmul weights to bf16 ONCE (do not re-cast per forward)."""
    (ln1_g, ln1_b, ln2_g, ln2_b,
     w_in, b_in, w_out, b_out, w1, b1, w2, b2) = params
    return (ln1_g, ln1_b, ln2_g, ln2_b,
            w_in.astype(jnp.bfloat16), b_in, w_out.astype(jnp.bfloat16), b_out,
            w1.astype(jnp.bfloat16), b1, w2.astype(jnp.bfloat16), b2)


def clip_layer(x, params, n_head, *, batch_tile=None):
    B, S, D = x.shape
    (ln1_g, ln1_b, ln2_g, ln2_b,
     w_in, b_in, w_out, b_out, w1, b1, w2, b2) = params
    if w_in.dtype != jnp.bfloat16:   # tolerate un-prepared params
        w_in, w_out, w1, w2 = (w.astype(jnp.bfloat16) for w in (w_in, w_out, w1, w2))

    dev = _device_info()
    hidden = w1.shape[1]
    hid_tile = _pick_hidden_tile(hidden)
    bt = batch_tile if batch_tile is not None else _pick_batch_tile(
        B, S, D, hid_tile, dev["vmem_budget"], dev["num_tc"])
    assert B % bt == 0, "batch tile must divide batch"
    n_tiles = B // bt
    H = n_head
    dh = D // H

    # ---- cost estimate (lets XLA schedule around the fused layer) ----
    flops = (2 * B * S * D * (3 * D + D + 8 * D)        # qkv + out-proj + MLP
             + 4 * B * H * S * S * dh)                  # scores + PV
    transcendentals = B * H * S * S + B * S * 4 * D     # softmax exp + sigmoid
    bytes_accessed = (8 * B * S * D
                      + 2 * (w_in.size + w_out.size + w1.size + w2.size)
                      + 4 * (b_in.size + b_out.size + b1.size + b2.size
                             + ln1_g.size + ln1_b.size + ln2_g.size + ln2_b.size))
    cost = pl.CostEstimate(flops=flops, transcendentals=transcendentals,
                           bytes_accessed=bytes_accessed)

    # ---- VMEM budget: single-buffered bf16 weights + 2-buffered io tiles ----
    R = bt * S
    need = (2 * 12 * D * D + 64 * D
            + 2 * 2 * 4 * R * D
            + 4 * R * 3 * D + 2 * R * 3 * D + 12 * bt * S * S
            + 8 * R * D + 6 * R * hid_tile)
    vmem_limit = int(min(dev["vmem_budget"], max(32 << 20, int(1.5 * need))))

    kern = functools.partial(clip_layer_kernel, n_head=n_head,
                             hid_tile=hid_tile, gelu_bf16=dev["bf16_gelu"])
    args = (x, ln1_g, ln1_b, ln2_g, ln2_b,
            w_in, b_in, w_out, b_out, w1, b1, w2, b2)

    def build(single_buffer_weights):
        def resident(a):
            # Constant index_map -> same block every grid step; single-buffer it.
            kw = {"pipeline_mode": pl.Buffered(1)} if single_buffer_weights else {}
            return pl.BlockSpec(a.shape, lambda i, nd=a.ndim: (0,) * nd, **kw)

        return pl.pallas_call(
            kern,
            out_shape=jax.ShapeDtypeStruct((B, S, D), jnp.float32),
            grid=(n_tiles,),
            in_specs=[
                pl.BlockSpec((bt, S, D), lambda i: (i, 0, 0)),
                resident(ln1_g), resident(ln1_b), resident(ln2_g), resident(ln2_b),
                resident(w_in), resident(b_in), resident(w_out), resident(b_out),
                resident(w1), resident(b1), resident(w2), resident(b2),
            ],
            out_specs=pl.BlockSpec((bt, S, D), lambda i: (i, 0, 0)),
            compiler_params=pltpu.CompilerParams(
                dimension_semantics=("parallel",),
                vmem_limit_bytes=vmem_limit),
            cost_estimate=cost,
        )

    try:
        return jax.block_until_ready(build(True)(*args))
    except Exception:
        # TODO(synk): remove once pl.Buffered(1) (single-buffered resident
        # weights) is available everywhere; double-buffered weights are a
        # correct (just VMEM-hungrier) fallback.
        return jax.block_until_ready(build(False)(*args))


# ---------------------------------------------------------------------------
# Pure-JAX fp32 reference mirroring the PyTorch forward
# ---------------------------------------------------------------------------
def reference(x, params, n_head):
    (ln1_g, ln1_b, ln2_g, ln2_b,
     w_in, b_in, w_out, b_out, w1, b1, w2, b2) = params
    B, S, D = x.shape
    dh = D // n_head
    eps = 1e-5

    def ln(v, g, b):
        mu = v.mean(-1, keepdims=True)
        var = ((v - mu) ** 2).mean(-1, keepdims=True)
        return (v - mu) / jnp.sqrt(var + eps) * g[0] + b[0]

    res = x
    xn = ln(x, ln1_g, ln1_b)
    qkv = xn @ w_in + b_in[0]
    q, k, v = jnp.split(qkv, 3, axis=-1)
    q = q.reshape(B, S, n_head, dh).transpose(0, 2, 1, 3)
    k = k.reshape(B, S, n_head, dh).transpose(0, 2, 1, 3)
    v = v.reshape(B, S, n_head, dh).transpose(0, 2, 1, 3)
    w = jnp.einsum("bhqd,bhkd->bhqk", q, k)
    mask = jnp.triu(jnp.ones((S, S), bool), k=1)
    w = jnp.where(mask[None, None], -jnp.inf, w) / math.sqrt(dh)
    w = jax.nn.softmax(w, axis=-1)
    a = jnp.einsum("bhqk,bhkd->bhqd", w, v).transpose(0, 2, 1, 3).reshape(B, S, D)
    a = a @ w_out + b_out[0]
    x1 = res + a
    x2 = ln(x1, ln2_g, ln2_b)
    h = x2 @ w1 + b1[0]
    h = h * jax.nn.sigmoid(1.782 * h)
    h = h @ w2 + b2[0]
    return x1 + h


def init_params(key, n_head, embed_dim):
    D = embed_dim
    keys = jax.random.split(key, 8)
    s = 0.02
    ln1_g = jnp.ones((1, D), jnp.float32)
    ln1_b = jnp.zeros((1, D), jnp.float32)
    ln2_g = jnp.ones((1, D), jnp.float32)
    ln2_b = jnp.zeros((1, D), jnp.float32)
    w_in = s * jax.random.normal(keys[0], (D, 3 * D), jnp.float32)
    b_in = s * jax.random.normal(keys[1], (1, 3 * D), jnp.float32)
    w_out = s * jax.random.normal(keys[2], (D, D), jnp.float32)
    b_out = s * jax.random.normal(keys[3], (1, D), jnp.float32)
    w1 = s * jax.random.normal(keys[4], (D, 4 * D), jnp.float32)
    b1 = s * jax.random.normal(keys[5], (1, 4 * D), jnp.float32)
    w2 = s * jax.random.normal(keys[6], (4 * D, D), jnp.float32)
    b2 = s * jax.random.normal(keys[7], (1, D), jnp.float32)
    return (ln1_g, ln1_b, ln2_g, ln2_b,
            w_in, b_in, w_out, b_out, w1, b1, w2, b2)


if __name__ == "__main__":
    n_head = 4
    embed_dim = 32
    B, S = 8, 8

    key = jax.random.PRNGKey(0)
    kx, kp = jax.random.split(key)
    x = jax.random.normal(kx, (B, S, embed_dim), jnp.float32)
    params = init_params(kp, n_head, embed_dim)

    pparams = prepare_params(params)       # bf16 weight cast done once
    out = clip_layer(x, pparams, n_head)
    out = jax.block_until_ready(out)

    ref = reference(x, params, n_head)
    # bf16 matmul/gate operands + approx softmax reciprocal vs. fp32 reference.
    np.testing.assert_allclose(np.asarray(out), np.asarray(ref),
                               rtol=2e-2, atol=2e-2)
    print("KERNEL_OK")
</pallas_src>

<mosaic_0001>
module attributes {stable_mosaic.version = 11 : i64} {
  func.func @clip_layer_kernel(%arg0: i32, %arg1: memref<4x8x32xf32, #tpu.memory_space<vmem>>, %arg2: memref<1x32xf32, #tpu.memory_space<vmem>>, %arg3: memref<1x32xf32, #tpu.memory_space<vmem>>, %arg4: memref<1x32xf32, #tpu.memory_space<vmem>>, %arg5: memref<1x32xf32, #tpu.memory_space<vmem>>, %arg6: memref<32x96xbf16, #tpu.memory_space<vmem>>, %arg7: memref<1x96xf32, #tpu.memory_space<vmem>>, %arg8: memref<32x32xbf16, #tpu.memory_space<vmem>>, %arg9: memref<1x32xf32, #tpu.memory_space<vmem>>, %arg10: memref<32x128xbf16, #tpu.memory_space<vmem>>, %arg11: memref<1x128xf32, #tpu.memory_space<vmem>>, %arg12: memref<128x32xbf16, #tpu.memory_space<vmem>>, %arg13: memref<1x32xf32, #tpu.memory_space<vmem>>, %arg14: memref<4x8x32xf32, #tpu.memory_space<vmem>>) attributes {dimension_semantics = [#tpu.dimension_semantics<parallel>], iteration_bounds = array<i64: 2>, scalar_prefetch = 0 : i64, scratch_operands = 0 : i64, tpu.core_type = #tpu.core_type<tc>, window_params = [{transform_indices = @transform_0, window_bounds = array<i64: 4, 8, 32>}, {pipeline_mode = #tpu.pipeline_mode<synchronous>, transform_indices = @transform_1, window_bounds = array<i64: 1, 32>}, {pipeline_mode = #tpu.pipeline_mode<synchronous>, transform_indices = @transform_2, window_bounds = array<i64: 1, 32>}, {pipeline_mode = #tpu.pipeline_mode<synchronous>, transform_indices = @transform_3, window_bounds = array<i64: 1, 32>}, {pipeline_mode = #tpu.pipeline_mode<synchronous>, transform_indices = @transform_4, window_bounds = array<i64: 1, 32>}, {pipeline_mode = #tpu.pipeline_mode<synchronous>, transform_indices = @transform_5, window_bounds = array<i64: 32, 96>}, {pipeline_mode = #tpu.pipeline_mode<synchronous>, transform_indices = @transform_6, window_bounds = array<i64: 1, 96>}, {pipeline_mode = #tpu.pipeline_mode<synchronous>, transform_indices = @transform_7, window_bounds = array<i64: 32, 32>}, {pipeline_mode = #tpu.pipeline_mode<synchronous>, transform_indices = @transform_8, window_bounds = array<i64: 1, 32>}, {pipeline_mode = #tpu.pipeline_mode<synchronous>, transform_indices = @transform_9, window_bounds = array<i64: 32, 128>}, {pipeline_mode = #tpu.pipeline_mode<synchronous>, transform_indices = @transform_10, window_bounds = array<i64: 1, 128>}, {pipeline_mode = #tpu.pipeline_mode<synchronous>, transform_indices = @transform_11, window_bounds = array<i64: 128, 32>}, {pipeline_mode = #tpu.pipeline_mode<synchronous>, transform_indices = @transform_12, window_bounds = array<i64: 1, 32>}, {transform_indices = @transform_13, window_bounds = array<i64: 4, 8, 32>}]} {
    %c0 = arith.constant 0 : index
    %c0_0 = arith.constant 0 : index
    %c0_1 = arith.constant 0 : index
    %0 = vector.load %arg1[%c0, %c0_0, %c0_1] : memref<4x8x32xf32, #tpu.memory_space<vmem>>, vector<4x8x32xf32>
    %1 = vector.shape_cast %0 : vector<4x8x32xf32> to vector<32x32xf32>
    %c0_2 = arith.constant 0 : index
    %c0_3 = arith.constant 0 : index
    %2 = vector.load %arg2[%c0_2, %c0_3] : memref<1x32xf32, #tpu.memory_space<vmem>>, vector<1x32xf32>
    %3 = vector.shape_cast %2 : vector<1x32xf32> to vector<32xf32>
    %c0_4 = arith.constant 0 : index
    %c0_5 = arith.constant 0 : index
    %4 = vector.load %arg3[%c0_4, %c0_5] : memref<1x32xf32, #tpu.memory_space<vmem>>, vector<1x32xf32>
    %5 = vector.shape_cast %4 : vector<1x32xf32> to vector<32xf32>
    %cst = arith.constant dense<0.000000e+00> : vector<32xf32>
    %6 = vector.multi_reduction <add>, %1, %cst [1] : vector<32x32xf32> to vector<32xf32>
    %7 = vector.shape_cast %6 : vector<32xf32> to vector<32x1xf32>
    %cst_6 = arith.constant 3.200000e+01 : f32
    %8 = vector.broadcast %cst_6 : f32 to vector<32x1xf32>
    %9 = arith.divf %7, %8 : vector<32x1xf32>
    %10 = vector.broadcast %9 : vector<32x1xf32> to vector<32x32xf32>
    %11 = arith.subf %1, %10 : vector<32x32xf32>
    %12 = arith.mulf %11, %11 : vector<32x32xf32>
    %cst_7 = arith.constant dense<0.000000e+00> : vector<32xf32>
    %13 = vector.multi_reduction <add>, %12, %cst_7 [1] : vector<32x32xf32> to vector<32xf32>
    %14 = vector.shape_cast %13 : vector<32xf32> to vector<32x1xf32>
    %cst_8 = arith.constant 3.200000e+01 : f32
    %15 = vector.broadcast %cst_8 : f32 to vector<32x1xf32>
    %16 = arith.divf %14, %15 : vector<32x1xf32>
    %17 = vector.broadcast %9 : vector<32x1xf32> to vector<32x32xf32>
    %18 = arith.subf %1, %17 : vector<32x32xf32>
    %cst_9 = arith.constant 9.99999974E-6 : f32
    %19 = vector.broadcast %cst_9 : f32 to vector<32x1xf32>
    %20 = arith.addf %16, %19 : vector<32x1xf32>
    %21 = math.rsqrt %20 : vector<32x1xf32>
    %22 = vector.broadcast %21 : vector<32x1xf32> to vector<32x32xf32>
    %23 = arith.mulf %18, %22 : vector<32x32xf32>
    %24 = vector.shape_cast %3 : vector<32xf32> to vector<1x32xf32>
    %25 = vector.broadcast %24 : vector<1x32xf32> to vector<32x32xf32>
    %26 = arith.mulf %23, %25 : vector<32x32xf32>
    %27 = vector.shape_cast %5 : vector<32xf32> to vector<1x32xf32>
    %28 = vector.broadcast %27 : vector<1x32xf32> to vector<32x32xf32>
    %29 = arith.addf %26, %28 : vector<32x32xf32>
    %30 = arith.truncf %29 : vector<32x32xf32> to vector<32x32xbf16>
    %c0_10 = arith.constant 0 : index
    %c0_11 = arith.constant 0 : index
    %31 = vector.load %arg6[%c0_10, %c0_11] : memref<32x96xbf16, #tpu.memory_space<vmem>>, vector<32x96xbf16>
    %cst_12 = arith.constant dense<0.000000e+00> : vector<32x96xf32>
    %32 = tpu.matmul %30, %31, %cst_12 {dimension_numbers = #tpu.dot_dimension_numbers<[1], [0], [0], [1], [0, 0, 1, 1], [], []>} : vector<32x32xbf16>, vector<32x96xbf16>, vector<32x96xf32> -> vector<32x96xf32>
    %c0_13 = arith.constant 0 : index
    %c0_14 = arith.constant 0 : index
    %33 = vector.load %arg7[%c0_13, %c0_14] : memref<1x96xf32, #tpu.memory_space<vmem>>, vector<1x96xf32>
    %34 = vector.shape_cast %33 : vector<1x96xf32> to vector<96xf32>
    %35 = vector.shape_cast %34 : vector<96xf32> to vector<1x96xf32>
    %36 = vector.broadcast %35 : vector<1x96xf32> to vector<32x96xf32>
    %37 = arith.addf %32, %36 : vector<32x96xf32>
    %38 = vector.extract_strided_slice %37 {offsets = [0, 0], sizes = [32, 32], strides = [1, 1]} : vector<32x96xf32> to vector<32x32xf32>
    %cst_15 = arith.constant 0.353553385 : f32
    %39 = vector.broadcast %cst_15 : f32 to vector<32x32xf32>
    %40 = arith.mulf %38, %39 : vector<32x32xf32>
    %41 = arith.truncf %40 : vector<32x32xf32> to vector<32x32xbf16>
    %42 = vector.extract_strided_slice %37 {offsets = [0, 32], sizes = [32, 32], strides = [1, 1]} : vector<32x96xf32> to vector<32x32xf32>
    %43 = arith.truncf %42 : vector<32x32xf32> to vector<32x32xbf16>
    %44 = vector.extract_strided_slice %37 {offsets = [0, 64], sizes = [32, 32], strides = [1, 1]} : vector<32x96xf32> to vector<32x32xf32>
    %45 = arith.truncf %44 : vector<32x32xf32> to vector<32x32xbf16>
    %46 = tpu.iota {dimensions = array<i32: 0>} : vector<8x8xi32>
    %47 = tpu.iota {dimensions = array<i32: 1>} : vector<8x8xi32>
    %48 = arith.cmpi sgt, %47, %46 : vector<8x8xi32>
    %49 = vector.shape_cast %48 : vector<8x8xi1> to vector<1x8x8xi1>
    %cst_16 = arith.constant 0.000000e+00 : f32
    %50 = vector.broadcast %cst_16 : f32 to vector<32x32xf32>
    %c0_17 = arith.constant 0 : index
    %c0_18 = arith.constant 0 : index
    %51 = vector.load %arg9[%c0_17, %c0_18] : memref<1x32xf32, #tpu.memory_space<vmem>>, vector<1x32xf32>
    %52 = vector.shape_cast %51 : vector<1x32xf32> to vector<32xf32>
    %53 = vector.shape_cast %52 : vector<32xf32> to vector<1x32xf32>
    %54 = vector.broadcast %53 : vector<1x32xf32> to vector<32x32xf32>
    %55 = arith.addf %50, %54 : vector<32x32xf32>
    %56 = vector.extract_strided_slice %41 {offsets = [0, 0], sizes = [32, 8], strides = [1, 1]} : vector<32x32xbf16> to vector<32x8xbf16>
    %57 = vector.shape_cast %56 : vector<32x8xbf16> to vector<4x8x8xbf16>
    %58 = vector.extract_strided_slice %43 {offsets = [0, 0], sizes = [32, 8], strides = [1, 1]} : vector<32x32xbf16> to vector<32x8xbf16>
    %59 = vector.shape_cast %58 : vector<32x8xbf16> to vector<4x8x8xbf16>
    %60 = vector.extract_strided_slice %45 {offsets = [0, 0], sizes = [32, 8], strides = [1, 1]} : vector<32x32xbf16> to vector<32x8xbf16>
    %61 = vector.shape_cast %60 : vector<32x8xbf16> to vector<4x8x8xbf16>
    "tpu.trace_start"() <{level = 10 : i32, message = "bqd,bkd->bqk"}> : () -> ()
    %cst_19 = arith.constant dense<0.000000e+00> : vector<4x8x8xf32>
    %62 = tpu.matmul %57, %59, %cst_19 {dimension_numbers = #tpu.dot_dimension_numbers<[2], [2], [1], [1], [0, 0, 0, 1, 1, 1], [0], [0]>} : vector<4x8x8xbf16>, vector<4x8x8xbf16>, vector<4x8x8xf32> -> vector<4x8x8xf32>
    %cst_20 = arith.constant 0xFF800000 : f32
    "tpu.trace_stop"() : () -> ()
    %63 = vector.shape_cast %49 : vector<1x8x8xi1> to vector<1x8x8xi1>
    %64 = vector.broadcast %63 : vector<1x8x8xi1> to vector<4x8x8xi1>
    %65 = vector.broadcast %cst_20 : f32 to vector<4x8x8xf32>
    %66 = arith.select %64, %65, %62 : vector<4x8x8xi1>, vector<4x8x8xf32>
    %cst_21 = arith.constant dense<0xFF800000> : vector<4x8xf32>
    %67 = vector.multi_reduction <maximumf>, %66, %cst_21 [2] : vector<4x8x8xf32> to vector<4x8xf32>
    %68 = vector.shape_cast %67 : vector<4x8xf32> to vector<4x8x1xf32>
    %69 = vector.broadcast %68 : vector<4x8x1xf32> to vector<4x8x8xf32>
    %70 = arith.subf %66, %69 : vector<4x8x8xf32>
    %71 = math.exp %70 : vector<4x8x8xf32>
    %cst_22 = arith.constant dense<0.000000e+00> : vector<4x8xf32>
    %72 = vector.multi_reduction <add>, %71, %cst_22 [2] : vector<4x8x8xf32> to vector<4x8xf32>
    %73 = vector.shape_cast %72 : vector<4x8xf32> to vector<4x8x1xf32>
    %74 = tpu.reciprocal %73 {approx = true} : vector<4x8x1xf32> -> vector<4x8x1xf32>
    %75 = vector.broadcast %74 : vector<4x8x1xf32> to vector<4x8x8xf32>
    %76 = arith.mulf %71, %75 : vector<4x8x8xf32>
    %77 = arith.truncf %76 : vector<4x8x8xf32> to vector<4x8x8xbf16>
    "tpu.trace_start"() <{level = 10 : i32, message = "bqk,bkd->bqd"}> : () -> ()
    %cst_23 = arith.constant dense<0.000000e+00> : vector<4x8x8xf32>
    %78 = tpu.matmul %77, %61, %cst_23 {dimension_numbers = #tpu.dot_dimension_numbers<[2], [1], [1], [2], [0, 0, 0, 1, 1, 2], [0], [0]>} : vector<4x8x8xbf16>, vector<4x8x8xbf16>, vector<4x8x8xf32> -> vector<4x8x8xf32>
    "tpu.trace_stop"() : () -> ()
    %79 = vector.shape_cast %78 : vector<4x8x8xf32> to vector<32x8xf32>
    %80 = arith.truncf %79 : vector<32x8xf32> to vector<32x8xbf16>
    %c0_24 = arith.constant 0 : index
    %c0_25 = arith.constant 0 : index
    %81 = vector.load %arg8[%c0_24, %c0_25] : memref<32x32xbf16, #tpu.memory_space<vmem>>, vector<8x32xbf16>
    %cst_26 = arith.constant dense<0.000000e+00> : vector<32x32xf32>
    %82 = tpu.matmul %80, %81, %cst_26 {dimension_numbers = #tpu.dot_dimension_numbers<[1], [0], [0], [1], [0, 0, 1, 1], [], []>} : vector<32x8xbf16>, vector<8x32xbf16>, vector<32x32xf32> -> vector<32x32xf32>
    %83 = arith.addf %55, %82 : vector<32x32xf32>
    %84 = vector.extract_strided_slice %41 {offsets = [0, 8], sizes = [32, 8], strides = [1, 1]} : vector<32x32xbf16> to vector<32x8xbf16>
    %85 = vector.shape_cast %84 : vector<32x8xbf16> to vector<4x8x8xbf16>
    %86 = vector.extract_strided_slice %43 {offsets = [0, 8], sizes = [32, 8], strides = [1, 1]} : vector<32x32xbf16> to vector<32x8xbf16>
    %87 = vector.shape_cast %86 : vector<32x8xbf16> to vector<4x8x8xbf16>
    %88 = vector.extract_strided_slice %45 {offsets = [0, 8], sizes = [32, 8], strides = [1, 1]} : vector<32x32xbf16> to vector<32x8xbf16>
    %89 = vector.shape_cast %88 : vector<32x8xbf16> to vector<4x8x8xbf16>
    "tpu.trace_start"() <{level = 10 : i32, message = "bqd,bkd->bqk"}> : () -> ()
    %cst_27 = arith.constant dense<0.000000e+00> : vector<4x8x8xf32>
    %90 = tpu.matmul %85, %87, %cst_27 {dimension_numbers = #tpu.dot_dimension_numbers<[2], [2], [1], [1], [0, 0, 0, 1, 1, 1], [0], [0]>} : vector<4x8x8xbf16>, vector<4x8x8xbf16>, vector<4x8x8xf32> -> vector<4x8x8xf32>
    %cst_28 = arith.constant 0xFF800000 : f32
    "tpu.trace_stop"() : () -> ()
    %91 = vector.shape_cast %49 : vector<1x8x8xi1> to vector<1x8x8xi1>
    %92 = vector.broadcast %91 : vector<1x8x8xi1> to vector<4x8x8xi1>
    %93 = vector.broadcast %cst_28 : f32 to vector<4x8x8xf32>
    %94 = arith.select %92, %93, %90 : vector<4x8x8xi1>, vector<4x8x8xf32>
    %cst_29 = arith.constant dense<0xFF800000> : vector<4x8xf32>
    %95 = vector.multi_reduction <maximumf>, %94, %cst_29 [2] : vector<4x8x8xf32> to vector<4x8xf32>
    %96 = vector.shape_cast %95 : vector<4x8xf32> to vector<4x8x1xf32>
    %97 = vector.broadcast %96 : vector<4x8x1xf32> to vector<4x8x8xf32>
    %98 = arith.subf %94, %97 : vector<4x8x8xf32>
    %99 = math.exp %98 : vector<4x8x8xf32>
    %cst_30 = arith.constant dense<0.000000e+00> : vector<4x8xf32>
    %100 = vector.multi_reduction <add>, %99, %cst_30 [2] : vector<4x8x8xf32> to vector<4x8xf32>
    %101 = vector.shape_cast %100 : vector<4x8xf32> to vector<4x8x1xf32>
    %102 = tpu.reciprocal %101 {approx = true} : vector<4x8x1xf32> -> vector<4x8x1xf32>
    %103 = vector.broadcast %102 : vector<4x8x1xf32> to vector<4x8x8xf32>
    %104 = arith.mulf %99, %103 : vector<4x8x8xf32>
    %105 = arith.truncf %104 : vector<4x8x8xf32> to vector<4x8x8xbf16>
    "tpu.trace_start"() <{level = 10 : i32, message = "bqk,bkd->bqd"}> : () -> ()
    %cst_31 = arith.constant dense<0.000000e+00> : vector<4x8x8xf32>
    %106 = tpu.matmul %105, %89, %cst_31 {dimension_numbers = #tpu.dot_dimension_numbers<[2], [1], [1], [2], [0, 0, 0, 1, 1, 2], [0], [0]>} : vector<4x8x8xbf16>, vector<4x8x8xbf16>, vector<4x8x8xf32> -> vector<4x8x8xf32>
    "tpu.trace_stop"() : () -> ()
    %107 = vector.shape_cast %106 : vector<4x8x8xf32> to vector<32x8xf32>
    %108 = arith.truncf %107 : vector<32x8xf32> to vector<32x8xbf16>
    %c8 = arith.constant 8 : index
    %c0_32 = arith.constant 0 : index
    %109 = vector.load %arg8[%c8, %c0_32] : memref<32x32xbf16, #tpu.memory_space<vmem>>, vector<8x32xbf16>
    %cst_33 = arith.constant dense<0.000000e+00> : vector<32x32xf32>
    %110 = tpu.matmul %108, %109, %cst_33 {dimension_numbers = #tpu.dot_dimension_numbers<[1], [0], [0], [1], [0, 0, 1, 1], [], []>} : vector<32x8xbf16>, vector<8x32xbf16>, vector<32x32xf32> -> vector<32x32xf32>
    %111 = arith.addf %83, %110 : vector<32x32xf32>
    %112 = vector.extract_strided_slice %41 {offsets = [0, 16], sizes = [32, 8], strides = [1, 1]} : vector<32x32xbf16> to vector<32x8xbf16>
    %113 = vector.shape_cast %112 : vector<32x8xbf16> to vector<4x8x8xbf16>
    %114 = vector.extract_strided_slice %43 {offsets = [0, 16], sizes = [32, 8], strides = [1, 1]} : vector<32x32xbf16> to vector<32x8xbf16>
    %115 = vector.shape_cast %114 : vector<32x8xbf16> to vector<4x8x8xbf16>
    %116 = vector.extract_strided_slice %45 {offsets = [0, 16], sizes = [32, 8], strides = [1, 1]} : vector<32x32xbf16> to vector<32x8xbf16>
    %117 = vector.shape_cast %116 : vector<32x8xbf16> to vector<4x8x8xbf16>
    "tpu.trace_start"() <{level = 10 : i32, message = "bqd,bkd->bqk"}> : () -> ()
    %cst_34 = arith.constant dense<0.000000e+00> : vector<4x8x8xf32>
    %118 = tpu.matmul %113, %115, %cst_34 {dimension_numbers = #tpu.dot_dimension_numbers<[2], [2], [1], [1], [0, 0, 0, 1, 1, 1], [0], [0]>} : vector<4x8x8xbf16>, vector<4x8x8xbf16>, vector<4x8x8xf32> -> vector<4x8x8xf32>
    %cst_35 = arith.constant 0xFF800000 : f32
    "tpu.trace_stop"() : () -> ()
    %119 = vector.shape_cast %49 : vector<1x8x8xi1> to vector<1x8x8xi1>
    %120 = vector.broadcast %119 : vector<1x8x8xi1> to vector<4x8x8xi1>
    %121 = vector.broadcast %cst_35 : f32 to vector<4x8x8xf32>
    %122 = arith.select %120, %121, %118 : vector<4x8x8xi1>, vector<4x8x8xf32>
    %cst_36 = arith.constant dense<0xFF800000> : vector<4x8xf32>
    %123 = vector.multi_reduction <maximumf>, %122, %cst_36 [2] : vector<4x8x8xf32> to vector<4x8xf32>
    %124 = vector.shape_cast %123 : vector<4x8xf32> to vector<4x8x1xf32>
    %125 = vector.broadcast %124 : vector<4x8x1xf32> to vector<4x8x8xf32>
    %126 = arith.subf %122, %125 : vector<4x8x8xf32>
    %127 = math.exp %126 : vector<4x8x8xf32>
    %cst_37 = arith.constant dense<0.000000e+00> : vector<4x8xf32>
    %128 = vector.multi_reduction <add>, %127, %cst_37 [2] : vector<4x8x8xf32> to vector<4x8xf32>
    %129 = vector.shape_cast %128 : vector<4x8xf32> to vector<4x8x1xf32>
    %130 = tpu.reciprocal %129 {approx = true} : vector<4x8x1xf32> -> vector<4x8x1xf32>
    %131 = vector.broadcast %130 : vector<4x8x1xf32> to vector<4x8x8xf32>
    %132 = arith.mulf %127, %131 : vector<4x8x8xf32>
    %133 = arith.truncf %132 : vector<4x8x8xf32> to vector<4x8x8xbf16>
    "tpu.trace_start"() <{level = 10 : i32, message = "bqk,bkd->bqd"}> : () -> ()
    %cst_38 = arith.constant dense<0.000000e+00> : vector<4x8x8xf32>
    %134 = tpu.matmul %133, %117, %cst_38 {dimension_numbers = #tpu.dot_dimension_numbers<[2], [1], [1], [2], [0, 0, 0, 1, 1, 2], [0], [0]>} : vector<4x8x8xbf16>, vector<4x8x8xbf16>, vector<4x8x8xf32> -> vector<4x8x8xf32>
    "tpu.trace_stop"() : () -> ()
    %135 = vector.shape_cast %134 : vector<4x8x8xf32> to vector<32x8xf32>
    %136 = arith.truncf %135 : vector<32x8xf32> to vector<32x8xbf16>
    %c16 = arith.constant 16 : index
    %c0_39 = arith.constant 0 : index
    %137 = vector.load %arg8[%c16, %c0_39] : memref<32x32xbf16, #tpu.memory_space<vmem>>, vector<8x32xbf16>
    %cst_40 = arith.constant dense<0.000000e+00> : vector<32x32xf32>
    %138 = tpu.matmul %136, %137, %cst_40 {dimension_numbers = #tpu.dot_dimension_numbers<[1], [0], [0], [1], [0, 0, 1, 1], [], []>} : vector<32x8xbf16>, vector<8x32xbf16>, vector<32x32xf32> -> vector<32x32xf32>
    %139 = arith.addf %111, %138 : vector<32x32xf32>
    %140 = vector.extract_strided_slice %41 {offsets = [0, 24], sizes = [32, 8], strides = [1, 1]} : vector<32x32xbf16> to vector<32x8xbf16>
    %141 = vector.shape_cast %140 : vector<32x8xbf16> to vector<4x8x8xbf16>
    %142 = vector.extract_strided_slice %43 {offsets = [0, 24], sizes = [32, 8], strides = [1, 1]} : vector<32x32xbf16> to vector<32x8xbf16>
    %143 = vector.shape_cast %142 : vector<32x8xbf16> to vector<4x8x8xbf16>
    %144 = vector.extract_strided_slice %45 {offsets = [0, 24], sizes = [32, 8], strides = [1, 1]} : vector<32x32xbf16> to vector<32x8xbf16>
    %145 = vector.shape_cast %144 : vector<32x8xbf16> to vector<4x8x8xbf16>
    "tpu.trace_start"() <{level = 10 : i32, message = "bqd,bkd->bqk"}> : () -> ()
    %cst_41 = arith.constant dense<0.000000e+00> : vector<4x8x8xf32>
    %146 = tpu.matmul %141, %143, %cst_41 {dimension_numbers = #tpu.dot_dimension_numbers<[2], [2], [1], [1], [0, 0, 0, 1, 1, 1], [0], [0]>} : vector<4x8x8xbf16>, vector<4x8x8xbf16>, vector<4x8x8xf32> -> vector<4x8x8xf32>
    %cst_42 = arith.constant 0xFF800000 : f32
    "tpu.trace_stop"() : () -> ()
    %147 = vector.shape_cast %49 : vector<1x8x8xi1> to vector<1x8x8xi1>
    %148 = vector.broadcast %147 : vector<1x8x8xi1> to vector<4x8x8xi1>
    %149 = vector.broadcast %cst_42 : f32 to vector<4x8x8xf32>
    %150 = arith.select %148, %149, %146 : vector<4x8x8xi1>, vector<4x8x8xf32>
    %cst_43 = arith.constant dense<0xFF800000> : vector<4x8xf32>
    %151 = vector.multi_reduction <maximumf>, %150, %cst_43 [2] : vector<4x8x8xf32> to vector<4x8xf32>
    %152 = vector.shape_cast %151 : vector<4x8xf32> to vector<4x8x1xf32>
    %153 = vector.broadcast %152 : vector<4x8x1xf32> to vector<4x8x8xf32>
    %154 = arith.subf %150, %153 : vector<4x8x8xf32>
    %155 = math.exp %154 : vector<4x8x8xf32>
    %cst_44 = arith.constant dense<0.000000e+00> : vector<4x8xf32>
    %156 = vector.multi_reduction <add>, %155, %cst_44 [2] : vector<4x8x8xf32> to vector<4x8xf32>
    %157 = vector.shape_cast %156 : vector<4x8xf32> to vector<4x8x1xf32>
    %158 = tpu.reciprocal %157 {approx = true} : vector<4x8x1xf32> -> vector<4x8x1xf32>
    %159 = vector.broadcast %158 : vector<4x8x1xf32> to vector<4x8x8xf32>
    %160 = arith.mulf %155, %159 : vector<4x8x8xf32>
    %161 = arith.truncf %160 : vector<4x8x8xf32> to vector<4x8x8xbf16>
    "tpu.trace_start"() <{level = 10 : i32, message = "bqk,bkd->bqd"}> : () -> ()
    %cst_45 = arith.constant dense<0.000000e+00> : vector<4x8x8xf32>
    %162 = tpu.matmul %161, %145, %cst_45 {dimension_numbers = #tpu.dot_dimension_numbers<[2], [1], [1], [2], [0, 0, 0, 1, 1, 2], [0], [0]>} : vector<4x8x8xbf16>, vector<4x8x8xbf16>, vector<4x8x8xf32> -> vector<4x8x8xf32>
    "tpu.trace_stop"() : () -> ()
    %163 = vector.shape_cast %162 : vector<4x8x8xf32> to vector<32x8xf32>
    %164 = arith.truncf %163 : vector<32x8xf32> to vector<32x8xbf16>
    %c24 = arith.constant 24 : index
    %c0_46 = arith.constant 0 : index
    %165 = vector.load %arg8[%c24, %c0_46] : memref<32x32xbf16, #tpu.memory_space<vmem>>, vector<8x32xbf16>
    %cst_47 = arith.constant dense<0.000000e+00> : vector<32x32xf32>
    %166 = tpu.matmul %164, %165, %cst_47 {dimension_numbers = #tpu.dot_dimension_numbers<[1], [0], [0], [1], [0, 0, 1, 1], [], []>} : vector<32x8xbf16>, vector<8x32xbf16>, vector<32x32xf32> -> vector<32x32xf32>
    %167 = arith.addf %139, %166 : vector<32x32xf32>
    %168 = arith.addf %1, %167 : vector<32x32xf32>
    %c0_48 = arith.constant 0 : index
    %c0_49 = arith.constant 0 : index
    %169 = vector.load %arg4[%c0_48, %c0_49] : memref<1x32xf32, #tpu.memory_space<vmem>>, vector<1x32xf32>
    %170 = vector.shape_cast %169 : vector<1x32xf32> to vector<32xf32>
    %c0_50 = arith.constant 0 : index
    %c0_51 = arith.constant 0 : index
    %171 = vector.load %arg5[%c0_50, %c0_51] : memref<1x32xf32, #tpu.memory_space<vmem>>, vector<1x32xf32>
    %172 = vector.shape_cast %171 : vector<1x32xf32> to vector<32xf32>
    %cst_52 = arith.constant dense<0.000000e+00> : vector<32xf32>
    %173 = vector.multi_reduction <add>, %168, %cst_52 [1] : vector<32x32xf32> to vector<32xf32>
    %174 = vector.shape_cast %173 : vector<32xf32> to vector<32x1xf32>
    %cst_53 = arith.constant 3.200000e+01 : f32
    %175 = vector.broadcast %cst_53 : f32 to vector<32x1xf32>
    %176 = arith.divf %174, %175 : vector<32x1xf32>
    %177 = vector.broadcast %176 : vector<32x1xf32> to vector<32x32xf32>
    %178 = arith.subf %168, %177 : vector<32x32xf32>
    %179 = arith.mulf %178, %178 : vector<32x32xf32>
    %cst_54 = arith.constant dense<0.000000e+00> : vector<32xf32>
    %180 = vector.multi_reduction <add>, %179, %cst_54 [1] : vector<32x32xf32> to vector<32xf32>
    %181 = vector.shape_cast %180 : vector<32xf32> to vector<32x1xf32>
    %cst_55 = arith.constant 3.200000e+01 : f32
    %182 = vector.broadcast %cst_55 : f32 to vector<32x1xf32>
    %183 = arith.divf %181, %182 : vector<32x1xf32>
    %184 = vector.broadcast %176 : vector<32x1xf32> to vector<32x32xf32>
    %185 = arith.subf %168, %184 : vector<32x32xf32>
    %cst_56 = arith.constant 9.99999974E-6 : f32
    %186 = vector.broadcast %cst_56 : f32 to vector<32x1xf32>
    %187 = arith.addf %183, %186 : vector<32x1xf32>
    %188 = math.rsqrt %187 : vector<32x1xf32>
    %189 = vector.broadcast %188 : vector<32x1xf32> to vector<32x32xf32>
    %190 = arith.mulf %185, %189 : vector<32x32xf32>
    %191 = vector.shape_cast %170 : vector<32xf32> to vector<1x32xf32>
    %192 = vector.broadcast %191 : vector<1x32xf32> to vector<32x32xf32>
    %193 = arith.mulf %190, %192 : vector<32x32xf32>
    %194 = vector.shape_cast %172 : vector<32xf32> to vector<1x32xf32>
    %195 = vector.broadcast %194 : vector<1x32xf32> to vector<32x32xf32>
    %196 = arith.addf %193, %195 : vector<32x32xf32>
    %197 = arith.truncf %196 : vector<32x32xf32> to vector<32x32xbf16>
    %cst_57 = arith.constant 0.000000e+00 : f32
    %198 = vector.broadcast %cst_57 : f32 to vector<32x32xf32>
    %c0_58 = arith.constant 0 : index
    %c0_59 = arith.constant 0 : index
    %199 = vector.load %arg13[%c0_58, %c0_59] : memref<1x32xf32, #tpu.memory_space<vmem>>, vector<1x32xf32>
    %200 = vector.shape_cast %199 : vector<1x32xf32> to vector<32xf32>
    %201 = vector.shape_cast %200 : vector<32xf32> to vector<1x32xf32>
    %202 = vector.broadcast %201 : vector<1x32xf32> to vector<32x32xf32>
    %203 = arith.addf %198, %202 : vector<32x32xf32>
    %c0_60 = arith.constant 0 : index
    %c0_61 = arith.constant 0 : index
    %204 = vector.load %arg10[%c0_60, %c0_61] : memref<32x128xbf16, #tpu.memory_space<vmem>>, vector<32x128xbf16>
    %cst_62 = arith.constant dense<0.000000e+00> : vector<32x128xf32>
    %205 = tpu.matmul %197, %204, %cst_62 {dimension_numbers = #tpu.dot_dimension_numbers<[1], [0], [0], [1], [0, 0, 1, 1], [], []>} : vector<32x32xbf16>, vector<32x128xbf16>, vector<32x128xf32> -> vector<32x128xf32>
    %c0_63 = arith.constant 0 : index
    %c0_64 = arith.constant 0 : index
    %206 = vector.load %arg11[%c0_63, %c0_64] : memref<1x128xf32, #tpu.memory_space<vmem>>, vector<1x128xf32>
    %207 = vector.shape_cast %206 : vector<1x128xf32> to vector<128xf32>
    %208 = vector.shape_cast %207 : vector<128xf32> to vector<1x128xf32>
    %209 = vector.broadcast %208 : vector<1x128xf32> to vector<32x128xf32>
    %210 = arith.addf %205, %209 : vector<32x128xf32>
    %cst_65 = arith.constant 1.782000e+00 : f32
    %211 = vector.broadcast %cst_65 : f32 to vector<32x128xf32>
    %212 = arith.mulf %211, %210 : vector<32x128xf32>
    %213 = arith.negf %212 : vector<32x128xf32>
    %214 = math.exp %213 : vector<32x128xf32>
    %cst_66 = arith.constant 1.000000e+00 : f32
    %215 = vector.broadcast %cst_66 : f32 to vector<32x128xf32>
    %216 = arith.addf %215, %214 : vector<32x128xf32>
    %217 = arith.divf %215, %216 : vector<32x128xf32>
    %218 = arith.mulf %210, %217 : vector<32x128xf32>
    %219 = arith.truncf %218 : vector<32x128xf32> to vector<32x128xbf16>
    %c0_67 = arith.constant 0 : index
    %c0_68 = arith.constant 0 : index
    %220 = vector.load %arg12[%c0_67, %c0_68] : memref<128x32xbf16, #tpu.memory_space<vmem>>, vector<128x32xbf16>
    %cst_69 = arith.constant dense<0.000000e+00> : vector<32x32xf32>
    %221 = tpu.matmul %219, %220, %cst_69 {dimension_numbers = #tpu.dot_dimension_numbers<[1], [0], [0], [1], [0, 0, 1, 1], [], []>} : vector<32x128xbf16>, vector<128x32xbf16>, vector<32x32xf32> -> vector<32x32xf32>
    %222 = arith.addf %203, %221 : vector<32x32xf32>
    %223 = arith.addf %168, %222 : vector<32x32xf32>
    %224 = vector.shape_cast %223 : vector<32x32xf32> to vector<4x8x32xf32>
    %c0_70 = arith.constant 0 : index
    %c0_71 = arith.constant 0 : index
    %c0_72 = arith.constant 0 : index
    %225 = vector.load %arg14[%c0_70, %c0_71, %c0_72] : memref<4x8x32xf32, #tpu.memory_space<vmem>>, vector<4x8x32xf32>
    tpu.vector_store %arg14[%c0_70, %c0_71, %c0_72], %224 {strides = array<i32>} : memref<4x8x32xf32, #tpu.memory_space<vmem>>, vector<4x8x32xf32>,
    return
  }
  func.func @transform_0(%arg0: i32) -> (i32, i32, i32) {
    %c0_i32 = arith.constant 0 : i32
    %c0_i32_0 = arith.constant 0 : i32
    %c0_i32_1 = arith.constant 0 : i32
    return %arg0, %c0_i32, %c0_i32_0 : i32, i32, i32
  }
  func.func @transform_1(%arg0: i32) -> (i32, i32) {
    %c0_i32 = arith.constant 0 : i32
    %c0_i32_0 = arith.constant 0 : i32
    %c0_i32_1 = arith.constant 0 : i32
    return %c0_i32, %c0_i32_0 : i32, i32
  }
  func.func @transform_2(%arg0: i32) -> (i32, i32) {
    %c0_i32 = arith.constant 0 : i32
    %c0_i32_0 = arith.constant 0 : i32
    %c0_i32_1 = arith.constant 0 : i32
    return %c0_i32, %c0_i32_0 : i32, i32
  }
  func.func @transform_3(%arg0: i32) -> (i32, i32) {
    %c0_i32 = arith.constant 0 : i32
    %c0_i32_0 = arith.constant 0 : i32
    %c0_i32_1 = arith.constant 0 : i32
    return %c0_i32, %c0_i32_0 : i32, i32
  }
  func.func @transform_4(%arg0: i32) -> (i32, i32) {
    %c0_i32 = arith.constant 0 : i32
    %c0_i32_0 = arith.constant 0 : i32
    %c0_i32_1 = arith.constant 0 : i32
    return %c0_i32, %c0_i32_0 : i32, i32
  }
  func.func @transform_5(%arg0: i32) -> (i32, i32) {
    %c0_i32 = arith.constant 0 : i32
    %c0_i32_0 = arith.constant 0 : i32
    %c0_i32_1 = arith.constant 0 : i32
    return %c0_i32, %c0_i32_0 : i32, i32
  }
  func.func @transform_6(%arg0: i32) -> (i32, i32) {
    %c0_i32 = arith.constant 0 : i32
    %c0_i32_0 = arith.constant 0 : i32
    %c0_i32_1 = arith.constant 0 : i32
    return %c0_i32, %c0_i32_0 : i32, i32
  }
  func.func @transform_7(%arg0: i32) -> (i32, i32) {
    %c0_i32 = arith.constant 0 : i32
    %c0_i32_0 = arith.constant 0 : i32
    %c0_i32_1 = arith.constant 0 : i32
    return %c0_i32, %c0_i32_0 : i32, i32
  }
  func.func @transform_8(%arg0: i32) -> (i32, i32) {
    %c0_i32 = arith.constant 0 : i32
    %c0_i32_0 = arith.constant 0 : i32
    %c0_i32_1 = arith.constant 0 : i32
    return %c0_i32, %c0_i32_0 : i32, i32
  }
  func.func @transform_9(%arg0: i32) -> (i32, i32) {
    %c0_i32 = arith.constant 0 : i32
    %c0_i32_0 = arith.constant 0 : i32
    %c0_i32_1 = arith.constant 0 : i32
    return %c0_i32, %c0_i32_0 : i32, i32
  }
  func.func @transform_10(%arg0: i32) -> (i32, i32) {
    %c0_i32 = arith.constant 0 : i32
    %c0_i32_0 = arith.constant 0 : i32
    %c0_i32_1 = arith.constant 0 : i32
    return %c0_i32, %c0_i32_0 : i32, i32
  }
  func.func @transform_11(%arg0: i32) -> (i32, i32) {
    %c0_i32 = arith.constant 0 : i32
    %c0_i32_0 = arith.constant 0 : i32
    %c0_i32_1 = arith.constant 0 : i32
    return %c0_i32, %c0_i32_0 : i32, i32
  }
  func.func @transform_12(%arg0: i32) -> (i32, i32) {
    %c0_i32 = arith.constant 0 : i32
    %c0_i32_0 = arith.constant 0 : i32
    %c0_i32_1 = arith.constant 0 : i32
    return %c0_i32, %c0_i32_0 : i32, i32
  }
  func.func @transform_13(%arg0: i32) -> (i32, i32, i32) {
    %c0_i32 = arith.constant 0 : i32
    %c0_i32_0 = arith.constant 0 : i32
    %c0_i32_1 = arith.constant 0 : i32
    return %arg0, %c0_i32, %c0_i32_0 : i32, i32, i32
  }
}

module attributes {stable_mosaic.version = 11 : i64} {
  func.func @clip_layer_kernel(%arg0: i32, %arg1: memref<4x8x32xf32, #tpu.memory_space<vmem>>, %arg2: memref<1x32xf32, #tpu.memory_space<vmem>>, %arg3: memref<1x32xf32, #tpu.memory_space<vmem>>, %arg4: memref<1x32xf32, #tpu.memory_space<vmem>>, %arg5: memref<1x32xf32, #tpu.memory_space<vmem>>, %arg6: memref<32x96xbf16, #tpu.memory_space<vmem>>, %arg7: memref<1x96xf32, #tpu.memory_space<vmem>>, %arg8: memref<32x32xbf16, #tpu.memory_space<vmem>>, %arg9: memref<1x32xf32, #tpu.memory_space<vmem>>, %arg10: memref<32x128xbf16, #tpu.memory_space<vmem>>, %arg11: memref<1x128xf32, #tpu.memory_space<vmem>>, %arg12: memref<128x32xbf16, #tpu.memory_space<vmem>>, %arg13: memref<1x32xf32, #tpu.memory_space<vmem>>, %arg14: memref<4x8x32xf32, #tpu.memory_space<vmem>>) attributes {dimension_semantics = [#tpu.dimension_semantics<parallel>], iteration_bounds = array<i64: 2>, scalar_prefetch = 0 : i64, scratch_operands = 0 : i64, tpu.core_type = #tpu.core_type<tc>, window_params = [{transform_indices = @transform_0, window_bounds = array<i64: 4, 8, 32>}, {pipeline_mode = #tpu.pipeline_mode<synchronous>, transform_indices = @transform_1, window_bounds = array<i64: 1, 32>}, {pipeline_mode = #tpu.pipeline_mode<synchronous>, transform_indices = @transform_2, window_bounds = array<i64: 1, 32>}, {pipeline_mode = #tpu.pipeline_mode<synchronous>, transform_indices = @transform_3, window_bounds = array<i64: 1, 32>}, {pipeline_mode = #tpu.pipeline_mode<synchronous>, transform_indices = @transform_4, window_bounds = array<i64: 1, 32>}, {pipeline_mode = #tpu.pipeline_mode<synchronous>, transform_indices = @transform_5, window_bounds = array<i64: 32, 96>}, {pipeline_mode = #tpu.pipeline_mode<synchronous>, transform_indices = @transform_6, window_bounds = array<i64: 1, 96>}, {pipeline_mode = #tpu.pipeline_mode<synchronous>, transform_indices = @transform_7, window_bounds = array<i64: 32, 32>}, {pipeline_mode = #tpu.pipeline_mode<synchronous>, transform_indices = @transform_8, window_bounds = array<i64: 1, 32>}, {pipeline_mode = #tpu.pipeline_mode<synchronous>, transform_indices = @transform_9, window_bounds = array<i64: 32, 128>}, {pipeline_mode = #tpu.pipeline_mode<synchronous>, transform_indices = @transform_10, window_bounds = array<i64: 1, 128>}, {pipeline_mode = #tpu.pipeline_mode<synchronous>, transform_indices = @transform_11, window_bounds = array<i64: 128, 32>}, {pipeline_mode = #tpu.pipeline_mode<synchronous>, transform_indices = @transform_12, window_bounds = array<i64: 1, 32>}, {transform_indices = @transform_13, window_bounds = array<i64: 4, 8, 32>}]} {
    %c0 = arith.constant 0 : index
    %c0_0 = arith.constant 0 : index
    %c0_1 = arith.constant 0 : index
    %0 = vector.load %arg1[%c0, %c0_0, %c0_1] : memref<4x8x32xf32, #tpu.memory_space<vmem>>, vector<4x8x32xf32>
    %1 = vector.shape_cast %0 : vector<4x8x32xf32> to vector<32x32xf32>
    %c0_2 = arith.constant 0 : index
    %c0_3 = arith.constant 0 : index
    %2 = vector.load %arg2[%c0_2, %c0_3] : memref<1x32xf32, #tpu.memory_space<vmem>>, vector<1x32xf32>
    %3 = vector.shape_cast %2 : vector<1x32xf32> to vector<32xf32>
    %c0_4 = arith.constant 0 : index
    %c0_5 = arith.constant 0 : index
    %4 = vector.load %arg3[%c0_4, %c0_5] : memref<1x32xf32, #tpu.memory_space<vmem>>, vector<1x32xf32>
    %5 = vector.shape_cast %4 : vector<1x32xf32> to vector<32xf32>
    %cst = arith.constant dense<0.000000e+00> : vector<32xf32>
    %6 = vector.multi_reduction <add>, %1, %cst [1] : vector<32x32xf32> to vector<32xf32>
    %7 = vector.shape_cast %6 : vector<32xf32> to vector<32x1xf32>
    %cst_6 = arith.constant 3.200000e+01 : f32
    %8 = vector.broadcast %cst_6 : f32 to vector<32x1xf32>
    %9 = arith.divf %7, %8 : vector<32x1xf32>
    %10 = vector.broadcast %9 : vector<32x1xf32> to vector<32x32xf32>
    %11 = arith.subf %1, %10 : vector<32x32xf32>
    %12 = arith.mulf %11, %11 : vector<32x32xf32>
    %cst_7 = arith.constant dense<0.000000e+00> : vector<32xf32>
    %13 = vector.multi_reduction <add>, %12, %cst_7 [1] : vector<32x32xf32> to vector<32xf32>
    %14 = vector.shape_cast %13 : vector<32xf32> to vector<32x1xf32>
    %cst_8 = arith.constant 3.200000e+01 : f32
    %15 = vector.broadcast %cst_8 : f32 to vector<32x1xf32>
    %16 = arith.divf %14, %15 : vector<32x1xf32>
    %17 = vector.broadcast %9 : vector<32x1xf32> to vector<32x32xf32>
    %18 = arith.subf %1, %17 : vector<32x32xf32>
    %cst_9 = arith.constant 9.99999974E-6 : f32
    %19 = vector.broadcast %cst_9 : f32 to vector<32x1xf32>
    %20 = arith.addf %16, %19 : vector<32x1xf32>
    %21 = math.rsqrt %20 : vector<32x1xf32>
    %22 = vector.broadcast %21 : vector<32x1xf32> to vector<32x32xf32>
    %23 = arith.mulf %18, %22 : vector<32x32xf32>
    %24 = vector.shape_cast %3 : vector<32xf32> to vector<1x32xf32>
    %25 = vector.broadcast %24 : vector<1x32xf32> to vector<32x32xf32>
    %26 = arith.mulf %23, %25 : vector<32x32xf32>
    %27 = vector.shape_cast %5 : vector<32xf32> to vector<1x32xf32>
    %28 = vector.broadcast %27 : vector<1x32xf32> to vector<32x32xf32>
    %29 = arith.addf %26, %28 : vector<32x32xf32>
    %30 = arith.truncf %29 : vector<32x32xf32> to vector<32x32xbf16>
    %c0_10 = arith.constant 0 : index
    %c0_11 = arith.constant 0 : index
    %31 = vector.load %arg6[%c0_10, %c0_11] : memref<32x96xbf16, #tpu.memory_space<vmem>>, vector<32x96xbf16>
    %cst_12 = arith.constant dense<0.000000e+00> : vector<32x96xf32>
    %32 = tpu.matmul %30, %31, %cst_12 {dimension_numbers = #tpu.dot_dimension_numbers<[1], [0], [0], [1], [0, 0, 1, 1], [], []>} : vector<32x32xbf16>, vector<32x96xbf16>, vector<32x96xf32> -> vector<32x96xf32>
    %c0_13 = arith.constant 0 : index
    %c0_14 = arith.constant 0 : index
    %33 = vector.load %arg7[%c0_13, %c0_14] : memref<1x96xf32, #tpu.memory_space<vmem>>, vector<1x96xf32>
    %34 = vector.shape_cast %33 : vector<1x96xf32> to vector<96xf32>
    %35 = vector.shape_cast %34 : vector<96xf32> to vector<1x96xf32>
    %36 = vector.broadcast %35 : vector<1x96xf32> to vector<32x96xf32>
    %37 = arith.addf %32, %36 : vector<32x96xf32>
    %38 = vector.extract_strided_slice %37 {offsets = [0, 0], sizes = [32, 32], strides = [1, 1]} : vector<32x96xf32> to vector<32x32xf32>
    %cst_15 = arith.constant 0.353553385 : f32
    %39 = vector.broadcast %cst_15 : f32 to vector<32x32xf32>
    %40 = arith.mulf %38, %39 : vector<32x32xf32>
    %41 = arith.truncf %40 : vector<32x32xf32> to vector<32x32xbf16>
    %42 = vector.extract_strided_slice %37 {offsets = [0, 32], sizes = [32, 32], strides = [1, 1]} : vector<32x96xf32> to vector<32x32xf32>
    %43 = arith.truncf %42 : vector<32x32xf32> to vector<32x32xbf16>
    %44 = vector.extract_strided_slice %37 {offsets = [0, 64], sizes = [32, 32], strides = [1, 1]} : vector<32x96xf32> to vector<32x32xf32>
    %45 = arith.truncf %44 : vector<32x32xf32> to vector<32x32xbf16>
    %46 = tpu.iota {dimensions = array<i32: 0>} : vector<8x8xi32>
    %47 = tpu.iota {dimensions = array<i32: 1>} : vector<8x8xi32>
    %48 = arith.cmpi sgt, %47, %46 : vector<8x8xi32>
    %49 = vector.shape_cast %48 : vector<8x8xi1> to vector<1x8x8xi1>
    %cst_16 = arith.constant 0.000000e+00 : f32
    %50 = vector.broadcast %cst_16 : f32 to vector<32x32xf32>
    %c0_17 = arith.constant 0 : index
    %c0_18 = arith.constant 0 : index
    %51 = vector.load %arg9[%c0_17, %c0_18] : memref<1x32xf32, #tpu.memory_space<vmem>>, vector<1x32xf32>
    %52 = vector.shape_cast %51 : vector<1x32xf32> to vector<32xf32>
    %53 = vector.shape_cast %52 : vector<32xf32> to vector<1x32xf32>
    %54 = vector.broadcast %53 : vector<1x32xf32> to vector<32x32xf32>
    %55 = arith.addf %50, %54 : vector<32x32xf32>
    %56 = vector.extract_strided_slice %41 {offsets = [0, 0], sizes = [32, 8], strides = [1, 1]} : vector<32x32xbf16> to vector<32x8xbf16>
    %57 = vector.shape_cast %56 : vector<32x8xbf16> to vector<4x8x8xbf16>
    %58 = vector.extract_strided_slice %43 {offsets = [0, 0], sizes = [32, 8], strides = [1, 1]} : vector<32x32xbf16> to vector<32x8xbf16>
    %59 = vector.shape_cast %58 : vector<32x8xbf16> to vector<4x8x8xbf16>
    %60 = vector.extract_strided_slice %45 {offsets = [0, 0], sizes = [32, 8], strides = [1, 1]} : vector<32x32xbf16> to vector<32x8xbf16>
    %61 = vector.shape_cast %60 : vector<32x8xbf16> to vector<4x8x8xbf16>
    "tpu.trace_start"() <{level = 10 : i32, message = "bqd,bkd->bqk"}> : () -> ()
    %cst_19 = arith.constant dense<0.000000e+00> : vector<4x8x8xf32>
    %62 = tpu.matmul %57, %59, %cst_19 {dimension_numbers = #tpu.dot_dimension_numbers<[2], [2], [1], [1], [0, 0, 0, 1, 1, 1], [0], [0]>} : vector<4x8x8xbf16>, vector<4x8x8xbf16>, vector<4x8x8xf32> -> vector<4x8x8xf32>
    %cst_20 = arith.constant 0xFF800000 : f32
    "tpu.trace_stop"() : () -> ()
    %63 = vector.shape_cast %49 : vector<1x8x8xi1> to vector<1x8x8xi1>
    %64 = vector.broadcast %63 : vector<1x8x8xi1> to vector<4x8x8xi1>
    %65 = vector.broadcast %cst_20 : f32 to vector<4x8x8xf32>
    %66 = arith.select %64, %65, %62 : vector<4x8x8xi1>, vector<4x8x8xf32>
    %cst_21 = arith.constant dense<0xFF800000> : vector<4x8xf32>
    %67 = vector.multi_reduction <maximumf>, %66, %cst_21 [2] : vector<4x8x8xf32> to vector<4x8xf32>
    %68 = vector.shape_cast %67 : vector<4x8xf32> to vector<4x8x1xf32>
    %69 = vector.broadcast %68 : vector<4x8x1xf32> to vector<4x8x8xf32>
    %70 = arith.subf %66, %69 : vector<4x8x8xf32>
    %71 = math.exp %70 : vector<4x8x8xf32>
    %cst_22 = arith.constant dense<0.000000e+00> : vector<4x8xf32>
    %72 = vector.multi_reduction <add>, %71, %cst_22 [2] : vector<4x8x8xf32> to vector<4x8xf32>
    %73 = vector.shape_cast %72 : vector<4x8xf32> to vector<4x8x1xf32>
    %74 = tpu.reciprocal %73 {approx = true} : vector<4x8x1xf32> -> vector<4x8x1xf32>
    %75 = vector.broadcast %74 : vector<4x8x1xf32> to vector<4x8x8xf32>
    %76 = arith.mulf %71, %75 : vector<4x8x8xf32>
    %77 = arith.truncf %76 : vector<4x8x8xf32> to vector<4x8x8xbf16>
    "tpu.trace_start"() <{level = 10 : i32, message = "bqk,bkd->bqd"}> : () -> ()
    %cst_23 = arith.constant dense<0.000000e+00> : vector<4x8x8xf32>
    %78 = tpu.matmul %77, %61, %cst_23 {dimension_numbers = #tpu.dot_dimension_numbers<[2], [1], [1], [2], [0, 0, 0, 1, 1, 2], [0], [0]>} : vector<4x8x8xbf16>, vector<4x8x8xbf16>, vector<4x8x8xf32> -> vector<4x8x8xf32>
    "tpu.trace_stop"() : () -> ()
    %79 = vector.shape_cast %78 : vector<4x8x8xf32> to vector<32x8xf32>
    %80 = arith.truncf %79 : vector<32x8xf32> to vector<32x8xbf16>
    %c0_24 = arith.constant 0 : index
    %c0_25 = arith.constant 0 : index
    %81 = vector.load %arg8[%c0_24, %c0_25] : memref<32x32xbf16, #tpu.memory_space<vmem>>, vector<8x32xbf16>
    %cst_26 = arith.constant dense<0.000000e+00> : vector<32x32xf32>
    %82 = tpu.matmul %80, %81, %cst_26 {dimension_numbers = #tpu.dot_dimension_numbers<[1], [0], [0], [1], [0, 0, 1, 1], [], []>} : vector<32x8xbf16>, vector<8x32xbf16>, vector<32x32xf32> -> vector<32x32xf32>
    %83 = arith.addf %55, %82 : vector<32x32xf32>
    %84 = vector.extract_strided_slice %41 {offsets = [0, 8], sizes = [32, 8], strides = [1, 1]} : vector<32x32xbf16> to vector<32x8xbf16>
    %85 = vector.shape_cast %84 : vector<32x8xbf16> to vector<4x8x8xbf16>
    %86 = vector.extract_strided_slice %43 {offsets = [0, 8], sizes = [32, 8], strides = [1, 1]} : vector<32x32xbf16> to vector<32x8xbf16>
    %87 = vector.shape_cast %86 : vector<32x8xbf16> to vector<4x8x8xbf16>
    %88 = vector.extract_strided_slice %45 {offsets = [0, 8], sizes = [32, 8], strides = [1, 1]} : vector<32x32xbf16> to vector<32x8xbf16>
    %89 = vector.shape_cast %88 : vector<32x8xbf16> to vector<4x8x8xbf16>
    "tpu.trace_start"() <{level = 10 : i32, message = "bqd,bkd->bqk"}> : () -> ()
    %cst_27 = arith.constant dense<0.000000e+00> : vector<4x8x8xf32>
    %90 = tpu.matmul %85, %87, %cst_27 {dimension_numbers = #tpu.dot_dimension_numbers<[2], [2], [1], [1], [0, 0, 0, 1, 1, 1], [0], [0]>} : vector<4x8x8xbf16>, vector<4x8x8xbf16>, vector<4x8x8xf32> -> vector<4x8x8xf32>
    %cst_28 = arith.constant 0xFF800000 : f32
    "tpu.trace_stop"() : () -> ()
    %91 = vector.shape_cast %49 : vector<1x8x8xi1> to vector<1x8x8xi1>
    %92 = vector.broadcast %91 : vector<1x8x8xi1> to vector<4x8x8xi1>
    %93 = vector.broadcast %cst_28 : f32 to vector<4x8x8xf32>
    %94 = arith.select %92, %93, %90 : vector<4x8x8xi1>, vector<4x8x8xf32>
    %cst_29 = arith.constant dense<0xFF800000> : vector<4x8xf32>
    %95 = vector.multi_reduction <maximumf>, %94, %cst_29 [2] : vector<4x8x8xf32> to vector<4x8xf32>
    %96 = vector.shape_cast %95 : vector<4x8xf32> to vector<4x8x1xf32>
    %97 = vector.broadcast %96 : vector<4x8x1xf32> to vector<4x8x8xf32>
    %98 = arith.subf %94, %97 : vector<4x8x8xf32>
    %99 = math.exp %98 : vector<4x8x8xf32>
    %cst_30 = arith.constant dense<0.000000e+00> : vector<4x8xf32>
    %100 = vector.multi_reduction <add>, %99, %cst_30 [2] : vector<4x8x8xf32> to vector<4x8xf32>
    %101 = vector.shape_cast %100 : vector<4x8xf32> to vector<4x8x1xf32>
    %102 = tpu.reciprocal %101 {approx = true} : vector<4x8x1xf32> -> vector<4x8x1xf32>
    %103 = vector.broadcast %102 : vector<4x8x1xf32> to vector<4x8x8xf32>
    %104 = arith.mulf %99, %103 : vector<4x8x8xf32>
    %105 = arith.truncf %104 : vector<4x8x8xf32> to vector<4x8x8xbf16>
    "tpu.trace_start"() <{level = 10 : i32, message = "bqk,bkd->bqd"}> : () -> ()
    %cst_31 = arith.constant dense<0.000000e+00> : vector<4x8x8xf32>
    %106 = tpu.matmul %105, %89, %cst_31 {dimension_numbers = #tpu.dot_dimension_numbers<[2], [1], [1], [2], [0, 0, 0, 1, 1, 2], [0], [0]>} : vector<4x8x8xbf16>, vector<4x8x8xbf16>, vector<4x8x8xf32> -> vector<4x8x8xf32>
    "tpu.trace_stop"() : () -> ()
    %107 = vector.shape_cast %106 : vector<4x8x8xf32> to vector<32x8xf32>
    %108 = arith.truncf %107 : vector<32x8xf32> to vector<32x8xbf16>
    %c8 = arith.constant 8 : index
    %c0_32 = arith.constant 0 : index
    %109 = vector.load %arg8[%c8, %c0_32] : memref<32x32xbf16, #tpu.memory_space<vmem>>, vector<8x32xbf16>
    %cst_33 = arith.constant dense<0.000000e+00> : vector<32x32xf32>
    %110 = tpu.matmul %108, %109, %cst_33 {dimension_numbers = #tpu.dot_dimension_numbers<[1], [0], [0], [1], [0, 0, 1, 1], [], []>} : vector<32x8xbf16>, vector<8x32xbf16>, vector<32x32xf32> -> vector<32x32xf32>
    %111 = arith.addf %83, %110 : vector<32x32xf32>
    %112 = vector.extract_strided_slice %41 {offsets = [0, 16], sizes = [32, 8], strides = [1, 1]} : vector<32x32xbf16> to vector<32x8xbf16>
    %113 = vector.shape_cast %112 : vector<32x8xbf16> to vector<4x8x8xbf16>
    %114 = vector.extract_strided_slice %43 {offsets = [0, 16], sizes = [32, 8], strides = [1, 1]} : vector<32x32xbf16> to vector<32x8xbf16>
    %115 = vector.shape_cast %114 : vector<32x8xbf16> to vector<4x8x8xbf16>
    %116 = vector.extract_strided_slice %45 {offsets = [0, 16], sizes = [32, 8], strides = [1, 1]} : vector<32x32xbf16> to vector<32x8xbf16>
    %117 = vector.shape_cast %116 : vector<32x8xbf16> to vector<4x8x8xbf16>
    "tpu.trace_start"() <{level = 10 : i32, message = "bqd,bkd->bqk"}> : () -> ()
    %cst_34 = arith.constant dense<0.000000e+00> : vector<4x8x8xf32>
    %118 = tpu.matmul %113, %115, %cst_34 {dimension_numbers = #tpu.dot_dimension_numbers<[2], [2], [1], [1], [0, 0, 0, 1, 1, 1], [0], [0]>} : vector<4x8x8xbf16>, vector<4x8x8xbf16>, vector<4x8x8xf32> -> vector<4x8x8xf32>
    %cst_35 = arith.constant 0xFF800000 : f32
    "tpu.trace_stop"() : () -> ()
    %119 = vector.shape_cast %49 : vector<1x8x8xi1> to vector<1x8x8xi1>
    %120 = vector.broadcast %119 : vector<1x8x8xi1> to vector<4x8x8xi1>
    %121 = vector.broadcast %cst_35 : f32 to vector<4x8x8xf32>
    %122 = arith.select %120, %121, %118 : vector<4x8x8xi1>, vector<4x8x8xf32>
    %cst_36 = arith.constant dense<0xFF800000> : vector<4x8xf32>
    %123 = vector.multi_reduction <maximumf>, %122, %cst_36 [2] : vector<4x8x8xf32> to vector<4x8xf32>
    %124 = vector.shape_cast %123 : vector<4x8xf32> to vector<4x8x1xf32>
    %125 = vector.broadcast %124 : vector<4x8x1xf32> to vector<4x8x8xf32>
    %126 = arith.subf %122, %125 : vector<4x8x8xf32>
    %127 = math.exp %126 : vector<4x8x8xf32>
    %cst_37 = arith.constant dense<0.000000e+00> : vector<4x8xf32>
    %128 = vector.multi_reduction <add>, %127, %cst_37 [2] : vector<4x8x8xf32> to vector<4x8xf32>
    %129 = vector.shape_cast %128 : vector<4x8xf32> to vector<4x8x1xf32>
    %130 = tpu.reciprocal %129 {approx = true} : vector<4x8x1xf32> -> vector<4x8x1xf32>
    %131 = vector.broadcast %130 : vector<4x8x1xf32> to vector<4x8x8xf32>
    %132 = arith.mulf %127, %131 : vector<4x8x8xf32>
    %133 = arith.truncf %132 : vector<4x8x8xf32> to vector<4x8x8xbf16>
    "tpu.trace_start"() <{level = 10 : i32, message = "bqk,bkd->bqd"}> : () -> ()
    %cst_38 = arith.constant dense<0.000000e+00> : vector<4x8x8xf32>
    %134 = tpu.matmul %133, %117, %cst_38 {dimension_numbers = #tpu.dot_dimension_numbers<[2], [1], [1], [2], [0, 0, 0, 1, 1, 2], [0], [0]>} : vector<4x8x8xbf16>, vector<4x8x8xbf16>, vector<4x8x8xf32> -> vector<4x8x8xf32>
    "tpu.trace_stop"() : () -> ()
    %135 = vector.shape_cast %134 : vector<4x8x8xf32> to vector<32x8xf32>
    %136 = arith.truncf %135 : vector<32x8xf32> to vector<32x8xbf16>
    %c16 = arith.constant 16 : index
    %c0_39 = arith.constant 0 : index
    %137 = vector.load %arg8[%c16, %c0_39] : memref<32x32xbf16, #tpu.memory_space<vmem>>, vector<8x32xbf16>
    %cst_40 = arith.constant dense<0.000000e+00> : vector<32x32xf32>
    %138 = tpu.matmul %136, %137, %cst_40 {dimension_numbers = #tpu.dot_dimension_numbers<[1], [0], [0], [1], [0, 0, 1, 1], [], []>} : vector<32x8xbf16>, vector<8x32xbf16>, vector<32x32xf32> -> vector<32x32xf32>
    %139 = arith.addf %111, %138 : vector<32x32xf32>
    %140 = vector.extract_strided_slice %41 {offsets = [0, 24], sizes = [32, 8], strides = [1, 1]} : vector<32x32xbf16> to vector<32x8xbf16>
    %141 = vector.shape_cast %140 : vector<32x8xbf16> to vector<4x8x8xbf16>
    %142 = vector.extract_strided_slice %43 {offsets = [0, 24], sizes = [32, 8], strides = [1, 1]} : vector<32x32xbf16> to vector<32x8xbf16>
    %143 = vector.shape_cast %142 : vector<32x8xbf16> to vector<4x8x8xbf16>
    %144 = vector.extract_strided_slice %45 {offsets = [0, 24], sizes = [32, 8], strides = [1, 1]} : vector<32x32xbf16> to vector<32x8xbf16>
    %145 = vector.shape_cast %144 : vector<32x8xbf16> to vector<4x8x8xbf16>
    "tpu.trace_start"() <{level = 10 : i32, message = "bqd,bkd->bqk"}> : () -> ()
    %cst_41 = arith.constant dense<0.000000e+00> : vector<4x8x8xf32>
    %146 = tpu.matmul %141, %143, %cst_41 {dimension_numbers = #tpu.dot_dimension_numbers<[2], [2], [1], [1], [0, 0, 0, 1, 1, 1], [0], [0]>} : vector<4x8x8xbf16>, vector<4x8x8xbf16>, vector<4x8x8xf32> -> vector<4x8x8xf32>
    %cst_42 = arith.constant 0xFF800000 : f32
    "tpu.trace_stop"() : () -> ()
    %147 = vector.shape_cast %49 : vector<1x8x8xi1> to vector<1x8x8xi1>
    %148 = vector.broadcast %147 : vector<1x8x8xi1> to vector<4x8x8xi1>
    %149 = vector.broadcast %cst_42 : f32 to vector<4x8x8xf32>
    %150 = arith.select %148, %149, %146 : vector<4x8x8xi1>, vector<4x8x8xf32>
    %cst_43 = arith.constant dense<0xFF800000> : vector<4x8xf32>
    %151 = vector.multi_reduction <maximumf>, %150, %cst_43 [2] : vector<4x8x8xf32> to vector<4x8xf32>
    %152 = vector.shape_cast %151 : vector<4x8xf32> to vector<4x8x1xf32>
    %153 = vector.broadcast %152 : vector<4x8x1xf32> to vector<4x8x8xf32>
    %154 = arith.subf %150, %153 : vector<4x8x8xf32>
    %155 = math.exp %154 : vector<4x8x8xf32>
    %cst_44 = arith.constant dense<0.000000e+00> : vector<4x8xf32>
    %156 = vector.multi_reduction <add>, %155, %cst_44 [2] : vector<4x8x8xf32> to vector<4x8xf32>
    %157 = vector.shape_cast %156 : vector<4x8xf32> to vector<4x8x1xf32>
    %158 = tpu.reciprocal %157 {approx = true} : vector<4x8x1xf32> -> vector<4x8x1xf32>
    %159 = vector.broadcast %158 : vector<4x8x1xf32> to vector<4x8x8xf32>
    %160 = arith.mulf %155, %159 : vector<4x8x8xf32>
    %161 = arith.truncf %160 : vector<4x8x8xf32> to vector<4x8x8xbf16>
    "tpu.trace_start"() <{level = 10 : i32, message = "bqk,bkd->bqd"}> : () -> ()
    %cst_45 = arith.constant dense<0.000000e+00> : vector<4x8x8xf32>
    %162 = tpu.matmul %161, %145, %cst_45 {dimension_numbers = #tpu.dot_dimension_numbers<[2], [1], [1], [2], [0, 0, 0, 1, 1, 2], [0], [0]>} : vector<4x8x8xbf16>, vector<4x8x8xbf16>, vector<4x8x8xf32> -> vector<4x8x8xf32>
    "tpu.trace_stop"() : () -> ()
    %163 = vector.shape_cast %162 : vector<4x8x8xf32> to vector<32x8xf32>
    %164 = arith.truncf %163 : vector<32x8xf32> to vector<32x8xbf16>
    %c24 = arith.constant 24 : index
    %c0_46 = arith.constant 0 : index
    %165 = vector.load %arg8[%c24, %c0_46] : memref<32x32xbf16, #tpu.memory_space<vmem>>, vector<8x32xbf16>
    %cst_47 = arith.constant dense<0.000000e+00> : vector<32x32xf32>
    %166 = tpu.matmul %164, %165, %cst_47 {dimension_numbers = #tpu.dot_dimension_numbers<[1], [0], [0], [1], [0, 0, 1, 1], [], []>} : vector<32x8xbf16>, vector<8x32xbf16>, vector<32x32xf32> -> vector<32x32xf32>
    %167 = arith.addf %139, %166 : vector<32x32xf32>
    %168 = arith.addf %1, %167 : vector<32x32xf32>
    %c0_48 = arith.constant 0 : index
    %c0_49 = arith.constant 0 : index
    %169 = vector.load %arg4[%c0_48, %c0_49] : memref<1x32xf32, #tpu.memory_space<vmem>>, vector<1x32xf32>
    %170 = vector.shape_cast %169 : vector<1x32xf32> to vector<32xf32>
    %c0_50 = arith.constant 0 : index
    %c0_51 = arith.constant 0 : index
    %171 = vector.load %arg5[%c0_50, %c0_51] : memref<1x32xf32, #tpu.memory_space<vmem>>, vector<1x32xf32>
    %172 = vector.shape_cast %171 : vector<1x32xf32> to vector<32xf32>
    %cst_52 = arith.constant dense<0.000000e+00> : vector<32xf32>
    %173 = vector.multi_reduction <add>, %168, %cst_52 [1] : vector<32x32xf32> to vector<32xf32>
    %174 = vector.shape_cast %173 : vector<32xf32> to vector<32x1xf32>
    %cst_53 = arith.constant 3.200000e+01 : f32
    %175 = vector.broadcast %cst_53 : f32 to vector<32x1xf32>
    %176 = arith.divf %174, %175 : vector<32x1xf32>
    %177 = vector.broadcast %176 : vector<32x1xf32> to vector<32x32xf32>
    %178 = arith.subf %168, %177 : vector<32x32xf32>
    %179 = arith.mulf %178, %178 : vector<32x32xf32>
    %cst_54 = arith.constant dense<0.000000e+00> : vector<32xf32>
    %180 = vector.multi_reduction <add>, %179, %cst_54 [1] : vector<32x32xf32> to vector<32xf32>
    %181 = vector.shape_cast %180 : vector<32xf32> to vector<32x1xf32>
    %cst_55 = arith.constant 3.200000e+01 : f32
    %182 = vector.broadcast %cst_55 : f32 to vector<32x1xf32>
    %183 = arith.divf %181, %182 : vector<32x1xf32>
    %184 = vector.broadcast %176 : vector<32x1xf32> to vector<32x32xf32>
    %185 = arith.subf %168, %184 : vector<32x32xf32>
    %cst_56 = arith.constant 9.99999974E-6 : f32
    %186 = vector.broadcast %cst_56 : f32 to vector<32x1xf32>
    %187 = arith.addf %183, %186 : vector<32x1xf32>
    %188 = math.rsqrt %187 : vector<32x1xf32>
    %189 = vector.broadcast %188 : vector<32x1xf32> to vector<32x32xf32>
    %190 = arith.mulf %185, %189 : vector<32x32xf32>
    %191 = vector.shape_cast %170 : vector<32xf32> to vector<1x32xf32>
    %192 = vector.broadcast %191 : vector<1x32xf32> to vector<32x32xf32>
    %193 = arith.mulf %190, %192 : vector<32x32xf32>
    %194 = vector.shape_cast %172 : vector<32xf32> to vector<1x32xf32>
    %195 = vector.broadcast %194 : vector<1x32xf32> to vector<32x32xf32>
    %196 = arith.addf %193, %195 : vector<32x32xf32>
    %197 = arith.truncf %196 : vector<32x32xf32> to vector<32x32xbf16>
    %cst_57 = arith.constant 0.000000e+00 : f32
    %198 = vector.broadcast %cst_57 : f32 to vector<32x32xf32>
    %c0_58 = arith.constant 0 : index
    %c0_59 = arith.constant 0 : index
    %199 = vector.load %arg13[%c0_58, %c0_59] : memref<1x32xf32, #tpu.memory_space<vmem>>, vector<1x32xf32>
    %200 = vector.shape_cast %199 : vector<1x32xf32> to vector<32xf32>
    %201 = vector.shape_cast %200 : vector<32xf32> to vector<1x32xf32>
    %202 = vector.broadcast %201 : vector<1x32xf32> to vector<32x32xf32>
    %203 = arith.addf %198, %202 : vector<32x32xf32>
    %c0_60 = arith.constant 0 : index
    %c0_61 = arith.constant 0 : index
    %204 = vector.load %arg10[%c0_60, %c0_61] : memref<32x128xbf16, #tpu.memory_space<vmem>>, vector<32x128xbf16>
    %cst_62 = arith.constant dense<0.000000e+00> : vector<32x128xf32>
    %205 = tpu.matmul %197, %204, %cst_62 {dimension_numbers = #tpu.dot_dimension_numbers<[1], [0], [0], [1], [0, 0, 1, 1], [], []>} : vector<32x32xbf16>, vector<32x128xbf16>, vector<32x128xf32> -> vector<32x128xf32>
    %c0_63 = arith.constant 0 : index
    %c0_64 = arith.constant 0 : index
    %206 = vector.load %arg11[%c0_63, %c0_64] : memref<1x128xf32, #tpu.memory_space<vmem>>, vector<1x128xf32>
    %207 = vector.shape_cast %206 : vector<1x128xf32> to vector<128xf32>
    %208 = vector.shape_cast %207 : vector<128xf32> to vector<1x128xf32>
    %209 = vector.broadcast %208 : vector<1x128xf32> to vector<32x128xf32>
    %210 = arith.addf %205, %209 : vector<32x128xf32>
    %cst_65 = arith.constant 1.782000e+00 : f32
    %211 = vector.broadcast %cst_65 : f32 to vector<32x128xf32>
    %212 = arith.mulf %211, %210 : vector<32x128xf32>
    %213 = arith.negf %212 : vector<32x128xf32>
    %214 = math.exp %213 : vector<32x128xf32>
    %cst_66 = arith.constant 1.000000e+00 : f32
    %215 = vector.broadcast %cst_66 : f32 to vector<32x128xf32>
    %216 = arith.addf %215, %214 : vector<32x128xf32>
    %217 = arith.divf %215, %216 : vector<32x128xf32>
    %218 = arith.mulf %210, %217 : vector<32x128xf32>
    %219 = arith.truncf %218 : vector<32x128xf32> to vector<32x128xbf16>
    %c0_67 = arith.constant 0 : index
    %c0_68 = arith.constant 0 : index
    %220 = vector.load %arg12[%c0_67, %c0_68] : memref<128x32xbf16, #tpu.memory_space<vmem>>, vector<128x32xbf16>
    %cst_69 = arith.constant dense<0.000000e+00> : vector<32x32xf32>
    %221 = tpu.matmul %219, %220, %cst_69 {dimension_numbers = #tpu.dot_dimension_numbers<[1], [0], [0], [1], [0, 0, 1, 1], [], []>} : vector<32x128xbf16>, vector<128x32xbf16>, vector<32x32xf32> -> vector<32x32xf32>
    %222 = arith.addf %203, %221 : vector<32x32xf32>
    %223 = arith.addf %168, %222 : vector<32x32xf32>
    %224 = vector.shape_cast %223 : vector<32x32xf32> to vector<4x8x32xf32>
    %c0_70 = arith.constant 0 : index
    %c0_71 = arith.constant 0 : index
    %c0_72 = arith.constant 0 : index
    %225 = vector.load %arg14[%c0_70, %c0_71, %c0_72] : memref<4x8x32xf32, #tpu.memory_space<vmem>>, vector<4x8x32xf32>
    tpu.vector_store %arg14[%c0_70, %c0_71, %c0_72], %224 {strides = array<i32>} : memref<4x8x32xf32, #tpu.memory_space<vmem>>, vector<4x8x32xf32>,
    return
  }
  func.func @transform_0(%arg0: i32) -> (i32, i32, i32) {
    %c0_i32 = arith.constant 0 : i32
    %c0_i32_0 = arith.constant 0 : i32
    %c0_i32_1 = arith.constant 0 : i32
    return %arg0, %c0_i32, %c0_i32_0 : i32, i32, i32
  }
  func.func @transform_1(%arg0: i32) -> (i32, i32) {
    %c0_i32 = arith.constant 0 : i32
    %c0_i32_0 = arith.constant 0 : i32
    %c0_i32_1 = arith.constant 0 : i32
    return %c0_i32, %c0_i32_0 : i32, i32
  }
  func.func @transform_2(%arg0: i32) -> (i32, i32) {
    %c0_i32 = arith.constant 0 : i32
    %c0_i32_0 = arith.constant 0 : i32
    %c0_i32_1 = arith.constant 0 : i32
    return %c0_i32, %c0_i32_0 : i32, i32
  }
  func.func @transform_3(%arg0: i32) -> (i32, i32) {
    %c0_i32 = arith.constant 0 : i32
    %c0_i32_0 = arith.constant 0 : i32
    %c0_i32_1 = arith.constant 0 : i32
    return %c0_i32, %c0_i32_0 : i32, i32
  }
  func.func @transform_4(%arg0: i32) -> (i32, i32) {
    %c0_i32 = arith.constant 0 : i32
    %c0_i32_0 = arith.constant 0 : i32
    %c0_i32_1 = arith.constant 0 : i32
    return %c0_i32, %c0_i32_0 : i32, i32
  }
  func.func @transform_5(%arg0: i32) -> (i32, i32) {
    %c0_i32 = arith.constant 0 : i32
    %c0_i32_0 = arith.constant 0 : i32
    %c0_i32_1 = arith.constant 0 : i32
    return %c0_i32, %c0_i32_0 : i32, i32
  }
  func.func @transform_6(%arg0: i32) -> (i32, i32) {
    %c0_i32 = arith.constant 0 : i32
    %c0_i32_0 = arith.constant 0 : i32
    %c0_i32_1 = arith.constant 0 : i32
    return %c0_i32, %c0_i32_0 : i32, i32
  }
  func.func @transform_7(%arg0: i32) -> (i32, i32) {
    %c0_i32 = arith.constant 0 : i32
    %c0_i32_0 = arith.constant 0 : i32
    %c0_i32_1 = arith.constant 0 : i32
    return %c0_i32, %c0_i32_0 : i32, i32
  }
  func.func @transform_8(%arg0: i32) -> (i32, i32) {
    %c0_i32 = arith.constant 0 : i32
    %c0_i32_0 = arith.constant 0 : i32
    %c0_i32_1 = arith.constant 0 : i32
    return %c0_i32, %c0_i32_0 : i32, i32
  }
  func.func @transform_9(%arg0: i32) -> (i32, i32) {
    %c0_i32 = arith.constant 0 : i32
    %c0_i32_0 = arith.constant 0 : i32
    %c0_i32_1 = arith.constant 0 : i32
    return %c0_i32, %c0_i32_0 : i32, i32
  }
  func.func @transform_10(%arg0: i32) -> (i32, i32) {
    %c0_i32 = arith.constant 0 : i32
    %c0_i32_0 = arith.constant 0 : i32
    %c0_i32_1 = arith.constant 0 : i32
    return %c0_i32, %c0_i32_0 : i32, i32
  }
  func.func @transform_11(%arg0: i32) -> (i32, i32) {
    %c0_i32 = arith.constant 0 : i32
    %c0_i32_0 = arith.constant 0 : i32
    %c0_i32_1 = arith.constant 0 : i32
    return %c0_i32, %c0_i32_0 : i32, i32
  }
  func.func @transform_12(%arg0: i32) -> (i32, i32) {
    %c0_i32 = arith.constant 0 : i32
    %c0_i32_0 = arith.constant 0 : i32
    %c0_i32_1 = arith.constant 0 : i32
    return %c0_i32, %c0_i32_0 : i32, i32
  }
  func.func @transform_13(%arg0: i32) -> (i32, i32, i32) {
    %c0_i32 = arith.constant 0 : i32
    %c0_i32_0 = arith.constant 0 : i32
    %c0_i32_1 = arith.constant 0 : i32
    return %arg0, %c0_i32, %c0_i32_0 : i32, i32, i32
  }
}

</mosaic_0001>

<llo_original>
// kernel: tpu_custom_call.1
$region0: #{tpu_custom_call.1}
  #allocation0 [shape = 'u32[]', space=smem, size = 0x4, offset = 0x4, fixed_abs, tag = 'smem constant byte address 0x4 - core index']
  #allocation1 [shape = 'u32[144,128]{1,0:T(1,128)}', space=vmem, size = 0x12000, scoped, tag = 'internal scratch']
  %s0 = inlined_call_operand.vmem [shape: f32[8,8,32], index: 0, kind: input, shape index: {}]
  %s1 = inlined_call_operand.vmem [shape: f32[1,32], index: 1, kind: input, shape index: {}]
  %s2 = inlined_call_operand.vmem [shape: f32[1,32], index: 2, kind: input, shape index: {}]
  %s3 = inlined_call_operand.hbm [shape: f32[1,32], index: 3, kind: input, shape index: {}]
  %s4 = inlined_call_operand.hbm [shape: f32[1,32], index: 4, kind: input, shape index: {}]
  %s5 = inlined_call_operand.vmem [shape: bf16[32,96], index: 5, kind: input, shape index: {}]
  %s6 = inlined_call_operand.hbm [shape: f32[1,96], index: 6, kind: input, shape index: {}]
  %s7 = inlined_call_operand.hbm [shape: bf16[32,32], index: 7, kind: input, shape index: {}]
  %s8 = inlined_call_operand.hbm [shape: f32[1,32], index: 8, kind: input, shape index: {}]
  %s9 = inlined_call_operand.vmem [shape: bf16[32,128], index: 9, kind: input, shape index: {}]
  %s10 = inlined_call_operand.vmem [shape: f32[1,128], index: 10, kind: input, shape index: {}]
  %s11 = inlined_call_operand.vmem [shape: bf16[128,32], index: 11, kind: input, shape index: {}]
  %s12 = inlined_call_operand.vmem [shape: f32[1,32], index: 12, kind: input, shape index: {}]
  %s13 = inlined_call_operand.hbm [shape: f32[8,8,32], index: 13, kind: output, shape index: {}]
  %s14 = sld [smem:[#allocation0]]
  $region105: #{tpu_custom_call.1} parent=0
    _
  %s16 = ssub.s32 1, %s14
  %s17 = scalar_select 0, %s16, %s14
  $region1: #{tpu_custom_call.1} parent=0
    #allocation2 [shape = 'u8[512]{0}', space=vmem, size = 0x400, scoped, tag = 'input window, operand 3, single buffered']
    #allocation3 [shape = 's32[2]{0}', space=sflag, size = 0x8, scoped, tag = 'scoped memory for tpu_custom_call.1']
    #allocation4 [shape = 's32[2]{0}', space=sflag, size = 0x8, scoped, tag = 'scoped memory for tpu_custom_call.1']
    #allocation5 [shape = 'u8[512]{0}', space=vmem, size = 0x400, scoped, tag = 'input window, operand 4, single buffered']
    #allocation6 [shape = 's32[1]{0}', space=sflag, size = 0x4, scoped, tag = 'scoped memory for tpu_custom_call.1']
    #allocation7 [shape = 'u8[512]{0}', space=vmem, size = 0x400, scoped, tag = 'input window, operand 6, single buffered']
    #allocation8 [shape = 'u8[8192]{0}', space=vmem, size = 0x2000, scoped, tag = 'input window, operand 7, single buffered']
    #allocation9 [shape = 's32[1]{0}', space=sflag, size = 0x4, scoped, tag = 'scoped memory for tpu_custom_call.1']
    #allocation10 [shape = 'u8[512]{0}', space=vmem, size = 0x400, scoped, tag = 'input window, operand 8, single buffered']
    #allocation11 [shape = 'u8[32768]{0}', space=vmem, size = 0x8000, scoped, tag = 'output window, operand 0']
    %18 = vsyncpa [#allocation3], 0
    %19 = vsyncpa [#allocation6], 0
    %20 = vsyncpa [#allocation9], 0
    %21 = vsyncpa [#allocation4], 0
    %s22 = scalar_lea.sflag [#allocation4], 1
    %23 = vsyncpa %s22, 0
    loop: start=0, step=1, limit=4
    $region2: #{tpu_custom_call.1} parent=1 // loop_pre_header
      _
    $region3: #{tpu_custom_call.1} parent=1 // loop_header
      %s25 = sphi 0, %s29
      %p26 = scmp.ge.s32.totalorder %s25, 4
      %s35 = sphi 0, %s37
      %s38 = sphi 0, %s35
      %s39 = sphi 0, %s38
      %s55 = sphi 0, %s39
      %s59 = sphi 0, %s59
      %s61 = sphi 0, %s59
      %s62 = sphi 0, %s61
      %s76 = sphi 0, %s62
      %s80 = sphi 0, %s80
      %s82 = sphi 0, %s80
      %s83 = sphi 0, %s82
      %s97 = sphi 0, %s83
      %s101 = sphi 0, %s101
      %s103 = sphi 0, %s101
      %s104 = sphi 0, %s103
      %s118 = sphi 0, %s104
      %s122 = sphi 0, %s122
      %s124 = sphi 0, %s122
      %s125 = sphi 0, %s124
      %s139 = sphi 0, %s125
      %s143 = sphi 0, %s143
      %s145 = sphi 0, %s143
      %s146 = sphi 0, %s145
      %s160 = sphi 0, %s146
      %s164 = sphi 0, %s164
      %s166 = sphi 0, %s164
      %s167 = sphi 0, %s166
      %s181 = sphi 0, %s167
      %s185 = sphi 0, %s185
      %s187 = sphi 0, %s185
      %s188 = sphi 0, %s187
      %s202 = sphi 0, %s188
      %s206 = sphi 0, %s206
      %s208 = sphi 0, %s206
      %s209 = sphi 0, %s208
      %s223 = sphi 0, %s209
      %s227 = sphi 0, %s227
      %s229 = sphi 0, %s227
      %s230 = sphi 0, %s229
      %s244 = sphi 0, %s230
      %s248 = sphi 0, %s248
      %s250 = sphi 0, %s248
      %s251 = sphi 0, %s250
      %s265 = sphi 0, %s251
      %s269 = sphi 0, %s269
      %s271 = sphi 0, %s269
      %s272 = sphi 0, %s271
      %s286 = sphi 0, %s272
      %s290 = sphi 0, %s290
      %s292 = sphi 0, %s290
      %s293 = sphi 0, %s292
      %s307 = sphi 0, %s293
      %s313 = sphi 0, %s315
      %s316 = sphi 0, %s313
      %s317 = sphi 0, %s316
      %s333 = sphi 0, %s317
    $region4: #{tpu_custom_call.1} parent=1 // loop_header_branch
      %28 = sbr.rel (%p26) target = $region8
    $region5: #{tpu_custom_call.1} parent=1 // loop_body
      %s30 = ssub.s32 %s25, 1
      %s31 = ssub.s32 %s25, 2
      %s32 = sadd.s32 %s25, 1
      %s33 = ssub.s32 %s25, %s32
      %p34 = scmp.eq.s32.totalorder %s33, 0
      %s36 = sadd.s32 %s35, 1
      %s37 = scalar_select %p34, %s35, %s36
      %p40 = pneg %p34
      %p41 = scmp.eq.s32.totalorder %s25, 1
      %p42 = por %p40, %p41
      %p43 = scmp.ne.s32.totalorder %s35, %s38
      %p44 = scmp.eq.s32.totalorder %s25, 0
      %p45 = por %p43, %p44
      %p46 = scmp.ne.s32.totalorder %s35, %s38
      %p47 = scmp.eq.s32.totalorder %s30, 1
      %p48 = por %p46, %p47
      %p49 = scmp.ne.s32.totalorder %s38, %s39
      %p50 = scmp.eq.s32.totalorder %s30, 0
      %p51 = por %p49, %p50
      %p52 = scmp.ne.s32.totalorder %s38, %s39
      %p53 = scmp.eq.s32.totalorder %s31, 1
      %p54 = por %p52, %p53
      %p56 = scmp.ne.s32.totalorder %s39, %s55
      %p57 = scmp.eq.s32.totalorder %s31, 0
      %p58 = por %p56, %p57
      %s60 = sadd.s32 %s59, 1
      %p63 = scmp.eq.s32.totalorder %s25, 1
      %p64 = scmp.ne.s32.totalorder %s59, %s61
      %p65 = scmp.eq.s32.totalorder %s25, 0
      %p66 = por %p64, %p65
      %p67 = scmp.ne.s32.totalorder %s59, %s61
      %p68 = scmp.eq.s32.totalorder %s30, 1
      %p69 = por %p67, %p68
      %p70 = scmp.ne.s32.totalorder %s61, %s62
      %p71 = scmp.eq.s32.totalorder %s30, 0
      %p72 = por %p70, %p71
      %p73 = scmp.ne.s32.totalorder %s61, %s62
      %p74 = scmp.eq.s32.totalorder %s31, 1
      %p75 = por %p73, %p74
      %p77 = scmp.ne.s32.totalorder %s62, %s76
      %p78 = scmp.eq.s32.totalorder %s31, 0
      %p79 = por %p77, %p78
      %s81 = sadd.s32 %s80, 1
      %p84 = scmp.eq.s32.totalorder %s25, 1
      %p85 = scmp.ne.s32.totalorder %s80, %s82
      %p86 = scmp.eq.s32.totalorder %s25, 0
      %p87 = por %p85, %p86
      %p88 = scmp.ne.s32.totalorder %s80, %s82
      %p89 = scmp.eq.s32.totalorder %s30, 1
      %p90 = por %p88, %p89
      %p91 = scmp.ne.s32.totalorder %s82, %s83
      %p92 = scmp.eq.s32.totalorder %s30, 0
      %p93 = por %p91, %p92
      %p94 = scmp.ne.s32.totalorder %s82, %s83
      %p95 = scmp.eq.s32.totalorder %s31, 1
      %p96 = por %p94, %p95
      %p98 = scmp.ne.s32.totalorder %s83, %s97
      %p99 = scmp.eq.s32.totalorder %s31, 0
      %p100 = por %p98, %p99
      %s102 = sadd.s32 %s101, 1
      %p105 = scmp.eq.s32.totalorder %s25, 1
      %p106 = scmp.ne.s32.totalorder %s101, %s103
      %p107 = scmp.eq.s32.totalorder %s25, 0
      %p108 = por %p106, %p107
      %p109 = scmp.ne.s32.totalorder %s101, %s103
      %p110 = scmp.eq.s32.totalorder %s30, 1
      %p111 = por %p109, %p110
      %p112 = scmp.ne.s32.totalorder %s103, %s104
      %p113 = scmp.eq.s32.totalorder %s30, 0
      %p114 = por %p112, %p113
      %p115 = scmp.ne.s32.totalorder %s103, %s104
      %p116 = scmp.eq.s32.totalorder %s31, 1
      %p117 = por %p115, %p116
      %p119 = scmp.ne.s32.totalorder %s104, %s118
      %p120 = scmp.eq.s32.totalorder %s31, 0
      %p121 = por %p119, %p120
      %s123 = sadd.s32 %s122, 1
      %p126 = scmp.eq.s32.totalorder %s25, 1
      %p127 = scmp.ne.s32.totalorder %s122, %s124
      %p128 = scmp.eq.s32.totalorder %s25, 0
      %p129 = por %p127, %p128
      %p130 = scmp.ne.s32.totalorder %s122, %s124
      %p131 = scmp.eq.s32.totalorder %s30, 1
      %p132 = por %p130, %p131
      %p133 = scmp.ne.s32.totalorder %s124, %s125
      %p134 = scmp.eq.s32.totalorder %s30, 0
      %p135 = por %p133, %p134
      %p136 = scmp.ne.s32.totalorder %s124, %s125
      %p137 = scmp.eq.s32.totalorder %s31, 1
      %p138 = por %p136, %p137
      %p140 = scmp.ne.s32.totalorder %s125, %s139
      %p141 = scmp.eq.s32.totalorder %s31, 0
      %p142 = por %p140, %p141
      %s144 = sadd.s32 %s143, 1
      %p147 = scmp.eq.s32.totalorder %s25, 1
      %p148 = scmp.ne.s32.totalorder %s143, %s145
      %p149 = scmp.eq.s32.totalorder %s25, 0
      %p150 = por %p148, %p149
      %p151 = scmp.ne.s32.totalorder %s143, %s145
      %p152 = scmp.eq.s32.totalorder %s30, 1
      %p153 = por %p151, %p152
      %p154 = scmp.ne.s32.totalorder %s145, %s146
      %p155 = scmp.eq.s32.totalorder %s30, 0
      %p156 = por %p154, %p155
      %p157 = scmp.ne.s32.totalorder %s145, %s146
      %p158 = scmp.eq.s32.totalorder %s31, 1
      %p159 = por %p157, %p158
      %p161 = scmp.ne.s32.totalorder %s146, %s160
      %p162 = scmp.eq.s32.totalorder %s31, 0
      %p163 = por %p161, %p162
      %s165 = sadd.s32 %s164, 1
      %p168 = scmp.eq.s32.totalorder %s25, 1
      %p169 = scmp.ne.s32.totalorder %s164, %s166
      %p170 = scmp.eq.s32.totalorder %s25, 0
      %p171 = por %p169, %p170
      %p172 = scmp.ne.s32.totalorder %s164, %s166
      %p173 = scmp.eq.s32.totalorder %s30, 1
      %p174 = por %p172, %p173
      %p175 = scmp.ne.s32.totalorder %s166, %s167
      %p176 = scmp.eq.s32.totalorder %s30, 0
      %p177 = por %p175, %p176
      %p178 = scmp.ne.s32.totalorder %s166, %s167
      %p179 = scmp.eq.s32.totalorder %s31, 1
      %p180 = por %p178, %p179
      %p182 = scmp.ne.s32.totalorder %s167, %s181
      %p183 = scmp.eq.s32.totalorder %s31, 0
      %p184 = por %p182, %p183
      %s186 = sadd.s32 %s185, 1
      %p189 = scmp.eq.s32.totalorder %s25, 1
      %p190 = scmp.ne.s32.totalorder %s185, %s187
      %p191 = scmp.eq.s32.totalorder %s25, 0
      %p192 = por %p190, %p191
      %p193 = scmp.ne.s32.totalorder %s185, %s187
      %p194 = scmp.eq.s32.totalorder %s30, 1
      %p195 = por %p193, %p194
      %p196 = scmp.ne.s32.totalorder %s187, %s188
      %p197 = scmp.eq.s32.totalorder %s30, 0
      %p198 = por %p196, %p197
      %p199 = scmp.ne.s32.totalorder %s187, %s188
      %p200 = scmp.eq.s32.totalorder %s31, 1
      %p201 = por %p199, %p200
      %p203 = scmp.ne.s32.totalorder %s188, %s202
      %p204 = scmp.eq.s32.totalorder %s31, 0
      %p205 = por %p203, %p204
      %s207 = sadd.s32 %s206, 1
      %p210 = scmp.eq.s32.totalorder %s25, 1
      %p211 = scmp.ne.s32.totalorder %s206, %s208
      %p212 = scmp.eq.s32.totalorder %s25, 0
      %p213 = por %p211, %p212
      %p214 = scmp.ne.s32.totalorder %s206, %s208
      %p215 = scmp.eq.s32.totalorder %s30, 1
      %p216 = por %p214, %p215
      %p217 = scmp.ne.s32.totalorder %s208, %s209
      %p218 = scmp.eq.s32.totalorder %s30, 0
      %p219 = por %p217, %p218
      %p220 = scmp.ne.s32.totalorder %s208, %s209
      %p221 = scmp.eq.s32.totalorder %s31, 1
      %p222 = por %p220, %p221
      %p224 = scmp.ne.s32.totalorder %s209, %s223
      %p225 = scmp.eq.s32.totalorder %s31, 0
      %p226 = por %p224, %p225
      %s228 = sadd.s32 %s227, 1
      %p231 = scmp.eq.s32.totalorder %s25, 1
      %p232 = scmp.ne.s32.totalorder %s227, %s229
      %p233 = scmp.eq.s32.totalorder %s25, 0
      %p234 = por %p232, %p233
      %p235 = scmp.ne.s32.totalorder %s227, %s229
      %p236 = scmp.eq.s32.totalorder %s30, 1
      %p237 = por %p235, %p236
      %p238 = scmp.ne.s32.totalorder %s229, %s230
      %p239 = scmp.eq.s32.totalorder %s30, 0
      %p240 = por %p238, %p239
      %p241 = scmp.ne.s32.totalorder %s229, %s230
      %p242 = scmp.eq.s32.totalorder %s31, 1
      %p243 = por %p241, %p242
      %p245 = scmp.ne.s32.totalorder %s230, %s244
      %p246 = scmp.eq.s32.totalorder %s31, 0
      %p247 = por %p245, %p246
      %s249 = sadd.s32 %s248, 1
      %p252 = scmp.eq.s32.totalorder %s25, 1
      %p253 = scmp.ne.s32.totalorder %s248, %s250
      %p254 = scmp.eq.s32.totalorder %s25, 0
      %p255 = por %p253, %p254
      %p256 = scmp.ne.s32.totalorder %s248, %s250
      %p257 = scmp.eq.s32.totalorder %s30, 1
      %p258 = por %p256, %p257
      %p259 = scmp.ne.s32.totalorder %s250, %s251
      %p260 = scmp.eq.s32.totalorder %s30, 0
      %p261 = por %p259, %p260
      %p262 = scmp.ne.s32.totalorder %s250, %s251
      %p263 = scmp.eq.s32.totalorder %s31, 1
      %p264 = por %p262, %p263
      %p266 = scmp.ne.s32.totalorder %s251, %s265
      %p267 = scmp.eq.s32.totalorder %s31, 0
      %p268 = por %p266, %p267
      %s270 = sadd.s32 %s269, 1
      %p273 = scmp.eq.s32.totalorder %s25, 1
      %p274 = scmp.ne.s32.totalorder %s269, %s271
      %p275 = scmp.eq.s32.totalorder %s25, 0
      %p276 = por %p274, %p275
      %p277 = scmp.ne.s32.totalorder %s269, %s271
      %p278 = scmp.eq.s32.totalorder %s30, 1
      %p279 = por %p277, %p278
      %p280 = scmp.ne.s32.totalorder %s271, %s272
      %p281 = scmp.eq.s32.totalorder %s30, 0
      %p282 = por %p280, %p281
      %p283 = scmp.ne.s32.totalorder %s271, %s272
      %p284 = scmp.eq.s32.totalorder %s31, 1
      %p285 = por %p283, %p284
      %p287 = scmp.ne.s32.totalorder %s272, %s286
      %p288 = scmp.eq.s32.totalorder %s31, 0
      %p289 = por %p287, %p288
      %s291 = sadd.s32 %s290, 1
      %p294 = scmp.eq.s32.totalorder %s25, 1
      %p295 = scmp.ne.s32.totalorder %s290, %s292
      %p296 = scmp.eq.s32.totalorder %s25, 0
      %p297 = por %p295, %p296
      %p298 = scmp.ne.s32.totalorder %s290, %s292
      %p299 = scmp.eq.s32.totalorder %s30, 1
      %p300 = por %p298, %p299
      %p301 = scmp.ne.s32.totalorder %s292, %s293
      %p302 = scmp.eq.s32.totalorder %s30, 0
      %p303 = por %p301, %p302
      %p304 = scmp.ne.s32.totalorder %s292, %s293
      %p305 = scmp.eq.s32.totalorder %s31, 1
      %p306 = por %p304, %p305
      %p308 = scmp.ne.s32.totalorder %s293, %s307
      %p309 = scmp.eq.s32.totalorder %s31, 0
      %p310 = por %p308, %p309
      %s311 = ssub.s32 %s25, %s32
      %p312 = scmp.eq.s32.totalorder %s311, 0
      %s314 = sadd.s32 %s313, 1
      %s315 = scalar_select %p312, %s313, %s314
      %p318 = pneg %p312
      %p319 = scmp.eq.s32.totalorder %s25, 1
      %p320 = por %p318, %p319
      %p321 = scmp.ne.s32.totalorder %s313, %s316
      %p322 = scmp.eq.s32.totalorder %s25, 0
      %p323 = por %p321, %p322
      %p324 = scmp.ne.s32.totalorder %s313, %s316
      %p325 = scmp.eq.s32.totalorder %s30, 1
      %p326 = por %p324, %p325
      %p327 = scmp.ne.s32.totalorder %s316, %s317
      %p328 = scmp.eq.s32.totalorder %s30, 0
      %p329 = por %p327, %p328
      %p330 = scmp.ne.s32.totalorder %s316, %s317
      %p331 = scmp.eq.s32.totalorder %s31, 1
      %p332 = por %p330, %p331
      %p334 = scmp.ne.s32.totalorder %s317, %s333
      %p335 = scmp.eq.s32.totalorder %s31, 0
      %p336 = por %p334, %p335
      %p337 = scmp.le.s32.totalorder 1, %s25
      %p338 = scmp.lt.s32.totalorder %s25, 3
      %p339 = pnand %p337, %p338
      %p340 = pneg %p339
      // Predicated region
      $region9: #{tpu_custom_call.1} parent=5 // pred_check
        _
      $region10: #{tpu_custom_call.1} parent=5 // pred_check_branch
        %342 = sbr.rel (%p339) target = $region12
      $region11: #{tpu_custom_call.1} parent=5 // pred_region
        %s343 = ssub.s32 %s25, 1
        // Predicated region
        $region13: #{tpu_custom_call.1} parent=11 // pred_check
          %p344 = pneg %p72
        $region14: #{tpu_custom_call.1} parent=11 // pred_check_branch
          %346 = sbr.rel (%p344) target = $region16
        $region15: #{tpu_custom_call.1} parent=11 // pred_region
          _
        $region16: #{tpu_custom_call.1} parent=11 // pred_fallthru
          _
        // Predicated region
        $region17: #{tpu_custom_call.1} parent=11 // pred_check
          %p347 = pneg %p93
        $region18: #{tpu_custom_call.1} parent=11 // pred_check_branch
          %349 = sbr.rel (%p347) target = $region20
        $region19: #{tpu_custom_call.1} parent=11 // pred_region
          _
        $region20: #{tpu_custom_call.1} parent=11 // pred_fallthru
          _
        // Predicated region
        $region21: #{tpu_custom_call.1} parent=11 // pred_check
          %p350 = pneg %p114
        $region22: #{tpu_custom_call.1} parent=11 // pred_check_branch
          %352 = sbr.rel (%p350) target = $region24
        $region23: #{tpu_custom_call.1} parent=11 // pred_region
          %s354 = ssub.s32 16, 16
          %355 = vsyncadd [#allocation3], %s354
          %s357 = sshll.u32 [#allocation2], 4
          %s358 = int_to_ptr.vmem [resolvable:$true] %s357
          %360 = dma.hbm_to_vmem [thread:$0]  %s3, 16, %s358, [#allocation3]
        $region24: #{tpu_custom_call.1} parent=11 // pred_fallthru
          _
        // Predicated region
        $region25: #{tpu_custom_call.1} parent=11 // pred_check
          %p361 = pneg %p135
        $region26: #{tpu_custom_call.1} parent=11 // pred_check_branch
          %363 = sbr.rel (%p361) target = $region28
        $region27: #{tpu_custom_call.1} parent=11 // pred_region
          %s365 = ssub.s32 16, 16
          %366 = vsyncadd [#allocation6], %s365
          %s368 = sshll.u32 [#allocation5], 4
          %s369 = int_to_ptr.vmem [resolvable:$true] %s368
          %371 = dma.hbm_to_vmem [thread:$0]  %s4, 16, %s369, [#allocation6]
        $region28: #{tpu_custom_call.1} parent=11 // pred_fallthru
          _
        // Predicated region
        $region29: #{tpu_custom_call.1} parent=11 // pred_check
          %p372 = pneg %p156
        $region30: #{tpu_custom_call.1} parent=11 // pred_check_branch
          %374 = sbr.rel (%p372) target = $region32
        $region31: #{tpu_custom_call.1} parent=11 // pred_region
          _
        $region32: #{tpu_custom_call.1} parent=11 // pred_fallthru
          _
        // Predicated region
        $region33: #{tpu_custom_call.1} parent=11 // pred_check
          %p375 = pneg %p177
        $region34: #{tpu_custom_call.1} parent=11 // pred_check_branch
          %377 = sbr.rel (%p375) target = $region36
        $region35: #{tpu_custom_call.1} parent=11 // pred_region
          %s379 = ssub.s32 16, 16
          %380 = vsyncadd [#allocation6], %s379
          %s382 = sshll.u32 [#allocation7], 4
          %s383 = int_to_ptr.vmem [resolvable:$true] %s382
          %385 = dma.hbm_to_vmem [thread:$0]  %s6, 16, %s383, [#allocation6]
        $region36: #{tpu_custom_call.1} parent=11 // pred_fallthru
          _
        // Predicated region
        $region37: #{tpu_custom_call.1} parent=11 // pred_check
          %p386 = pneg %p198
        $region38: #{tpu_custom_call.1} parent=11 // pred_check_branch
          %388 = sbr.rel (%p386) target = $region40
        $region39: #{tpu_custom_call.1} parent=11 // pred_region
          %s390 = ssub.s32 256, 256
          %391 = vsyncadd [#allocation9], %s390
          %s392 = sshll.u32 [#allocation8], 4
          %s393 = int_to_ptr.vmem [resolvable:$true] %s392
          %398 = dma.hbm_to_vmem [thread:$0]  %s7, 256, %s393, [#allocation9], 64, 64, 4
        $region40: #{tpu_custom_call.1} parent=11 // pred_fallthru
          _
        // Predicated region
        $region41: #{tpu_custom_call.1} parent=11 // pred_check
          %p399 = pneg %p219
        $region42: #{tpu_custom_call.1} parent=11 // pred_check_branch
          %401 = sbr.rel (%p399) target = $region44
        $region43: #{tpu_custom_call.1} parent=11 // pred_region
          %s403 = ssub.s32 16, 16
          %404 = vsyncadd [#allocation9], %s403
          %s406 = sshll.u32 [#allocation10], 4
          %s407 = int_to_ptr.vmem [resolvable:$true] %s406
          %409 = dma.hbm_to_vmem [thread:$0]  %s8, 16, %s407, [#allocation9]
        $region44: #{tpu_custom_call.1} parent=11 // pred_fallthru
          _
        // Predicated region
        $region45: #{tpu_custom_call.1} parent=11 // pred_check
          %p410 = pneg %p240
        $region46: #{tpu_custom_call.1} parent=11 // pred_check_branch
          %412 = sbr.rel (%p410) target = $region48
        $region47: #{tpu_custom_call.1} parent=11 // pred_region
          _
        $region48: #{tpu_custom_call.1} parent=11 // pred_fallthru
          _
        // Predicated region
        $region49: #{tpu_custom_call.1} parent=11 // pred_check
          %p413 = pneg %p261
        $region50: #{tpu_custom_call.1} parent=11 // pred_check_branch
          %415 = sbr.rel (%p413) target = $region52
        $region51: #{tpu_custom_call.1} parent=11 // pred_region
          _
        $region52: #{tpu_custom_call.1} parent=11 // pred_fallthru
          _
        // Predicated region
        $region53: #{tpu_custom_call.1} parent=11 // pred_check
          %p416 = pneg %p282
        $region54: #{tpu_custom_call.1} parent=11 // pred_check_branch
          %418 = sbr.rel (%p416) target = $region56
        $region55: #{tpu_custom_call.1} parent=11 // pred_region
          _
        $region56: #{tpu_custom_call.1} parent=11 // pred_fallthru
          _
        // Predicated region
        $region57: #{tpu_custom_call.1} parent=11 // pred_check
          %p419 = pneg %p303
        $region58: #{tpu_custom_call.1} parent=11 // pred_check_branch
          %421 = sbr.rel (%p419) target = $region60
        $region59: #{tpu_custom_call.1} parent=11 // pred_region
          _
        $region60: #{tpu_custom_call.1} parent=11 // pred_fallthru
          _
      $region12: #{tpu_custom_call.1} parent=5 // pred_fallthru
        _
      %p422 = scmp.lt.s32.totalorder %s25, 2
      // Predicated region
      $region61: #{tpu_custom_call.1} parent=5 // pred_check
        %p423 = pneg %p422
      $region62: #{tpu_custom_call.1} parent=5 // pred_check_branch
        %425 = sbr.rel (%p423) target = $region64
      $region63: #{tpu_custom_call.1} parent=5 // pred_region
        // Predicated region
        $region65: #{tpu_custom_call.1} parent=63 // pred_check
          %p426 = pneg %p45
        $region66: #{tpu_custom_call.1} parent=63 // pred_check_branch
          %428 = sbr.rel (%p426) target = $region68
        $region67: #{tpu_custom_call.1} parent=63 // pred_region
          %s429 = smul.u32 4, %s25
          %p430 = scmp.lt.s32.totalorder %s429, 7
          %s431 = scalar_select %p430, %s429, 7
          %s432 = smul.addr %s431, 8
          %s433 = scalar_lea.vmem %s0, %s432
          %s434 = smul.u32 4, %s25
        $region68: #{tpu_custom_call.1} parent=63 // pred_fallthru
          _
      $region64: #{tpu_custom_call.1} parent=5 // pred_fallthru
        _
      %p435 = scmp.le.s32.totalorder 1, %s25
      %p436 = scmp.lt.s32.totalorder %s25, 3
      %p437 = pnand %p435, %p436
      %p438 = pneg %p437
      // Predicated region
      $region69: #{tpu_custom_call.1} parent=5 // pred_check
        _
      $region70: #{tpu_custom_call.1} parent=5 // pred_check_branch
        %440 = sbr.rel (%p437) target = $region72
      $region71: #{tpu_custom_call.1} parent=5 // pred_region
        %s441 = ssub.s32 %s25, 1
        // Predicated region
        $region73: #{tpu_custom_call.1} parent=71 // pred_check
          %p442 = pneg %p114
        $region74: #{tpu_custom_call.1} parent=71 // pred_check_branch
          %444 = sbr.rel (%p442) target = $region76
        $region75: #{tpu_custom_call.1} parent=71 // pred_region
          %445 = dma.done [#allocation3], 16
        $region76: #{tpu_custom_call.1} parent=71 // pred_fallthru
          _
        // Predicated region
        $region77: #{tpu_custom_call.1} parent=71 // pred_check
          %p446 = pneg %p135
        $region78: #{tpu_custom_call.1} parent=71 // pred_check_branch
          %448 = sbr.rel (%p446) target = $region80
        $region79: #{tpu_custom_call.1} parent=71 // pred_region
          %449 = dma.done [#allocation6], 16
        $region80: #{tpu_custom_call.1} parent=71 // pred_fallthru
          _
        // Predicated region
        $region81: #{tpu_custom_call.1} parent=71 // pred_check
          %p450 = pneg %p177
        $region82: #{tpu_custom_call.1} parent=71 // pred_check_branch
          %452 = sbr.rel (%p450) target = $region84
        $region83: #{tpu_custom_call.1} parent=71 // pred_region
          %453 = dma.done [#allocation6], 16
        $region84: #{tpu_custom_call.1} parent=71 // pred_fallthru
          _
        // Predicated region
        $region85: #{tpu_custom_call.1} parent=71 // pred_check
          %p454 = pneg %p198
        $region86: #{tpu_custom_call.1} parent=71 // pred_check_branch
          %456 = sbr.rel (%p454) target = $region88
        $region87: #{tpu_custom_call.1} parent=71 // pred_region
          %457 = dma.done [#allocation9], 256
        $region88: #{tpu_custom_call.1} parent=71 // pred_fallthru
          _
        // Predicated region
        $region89: #{tpu_custom_call.1} parent=71 // pred_check
          %p458 = pneg %p219
        $region90: #{tpu_custom_call.1} parent=71 // pred_check_branch
          %460 = sbr.rel (%p458) target = $region92
        $region91: #{tpu_custom_call.1} parent=71 // pred_region
          %461 = dma.done [#allocation9], 16
        $region92: #{tpu_custom_call.1} parent=71 // pred_fallthru
          _
        %s462 = smul.u32 4, %s30
        %p463 = scmp.lt.s32.totalorder %s462, 7
        %s464 = scalar_select %p463, %s462, 7
        %s465 = smul.addr %s464, 8
        %s466 = scalar_lea.vmem %s0, %s465
        %p467 = pneg %p51
        %p468 = pneg %p48
        %p469 = pneg %p72
        %p470 = pneg %p69
        %p471 = pneg %p93
        %p472 = pneg %p90
        %p473 = pneg %p114
        %p474 = pneg %p111
        %p475 = pneg %p135
        %p476 = pneg %p132
        %p477 = pneg %p156
        %p478 = pneg %p153
        %p479 = pneg %p177
        %p480 = pneg %p174
        %p481 = pneg %p198
        %p482 = pneg %p195
        %p483 = pneg %p219
        %p484 = pneg %p216
        %p485 = pneg %p240
        %p486 = pneg %p237
        %p487 = pneg %p261
        %p488 = pneg %p258
        %p489 = pneg %p282
        %p490 = pneg %p279
        %p491 = pneg %p303
        %p492 = pneg %p300
        %p493 = pneg %p329
        %p494 = pneg %p326
        %s495 = sand.u32 %s316, 1
        %s496 = scalar_lea.sflag [#allocation4], %s495
        %s497 = sand.u32 %s316, 1
        %s498 = smul.addr %s497, 32
        %s499 = scalar_lea.vmem [#allocation11], %s498
        %s500 = smul.u32 4, %s30
        %p501 = scmp.lt.s32.totalorder %s500, 7
        %s502 = scalar_select %p501, %s500, 7
        %s503 = smul.addr %s502, 8
        %s504 = scalar_lea.vmem %s0, %s503
        %s505 = smul.u32 4, %s30
        %s506 = smul.u32 4, %s30
        %v508 = vld [vmem:[%s504] sm:$0xff]
        %v509 = vld [vmem:[%s504 + $0x8] sm:$0xff]
        %v510 = vld [vmem:[%s504 + $0x10] sm:$0xff]
        %v511 = vld [vmem:[%s504 + $0x18] sm:$0xff]
        %v512 = vld [vmem:[%s1] sm:$0x1]
        %v513 = vld [vmem:[%s2] sm:$0x1]
        %vm514 = vcmask 261120
        %v515 = vsel %vm514, %v508, 0.0
        %516 = vadd.xlane.f32.xlu0 %v515
        %v517 = vpop.xlane.xlu0 %516
        %v518 = vsel %vm514, %v509, 0.0
        %519 = vadd.xlane.f32.xlu0 %v518
        %v520 = vpop.xlane.xlu0 %519
        %v521 = vsel %vm514, %v510, 0.0
        %522 = vadd.xlane.f32.xlu0 %v521
        %v523 = vpop.xlane.xlu0 %522
        %v524 = vsel %vm514, %v511, 0.0
        %525 = vadd.xlane.f32.xlu0 %v524
        %v526 = vpop.xlane.xlu0 %525
        %v527 = vrcp.pop 32.0
        %v528 = vmul.f32 %v517, %v527
        %v529 = vmul.f32 %v520, %v527
        %v530 = vmul.f32 %v523, %v527
        %v531 = vmul.f32 %v526, %v527
        %v532 = vsub.f32 %v508, %v528
        %v533 = vsub.f32 %v509, %v529
        %v534 = vsub.f32 %v510, %v530
        %v535 = vsub.f32 %v511, %v531
        %v536 = vmul.f32 %v532, %v532
        %v537 = vmul.f32 %v533, %v533
        %v538 = vmul.f32 %v534, %v534
        %v539 = vmul.f32 %v535, %v535
        %v540 = vsel %vm514, %v536, 0.0
        %541 = vadd.xlane.f32.xlu0 %v540
        %v542 = vpop.xlane.xlu0 %541
        %v543 = vsel %vm514, %v537, 0.0
        %544 = vadd.xlane.f32.xlu0 %v543
        %v545 = vpop.xlane.xlu0 %544
        %v546 = vsel %vm514, %v538, 0.0
        %547 = vadd.xlane.f32.xlu0 %v546
        %v548 = vpop.xlane.xlu0 %547
        %v549 = vsel %vm514, %v539, 0.0
        %550 = vadd.xlane.f32.xlu0 %v549
        %v551 = vpop.xlane.xlu0 %550
        %v552 = vmul.f32 %v542, %v527
        %v553 = vmul.f32 %v545, %v527
        %v554 = vmul.f32 %v548, %v527
        %v555 = vmul.f32 %v551, %v527
        %v556 = vadd.f32 %v552, 1e-05
        %v557 = vadd.f32 %v553, 1e-05
        %v558 = vadd.f32 %v554, 1e-05
        %v559 = vadd.f32 %v555, 1e-05
        %v560 = vrsqrt.pop %v556
        %v561 = vrsqrt.pop %v557
        %v562 = vrsqrt.pop %v558
        %v563 = vrsqrt.pop %v559
        %v564 = vmul.f32 %v532, %v560
        %v565 = vmul.f32 %v533, %v561
        %v566 = vmul.f32 %v534, %v562
        %v567 = vmul.f32 %v535, %v563
        %v569 = vlaneseq
        %v570 = vshrl.u32 %v569, 7
        %v571 = vsub.s32 0, %v570
        %v572 = vrot.slane %v512, %v571
        %v574 = vmul.f32 %v564, %v572
        %v575 = vmul.f32 %v565, %v572
        %v576 = vmul.f32 %v566, %v572
        %v577 = vmul.f32 %v567, %v572
        %v579 = vlaneseq
        %v580 = vshrl.u32 %v579, 7
        %v581 = vsub.s32 0, %v580
        %v582 = vrot.slane %v513, %v581
        %v584 = vadd.f32 %v574, %v582
        %v585 = vadd.f32 %v575, %v582
        %v586 = vadd.f32 %v576, %v582
        %v587 = vadd.f32 %v577, %v582
        %v588 = vpack.c.bf16 %v585, %v584
        %v589 = vpack.c.bf16 %v587, %v586
        %v590 = vld [vmem:[%s5] sm:$0xf]
        %v591 = vld [vmem:[%s5 + $0x4] sm:$0xf]
        %v592 = vld [vmem:[%s5 + $0x8] sm:$0xf]
        %v593 = vld [vmem:[%s5 + $0xc] sm:$0xf]
        %v594 = vld [vmem:[#allocation7] sm:$0x1]
        %v596 = vlaneseq
        %v597 = vshrl.u32 %v596, 7
        %v598 = vsub.s32 0, %v597
        %v599 = vrot.slane %v594, %v598
        %v605 = vunpack.c.l.b16 %v590
        %v606 = vunpack.c.l.b16 %v591
        %v607 = vunpack.c.l.b16 %v592
        %v608 = vunpack.c.l.b16 %v593
        %v609 = vpack.c.b16 %v606, %v605
        %v610 = vpack.c.b16 %v608, %v607
        %v614 = vsel %vm514, %v588, 0
        %v617 = vsel %vm514, %v589, 0
        %619 = vmatprep.subr.bf16.mxu0 0
        %620 = vmatpush1.bf16.msra.mxu0 %v609
        %621 = vmatprep.subr.bf16.mxu0 0
        %622 = vmatpush1.bf16.msra.mxu0 %v610
        %623 = vmatprep.subr.bf16.mxu0 0
        %624 = vmatpush1.bf16.msra.mxu0 0
        %625 = vmatprep.subr.bf16.mxu0 0
        %626 = vmatpush1.bf16.msra.mxu0 0
        %627 = vmatprep.subr.bf16.mxu0 0
        %628 = vmatpush1.bf16.msra.mxu0 0
        %629 = vmatprep.subr.bf16.mxu0 0
        %630 = vmatpush1.bf16.msra.mxu0 0
        %631 = vmatprep.subr.bf16.mxu0 0
        %632 = vmatpush1.bf16.msra.mxu0 0
        %633 = vmatprep.subr.bf16.mxu0 0
        %634 = vmatpush1.bf16.msra.mxu0 0
        %635 = vmatprep.subr.bf16.mxu0 0
        %636 = vmatpush1.bf16.msra.mxu0 0
        %637 = vmatprep.subr.bf16.mxu0 0
        %638 = vmatpush1.bf16.msra.mxu0 0
        %639 = vmatprep.subr.bf16.mxu0 0
        %640 = vmatpush1.bf16.msra.mxu0 0
        %641 = vmatprep.subr.bf16.mxu0 0
        %642 = vmatpush1.bf16.msra.mxu0 0
        %643 = vmatprep.subr.bf16.mxu0 0
        %644 = vmatpush1.bf16.msra.mxu0 0
        %645 = vmatprep.subr.bf16.mxu0 0
        %646 = vmatpush1.bf16.msra.mxu0 0
        %647 = vmatprep.subr.bf16.mxu0 0
        %648 = vmatpush1.bf16.msra.mxu0 0
        %649 = vmatprep.subr.bf16.mxu0 0
        %650 = vmatpush1.bf16.msra.mxu0 0
        %651 = vmatprep.mubr.bf16.mxu0 0
        %652 = vmatmul.mubr.bf16.gmra.mrb[0].mxu0 %v614
        %v653 = vpop.f32.mrb[0].mxu0
        %v654 = vadd.f32 %v599, %v653
        %v655 = vpop.f32.mrb[0].mxu0
        %v656 = vpop.f32.mrb[0].mxu0
        %v657 = vadd.f32 %v599, %v656
        %v658 = vpop.f32.mrb[0].mxu0
        %659 = vmatprep.mubr.bf16.mxu0 0
        %660 = vmatmul.mubr.bf16.gmra.mrb[0].mxu0 %v617
        %v661 = vpop.f32.mrb[0].mxu0
        %v662 = vadd.f32 %v599, %v661
        %v663 = vpop.f32.mrb[0].mxu0
        %v664 = vpop.f32.mrb[0].mxu0
        %v665 = vadd.f32 %v599, %v664
        %v666 = vpop.f32.mrb[0].mxu0
        %667 = vdwg.mxu0
        %v668 = vmul.f32 %v654, 0.35355338
        %v669 = vmul.f32 %v657, 0.35355338
        %v670 = vmul.f32 %v662, 0.35355338
        %v671 = vmul.f32 %v665, 0.35355338
        %v672 = vpack.c.bf16 %v669, %v668
        %v673 = vpack.c.bf16 %v671, %v670
        %v674 = vpack.c.bf16 %v657, %v654
        %v675 = vpack.c.bf16 %v665, %v662
        %v676 = vlaneseq
        %v677 = vshrl.u32 %v676, 7
        %v678 = vlaneseq
        %v679 = vand.u32 %v678, 127
        %vm680 = vcmp.gt.s32.totalorder %v679, %v677
        %v681 = vld [vmem:[#allocation10] sm:$0x1]
        %v683 = vlaneseq
        %v684 = vshrl.u32 %v683, 7
        %v685 = vsub.s32 0, %v684
        %v686 = vrot.slane %v681, %v685
        %v688 = vadd.f32 %v686, 0.0
        %v691 = vunpack.c.l.b16 %v672
        %v692 = vunpack.c.h.b16 %v672
        %v693 = vunpack.c.l.b16 %v673
        %v694 = vunpack.c.h.b16 %v673
        %v695 = vpack.c.b16 %v691, %v691
        %v696 = vpack.c.b16 %v692, %v692
        %v697 = vpack.c.b16 %v693, %v693
        %v698 = vpack.c.b16 %v694, %v694
        %v701 = vunpack.c.l.b16 %v674
        %v702 = vunpack.c.h.b16 %v674
        %v703 = vunpack.c.l.b16 %v675
        %v704 = vunpack.c.h.b16 %v675
        %v705 = vpack.c.b16 %v701, %v701
        %706 = vrot.lane.b32.xlu0 %v705, 96
        %v707 = vpop.permute.xlu0 %706
        %vm708 = vcmask 64512
        %v710 = vsel %vm708, %v695, 0
        %v713 = vsel %vm708, %v707, 0
        %715 = vmatprep.subr.bf16.mxu0 0
        %716 = vmatpush1.bf16.xpose.msra.mxu0 %v713
        %717 = vmatprep.subr.bf16.mxu0 0
        %718 = vmatpush1.bf16.xpose.msra.mxu0 0
        %719 = vmatprep.subr.bf16.mxu0 0
        %720 = vmatpush1.bf16.xpose.msra.mxu0 0
        %721 = vmatprep.subr.bf16.mxu0 0
        %722 = vmatpush1.bf16.xpose.msra.mxu0 0
        %723 = vmatprep.subr.bf16.mxu0 0
        %724 = vmatpush1.bf16.xpose.msra.mxu0 0
        %725 = vmatprep.subr.bf16.mxu0 0
        %726 = vmatpush1.bf16.xpose.msra.mxu0 0
        %727 = vmatprep.subr.bf16.mxu0 0
        %728 = vmatpush1.bf16.xpose.msra.mxu0 0
        %729 = vmatprep.subr.bf16.mxu0 0
        %730 = vmatpush1.bf16.xpose.msra.mxu0 0
        %731 = vmatprep.subr.bf16.mxu0 0
        %732 = vmatpush1.bf16.xpose.msra.mxu0 0
        %733 = vmatprep.subr.bf16.mxu0 0
        %734 = vmatpush1.bf16.xpose.msra.mxu0 0
        %735 = vmatprep.subr.bf16.mxu0 0
        %736 = vmatpush1.bf16.xpose.msra.mxu0 0
        %737 = vmatprep.subr.bf16.mxu0 0
        %738 = vmatpush1.bf16.xpose.msra.mxu0 0
        %739 = vmatprep.subr.bf16.mxu0 0
        %740 = vmatpush1.bf16.xpose.msra.mxu0 0
        %741 = vmatprep.subr.bf16.mxu0 0
        %742 = vmatpush1.bf16.xpose.msra.mxu0 0
        %743 = vmatprep.subr.bf16.mxu0 0
        %744 = vmatpush1.bf16.xpose.msra.mxu0 0
        %745 = vmatprep.subr.bf16.mxu0 0
        %746 = vmatpush1.bf16.xpose.msra.mxu0 0
        %747 = vmatprep.mubr.bf16.mxu0 0
        %748 = vmatmul.mubr.bf16.gmra.mrb[0].mxu0 %v710
        %v749 = vpop.f32.mrb[0].mxu0
        %v750 = vadd.f32 0.0, %v749
        %v751 = vpop.f32.mrb[0].mxu0
        %v752 = vpop.f32.mrb[0].mxu0
        %v753 = vpop.f32.mrb[0].mxu0
        %754 = vdwg.mxu0
        %v755 = vpack.c.b16 %v702, %v702
        %756 = vrot.lane.b32.xlu0 %v755, 96
        %v757 = vpop.permute.xlu0 %756
        %v759 = vsel %vm708, %v696, 0
        %v762 = vsel %vm708, %v757, 0
        %764 = vmatprep.subr.bf16.mxu0 0
        %765 = vmatpush1.bf16.xpose.msra.mxu0 %v762
        %766 = vmatprep.subr.bf16.mxu0 0
        %767 = vmatpush1.bf16.xpose.msra.mxu0 0
        %768 = vmatprep.subr.bf16.mxu0 0
        %769 = vmatpush1.bf16.xpose.msra.mxu0 0
        %770 = vmatprep.subr.bf16.mxu0 0
        %771 = vmatpush1.bf16.xpose.msra.mxu0 0
        %772 = vmatprep.subr.bf16.mxu0 0
        %773 = vmatpush1.bf16.xpose.msra.mxu0 0
        %774 = vmatprep.subr.bf16.mxu0 0
        %775 = vmatpush1.bf16.xpose.msra.mxu0 0
        %776 = vmatprep.subr.bf16.mxu0 0
        %777 = vmatpush1.bf16.xpose.msra.mxu0 0
        %778 = vmatprep.subr.bf16.mxu0 0
        %779 = vmatpush1.bf16.xpose.msra.mxu0 0
        %780 = vmatprep.subr.bf16.mxu0 0
        %781 = vmatpush1.bf16.xpose.msra.mxu0 0
        %782 = vmatprep.subr.bf16.mxu0 0
        %783 = vmatpush1.bf16.xpose.msra.mxu0 0
        %784 = vmatprep.subr.bf16.mxu0 0
        %785 = vmatpush1.bf16.xpose.msra.mxu0 0
        %786 = vmatprep.subr.bf16.mxu0 0
        %787 = vmatpush1.bf16.xpose.msra.mxu0 0
        %788 = vmatprep.subr.bf16.mxu0 0
        %789 = vmatpush1.bf16.xpose.msra.mxu0 0
        %790 = vmatprep.subr.bf16.mxu0 0
        %791 = vmatpush1.bf16.xpose.msra.mxu0 0
        %792 = vmatprep.subr.bf16.mxu0 0
        %793 = vmatpush1.bf16.xpose.msra.mxu0 0
        %794 = vmatprep.subr.bf16.mxu0 0
        %795 = vmatpush1.bf16.xpose.msra.mxu0 0
        %796 = vmatprep.mubr.bf16.mxu0 0
        %797 = vmatmul.mubr.bf16.gmra.mrb[0].mxu0 %v759
        %v798 = vpop.f32.mrb[0].mxu0
        %v799 = vadd.f32 0.0, %v798
        %v800 = vpop.f32.mrb[0].mxu0
        %v801 = vpop.f32.mrb[0].mxu0
        %v802 = vpop.f32.mrb[0].mxu0
        %803 = vdwg.mxu0
        %v804 = vpack.c.b16 %v703, %v703
        %805 = vrot.lane.b32.xlu0 %v804, 96
        %v806 = vpop.permute.xlu0 %805
        %v808 = vsel %vm708, %v697, 0
        %v811 = vsel %vm708, %v806, 0
        %813 = vmatprep.subr.bf16.mxu0 0
        %814 = vmatpush1.bf16.xpose.msra.mxu0 %v811
        %815 = vmatprep.subr.bf16.mxu0 0
        %816 = vmatpush1.bf16.xpose.msra.mxu0 0
        %817 = vmatprep.subr.bf16.mxu0 0
        %818 = vmatpush1.bf16.xpose.msra.mxu0 0
        %819 = vmatprep.subr.bf16.mxu0 0
        %820 = vmatpush1.bf16.xpose.msra.mxu0 0
        %821 = vmatprep.subr.bf16.mxu0 0
        %822 = vmatpush1.bf16.xpose.msra.mxu0 0
        %823 = vmatprep.subr.bf16.mxu0 0
        %824 = vmatpush1.bf16.xpose.msra.mxu0 0
        %825 = vmatprep.subr.bf16.mxu0 0
        %826 = vmatpush1.bf16.xpose.msra.mxu0 0
        %827 = vmatprep.subr.bf16.mxu0 0
        %828 = vmatpush1.bf16.xpose.msra.mxu0 0
        %829 = vmatprep.subr.bf16.mxu0 0
        %830 = vmatpush1.bf16.xpose.msra.mxu0 0
        %831 = vmatprep.subr.bf16.mxu0 0
        %832 = vmatpush1.bf16.xpose.msra.mxu0 0
        %833 = vmatprep.subr.bf16.mxu0 0
        %834 = vmatpush1.bf16.xpose.msra.mxu0 0
        %835 = vmatprep.subr.bf16.mxu0 0
        %836 = vmatpush1.bf16.xpose.msra.mxu0 0
        %837 = vmatprep.subr.bf16.mxu0 0
        %838 = vmatpush1.bf16.xpose.msra.mxu0 0
        %839 = vmatprep.subr.bf16.mxu0 0
        %840 = vmatpush1.bf16.xpose.msra.mxu0 0
        %841 = vmatprep.subr.bf16.mxu0 0
        %842 = vmatpush1.bf16.xpose.msra.mxu0 0
        %843 = vmatprep.subr.bf16.mxu0 0
        %844 = vmatpush1.bf16.xpose.msra.mxu0 0
        %845 = vmatprep.mubr.bf16.mxu0 0
        %846 = vmatmul.mubr.bf16.gmra.mrb[0].mxu0 %v808
        %v847 = vpop.f32.mrb[0].mxu0
        %v848 = vadd.f32 0.0, %v847
        %v849 = vpop.f32.mrb[0].mxu0
        %v850 = vpop.f32.mrb[0].mxu0
        %v851 = vpop.f32.mrb[0].mxu0
        %852 = vdwg.mxu0
        %v853 = vpack.c.b16 %v704, %v704
        %854 = vrot.lane.b32.xlu0 %v853, 96
        %v855 = vpop.permute.xlu0 %854
        %v857 = vsel %vm708, %v698, 0
        %v860 = vsel %vm708, %v855, 0
        %862 = vmatprep.subr.bf16.mxu0 0
        %863 = vmatpush1.bf16.xpose.msra.mxu0 %v860
        %864 = vmatprep.subr.bf16.mxu0 0
        %865 = vmatpush1.bf16.xpose.msra.mxu0 0
        %866 = vmatprep.subr.bf16.mxu0 0
        %867 = vmatpush1.bf16.xpose.msra.mxu0 0
        %868 = vmatprep.subr.bf16.mxu0 0
        %869 = vmatpush1.bf16.xpose.msra.mxu0 0
        %870 = vmatprep.subr.bf16.mxu0 0
        %871 = vmatpush1.bf16.xpose.msra.mxu0 0
        %872 = vmatprep.subr.bf16.mxu0 0
        %873 = vmatpush1.bf16.xpose.msra.mxu0 0
        %874 = vmatprep.subr.bf16.mxu0 0
        %875 = vmatpush1.bf16.xpose.msra.mxu0 0
        %876 = vmatprep.subr.bf16.mxu0 0
        %877 = vmatpush1.bf16.xpose.msra.mxu0 0
        %878 = vmatprep.subr.bf16.mxu0 0
        %879 = vmatpush1.bf16.xpose.msra.mxu0 0
        %880 = vmatprep.subr.bf16.mxu0 0
        %881 = vmatpush1.bf16.xpose.msra.mxu0 0
        %882 = vmatprep.subr.bf16.mxu0 0
        %883 = vmatpush1.bf16.xpose.msra.mxu0 0
        %884 = vmatprep.subr.bf16.mxu0 0
        %885 = vmatpush1.bf16.xpose.msra.mxu0 0
        %886 = vmatprep.subr.bf16.mxu0 0
        %887 = vmatpush1.bf16.xpose.msra.mxu0 0
        %888 = vmatprep.subr.bf16.mxu0 0
        %889 = vmatpush1.bf16.xpose.msra.mxu0 0
        %890 = vmatprep.subr.bf16.mxu0 0
        %891 = vmatpush1.bf16.xpose.msra.mxu0 0
        %892 = vmatprep.subr.bf16.mxu0 0
        %893 = vmatpush1.bf16.xpose.msra.mxu0 0
        %894 = vmatprep.mubr.bf16.mxu0 0
        %895 = vmatmul.mubr.bf16.gmra.mrb[0].mxu0 %v857
        %v896 = vpop.f32.mrb[0].mxu0
        %v897 = vadd.f32 0.0, %v896
        %v898 = vpop.f32.mrb[0].mxu0
        %v899 = vpop.f32.mrb[0].mxu0
        %v900 = vpop.f32.mrb[0].mxu0
        %901 = vdwg.mxu0
        %v902 = vsel %vm680, 1, 0
        %vm903 = vcmp.eq.s32.totalorder %v902, 1
        %v904 = vsel %vm903, -inf, %v750
        %v905 = vsel %vm903, -inf, %v799
        %v906 = vsel %vm903, -inf, %v848
        %v907 = vsel %vm903, -inf, %v897
        %v908 = vsel %vm708, %v904, -inf
        %909 = vmax.xlane.f32.xlu0 %v908
        %v910 = vpop.xlane.xlu0 %909
        %v911 = vsel %vm708, %v905, -inf
        %912 = vmax.xlane.f32.xlu0 %v911
        %v913 = vpop.xlane.xlu0 %912
        %v914 = vsel %vm708, %v906, -inf
        %915 = vmax.xlane.f32.xlu0 %v914
        %v916 = vpop.xlane.xlu0 %915
        %v917 = vsel %vm708, %v907, -inf
        %918 = vmax.xlane.f32.xlu0 %v917
        %v919 = vpop.xlane.xlu0 %918
        %v920 = vsub.f32 %v904, %v910
        %v921 = vsub.f32 %v905, %v913
        %v922 = vsub.f32 %v906, %v916
        %v923 = vsub.f32 %v907, %v919
        %v924 = vmul.f32 %v920, 1.442695
        %v925 = vpow.pop %v924
        %v926 = vmul.f32 %v921, 1.442695
        %v927 = vpow.pop %v926
        %v928 = vmul.f32 %v922, 1.442695
        %v929 = vpow.pop %v928
        %v930 = vmul.f32 %v923, 1.442695
        %v931 = vpow.pop %v930
        %v932 = vsel %vm708, %v925, 0.0
        %933 = vadd.xlane.f32.xlu0 %v932
        %v934 = vpop.xlane.xlu0 %933
        %v935 = vsel %vm708, %v927, 0.0
        %936 = vadd.xlane.f32.xlu0 %v935
        %v937 = vpop.xlane.xlu0 %936
        %v938 = vsel %vm708, %v929, 0.0
        %939 = vadd.xlane.f32.xlu0 %v938
        %v940 = vpop.xlane.xlu0 %939
        %v941 = vsel %vm708, %v931, 0.0
        %942 = vadd.xlane.f32.xlu0 %v941
        %v943 = vpop.xlane.xlu0 %942
        %v944 = vrcp.pop %v934
        %v945 = vrcp.pop %v937
        %v946 = vrcp.pop %v940
        %v947 = vrcp.pop %v943
        %v948 = vmul.f32 %v925, %v944
        %v949 = vmul.f32 %v927, %v945
        %v950 = vmul.f32 %v929, %v946
        %v951 = vmul.f32 %v931, %v947
        %v952 = vpack.c.bf16 %v948, %v948
        %v953 = vpack.c.bf16 %v949, %v949
        %v954 = vpack.c.bf16 %v950, %v950
        %v955 = vpack.c.bf16 %v951, %v951
        %956 = vrot.lane.b32.xlu0 %v705, 64
        %v957 = vpop.permute.xlu0 %956
        %v959 = vsel %vm708, %v952, 0
        %vm961 = vcmask 1043456
        %v963 = vsel %vm961, %v957, 0
        %965 = vmatprep.subr.bf16.mxu0 0
        %966 = vmatpush1.bf16.msra.mxu0 %v963
        %967 = vmatprep.subr.bf16.mxu0 0
        %968 = vmatpush1.bf16.msra.mxu0 0
        %969 = vmatprep.subr.bf16.mxu0 0
        %970 = vmatpush1.bf16.msra.mxu0 0
        %971 = vmatprep.subr.bf16.mxu0 0
        %972 = vmatpush1.bf16.msra.mxu0 0
        %973 = vmatprep.subr.bf16.mxu0 0
        %974 = vmatpush1.bf16.msra.mxu0 0
        %975 = vmatprep.subr.bf16.mxu0 0
        %976 = vmatpush1.bf16.msra.mxu0 0
        %977 = vmatprep.subr.bf16.mxu0 0
        %978 = vmatpush1.bf16.msra.mxu0 0
        %979 = vmatprep.subr.bf16.mxu0 0
        %980 = vmatpush1.bf16.msra.mxu0 0
        %981 = vmatprep.subr.bf16.mxu0 0
        %982 = vmatpush1.bf16.msra.mxu0 0
        %983 = vmatprep.subr.bf16.mxu0 0
        %984 = vmatpush1.bf16.msra.mxu0 0
        %985 = vmatprep.subr.bf16.mxu0 0
        %986 = vmatpush1.bf16.msra.mxu0 0
        %987 = vmatprep.subr.bf16.mxu0 0
        %988 = vmatpush1.bf16.msra.mxu0 0
        %989 = vmatprep.subr.bf16.mxu0 0
        %990 = vmatpush1.bf16.msra.mxu0 0
        %991 = vmatprep.subr.bf16.mxu0 0
        %992 = vmatpush1.bf16.msra.mxu0 0
        %993 = vmatprep.subr.bf16.mxu0 0
        %994 = vmatpush1.bf16.msra.mxu0 0
        %995 = vmatprep.subr.bf16.mxu0 0
        %996 = vmatpush1.bf16.msra.mxu0 0
        %997 = vmatprep.mubr.bf16.mxu0 0
        %998 = vmatmul.mubr.bf16.gmra.mrb[0].mxu0 %v959
        %v999 = vpop.f32.mrb[0].mxu0
        %v1000 = vadd.f32 0.0, %v999
        %v1001 = vpop.f32.mrb[0].mxu0
        %v1002 = vpop.f32.mrb[0].mxu0
        %v1003 = vpop.f32.mrb[0].mxu0
        %1004 = vdwg.mxu0
        %1005 = vrot.lane.b32.xlu0 %v755, 64
        %v1006 = vpop.permute.xlu0 %1005
        %v1008 = vsel %vm708, %v953, 0
        %v1011 = vsel %vm961, %v1006, 0
        %1013 = vmatprep.subr.bf16.mxu0 0
        %1014 = vmatpush1.bf16.msra.mxu0 %v1011
        %1015 = vmatprep.subr.bf16.mxu0 0
        %1016 = vmatpush1.bf16.msra.mxu0 0
        %1017 = vmatprep.subr.bf16.mxu0 0
        %1018 = vmatpush1.bf16.msra.mxu0 0
        %1019 = vmatprep.subr.bf16.mxu0 0
        %1020 = vmatpush1.bf16.msra.mxu0 0
        %1021 = vmatprep.subr.bf16.mxu0 0
        %1022 = vmatpush1.bf16.msra.mxu0 0
        %1023 = vmatprep.subr.bf16.mxu0 0
        %1024 = vmatpush1.bf16.msra.mxu0 0
        %1025 = vmatprep.subr.bf16.mxu0 0
        %1026 = vmatpush1.bf16.msra.mxu0 0
        %1027 = vmatprep.subr.bf16.mxu0 0
        %1028 = vmatpush1.bf16.msra.mxu0 0
        %1029 = vmatprep.subr.bf16.mxu0 0
        %1030 = vmatpush1.bf16.msra.mxu0 0
        %1031 = vmatprep.subr.bf16.mxu0 0
        %1032 = vmatpush1.bf16.msra.mxu0 0
        %1033 = vmatprep.subr.bf16.mxu0 0
        %1034 = vmatpush1.bf16.msra.mxu0 0
        %1035 = vmatprep.subr.bf16.mxu0 0
        %1036 = vmatpush1.bf16.msra.mxu0 0
        %1037 = vmatprep.subr.bf16.mxu0 0
        %1038 = vmatpush1.bf16.msra.mxu0 0
        %1039 = vmatprep.subr.bf16.mxu0 0
        %1040 = vmatpush1.bf16.msra.mxu0 0
        %1041 = vmatprep.subr.bf16.mxu0 0
        %1042 = vmatpush1.bf16.msra.mxu0 0
        %1043 = vmatprep.subr.bf16.mxu0 0
        %1044 = vmatpush1.bf16.msra.mxu0 0
        %1045 = vmatprep.mubr.bf16.mxu0 0
        %1046 = vmatmul.mubr.bf16.gmra.mrb[0].mxu0 %v1008
        %v1047 = vpop.f32.mrb[0].mxu0
        %v1048 = vadd.f32 0.0, %v1047
        %v1049 = vpop.f32.mrb[0].mxu0
        %v1050 = vpop.f32.mrb[0].mxu0
        %v1051 = vpop.f32.mrb[0].mxu0
        %1052 = vdwg.mxu0
        %1053 = vrot.lane.b32.xlu0 %v804, 64
        %v1054 = vpop.permute.xlu0 %1053
        %v1056 = vsel %vm708, %v954, 0
        %v1059 = vsel %vm961, %v1054, 0
        %1061 = vmatprep.subr.bf16.mxu0 0
        %1062 = vmatpush1.bf16.msra.mxu0 %v1059
        %1063 = vmatprep.subr.bf16.mxu0 0
        %1064 = vmatpush1.bf16.msra.mxu0 0
        %1065 = vmatprep.subr.bf16.mxu0 0
        %1066 = vmatpush1.bf16.msra.mxu0 0
        %1067 = vmatprep.subr.bf16.mxu0 0
        %1068 = vmatpush1.bf16.msra.mxu0 0
        %1069 = vmatprep.subr.bf16.mxu0 0
        %1070 = vmatpush1.bf16.msra.mxu0 0
        %1071 = vmatprep.subr.bf16.mxu0 0
        %1072 = vmatpush1.bf16.msra.mxu0 0
        %1073 = vmatprep.subr.bf16.mxu0 0
        %1074 = vmatpush1.bf16.msra.mxu0 0
        %1075 = vmatprep.subr.bf16.mxu0 0
        %1076 = vmatpush1.bf16.msra.mxu0 0
        %1077 = vmatprep.subr.bf16.mxu0 0
        %1078 = vmatpush1.bf16.msra.mxu0 0
        %1079 = vmatprep.subr.bf16.mxu0 0
        %1080 = vmatpush1.bf16.msra.mxu0 0
        %1081 = vmatprep.subr.bf16.mxu0 0
        %1082 = vmatpush1.bf16.msra.mxu0 0
        %1083 = vmatprep.subr.bf16.mxu0 0
        %1084 = vmatpush1.bf16.msra.mxu0 0
        %1085 = vmatprep.subr.bf16.mxu0 0
        %1086 = vmatpush1.bf16.msra.mxu0 0
        %1087 = vmatprep.subr.bf16.mxu0 0
        %1088 = vmatpush1.bf16.msra.mxu0 0
        %1089 = vmatprep.subr.bf16.mxu0 0
        %1090 = vmatpush1.bf16.msra.mxu0 0
        %1091 = vmatprep.subr.bf16.mxu0 0
        %1092 = vmatpush1.bf16.msra.mxu0 0
        %1093 = vmatprep.mubr.bf16.mxu0 0
        %1094 = vmatmul.mubr.bf16.gmra.mrb[0].mxu0 %v1056
        %v1095 = vpop.f32.mrb[0].mxu0
        %v1096 = vadd.f32 0.0, %v1095
        %v1097 = vpop.f32.mrb[0].mxu0
        %v1098 = vpop.f32.mrb[0].mxu0
        %v1099 = vpop.f32.mrb[0].mxu0
        %1100 = vdwg.mxu0
        %1101 = vrot.lane.b32.xlu0 %v853, 64
        %v1102 = vpop.permute.xlu0 %1101
        %v1104 = vsel %vm708, %v955, 0
        %v1107 = vsel %vm961, %v1102, 0
        %1109 = vmatprep.subr.bf16.mxu0 0
        %1110 = vmatpush1.bf16.msra.mxu0 %v1107
        %1111 = vmatprep.subr.bf16.mxu0 0
        %1112 = vmatpush1.bf16.msra.mxu0 0
        %1113 = vmatprep.subr.bf16.mxu0 0
        %1114 = vmatpush1.bf16.msra.mxu0 0
        %1115 = vmatprep.subr.bf16.mxu0 0
        %1116 = vmatpush1.bf16.msra.mxu0 0
        %1117 = vmatprep.subr.bf16.mxu0 0
        %1118 = vmatpush1.bf16.msra.mxu0 0
        %1119 = vmatprep.subr.bf16.mxu0 0
        %1120 = vmatpush1.bf16.msra.mxu0 0
        %1121 = vmatprep.subr.bf16.mxu0 0
        %1122 = vmatpush1.bf16.msra.mxu0 0
        %1123 = vmatprep.subr.bf16.mxu0 0
        %1124 = vmatpush1.bf16.msra.mxu0 0
        %1125 = vmatprep.subr.bf16.mxu0 0
        %1126 = vmatpush1.bf16.msra.mxu0 0
        %1127 = vmatprep.subr.bf16.mxu0 0
        %1128 = vmatpush1.bf16.msra.mxu0 0
        %1129 = vmatprep.subr.bf16.mxu0 0
        %1130 = vmatpush1.bf16.msra.mxu0 0
        %1131 = vmatprep.subr.bf16.mxu0 0
        %1132 = vmatpush1.bf16.msra.mxu0 0
        %1133 = vmatprep.subr.bf16.mxu0 0
        %1134 = vmatpush1.bf16.msra.mxu0 0
        %1135 = vmatprep.subr.bf16.mxu0 0
        %1136 = vmatpush1.bf16.msra.mxu0 0
        %1137 = vmatprep.subr.bf16.mxu0 0
        %1138 = vmatpush1.bf16.msra.mxu0 0
        %1139 = vmatprep.subr.bf16.mxu0 0
        %1140 = vmatpush1.bf16.msra.mxu0 0
        %1141 = vmatprep.mubr.bf16.mxu0 0
        %1142 = vmatmul.mubr.bf16.gmra.mrb[0].mxu0 %v1104
        %v1143 = vpop.f32.mrb[0].mxu0
        %v1144 = vadd.f32 0.0, %v1143
        %v1145 = vpop.f32.mrb[0].mxu0
        %v1146 = vpop.f32.mrb[0].mxu0
        %v1147 = vpop.f32.mrb[0].mxu0
        %1148 = vdwg.mxu0
        %v1149 = vpack.c.bf16 %v1048, %v1000
        %v1150 = vpack.c.bf16 %v1144, %v1096
        %v1151 = vld [vmem:[#allocation8] sm:$0xf]
        %v1153 = vsel %vm708, %v1149, 0
        %v1156 = vsel %vm708, %v1150, 0
        %v1159 = vsel %vm961, %v1151, 0
        %1161 = vmatprep.subr.bf16.mxu0 0
        %1162 = vmatpush1.bf16.msra.mxu0 %v1159
        %1163 = vmatprep.subr.bf16.mxu0 0
        %1164 = vmatpush1.bf16.msra.mxu0 0
        %1165 = vmatprep.subr.bf16.mxu0 0
        %1166 = vmatpush1.bf16.msra.mxu0 0
        %1167 = vmatprep.subr.bf16.mxu0 0
        %1168 = vmatpush1.bf16.msra.mxu0 0
        %1169 = vmatprep.subr.bf16.mxu0 0
        %1170 = vmatpush1.bf16.msra.mxu0 0
        %1171 = vmatprep.subr.bf16.mxu0 0
        %1172 = vmatpush1.bf16.msra.mxu0 0
        %1173 = vmatprep.subr.bf16.mxu0 0
        %1174 = vmatpush1.bf16.msra.mxu0 0
        %1175 = vmatprep.subr.bf16.mxu0 0
        %1176 = vmatpush1.bf16.msra.mxu0 0
        %1177 = vmatprep.subr.bf16.mxu0 0
        %1178 = vmatpush1.bf16.msra.mxu0 0
        %1179 = vmatprep.subr.bf16.mxu0 0
        %1180 = vmatpush1.bf16.msra.mxu0 0
        %1181 = vmatprep.subr.bf16.mxu0 0
        %1182 = vmatpush1.bf16.msra.mxu0 0
        %1183 = vmatprep.subr.bf16.mxu0 0
        %1184 = vmatpush1.bf16.msra.mxu0 0
        %1185 = vmatprep.subr.bf16.mxu0 0
        %1186 = vmatpush1.bf16.msra.mxu0 0
        %1187 = vmatprep.subr.bf16.mxu0 0
        %1188 = vmatpush1.bf16.msra.mxu0 0
        %1189 = vmatprep.subr.bf16.mxu0 0
        %1190 = vmatpush1.bf16.msra.mxu0 0
        %1191 = vmatprep.subr.bf16.mxu0 0
        %1192 = vmatpush1.bf16.msra.mxu0 0
        %1193 = vmatprep.mubr.bf16.mxu0 0
        %1194 = vmatmul.mubr.bf16.gmra.mrb[0].mxu0 %v1153
        %v1195 = vpop.f32.mrb[0].mxu0
        %v1196 = vadd.f32 0.0, %v1195
        %v1197 = vpop.f32.mrb[0].mxu0
        %v1198 = vpop.f32.mrb[0].mxu0
        %v1199 = vadd.f32 0.0, %v1198
        %v1200 = vpop.f32.mrb[0].mxu0
        %1201 = vmatprep.mubr.bf16.mxu0 0
        %1202 = vmatmul.mubr.bf16.gmra.mrb[0].mxu0 %v1156
        %v1203 = vpop.f32.mrb[0].mxu0
        %v1204 = vadd.f32 0.0, %v1203
        %v1205 = vpop.f32.mrb[0].mxu0
        %v1206 = vpop.f32.mrb[0].mxu0
        %v1207 = vadd.f32 0.0, %v1206
        %v1208 = vpop.f32.mrb[0].mxu0
        %1209 = vdwg.mxu0
        %v1210 = vadd.f32 %v688, %v1196
        %v1211 = vadd.f32 %v688, %v1199
        %v1212 = vadd.f32 %v688, %v1204
        %v1213 = vadd.f32 %v688, %v1207
        %1214 = vrot.lane.b32.xlu0 %v695, 120
        %v1215 = vpop.permute.xlu0 %1214
        %1216 = vrot.lane.b32.xlu0 %v705, 88
        %v1217 = vpop.permute.xlu0 %1216
        %v1219 = vsel %vm708, %v1215, 0
        %v1222 = vsel %vm708, %v1217, 0
        %1224 = vmatprep.subr.bf16.mxu0 0
        %1225 = vmatpush1.bf16.xpose.msra.mxu0 %v1222
        %1226 = vmatprep.subr.bf16.mxu0 0
        %1227 = vmatpush1.bf16.xpose.msra.mxu0 0
        %1228 = vmatprep.subr.bf16.mxu0 0
        %1229 = vmatpush1.bf16.xpose.msra.mxu0 0
        %1230 = vmatprep.subr.bf16.mxu0 0
        %1231 = vmatpush1.bf16.xpose.msra.mxu0 0
        %1232 = vmatprep.subr.bf16.mxu0 0
        %1233 = vmatpush1.bf16.xpose.msra.mxu0 0
        %1234 = vmatprep.subr.bf16.mxu0 0
        %1235 = vmatpush1.bf16.xpose.msra.mxu0 0
        %1236 = vmatprep.subr.bf16.mxu0 0
        %1237 = vmatpush1.bf16.xpose.msra.mxu0 0
        %1238 = vmatprep.subr.bf16.mxu0 0
        %1239 = vmatpush1.bf16.xpose.msra.mxu0 0
        %1240 = vmatprep.subr.bf16.mxu0 0
        %1241 = vmatpush1.bf16.xpose.msra.mxu0 0
        %1242 = vmatprep.subr.bf16.mxu0 0
        %1243 = vmatpush1.bf16.xpose.msra.mxu0 0
        %1244 = vmatprep.subr.bf16.mxu0 0
        %1245 = vmatpush1.bf16.xpose.msra.mxu0 0
        %1246 = vmatprep.subr.bf16.mxu0 0
        %1247 = vmatpush1.bf16.xpose.msra.mxu0 0
        %1248 = vmatprep.subr.bf16.mxu0 0
        %1249 = vmatpush1.bf16.xpose.msra.mxu0 0
        %1250 = vmatprep.subr.bf16.mxu0 0
        %1251 = vmatpush1.bf16.xpose.msra.mxu0 0
        %1252 = vmatprep.subr.bf16.mxu0 0
        %1253 = vmatpush1.bf16.xpose.msra.mxu0 0
        %1254 = vmatprep.subr.bf16.mxu0 0
        %1255 = vmatpush1.bf16.xpose.msra.mxu0 0
        %1256 = vmatprep.mubr.bf16.mxu0 0
        %1257 = vmatmul.mubr.bf16.gmra.mrb[0].mxu0 %v1219
        %v1258 = vpop.f32.mrb[0].mxu0
        %v1259 = vadd.f32 0.0, %v1258
        %v1260 = vpop.f32.mrb[0].mxu0
        %v1261 = vpop.f32.mrb[0].mxu0
        %v1262 = vpop.f32.mrb[0].mxu0
        %1263 = vdwg.mxu0
        %1264 = vrot.lane.b32.xlu0 %v696, 120
        %v1265 = vpop.permute.xlu0 %1264
        %1266 = vrot.lane.b32.xlu0 %v755, 88
        %v1267 = vpop.permute.xlu0 %1266
        %v1269 = vsel %vm708, %v1265, 0
        %v1272 = vsel %vm708, %v1267, 0
        %1274 = vmatprep.subr.bf16.mxu0 0
        %1275 = vmatpush1.bf16.xpose.msra.mxu0 %v1272
        %1276 = vmatprep.subr.bf16.mxu0 0
        %1277 = vmatpush1.bf16.xpose.msra.mxu0 0
        %1278 = vmatprep.subr.bf16.mxu0 0
        %1279 = vmatpush1.bf16.xpose.msra.mxu0 0
        %1280 = vmatprep.subr.bf16.mxu0 0
        %1281 = vmatpush1.bf16.xpose.msra.mxu0 0
        %1282 = vmatprep.subr.bf16.mxu0 0
        %1283 = vmatpush1.bf16.xpose.msra.mxu0 0
        %1284 = vmatprep.subr.bf16.mxu0 0
        %1285 = vmatpush1.bf16.xpose.msra.mxu0 0
        %1286 = vmatprep.subr.bf16.mxu0 0
        %1287 = vmatpush1.bf16.xpose.msra.mxu0 0
        %1288 = vmatprep.subr.bf16.mxu0 0
        %1289 = vmatpush1.bf16.xpose.msra.mxu0 0
        %1290 = vmatprep.subr.bf16.mxu0 0
        %1291 = vmatpush1.bf16.xpose.msra.mxu0 0
        %1292 = vmatprep.subr.bf16.mxu0 0
        %1293 = vmatpush1.bf16.xpose.msra.mxu0 0
        %1294 = vmatprep.subr.bf16.mxu0 0
        %1295 = vmatpush1.bf16.xpose.msra.mxu0 0
        %1296 = vmatprep.subr.bf16.mxu0 0
        %1297 = vmatpush1.bf16.xpose.msra.mxu0 0
        %1298 = vmatprep.subr.bf16.mxu0 0
        %1299 = vmatpush1.bf16.xpose.msra.mxu0 0
        %1300 = vmatprep.subr.bf16.mxu0 0
        %1301 = vmatpush1.bf16.xpose.msra.mxu0 0
        %1302 = vmatprep.subr.bf16.mxu0 0
        %1303 = vmatpush1.bf16.xpose.msra.mxu0 0
        %1304 = vmatprep.subr.bf16.mxu0 0
        %1305 = vmatpush1.bf16.xpose.msra.mxu0 0
        %1306 = vmatprep.mubr.bf16.mxu0 0
        %1307 = vmatmul.mubr.bf16.gmra.mrb[0].mxu0 %v1269
        %v1308 = vpop.f32.mrb[0].mxu0
        %v1309 = vadd.f32 0.0, %v1308
        %v1310 = vpop.f32.mrb[0].mxu0
        %v1311 = vpop.f32.mrb[0].mxu0
        %v1312 = vpop.f32.mrb[0].mxu0
        %1313 = vdwg.mxu0
        %1314 = vrot.lane.b32.xlu0 %v697, 120
        %v1315 = vpop.permute.xlu0 %1314
        %1316 = vrot.lane.b32.xlu0 %v804, 88
        %v1317 = vpop.permute.xlu0 %1316
        %v1319 = vsel %vm708, %v1315, 0
        %v1322 = vsel %vm708, %v1317, 0
        %1324 = vmatprep.subr.bf16.mxu0 0
        %1325 = vmatpush1.bf16.xpose.msra.mxu0 %v1322
        %1326 = vmatprep.subr.bf16.mxu0 0
        %1327 = vmatpush1.bf16.xpose.msra.mxu0 0
        %1328 = vmatprep.subr.bf16.mxu0 0
        %1329 = vmatpush1.bf16.xpose.msra.mxu0 0
        %1330 = vmatprep.subr.bf16.mxu0 0
        %1331 = vmatpush1.bf16.xpose.msra.mxu0 0
        %1332 = vmatprep.subr.bf16.mxu0 0
        %1333 = vmatpush1.bf16.xpose.msra.mxu0 0
        %1334 = vmatprep.subr.bf16.mxu0 0
        %1335 = vmatpush1.bf16.xpose.msra.mxu0 0
        %1336 = vmatprep.subr.bf16.mxu0 0
        %1337 = vmatpush1.bf16.xpose.msra.mxu0 0
        %1338 = vmatprep.subr.bf16.mxu0 0
        %1339 = vmatpush1.bf16.xpose.msra.mxu0 0
        %1340 = vmatprep.subr.bf16.mxu0 0
        %1341 = vmatpush1.bf16.xpose.msra.mxu0 0
        %1342 = vmatprep.subr.bf16.mxu0 0
        %1343 = vmatpush1.bf16.xpose.msra.mxu0 0
        %1344 = vmatprep.subr.bf16.mxu0 0
        %1345 = vmatpush1.bf16.xpose.msra.mxu0 0
        %1346 = vmatprep.subr.bf16.mxu0 0
        %1347 = vmatpush1.bf16.xpose.msra.mxu0 0
        %1348 = vmatprep.subr.bf16.mxu0 0
        %1349 = vmatpush1.bf16.xpose.msra.mxu0 0
        %1350 = vmatprep.subr.bf16.mxu0 0
        %1351 = vmatpush1.bf16.xpose.msra.mxu0 0
        %1352 = vmatprep.subr.bf16.mxu0 0
        %1353 = vmatpush1.bf16.xpose.msra.mxu0 0
        %1354 = vmatprep.subr.bf16.mxu0 0
        %1355 = vmatpush1.bf16.xpose.msra.mxu0 0
        %1356 = vmatprep.mubr.bf16.mxu0 0
        %1357 = vmatmul.mubr.bf16.gmra.mrb[0].mxu0 %v1319
        %v1358 = vpop.f32.mrb[0].mxu0
        %v1359 = vadd.f32 0.0, %v1358
        %v1360 = vpop.f32.mrb[0].mxu0
        %v1361 = vpop.f32.mrb[0].mxu0
        %v1362 = vpop.f32.mrb[0].mxu0
        %1363 = vdwg.mxu0
        %1364 = vrot.lane.b32.xlu0 %v698, 120
        %v1365 = vpop.permute.xlu0 %1364
        %1366 = vrot.lane.b32.xlu0 %v853, 88
        %v1367 = vpop.permute.xlu0 %1366
        %v1369 = vsel %vm708, %v1365, 0
        %v1372 = vsel %vm708, %v1367, 0
        %1374 = vmatprep.subr.bf16.mxu0 0
        %1375 = vmatpush1.bf16.xpose.msra.mxu0 %v1372
        %1376 = vmatprep.subr.bf16.mxu0 0
        %1377 = vmatpush1.bf16.xpose.msra.mxu0 0
        %1378 = vmatprep.subr.bf16.mxu0 0
        %1379 = vmatpush1.bf16.xpose.msra.mxu0 0
        %1380 = vmatprep.subr.bf16.mxu0 0
        %1381 = vmatpush1.bf16.xpose.msra.mxu0 0
        %1382 = vmatprep.subr.bf16.mxu0 0
        %1383 = vmatpush1.bf16.xpose.msra.mxu0 0
        %1384 = vmatprep.subr.bf16.mxu0 0
        %1385 = vmatpush1.bf16.xpose.msra.mxu0 0
        %1386 = vmatprep.subr.bf16.mxu0 0
        %1387 = vmatpush1.bf16.xpose.msra.mxu0 0
        %1388 = vmatprep.subr.bf16.mxu0 0
        %1389 = vmatpush1.bf16.xpose.msra.mxu0 0
        %1390 = vmatprep.subr.bf16.mxu0 0
        %1391 = vmatpush1.bf16.xpose.msra.mxu0 0
        %1392 = vmatprep.subr.bf16.mxu0 0
        %1393 = vmatpush1.bf16.xpose.msra.mxu0 0
        %1394 = vmatprep.subr.bf16.mxu0 0
        %1395 = vmatpush1.bf16.xpose.msra.mxu0 0
        %1396 = vmatprep.subr.bf16.mxu0 0
        %1397 = vmatpush1.bf16.xpose.msra.mxu0 0
        %1398 = vmatprep.subr.bf16.mxu0 0
        %1399 = vmatpush1.bf16.xpose.msra.mxu0 0
        %1400 = vmatprep.subr.bf16.mxu0 0
        %1401 = vmatpush1.bf16.xpose.msra.mxu0 0
        %1402 = vmatprep.subr.bf16.mxu0 0
        %1403 = vmatpush1.bf16.xpose.msra.mxu0 0
        %1404 = vmatprep.subr.bf16.mxu0 0
        %1405 = vmatpush1.bf16.xpose.msra.mxu0 0
        %1406 = vmatprep.mubr.bf16.mxu0 0
        %1407 = vmatmul.mubr.bf16.gmra.mrb[0].mxu0 %v1369
        %v1408 = vpop.f32.mrb[0].mxu0
        %v1409 = vadd.f32 0.0, %v1408
        %v1410 = vpop.f32.mrb[0].mxu0
        %v1411 = vpop.f32.mrb[0].mxu0
        %v1412 = vpop.f32.mrb[0].mxu0
        %1413 = vdwg.mxu0
        %v1414 = vsel %vm903, -inf, %v1259
        %v1415 = vsel %vm903, -inf, %v1309
        %v1416 = vsel %vm903, -inf, %v1359
        %v1417 = vsel %vm903, -inf, %v1409
        %v1418 = vsel %vm708, %v1414, -inf
        %1419 = vmax.xlane.f32.xlu0 %v1418
        %v1420 = vpop.xlane.xlu0 %1419
        %v1421 = vsel %vm708, %v1415, -inf
        %1422 = vmax.xlane.f32.xlu0 %v1421
        %v1423 = vpop.xlane.xlu0 %1422
        %v1424 = vsel %vm708, %v1416, -inf
        %1425 = vmax.xlane.f32.xlu0 %v1424
        %v1426 = vpop.xlane.xlu0 %1425
        %v1427 = vsel %vm708, %v1417, -inf
        %1428 = vmax.xlane.f32.xlu0 %v1427
        %v1429 = vpop.xlane.xlu0 %1428
        %v1430 = vsub.f32 %v1414, %v1420
        %v1431 = vsub.f32 %v1415, %v1423
        %v1432 = vsub.f32 %v1416, %v1426
        %v1433 = vsub.f32 %v1417, %v1429
        %v1434 = vmul.f32 %v1430, 1.442695
        %v1435 = vpow.pop %v1434
        %v1436 = vmul.f32 %v1431, 1.442695
        %v1437 = vpow.pop %v1436
        %v1438 = vmul.f32 %v1432, 1.442695
        %v1439 = vpow.pop %v1438
        %v1440 = vmul.f32 %v1433, 1.442695
        %v1441 = vpow.pop %v1440
        %v1442 = vsel %vm708, %v1435, 0.0
        %1443 = vadd.xlane.f32.xlu0 %v1442
        %v1444 = vpop.xlane.xlu0 %1443
        %v1445 = vsel %vm708, %v1437, 0.0
        %1446 = vadd.xlane.f32.xlu0 %v1445
        %v1447 = vpop.xlane.xlu0 %1446
        %v1448 = vsel %vm708, %v1439, 0.0
        %1449 = vadd.xlane.f32.xlu0 %v1448
        %v1450 = vpop.xlane.xlu0 %1449
        %v1451 = vsel %vm708, %v1441, 0.0
        %1452 = vadd.xlane.f32.xlu0 %v1451
        %v1453 = vpop.xlane.xlu0 %1452
        %v1454 = vrcp.pop %v1444
        %v1455 = vrcp.pop %v1447
        %v1456 = vrcp.pop %v1450
        %v1457 = vrcp.pop %v1453
        %v1458 = vmul.f32 %v1435, %v1454
        %v1459 = vmul.f32 %v1437, %v1455
        %v1460 = vmul.f32 %v1439, %v1456
        %v1461 = vmul.f32 %v1441, %v1457
        %v1462 = vpack.c.bf16 %v1458, %v1458
        %v1463 = vpack.c.bf16 %v1459, %v1459
        %v1464 = vpack.c.bf16 %v1460, %v1460
        %v1465 = vpack.c.bf16 %v1461, %v1461
        %1466 = vrot.lane.b32.xlu0 %v705, 56
        %v1467 = vpop.permute.xlu0 %1466
        %v1469 = vsel %vm708, %v1462, 0
        %v1472 = vsel %vm961, %v1467, 0
        %1474 = vmatprep.subr.bf16.mxu0 0
        %1475 = vmatpush1.bf16.msra.mxu0 %v1472
        %1476 = vmatprep.subr.bf16.mxu0 0
        %1477 = vmatpush1.bf16.msra.mxu0 0
        %1478 = vmatprep.subr.bf16.mxu0 0
        %1479 = vmatpush1.bf16.msra.mxu0 0
        %1480 = vmatprep.subr.bf16.mxu0 0
        %1481 = vmatpush1.bf16.msra.mxu0 0
        %1482 = vmatprep.subr.bf16.mxu0 0
        %1483 = vmatpush1.bf16.msra.mxu0 0
        %1484 = vmatprep.subr.bf16.mxu0 0
        %1485 = vmatpush1.bf16.msra.mxu0 0
        %1486 = vmatprep.subr.bf16.mxu0 0
        %1487 = vmatpush1.bf16.msra.mxu0 0
        %1488 = vmatprep.subr.bf16.mxu0 0
        %1489 = vmatpush1.bf16.msra.mxu0 0
        %1490 = vmatprep.subr.bf16.mxu0 0
        %1491 = vmatpush1.bf16.msra.mxu0 0
        %1492 = vmatprep.subr.bf16.mxu0 0
        %1493 = vmatpush1.bf16.msra.mxu0 0
        %1494 = vmatprep.subr.bf16.mxu0 0
        %1495 = vmatpush1.bf16.msra.mxu0 0
        %1496 = vmatprep.subr.bf16.mxu0 0
        %1497 = vmatpush1.bf16.msra.mxu0 0
        %1498 = vmatprep.subr.bf16.mxu0 0
        %1499 = vmatpush1.bf16.msra.mxu0 0
        %1500 = vmatprep.subr.bf16.mxu0 0
        %1501 = vmatpush1.bf16.msra.mxu0 0
        %1502 = vmatprep.subr.bf16.mxu0 0
        %1503 = vmatpush1.bf16.msra.mxu0 0
        %1504 = vmatprep.subr.bf16.mxu0 0
        %1505 = vmatpush1.bf16.msra.mxu0 0
        %1506 = vmatprep.mubr.bf16.mxu0 0
        %1507 = vmatmul.mubr.bf16.gmra.mrb[0].mxu0 %v1469
        %v1508 = vpop.f32.mrb[0].mxu0
        %v1509 = vadd.f32 0.0, %v1508
        %v1510 = vpop.f32.mrb[0].mxu0
        %v1511 = vpop.f32.mrb[0].mxu0
        %v1512 = vpop.f32.mrb[0].mxu0
        %1513 = vdwg.mxu0
        %1514 = vrot.lane.b32.xlu0 %v755, 56
        %v1515 = vpop.permute.xlu0 %1514
        %v1517 = vsel %vm708, %v1463, 0
        %v1520 = vsel %vm961, %v1515, 0
        %1522 = vmatprep.subr.bf16.mxu0 0
        %1523 = vmatpush1.bf16.msra.mxu0 %v1520
        %1524 = vmatprep.subr.bf16.mxu0 0
        %1525 = vmatpush1.bf16.msra.mxu0 0
        %1526 = vmatprep.subr.bf16.mxu0 0
        %1527 = vmatpush1.bf16.msra.mxu0 0
        %1528 = vmatprep.subr.bf16.mxu0 0
        %1529 = vmatpush1.bf16.msra.mxu0 0
        %1530 = vmatprep.subr.bf16.mxu0 0
        %1531 = vmatpush1.bf16.msra.mxu0 0
        %1532 = vmatprep.subr.bf16.mxu0 0
        %1533 = vmatpush1.bf16.msra.mxu0 0
        %1534 = vmatprep.subr.bf16.mxu0 0
        %1535 = vmatpush1.bf16.msra.mxu0 0
        %1536 = vmatprep.subr.bf16.mxu0 0
        %1537 = vmatpush1.bf16.msra.mxu0 0
        %1538 = vmatprep.subr.bf16.mxu0 0
        %1539 = vmatpush1.bf16.msra.mxu0 0
        %1540 = vmatprep.subr.bf16.mxu0 0
        %1541 = vmatpush1.bf16.msra.mxu0 0
        %1542 = vmatprep.subr.bf16.mxu0 0
        %1543 = vmatpush1.bf16.msra.mxu0 0
        %1544 = vmatprep.subr.bf16.mxu0 0
        %1545 = vmatpush1.bf16.msra.mxu0 0
        %1546 = vmatprep.subr.bf16.mxu0 0
        %1547 = vmatpush1.bf16.msra.mxu0 0
        %1548 = vmatprep.subr.bf16.mxu0 0
        %1549 = vmatpush1.bf16.msra.mxu0 0
        %1550 = vmatprep.subr.bf16.mxu0 0
        %1551 = vmatpush1.bf16.msra.mxu0 0
        %1552 = vmatprep.subr.bf16.mxu0 0
        %1553 = vmatpush1.bf16.msra.mxu0 0
        %1554 = vmatprep.mubr.bf16.mxu0 0
        %1555 = vmatmul.mubr.bf16.gmra.mrb[0].mxu0 %v1517
        %v1556 = vpop.f32.mrb[0].mxu0
        %v1557 = vadd.f32 0.0, %v1556
        %v1558 = vpop.f32.mrb[0].mxu0
        %v1559 = vpop.f32.mrb[0].mxu0
        %v1560 = vpop.f32.mrb[0].mxu0
        %1561 = vdwg.mxu0
        %1562 = vrot.lane.b32.xlu0 %v804, 56
        %v1563 = vpop.permute.xlu0 %1562
        %v1565 = vsel %vm708, %v1464, 0
        %v1568 = vsel %vm961, %v1563, 0
        %1570 = vmatprep.subr.bf16.mxu0 0
        %1571 = vmatpush1.bf16.msra.mxu0 %v1568
        %1572 = vmatprep.subr.bf16.mxu0 0
        %1573 = vmatpush1.bf16.msra.mxu0 0
        %1574 = vmatprep.subr.bf16.mxu0 0
        %1575 = vmatpush1.bf16.msra.mxu0 0
        %1576 = vmatprep.subr.bf16.mxu0 0
        %1577 = vmatpush1.bf16.msra.mxu0 0
        %1578 = vmatprep.subr.bf16.mxu0 0
        %1579 = vmatpush1.bf16.msra.mxu0 0
        %1580 = vmatprep.subr.bf16.mxu0 0
        %1581 = vmatpush1.bf16.msra.mxu0 0
        %1582 = vmatprep.subr.bf16.mxu0 0
        %1583 = vmatpush1.bf16.msra.mxu0 0
        %1584 = vmatprep.subr.bf16.mxu0 0
        %1585 = vmatpush1.bf16.msra.mxu0 0
        %1586 = vmatprep.subr.bf16.mxu0 0
        %1587 = vmatpush1.bf16.msra.mxu0 0
        %1588 = vmatprep.subr.bf16.mxu0 0
        %1589 = vmatpush1.bf16.msra.mxu0 0
        %1590 = vmatprep.subr.bf16.mxu0 0
        %1591 = vmatpush1.bf16.msra.mxu0 0
        %1592 = vmatprep.subr.bf16.mxu0 0
        %1593 = vmatpush1.bf16.msra.mxu0 0
        %1594 = vmatprep.subr.bf16.mxu0 0
        %1595 = vmatpush1.bf16.msra.mxu0 0
        %1596 = vmatprep.subr.bf16.mxu0 0
        %1597 = vmatpush1.bf16.msra.mxu0 0
        %1598 = vmatprep.subr.bf16.mxu0 0
        %1599 = vmatpush1.bf16.msra.mxu0 0
        %1600 = vmatprep.subr.bf16.mxu0 0
        %1601 = vmatpush1.bf16.msra.mxu0 0
        %1602 = vmatprep.mubr.bf16.mxu0 0
        %1603 = vmatmul.mubr.bf16.gmra.mrb[0].mxu0 %v1565
        %v1604 = vpop.f32.mrb[0].mxu0
        %v1605 = vadd.f32 0.0, %v1604
        %v1606 = vpop.f32.mrb[0].mxu0
        %v1607 = vpop.f32.mrb[0].mxu0
        %v1608 = vpop.f32.mrb[0].mxu0
        %1609 = vdwg.mxu0
        %1610 = vrot.lane.b32.xlu0 %v853, 56
        %v1611 = vpop.permute.xlu0 %1610
        %v1613 = vsel %vm708, %v1465, 0
        %v1616 = vsel %vm961, %v1611, 0
        %1618 = vmatprep.subr.bf16.mxu0 0
        %1619 = vmatpush1.bf16.msra.mxu0 %v1616
        %1620 = vmatprep.subr.bf16.mxu0 0
        %1621 = vmatpush1.bf16.msra.mxu0 0
        %1622 = vmatprep.subr.bf16.mxu0 0
        %1623 = vmatpush1.bf16.msra.mxu0 0
        %1624 = vmatprep.subr.bf16.mxu0 0
        %1625 = vmatpush1.bf16.msra.mxu0 0
        %1626 = vmatprep.subr.bf16.mxu0 0
        %1627 = vmatpush1.bf16.msra.mxu0 0
        %1628 = vmatprep.subr.bf16.mxu0 0
        %1629 = vmatpush1.bf16.msra.mxu0 0
        %1630 = vmatprep.subr.bf16.mxu0 0
        %1631 = vmatpush1.bf16.msra.mxu0 0
        %1632 = vmatprep.subr.bf16.mxu0 0
        %1633 = vmatpush1.bf16.msra.mxu0 0
        %1634 = vmatprep.subr.bf16.mxu0 0
        %1635 = vmatpush1.bf16.msra.mxu0 0
        %1636 = vmatprep.subr.bf16.mxu0 0
        %1637 = vmatpush1.bf16.msra.mxu0 0
        %1638 = vmatprep.subr.bf16.mxu0 0
        %1639 = vmatpush1.bf16.msra.mxu0 0
        %1640 = vmatprep.subr.bf16.mxu0 0
        %1641 = vmatpush1.bf16.msra.mxu0 0
        %1642 = vmatprep.subr.bf16.mxu0 0
        %1643 = vmatpush1.bf16.msra.mxu0 0
        %1644 = vmatprep.subr.bf16.mxu0 0
        %1645 = vmatpush1.bf16.msra.mxu0 0
        %1646 = vmatprep.subr.bf16.mxu0 0
        %1647 = vmatpush1.bf16.msra.mxu0 0
        %1648 = vmatprep.subr.bf16.mxu0 0
        %1649 = vmatpush1.bf16.msra.mxu0 0
        %1650 = vmatprep.mubr.bf16.mxu0 0
        %1651 = vmatmul.mubr.bf16.gmra.mrb[0].mxu0 %v1613
        %v1652 = vpop.f32.mrb[0].mxu0
        %v1653 = vadd.f32 0.0, %v1652
        %v1654 = vpop.f32.mrb[0].mxu0
        %v1655 = vpop.f32.mrb[0].mxu0
        %v1656 = vpop.f32.mrb[0].mxu0
        %1657 = vdwg.mxu0
        %v1658 = vpack.c.bf16 %v1557, %v1509
        %v1659 = vpack.c.bf16 %v1653, %v1605
        %v1660 = vld [vmem:[#allocation8 + $0x4] sm:$0xf]
        %v1662 = vsel %vm708, %v1658, 0
        %v1665 = vsel %vm708, %v1659, 0
        %v1668 = vsel %vm961, %v1660, 0
        %1670 = vmatprep.subr.bf16.mxu0 0
        %1671 = vmatpush1.bf16.msra.mxu0 %v1668
        %1672 = vmatprep.subr.bf16.mxu0 0
        %1673 = vmatpush1.bf16.msra.mxu0 0
        %1674 = vmatprep.subr.bf16.mxu0 0
        %1675 = vmatpush1.bf16.msra.mxu0 0
        %1676 = vmatprep.subr.bf16.mxu0 0
        %1677 = vmatpush1.bf16.msra.mxu0 0
        %1678 = vmatprep.subr.bf16.mxu0 0
        %1679 = vmatpush1.bf16.msra.mxu0 0
        %1680 = vmatprep.subr.bf16.mxu0 0
        %1681 = vmatpush1.bf16.msra.mxu0 0
        %1682 = vmatprep.subr.bf16.mxu0 0
        %1683 = vmatpush1.bf16.msra.mxu0 0
        %1684 = vmatprep.subr.bf16.mxu0 0
        %1685 = vmatpush1.bf16.msra.mxu0 0
        %1686 = vmatprep.subr.bf16.mxu0 0
        %1687 = vmatpush1.bf16.msra.mxu0 0
        %1688 = vmatprep.subr.bf16.mxu0 0
        %1689 = vmatpush1.bf16.msra.mxu0 0
        %1690 = vmatprep.subr.bf16.mxu0 0
        %1691 = vmatpush1.bf16.msra.mxu0 0
        %1692 = vmatprep.subr.bf16.mxu0 0
        %1693 = vmatpush1.bf16.msra.mxu0 0
        %1694 = vmatprep.subr.bf16.mxu0 0
        %1695 = vmatpush1.bf16.msra.mxu0 0
        %1696 = vmatprep.subr.bf16.mxu0 0
        %1697 = vmatpush1.bf16.msra.mxu0 0
        %1698 = vmatprep.subr.bf16.mxu0 0
        %1699 = vmatpush1.bf16.msra.mxu0 0
        %1700 = vmatprep.subr.bf16.mxu0 0
        %1701 = vmatpush1.bf16.msra.mxu0 0
        %1702 = vmatprep.mubr.bf16.mxu0 0
        %1703 = vmatmul.mubr.bf16.gmra.mrb[0].mxu0 %v1662
        %v1704 = vpop.f32.mrb[0].mxu0
        %v1705 = vadd.f32 0.0, %v1704
        %v1706 = vpop.f32.mrb[0].mxu0
        %v1707 = vpop.f32.mrb[0].mxu0
        %v1708 = vadd.f32 0.0, %v1707
        %v1709 = vpop.f32.mrb[0].mxu0
        %1710 = vmatprep.mubr.bf16.mxu0 0
        %1711 = vmatmul.mubr.bf16.gmra.mrb[0].mxu0 %v1665
        %v1712 = vpop.f32.mrb[0].mxu0
        %v1713 = vadd.f32 0.0, %v1712
        %v1714 = vpop.f32.mrb[0].mxu0
        %v1715 = vpop.f32.mrb[0].mxu0
        %v1716 = vadd.f32 0.0, %v1715
        %v1717 = vpop.f32.mrb[0].mxu0
        %1718 = vdwg.mxu0
        %v1719 = vadd.f32 %v1210, %v1705
        %v1720 = vadd.f32 %v1211, %v1708
        %v1721 = vadd.f32 %v1212, %v1713
        %v1722 = vadd.f32 %v1213, %v1716
        %1723 = vrot.lane.b32.xlu0 %v695, 112
        %v1724 = vpop.permute.xlu0 %1723
        %1725 = vrot.lane.b32.xlu0 %v705, 80
        %v1726 = vpop.permute.xlu0 %1725
        %v1728 = vsel %vm708, %v1724, 0
        %v1731 = vsel %vm708, %v1726, 0
        %1733 = vmatprep.subr.bf16.mxu0 0
        %1734 = vmatpush1.bf16.xpose.msra.mxu0 %v1731
        %1735 = vmatprep.subr.bf16.mxu0 0
        %1736 = vmatpush1.bf16.xpose.msra.mxu0 0
        %1737 = vmatprep.subr.bf16.mxu0 0
        %1738 = vmatpush1.bf16.xpose.msra.mxu0 0
        %1739 = vmatprep.subr.bf16.mxu0 0
        %1740 = vmatpush1.bf16.xpose.msra.mxu0 0
        %1741 = vmatprep.subr.bf16.mxu0 0
        %1742 = vmatpush1.bf16.xpose.msra.mxu0 0
        %1743 = vmatprep.subr.bf16.mxu0 0
        %1744 = vmatpush1.bf16.xpose.msra.mxu0 0
        %1745 = vmatprep.subr.bf16.mxu0 0
        %1746 = vmatpush1.bf16.xpose.msra.mxu0 0
        %1747 = vmatprep.subr.bf16.mxu0 0
        %1748 = vmatpush1.bf16.xpose.msra.mxu0 0
        %1749 = vmatprep.subr.bf16.mxu0 0
        %1750 = vmatpush1.bf16.xpose.msra.mxu0 0
        %1751 = vmatprep.subr.bf16.mxu0 0
        %1752 = vmatpush1.bf16.xpose.msra.mxu0 0
        %1753 = vmatprep.subr.bf16.mxu0 0
        %1754 = vmatpush1.bf16.xpose.msra.mxu0 0
        %1755 = vmatprep.subr.bf16.mxu0 0
        %1756 = vmatpush1.bf16.xpose.msra.mxu0 0
        %1757 = vmatprep.subr.bf16.mxu0 0
        %1758 = vmatpush1.bf16.xpose.msra.mxu0 0
        %1759 = vmatprep.subr.bf16.mxu0 0
        %1760 = vmatpush1.bf16.xpose.msra.mxu0 0
        %1761 = vmatprep.subr.bf16.mxu0 0
        %1762 = vmatpush1.bf16.xpose.msra.mxu0 0
        %1763 = vmatprep.subr.bf16.mxu0 0
        %1764 = vmatpush1.bf16.xpose.msra.mxu0 0
        %1765 = vmatprep.mubr.bf16.mxu0 0
        %1766 = vmatmul.mubr.bf16.gmra.mrb[0].mxu0 %v1728
        %v1767 = vpop.f32.mrb[0].mxu0
        %v1768 = vadd.f32 0.0, %v1767
        %v1769 = vpop.f32.mrb[0].mxu0
        %v1770 = vpop.f32.mrb[0].mxu0
        %v1771 = vpop.f32.mrb[0].mxu0
        %1772 = vdwg.mxu0
        %1773 = vrot.lane.b32.xlu0 %v696, 112
        %v1774 = vpop.permute.xlu0 %1773
        %1775 = vrot.lane.b32.xlu0 %v755, 80
        %v1776 = vpop.permute.xlu0 %1775
        %v1778 = vsel %vm708, %v1774, 0
        %v1781 = vsel %vm708, %v1776, 0
        %1783 = vmatprep.subr.bf16.mxu0 0
        %1784 = vmatpush1.bf16.xpose.msra.mxu0 %v1781
        %1785 = vmatprep.subr.bf16.mxu0 0
        %1786 = vmatpush1.bf16.xpose.msra.mxu0 0
        %1787 = vmatprep.subr.bf16.mxu0 0
        %1788 = vmatpush1.bf16.xpose.msra.mxu0 0
        %1789 = vmatprep.subr.bf16.mxu0 0
        %1790 = vmatpush1.bf16.xpose.msra.mxu0 0
        %1791 = vmatprep.subr.bf16.mxu0 0
        %1792 = vmatpush1.bf16.xpose.msra.mxu0 0
        %1793 = vmatprep.subr.bf16.mxu0 0
        %1794 = vmatpush1.bf16.xpose.msra.mxu0 0
        %1795 = vmatprep.subr.bf16.mxu0 0
        %1796 = vmatpush1.bf16.xpose.msra.mxu0 0
        %1797 = vmatprep.subr.bf16.mxu0 0
        %1798 = vmatpush1.bf16.xpose.msra.mxu0 0
        %1799 = vmatprep.subr.bf16.mxu0 0
        %1800 = vmatpush1.bf16.xpose.msra.mxu0 0
        %1801 = vmatprep.subr.bf16.mxu0 0
        %1802 = vmatpush1.bf16.xpose.msra.mxu0 0
        %1803 = vmatprep.subr.bf16.mxu0 0
        %1804 = vmatpush1.bf16.xpose.msra.mxu0 0
        %1805 = vmatprep.subr.bf16.mxu0 0
        %1806 = vmatpush1.bf16.xpose.msra.mxu0 0
        %1807 = vmatprep.subr.bf16.mxu0 0
        %1808 = vmatpush1.bf16.xpose.msra.mxu0 0
        %1809 = vmatprep.subr.bf16.mxu0 0
        %1810 = vmatpush1.bf16.xpose.msra.mxu0 0
        %1811 = vmatprep.subr.bf16.mxu0 0
        %1812 = vmatpush1.bf16.xpose.msra.mxu0 0
        %1813 = vmatprep.subr.bf16.mxu0 0
        %1814 = vmatpush1.bf16.xpose.msra.mxu0 0
        %1815 = vmatprep.mubr.bf16.mxu0 0
        %1816 = vmatmul.mubr.bf16.gmra.mrb[0].mxu0 %v1778
        %v1817 = vpop.f32.mrb[0].mxu0
        %v1818 = vadd.f32 0.0, %v1817
        %v1819 = vpop.f32.mrb[0].mxu0
        %v1820 = vpop.f32.mrb[0].mxu0
        %v1821 = vpop.f32.mrb[0].mxu0
        %1822 = vdwg.mxu0
        %1823 = vrot.lane.b32.xlu0 %v697, 112
        %v1824 = vpop.permute.xlu0 %1823
        %1825 = vrot.lane.b32.xlu0 %v804, 80
        %v1826 = vpop.permute.xlu0 %1825
        %v1828 = vsel %vm708, %v1824, 0
        %v1831 = vsel %vm708, %v1826, 0
        %1833 = vmatprep.subr.bf16.mxu0 0
        %1834 = vmatpush1.bf16.xpose.msra.mxu0 %v1831
        %1835 = vmatprep.subr.bf16.mxu0 0
        %1836 = vmatpush1.bf16.xpose.msra.mxu0 0
        %1837 = vmatprep.subr.bf16.mxu0 0
        %1838 = vmatpush1.bf16.xpose.msra.mxu0 0
        %1839 = vmatprep.subr.bf16.mxu0 0
        %1840 = vmatpush1.bf16.xpose.msra.mxu0 0
        %1841 = vmatprep.subr.bf16.mxu0 0
        %1842 = vmatpush1.bf16.xpose.msra.mxu0 0
        %1843 = vmatprep.subr.bf16.mxu0 0
        %1844 = vmatpush1.bf16.xpose.msra.mxu0 0
        %1845 = vmatprep.subr.bf16.mxu0 0
        %1846 = vmatpush1.bf16.xpose.msra.mxu0 0
        %1847 = vmatprep.subr.bf16.mxu0 0
        %1848 = vmatpush1.bf16.xpose.msra.mxu0 0
        %1849 = vmatprep.subr.bf16.mxu0 0
        %1850 = vmatpush1.bf16.xpose.msra.mxu0 0
        %1851 = vmatprep.subr.bf16.mxu0 0
        %1852 = vmatpush1.bf16.xpose.msra.mxu0 0
        %1853 = vmatprep.subr.bf16.mxu0 0
        %1854 = vmatpush1.bf16.xpose.msra.mxu0 0
        %1855 = vmatprep.subr.bf16.mxu0 0
        %1856 = vmatpush1.bf16.xpose.msra.mxu0 0
        %1857 = vmatprep.subr.bf16.mxu0 0
        %1858 = vmatpush1.bf16.xpose.msra.mxu0 0
        %1859 = vmatprep.subr.bf16.mxu0 0
        %1860 = vmatpush1.bf16.xpose.msra.mxu0 0
        %1861 = vmatprep.subr.bf16.mxu0 0
        %1862 = vmatpush1.bf16.xpose.msra.mxu0 0
        %1863 = vmatprep.subr.bf16.mxu0 0
        %1864 = vmatpush1.bf16.xpose.msra.mxu0 0
        %1865 = vmatprep.mubr.bf16.mxu0 0
        %1866 = vmatmul.mubr.bf16.gmra.mrb[0].mxu0 %v1828
        %v1867 = vpop.f32.mrb[0].mxu0
        %v1868 = vadd.f32 0.0, %v1867
        %v1869 = vpop.f32.mrb[0].mxu0
        %v1870 = vpop.f32.mrb[0].mxu0
        %v1871 = vpop.f32.mrb[0].mxu0
        %1872 = vdwg.mxu0
        %1873 = vrot.lane.b32.xlu0 %v698, 112
        %v1874 = vpop.permute.xlu0 %1873
        %1875 = vrot.lane.b32.xlu0 %v853, 80
        %v1876 = vpop.permute.xlu0 %1875
        %v1878 = vsel %vm708, %v1874, 0
        %v1881 = vsel %vm708, %v1876, 0
        %1883 = vmatprep.subr.bf16.mxu0 0
        %1884 = vmatpush1.bf16.xpose.msra.mxu0 %v1881
        %1885 = vmatprep.subr.bf16.mxu0 0
        %1886 = vmatpush1.bf16.xpose.msra.mxu0 0
        %1887 = vmatprep.subr.bf16.mxu0 0
        %1888 = vmatpush1.bf16.xpose.msra.mxu0 0
        %1889 = vmatprep.subr.bf16.mxu0 0
        %1890 = vmatpush1.bf16.xpose.msra.mxu0 0
        %1891 = vmatprep.subr.bf16.mxu0 0
        %1892 = vmatpush1.bf16.xpose.msra.mxu0 0
        %1893 = vmatprep.subr.bf16.mxu0 0
        %1894 = vmatpush1.bf16.xpose.msra.mxu0 0
        %1895 = vmatprep.subr.bf16.mxu0 0
        %1896 = vmatpush1.bf16.xpose.msra.mxu0 0
        %1897 = vmatprep.subr.bf16.mxu0 0
        %1898 = vmatpush1.bf16.xpose.msra.mxu0 0
        %1899 = vmatprep.subr.bf16.mxu0 0
        %1900 = vmatpush1.bf16.xpose.msra.mxu0 0
        %1901 = vmatprep.subr.bf16.mxu0 0
        %1902 = vmatpush1.bf16.xpose.msra.mxu0 0
        %1903 = vmatprep.subr.bf16.mxu0 0
        %1904 = vmatpush1.bf16.xpose.msra.mxu0 0
        %1905 = vmatprep.subr.bf16.mxu0 0
        %1906 = vmatpush1.bf16.xpose.msra.mxu0 0
        %1907 = vmatprep.subr.bf16.mxu0 0
        %1908 = vmatpush1.bf16.xpose.msra.mxu0 0
        %1909 = vmatprep.subr.bf16.mxu0 0
        %1910 = vmatpush1.bf16.xpose.msra.mxu0 0
        %1911 = vmatprep.subr.bf16.mxu0 0
        %1912 = vmatpush1.bf16.xpose.msra.mxu0 0
        %1913 = vmatprep.subr.bf16.mxu0 0
        %1914 = vmatpush1.bf16.xpose.msra.mxu0 0
        %1915 = vmatprep.mubr.bf16.mxu0 0
        %1916 = vmatmul.mubr.bf16.gmra.mrb[0].mxu0 %v1878
        %v1917 = vpop.f32.mrb[0].mxu0
        %v1918 = vadd.f32 0.0, %v1917
        %v1919 = vpop.f32.mrb[0].mxu0
        %v1920 = vpop.f32.mrb[0].mxu0
        %v1921 = vpop.f32.mrb[0].mxu0
        %1922 = vdwg.mxu0
        %v1923 = vsel %vm903, -inf, %v1768
        %v1924 = vsel %vm903, -inf, %v1818
        %v1925 = vsel %vm903, -inf, %v1868
        %v1926 = vsel %vm903, -inf, %v1918
        %v1927 = vsel %vm708, %v1923, -inf
        %1928 = vmax.xlane.f32.xlu0 %v1927
        %v1929 = vpop.xlane.xlu0 %1928
        %v1930 = vsel %vm708, %v1924, -inf
        %1931 = vmax.xlane.f32.xlu0 %v1930
        %v1932 = vpop.xlane.xlu0 %1931
        %v1933 = vsel %vm708, %v1925, -inf
        %1934 = vmax.xlane.f32.xlu0 %v1933
        %v1935 = vpop.xlane.xlu0 %1934
        %v1936 = vsel %vm708, %v1926, -inf
        %1937 = vmax.xlane.f32.xlu0 %v1936
        %v1938 = vpop.xlane.xlu0 %1937
        %v1939 = vsub.f32 %v1923, %v1929
        %v1940 = vsub.f32 %v1924, %v1932
        %v1941 = vsub.f32 %v1925, %v1935
        %v1942 = vsub.f32 %v1926, %v1938
        %v1943 = vmul.f32 %v1939, 1.442695
        %v1944 = vpow.pop %v1943
        %v1945 = vmul.f32 %v1940, 1.442695
        %v1946 = vpow.pop %v1945
        %v1947 = vmul.f32 %v1941, 1.442695
        %v1948 = vpow.pop %v1947
        %v1949 = vmul.f32 %v1942, 1.442695
        %v1950 = vpow.pop %v1949
        %v1951 = vsel %vm708, %v1944, 0.0
        %1952 = vadd.xlane.f32.xlu0 %v1951
        %v1953 = vpop.xlane.xlu0 %1952
        %v1954 = vsel %vm708, %v1946, 0.0
        %1955 = vadd.xlane.f32.xlu0 %v1954
        %v1956 = vpop.xlane.xlu0 %1955
        %v1957 = vsel %vm708, %v1948, 0.0
        %1958 = vadd.xlane.f32.xlu0 %v1957
        %v1959 = vpop.xlane.xlu0 %1958
        %v1960 = vsel %vm708, %v1950, 0.0
        %1961 = vadd.xlane.f32.xlu0 %v1960
        %v1962 = vpop.xlane.xlu0 %1961
        %v1963 = vrcp.pop %v1953
        %v1964 = vrcp.pop %v1956
        %v1965 = vrcp.pop %v1959
        %v1966 = vrcp.pop %v1962
        %v1967 = vmul.f32 %v1944, %v1963
        %v1968 = vmul.f32 %v1946, %v1964
        %v1969 = vmul.f32 %v1948, %v1965
        %v1970 = vmul.f32 %v1950, %v1966
        %v1971 = vpack.c.bf16 %v1967, %v1967
        %v1972 = vpack.c.bf16 %v1968, %v1968
        %v1973 = vpack.c.bf16 %v1969, %v1969
        %v1974 = vpack.c.bf16 %v1970, %v1970
        %1975 = vrot.lane.b32.xlu0 %v705, 48
        %v1976 = vpop.permute.xlu0 %1975
        %v1978 = vsel %vm708, %v1971, 0
        %v1981 = vsel %vm961, %v1976, 0
        %1983 = vmatprep.subr.bf16.mxu0 0
        %1984 = vmatpush1.bf16.msra.mxu0 %v1981
        %1985 = vmatprep.subr.bf16.mxu0 0
        %1986 = vmatpush1.bf16.msra.mxu0 0
        %1987 = vmatprep.subr.bf16.mxu0 0
        %1988 = vmatpush1.bf16.msra.mxu0 0
        %1989 = vmatprep.subr.bf16.mxu0 0
        %1990 = vmatpush1.bf16.msra.mxu0 0
        %1991 = vmatprep.subr.bf16.mxu0 0
        %1992 = vmatpush1.bf16.msra.mxu0 0
        %1993 = vmatprep.subr.bf16.mxu0 0
        %1994 = vmatpush1.bf16.msra.mxu0 0
        %1995 = vmatprep.subr.bf16.mxu0 0
        %1996 = vmatpush1.bf16.msra.mxu0 0
        %1997 = vmatprep.subr.bf16.mxu0 0
        %1998 = vmatpush1.bf16.msra.mxu0 0
        %1999 = vmatprep.subr.bf16.mxu0 0
        %2000 = vmatpush1.bf16.msra.mxu0 0
        %2001 = vmatprep.subr.bf16.mxu0 0
        %2002 = vmatpush1.bf16.msra.mxu0 0
        %2003 = vmatprep.subr.bf16.mxu0 0
        %2004 = vmatpush1.bf16.msra.mxu0 0
        %2005 = vmatprep.subr.bf16.mxu0 0
        %2006 = vmatpush1.bf16.msra.mxu0 0
        %2007 = vmatprep.subr.bf16.mxu0 0
        %2008 = vmatpush1.bf16.msra.mxu0 0
        %2009 = vmatprep.subr.bf16.mxu0 0
        %2010 = vmatpush1.bf16.msra.mxu0 0
        %2011 = vmatprep.subr.bf16.mxu0 0
        %2012 = vmatpush1.bf16.msra.mxu0 0
        %2013 = vmatprep.subr.bf16.mxu0 0
        %2014 = vmatpush1.bf16.msra.mxu0 0
        %2015 = vmatprep.mubr.bf16.mxu0 0
        %2016 = vmatmul.mubr.bf16.gmra.mrb[0].mxu0 %v1978
        %v2017 = vpop.f32.mrb[0].mxu0
        %v2018 = vadd.f32 0.0, %v2017
        %v2019 = vpop.f32.mrb[0].mxu0
        %v2020 = vpop.f32.mrb[0].mxu0
        %v2021 = vpop.f32.mrb[0].mxu0
        %2022 = vdwg.mxu0
        %2023 = vrot.lane.b32.xlu0 %v755, 48
        %v2024 = vpop.permute.xlu0 %2023
        %v2026 = vsel %vm708, %v1972, 0
        %v2029 = vsel %vm961, %v2024, 0
        %2031 = vmatprep.subr.bf16.mxu0 0
        %2032 = vmatpush1.bf16.msra.mxu0 %v2029
        %2033 = vmatprep.subr.bf16.mxu0 0
        %2034 = vmatpush1.bf16.msra.mxu0 0
        %2035 = vmatprep.subr.bf16.mxu0 0
        %2036 = vmatpush1.bf16.msra.mxu0 0
        %2037 = vmatprep.subr.bf16.mxu0 0
        %2038 = vmatpush1.bf16.msra.mxu0 0
        %2039 = vmatprep.subr.bf16.mxu0 0
        %2040 = vmatpush1.bf16.msra.mxu0 0
        %2041 = vmatprep.subr.bf16.mxu0 0
        %2042 = vmatpush1.bf16.msra.mxu0 0
        %2043 = vmatprep.subr.bf16.mxu0 0
        %2044 = vmatpush1.bf16.msra.mxu0 0
        %2045 = vmatprep.subr.bf16.mxu0 0
        %2046 = vmatpush1.bf16.msra.mxu0 0
        %2047 = vmatprep.subr.bf16.mxu0 0
        %2048 = vmatpush1.bf16.msra.mxu0 0
        %2049 = vmatprep.subr.bf16.mxu0 0
        %2050 = vmatpush1.bf16.msra.mxu0 0
        %2051 = vmatprep.subr.bf16.mxu0 0
        %2052 = vmatpush1.bf16.msra.mxu0 0
        %2053 = vmatprep.subr.bf16.mxu0 0
        %2054 = vmatpush1.bf16.msra.mxu0 0
        %2055 = vmatprep.subr.bf16.mxu0 0
        %2056 = vmatpush1.bf16.msra.mxu0 0
        %2057 = vmatprep.subr.bf16.mxu0 0
        %2058 = vmatpush1.bf16.msra.mxu0 0
        %2059 = vmatprep.subr.bf16.mxu0 0
        %2060 = vmatpush1.bf16.msra.mxu0 0
        %2061 = vmatprep.subr.bf16.mxu0 0
        %2062 = vmatpush1.bf16.msra.mxu0 0
        %2063 = vmatprep.mubr.bf16.mxu0 0
        %2064 = vmatmul.mubr.bf16.gmra.mrb[0].mxu0 %v2026
        %v2065 = vpop.f32.mrb[0].mxu0
        %v2066 = vadd.f32 0.0, %v2065
        %v2067 = vpop.f32.mrb[0].mxu0
        %v2068 = vpop.f32.mrb[0].mxu0
        %v2069 = vpop.f32.mrb[0].mxu0
        %2070 = vdwg.mxu0
        %2071 = vrot.lane.b32.xlu0 %v804, 48
        %v2072 = vpop.permute.xlu0 %2071
        %v2074 = vsel %vm708, %v1973, 0
        %v2077 = vsel %vm961, %v2072, 0
        %2079 = vmatprep.subr.bf16.mxu0 0
        %2080 = vmatpush1.bf16.msra.mxu0 %v2077
        %2081 = vmatprep.subr.bf16.mxu0 0
        %2082 = vmatpush1.bf16.msra.mxu0 0
        %2083 = vmatprep.subr.bf16.mxu0 0
        %2084 = vmatpush1.bf16.msra.mxu0 0
        %2085 = vmatprep.subr.bf16.mxu0 0
        %2086 = vmatpush1.bf16.msra.mxu0 0
        %2087 = vmatprep.subr.bf16.mxu0 0
        %2088 = vmatpush1.bf16.msra.mxu0 0
        %2089 = vmatprep.subr.bf16.mxu0 0
        %2090 = vmatpush1.bf16.msra.mxu0 0
        %2091 = vmatprep.subr.bf16.mxu0 0
        %2092 = vmatpush1.bf16.msra.mxu0 0
        %2093 = vmatprep.subr.bf16.mxu0 0
        %2094 = vmatpush1.bf16.msra.mxu0 0
        %2095 = vmatprep.subr.bf16.mxu0 0
        %2096 = vmatpush1.bf16.msra.mxu0 0
        %2097 = vmatprep.subr.bf16.mxu0 0
        %2098 = vmatpush1.bf16.msra.mxu0 0
        %2099 = vmatprep.subr.bf16.mxu0 0
        %2100 = vmatpush1.bf16.msra.mxu0 0
        %2101 = vmatprep.subr.bf16.mxu0 0
        %2102 = vmatpush1.bf16.msra.mxu0 0
        %2103 = vmatprep.subr.bf16.mxu0 0
        %2104 = vmatpush1.bf16.msra.mxu0 0
        %2105 = vmatprep.subr.bf16.mxu0 0
        %2106 = vmatpush1.bf16.msra.mxu0 0
        %2107 = vmatprep.subr.bf16.mxu0 0
        %2108 = vmatpush1.bf16.msra.mxu0 0
        %2109 = vmatprep.subr.bf16.mxu0 0
        %2110 = vmatpush1.bf16.msra.mxu0 0
        %2111 = vmatprep.mubr.bf16.mxu0 0
        %2112 = vmatmul.mubr.bf16.gmra.mrb[0].mxu0 %v2074
        %v2113 = vpop.f32.mrb[0].mxu0
        %v2114 = vadd.f32 0.0, %v2113
        %v2115 = vpop.f32.mrb[0].mxu0
        %v2116 = vpop.f32.mrb[0].mxu0
        %v2117 = vpop.f32.mrb[0].mxu0
        %2118 = vdwg.mxu0
        %2119 = vrot.lane.b32.xlu0 %v853, 48
        %v2120 = vpop.permute.xlu0 %2119
        %v2122 = vsel %vm708, %v1974, 0
        %v2125 = vsel %vm961, %v2120, 0
        %2127 = vmatprep.subr.bf16.mxu0 0
        %2128 = vmatpush1.bf16.msra.mxu0 %v2125
        %2129 = vmatprep.subr.bf16.mxu0 0
        %2130 = vmatpush1.bf16.msra.mxu0 0
        %2131 = vmatprep.subr.bf16.mxu0 0
        %2132 = vmatpush1.bf16.msra.mxu0 0
        %2133 = vmatprep.subr.bf16.mxu0 0
        %2134 = vmatpush1.bf16.msra.mxu0 0
        %2135 = vmatprep.subr.bf16.mxu0 0
        %2136 = vmatpush1.bf16.msra.mxu0 0
        %2137 = vmatprep.subr.bf16.mxu0 0
        %2138 = vmatpush1.bf16.msra.mxu0 0
        %2139 = vmatprep.subr.bf16.mxu0 0
        %2140 = vmatpush1.bf16.msra.mxu0 0
        %2141 = vmatprep.subr.bf16.mxu0 0
        %2142 = vmatpush1.bf16.msra.mxu0 0
        %2143 = vmatprep.subr.bf16.mxu0 0
        %2144 = vmatpush1.bf16.msra.mxu0 0
        %2145 = vmatprep.subr.bf16.mxu0 0
        %2146 = vmatpush1.bf16.msra.mxu0 0
        %2147 = vmatprep.subr.bf16.mxu0 0
        %2148 = vmatpush1.bf16.msra.mxu0 0
        %2149 = vmatprep.subr.bf16.mxu0 0
        %2150 = vmatpush1.bf16.msra.mxu0 0
        %2151 = vmatprep.subr.bf16.mxu0 0
        %2152 = vmatpush1.bf16.msra.mxu0 0
        %2153 = vmatprep.subr.bf16.mxu0 0
        %2154 = vmatpush1.bf16.msra.mxu0 0
        %2155 = vmatprep.subr.bf16.mxu0 0
        %2156 = vmatpush1.bf16.msra.mxu0 0
        %2157 = vmatprep.subr.bf16.mxu0 0
        %2158 = vmatpush1.bf16.msra.mxu0 0
        %2159 = vmatprep.mubr.bf16.mxu0 0
        %2160 = vmatmul.mubr.bf16.gmra.mrb[0].mxu0 %v2122
        %v2161 = vpop.f32.mrb[0].mxu0
        %v2162 = vadd.f32 0.0, %v2161
        %v2163 = vpop.f32.mrb[0].mxu0
        %v2164 = vpop.f32.mrb[0].mxu0
        %v2165 = vpop.f32.mrb[0].mxu0
        %2166 = vdwg.mxu0
        %v2167 = vpack.c.bf16 %v2066, %v2018
        %v2168 = vpack.c.bf16 %v2162, %v2114
        %v2169 = vld [vmem:[#allocation8 + $0x8] sm:$0xf]
        %v2171 = vsel %vm708, %v2167, 0
        %v2174 = vsel %vm708, %v2168, 0
        %v2177 = vsel %vm961, %v2169, 0
        %2179 = vmatprep.subr.bf16.mxu0 0
        %2180 = vmatpush1.bf16.msra.mxu0 %v2177
        %2181 = vmatprep.subr.bf16.mxu0 0
        %2182 = vmatpush1.bf16.msra.mxu0 0
        %2183 = vmatprep.subr.bf16.mxu0 0
        %2184 = vmatpush1.bf16.msra.mxu0 0
        %2185 = vmatprep.subr.bf16.mxu0 0
        %2186 = vmatpush1.bf16.msra.mxu0 0
        %2187 = vmatprep.subr.bf16.mxu0 0
        %2188 = vmatpush1.bf16.msra.mxu0 0
        %2189 = vmatprep.subr.bf16.mxu0 0
        %2190 = vmatpush1.bf16.msra.mxu0 0
        %2191 = vmatprep.subr.bf16.mxu0 0
        %2192 = vmatpush1.bf16.msra.mxu0 0
        %2193 = vmatprep.subr.bf16.mxu0 0
        %2194 = vmatpush1.bf16.msra.mxu0 0
        %2195 = vmatprep.subr.bf16.mxu0 0
        %2196 = vmatpush1.bf16.msra.mxu0 0
        %2197 = vmatprep.subr.bf16.mxu0 0
        %2198 = vmatpush1.bf16.msra.mxu0 0
        %2199 = vmatprep.subr.bf16.mxu0 0
        %2200 = vmatpush1.bf16.msra.mxu0 0
        %2201 = vmatprep.subr.bf16.mxu0 0
        %2202 = vmatpush1.bf16.msra.mxu0 0
        %2203 = vmatprep.subr.bf16.mxu0 0
        %2204 = vmatpush1.bf16.msra.mxu0 0
        %2205 = vmatprep.subr.bf16.mxu0 0
        %2206 = vmatpush1.bf16.msra.mxu0 0
        %2207 = vmatprep.subr.bf16.mxu0 0
        %2208 = vmatpush1.bf16.msra.mxu0 0
        %2209 = vmatprep.subr.bf16.mxu0 0
        %2210 = vmatpush1.bf16.msra.mxu0 0
        %2211 = vmatprep.mubr.bf16.mxu0 0
        %2212 = vmatmul.mubr.bf16.gmra.mrb[0].mxu0 %v2171
        %v2213 = vpop.f32.mrb[0].mxu0
        %v2214 = vadd.f32 0.0, %v2213
        %v2215 = vpop.f32.mrb[0].mxu0
        %v2216 = vpop.f32.mrb[0].mxu0
        %v2217 = vadd.f32 0.0, %v2216
        %v2218 = vpop.f32.mrb[0].mxu0
        %2219 = vmatprep.mubr.bf16.mxu0 0
        %2220 = vmatmul.mubr.bf16.gmra.mrb[0].mxu0 %v2174
        %v2221 = vpop.f32.mrb[0].mxu0
        %v2222 = vadd.f32 0.0, %v2221
        %v2223 = vpop.f32.mrb[0].mxu0
        %v2224 = vpop.f32.mrb[0].mxu0
        %v2225 = vadd.f32 0.0, %v2224
        %v2226 = vpop.f32.mrb[0].mxu0
        %2227 = vdwg.mxu0
        %v2228 = vadd.f32 %v1719, %v2214
        %v2229 = vadd.f32 %v1720, %v2217
        %v2230 = vadd.f32 %v1721, %v2222
        %v2231 = vadd.f32 %v1722, %v2225
        %2232 = vrot.lane.b32.xlu0 %v695, 104
        %v2233 = vpop.permute.xlu0 %2232
        %2234 = vrot.lane.b32.xlu0 %v705, 72
        %v2235 = vpop.permute.xlu0 %2234
        %v2237 = vsel %vm708, %v2233, 0
        %v2240 = vsel %vm708, %v2235, 0
        %2242 = vmatprep.subr.bf16.mxu0 0
        %2243 = vmatpush1.bf16.xpose.msra.mxu0 %v2240
        %2244 = vmatprep.subr.bf16.mxu0 0
        %2245 = vmatpush1.bf16.xpose.msra.mxu0 0
        %2246 = vmatprep.subr.bf16.mxu0 0
        %2247 = vmatpush1.bf16.xpose.msra.mxu0 0
        %2248 = vmatprep.subr.bf16.mxu0 0
        %2249 = vmatpush1.bf16.xpose.msra.mxu0 0
        %2250 = vmatprep.subr.bf16.mxu0 0
        %2251 = vmatpush1.bf16.xpose.msra.mxu0 0
        %2252 = vmatprep.subr.bf16.mxu0 0
        %2253 = vmatpush1.bf16.xpose.msra.mxu0 0
        %2254 = vmatprep.subr.bf16.mxu0 0
        %2255 = vmatpush1.bf16.xpose.msra.mxu0 0
        %2256 = vmatprep.subr.bf16.mxu0 0
        %2257 = vmatpush1.bf16.xpose.msra.mxu0 0
        %2258 = vmatprep.subr.bf16.mxu0 0
        %2259 = vmatpush1.bf16.xpose.msra.mxu0 0
        %2260 = vmatprep.subr.bf16.mxu0 0
        %2261 = vmatpush1.bf16.xpose.msra.mxu0 0
        %2262 = vmatprep.subr.bf16.mxu0 0
        %2263 = vmatpush1.bf16.xpose.msra.mxu0 0
        %2264 = vmatprep.subr.bf16.mxu0 0
        %2265 = vmatpush1.bf16.xpose.msra.mxu0 0
        %2266 = vmatprep.subr.bf16.mxu0 0
        %2267 = vmatpush1.bf16.xpose.msra.mxu0 0
        %2268 = vmatprep.subr.bf16.mxu0 0
        %2269 = vmatpush1.bf16.xpose.msra.mxu0 0
        %2270 = vmatprep.subr.bf16.mxu0 0
        %2271 = vmatpush1.bf16.xpose.msra.mxu0 0
        %2272 = vmatprep.subr.bf16.mxu0 0
        %2273 = vmatpush1.bf16.xpose.msra.mxu0 0
        %2274 = vmatprep.mubr.bf16.mxu0 0
        %2275 = vmatmul.mubr.bf16.gmra.mrb[0].mxu0 %v2237
        %v2276 = vpop.f32.mrb[0].mxu0
        %v2277 = vadd.f32 0.0, %v2276
        %v2278 = vpop.f32.mrb[0].mxu0
        %v2279 = vpop.f32.mrb[0].mxu0
        %v2280 = vpop.f32.mrb[0].mxu0
        %2281 = vdwg.mxu0
        %2282 = vrot.lane.b32.xlu0 %v696, 104
        %v2283 = vpop.permute.xlu0 %2282
        %2284 = vrot.lane.b32.xlu0 %v755, 72
        %v2285 = vpop.permute.xlu0 %2284
        %v2287 = vsel %vm708, %v2283, 0
        %v2290 = vsel %vm708, %v2285, 0
        %2292 = vmatprep.subr.bf16.mxu0 0
        %2293 = vmatpush1.bf16.xpose.msra.mxu0 %v2290
        %2294 = vmatprep.subr.bf16.mxu0 0
        %2295 = vmatpush1.bf16.xpose.msra.mxu0 0
        %2296 = vmatprep.subr.bf16.mxu0 0
        %2297 = vmatpush1.bf16.xpose.msra.mxu0 0
        %2298 = vmatprep.subr.bf16.mxu0 0
        %2299 = vmatpush1.bf16.xpose.msra.mxu0 0
        %2300 = vmatprep.subr.bf16.mxu0 0
        %2301 = vmatpush1.bf16.xpose.msra.mxu0 0
        %2302 = vmatprep.subr.bf16.mxu0 0
        %2303 = vmatpush1.bf16.xpose.msra.mxu0 0
        %2304 = vmatprep.subr.bf16.mxu0 0
        %2305 = vmatpush1.bf16.xpose.msra.mxu0 0
        %2306 = vmatprep.subr.bf16.mxu0 0
        %2307 = vmatpush1.bf16.xpose.msra.mxu0 0
        %2308 = vmatprep.subr.bf16.mxu0 0
        %2309 = vmatpush1.bf16.xpose.msra.mxu0 0
        %2310 = vmatprep.subr.bf16.mxu0 0
        %2311 = vmatpush1.bf16.xpose.msra.mxu0 0
        %2312 = vmatprep.subr.bf16.mxu0 0
        %2313 = vmatpush1.bf16.xpose.msra.mxu0 0
        %2314 = vmatprep.subr.bf16.mxu0 0
        %2315 = vmatpush1.bf16.xpose.msra.mxu0 0
        %2316 = vmatprep.subr.bf16.mxu0 0
        %2317 = vmatpush1.bf16.xpose.msra.mxu0 0
        %2318 = vmatprep.subr.bf16.mxu0 0
        %2319 = vmatpush1.bf16.xpose.msra.mxu0 0
        %2320 = vmatprep.subr.bf16.mxu0 0
        %2321 = vmatpush1.bf16.xpose.msra.mxu0 0
        %2322 = vmatprep.subr.bf16.mxu0 0
        %2323 = vmatpush1.bf16.xpose.msra.mxu0 0
        %2324 = vmatprep.mubr.bf16.mxu0 0
        %2325 = vmatmul.mubr.bf16.gmra.mrb[0].mxu0 %v2287
        %v2326 = vpop.f32.mrb[0].mxu0
        %v2327 = vadd.f32 0.0, %v2326
        %v2328 = vpop.f32.mrb[0].mxu0
        %v2329 = vpop.f32.mrb[0].mxu0
        %v2330 = vpop.f32.mrb[0].mxu0
        %2331 = vdwg.mxu0
        %2332 = vrot.lane.b32.xlu0 %v697, 104
        %v2333 = vpop.permute.xlu0 %2332
        %2334 = vrot.lane.b32.xlu0 %v804, 72
        %v2335 = vpop.permute.xlu0 %2334
        %v2337 = vsel %vm708, %v2333, 0
        %v2340 = vsel %vm708, %v2335, 0
        %2342 = vmatprep.subr.bf16.mxu0 0
        %2343 = vmatpush1.bf16.xpose.msra.mxu0 %v2340
        %2344 = vmatprep.subr.bf16.mxu0 0
        %2345 = vmatpush1.bf16.xpose.msra.mxu0 0
        %2346 = vmatprep.subr.bf16.mxu0 0
        %2347 = vmatpush1.bf16.xpose.msra.mxu0 0
        %2348 = vmatprep.subr.bf16.mxu0 0
        %2349 = vmatpush1.bf16.xpose.msra.mxu0 0
        %2350 = vmatprep.subr.bf16.mxu0 0
        %2351 = vmatpush1.bf16.xpose.msra.mxu0 0
        %2352 = vmatprep.subr.bf16.mxu0 0
        %2353 = vmatpush1.bf16.xpose.msra.mxu0 0
        %2354 = vmatprep.subr.bf16.mxu0 0
        %2355 = vmatpush1.bf16.xpose.msra.mxu0 0
        %2356 = vmatprep.subr.bf16.mxu0 0
        %2357 = vmatpush1.bf16.xpose.msra.mxu0 0
        %2358 = vmatprep.subr.bf16.mxu0 0
        %2359 = vmatpush1.bf16.xpose.msra.mxu0 0
        %2360 = vmatprep.subr.bf16.mxu0 0
        %2361 = vmatpush1.bf16.xpose.msra.mxu0 0
        %2362 = vmatprep.subr.bf16.mxu0 0
        %2363 = vmatpush1.bf16.xpose.msra.mxu0 0
        %2364 = vmatprep.subr.bf16.mxu0 0
        %2365 = vmatpush1.bf16.xpose.msra.mxu0 0
        %2366 = vmatprep.subr.bf16.mxu0 0
        %2367 = vmatpush1.bf16.xpose.msra.mxu0 0
        %2368 = vmatprep.subr.bf16.mxu0 0
        %2369 = vmatpush1.bf16.xpose.msra.mxu0 0
        %2370 = vmatprep.subr.bf16.mxu0 0
        %2371 = vmatpush1.bf16.xpose.msra.mxu0 0
        %2372 = vmatprep.subr.bf16.mxu0 0
        %2373 = vmatpush1.bf16.xpose.msra.mxu0 0
        %2374 = vmatprep.mubr.bf16.mxu0 0
        %2375 = vmatmul.mubr.bf16.gmra.mrb[0].mxu0 %v2337
        %v2376 = vpop.f32.mrb[0].mxu0
        %v2377 = vadd.f32 0.0, %v2376
        %v2378 = vpop.f32.mrb[0].mxu0
        %v2379 = vpop.f32.mrb[0].mxu0
        %v2380 = vpop.f32.mrb[0].mxu0
        %2381 = vdwg.mxu0
        %2382 = vrot.lane.b32.xlu0 %v698, 104
        %v2383 = vpop.permute.xlu0 %2382
        %2384 = vrot.lane.b32.xlu0 %v853, 72
        %v2385 = vpop.permute.xlu0 %2384
        %v2387 = vsel %vm708, %v2383, 0
        %v2390 = vsel %vm708, %v2385, 0
        %2392 = vmatprep.subr.bf16.mxu0 0
        %2393 = vmatpush1.bf16.xpose.msra.mxu0 %v2390
        %2394 = vmatprep.subr.bf16.mxu0 0
        %2395 = vmatpush1.bf16.xpose.msra.mxu0 0
        %2396 = vmatprep.subr.bf16.mxu0 0
        %2397 = vmatpush1.bf16.xpose.msra.mxu0 0
        %2398 = vmatprep.subr.bf16.mxu0 0
        %2399 = vmatpush1.bf16.xpose.msra.mxu0 0
        %2400 = vmatprep.subr.bf16.mxu0 0
        %2401 = vmatpush1.bf16.xpose.msra.mxu0 0
        %2402 = vmatprep.subr.bf16.mxu0 0
        %2403 = vmatpush1.bf16.xpose.msra.mxu0 0
        %2404 = vmatprep.subr.bf16.mxu0 0
        %2405 = vmatpush1.bf16.xpose.msra.mxu0 0
        %2406 = vmatprep.subr.bf16.mxu0 0
        %2407 = vmatpush1.bf16.xpose.msra.mxu0 0
        %2408 = vmatprep.subr.bf16.mxu0 0
        %2409 = vmatpush1.bf16.xpose.msra.mxu0 0
        %2410 = vmatprep.subr.bf16.mxu0 0
        %2411 = vmatpush1.bf16.xpose.msra.mxu0 0
        %2412 = vmatprep.subr.bf16.mxu0 0
        %2413 = vmatpush1.bf16.xpose.msra.mxu0 0
        %2414 = vmatprep.subr.bf16.mxu0 0
        %2415 = vmatpush1.bf16.xpose.msra.mxu0 0
        %2416 = vmatprep.subr.bf16.mxu0 0
        %2417 = vmatpush1.bf16.xpose.msra.mxu0 0
        %2418 = vmatprep.subr.bf16.mxu0 0
        %2419 = vmatpush1.bf16.xpose.msra.mxu0 0
        %2420 = vmatprep.subr.bf16.mxu0 0
        %2421 = vmatpush1.bf16.xpose.msra.mxu0 0
        %2422 = vmatprep.subr.bf16.mxu0 0
        %2423 = vmatpush1.bf16.xpose.msra.mxu0 0
        %2424 = vmatprep.mubr.bf16.mxu0 0
        %2425 = vmatmul.mubr.bf16.gmra.mrb[0].mxu0 %v2387
        %v2426 = vpop.f32.mrb[0].mxu0
        %v2427 = vadd.f32 0.0, %v2426
        %v2428 = vpop.f32.mrb[0].mxu0
        %v2429 = vpop.f32.mrb[0].mxu0
        %v2430 = vpop.f32.mrb[0].mxu0
        %2431 = vdwg.mxu0
        %v2432 = vsel %vm903, -inf, %v2277
        %v2433 = vsel %vm903, -inf, %v2327
        %v2434 = vsel %vm903, -inf, %v2377
        %v2435 = vsel %vm903, -inf, %v2427
        %v2436 = vsel %vm708, %v2432, -inf
        %2437 = vmax.xlane.f32.xlu0 %v2436
        %v2438 = vpop.xlane.xlu0 %2437
        %v2439 = vsel %vm708, %v2433, -inf
        %2440 = vmax.xlane.f32.xlu0 %v2439
        %v2441 = vpop.xlane.xlu0 %2440
        %v2442 = vsel %vm708, %v2434, -inf
        %2443 = vmax.xlane.f32.xlu0 %v2442
        %v2444 = vpop.xlane.xlu0 %2443
        %v2445 = vsel %vm708, %v2435, -inf
        %2446 = vmax.xlane.f32.xlu0 %v2445
        %v2447 = vpop.xlane.xlu0 %2446
        %v2448 = vsub.f32 %v2432, %v2438
        %v2449 = vsub.f32 %v2433, %v2441
        %v2450 = vsub.f32 %v2434, %v2444
        %v2451 = vsub.f32 %v2435, %v2447
        %v2452 = vmul.f32 %v2448, 1.442695
        %v2453 = vpow.pop %v2452
        %v2454 = vmul.f32 %v2449, 1.442695
        %v2455 = vpow.pop %v2454
        %v2456 = vmul.f32 %v2450, 1.442695
        %v2457 = vpow.pop %v2456
        %v2458 = vmul.f32 %v2451, 1.442695
        %v2459 = vpow.pop %v2458
        %v2460 = vsel %vm708, %v2453, 0.0
        %2461 = vadd.xlane.f32.xlu0 %v2460
        %v2462 = vpop.xlane.xlu0 %2461
        %v2463 = vsel %vm708, %v2455, 0.0
        %2464 = vadd.xlane.f32.xlu0 %v2463
        %v2465 = vpop.xlane.xlu0 %2464
        %v2466 = vsel %vm708, %v2457, 0.0
        %2467 = vadd.xlane.f32.xlu0 %v2466
        %v2468 = vpop.xlane.xlu0 %2467
        %v2469 = vsel %vm708, %v2459, 0.0
        %2470 = vadd.xlane.f32.xlu0 %v2469
        %v2471 = vpop.xlane.xlu0 %2470
        %v2472 = vrcp.pop %v2462
        %v2473 = vrcp.pop %v2465
        %v2474 = vrcp.pop %v2468
        %v2475 = vrcp.pop %v2471
        %v2476 = vmul.f32 %v2453, %v2472
        %v2477 = vmul.f32 %v2455, %v2473
        %v2478 = vmul.f32 %v2457, %v2474
        %v2479 = vmul.f32 %v2459, %v2475
        %v2480 = vpack.c.bf16 %v2476, %v2476
        %v2481 = vpack.c.bf16 %v2477, %v2477
        %v2482 = vpack.c.bf16 %v2478, %v2478
        %v2483 = vpack.c.bf16 %v2479, %v2479
        %2484 = vrot.lane.b32.xlu0 %v705, 40
        %v2485 = vpop.permute.xlu0 %2484
        %v2487 = vsel %vm708, %v2480, 0
        %v2490 = vsel %vm961, %v2485, 0
        %2492 = vmatprep.subr.bf16.mxu0 0
        %2493 = vmatpush1.bf16.msra.mxu0 %v2490
        %2494 = vmatprep.subr.bf16.mxu0 0
        %2495 = vmatpush1.bf16.msra.mxu0 0
        %2496 = vmatprep.subr.bf16.mxu0 0
        %2497 = vmatpush1.bf16.msra.mxu0 0
        %2498 = vmatprep.subr.bf16.mxu0 0
        %2499 = vmatpush1.bf16.msra.mxu0 0
        %2500 = vmatprep.subr.bf16.mxu0 0
        %2501 = vmatpush1.bf16.msra.mxu0 0
        %2502 = vmatprep.subr.bf16.mxu0 0
        %2503 = vmatpush1.bf16.msra.mxu0 0
        %2504 = vmatprep.subr.bf16.mxu0 0
        %2505 = vmatpush1.bf16.msra.mxu0 0
        %2506 = vmatprep.subr.bf16.mxu0 0
        %2507 = vmatpush1.bf16.msra.mxu0 0
        %2508 = vmatprep.subr.bf16.mxu0 0
        %2509 = vmatpush1.bf16.msra.mxu0 0
        %2510 = vmatprep.subr.bf16.mxu0 0
        %2511 = vmatpush1.bf16.msra.mxu0 0
        %2512 = vmatprep.subr.bf16.mxu0 0
        %2513 = vmatpush1.bf16.msra.mxu0 0
        %2514 = vmatprep.subr.bf16.mxu0 0
        %2515 = vmatpush1.bf16.msra.mxu0 0
        %2516 = vmatprep.subr.bf16.mxu0 0
        %2517 = vmatpush1.bf16.msra.mxu0 0
        %2518 = vmatprep.subr.bf16.mxu0 0
        %2519 = vmatpush1.bf16.msra.mxu0 0
        %2520 = vmatprep.subr.bf16.mxu0 0
        %2521 = vmatpush1.bf16.msra.mxu0 0
        %2522 = vmatprep.subr.bf16.mxu0 0
        %2523 = vmatpush1.bf16.msra.mxu0 0
        %2524 = vmatprep.mubr.bf16.mxu0 0
        %2525 = vmatmul.mubr.bf16.gmra.mrb[0].mxu0 %v2487
        %v2526 = vpop.f32.mrb[0].mxu0
        %v2527 = vadd.f32 0.0, %v2526
        %v2528 = vpop.f32.mrb[0].mxu0
        %v2529 = vpop.f32.mrb[0].mxu0
        %v2530 = vpop.f32.mrb[0].mxu0
        %2531 = vdwg.mxu0
        %2532 = vrot.lane.b32.xlu0 %v755, 40
        %v2533 = vpop.permute.xlu0 %2532
        %v2535 = vsel %vm708, %v2481, 0
        %v2538 = vsel %vm961, %v2533, 0
        %2540 = vmatprep.subr.bf16.mxu0 0
        %2541 = vmatpush1.bf16.msra.mxu0 %v2538
        %2542 = vmatprep.subr.bf16.mxu0 0
        %2543 = vmatpush1.bf16.msra.mxu0 0
        %2544 = vmatprep.subr.bf16.mxu0 0
        %2545 = vmatpush1.bf16.msra.mxu0 0
        %2546 = vmatprep.subr.bf16.mxu0 0
        %2547 = vmatpush1.bf16.msra.mxu0 0
        %2548 = vmatprep.subr.bf16.mxu0 0
        %2549 = vmatpush1.bf16.msra.mxu0 0
        %2550 = vmatprep.subr.bf16.mxu0 0
        %2551 = vmatpush1.bf16.msra.mxu0 0
        %2552 = vmatprep.subr.bf16.mxu0 0
        %2553 = vmatpush1.bf16.msra.mxu0 0
        %2554 = vmatprep.subr.bf16.mxu0 0
        %2555 = vmatpush1.bf16.msra.mxu0 0
        %2556 = vmatprep.subr.bf16.mxu0 0
        %2557 = vmatpush1.bf16.msra.mxu0 0
        %2558 = vmatprep.subr.bf16.mxu0 0
        %2559 = vmatpush1.bf16.msra.mxu0 0
        %2560 = vmatprep.subr.bf16.mxu0 0
        %2561 = vmatpush1.bf16.msra.mxu0 0
        %2562 = vmatprep.subr.bf16.mxu0 0
        %2563 = vmatpush1.bf16.msra.mxu0 0
        %2564 = vmatprep.subr.bf16.mxu0 0
        %2565 = vmatpush1.bf16.msra.mxu0 0
        %2566 = vmatprep.subr.bf16.mxu0 0
        %2567 = vmatpush1.bf16.msra.mxu0 0
        %2568 = vmatprep.subr.bf16.mxu0 0
        %2569 = vmatpush1.bf16.msra.mxu0 0
        %2570 = vmatprep.subr.bf16.mxu0 0
        %2571 = vmatpush1.bf16.msra.mxu0 0
        %2572 = vmatprep.mubr.bf16.mxu0 0
        %2573 = vmatmul.mubr.bf16.gmra.mrb[0].mxu0 %v2535
        %v2574 = vpop.f32.mrb[0].mxu0
        %v2575 = vadd.f32 0.0, %v2574
        %v2576 = vpop.f32.mrb[0].mxu0
        %v2577 = vpop.f32.mrb[0].mxu0
        %v2578 = vpop.f32.mrb[0].mxu0
        %2579 = vdwg.mxu0
        %2580 = vrot.lane.b32.xlu0 %v804, 40
        %v2581 = vpop.permute.xlu0 %2580
        %v2583 = vsel %vm708, %v2482, 0
        %v2586 = vsel %vm961, %v2581, 0
        %2588 = vmatprep.subr.bf16.mxu0 0
        %2589 = vmatpush1.bf16.msra.mxu0 %v2586
        %2590 = vmatprep.subr.bf16.mxu0 0
        %2591 = vmatpush1.bf16.msra.mxu0 0
        %2592 = vmatprep.subr.bf16.mxu0 0
        %2593 = vmatpush1.bf16.msra.mxu0 0
        %2594 = vmatprep.subr.bf16.mxu0 0
        %2595 = vmatpush1.bf16.msra.mxu0 0
        %2596 = vmatprep.subr.bf16.mxu0 0
        %2597 = vmatpush1.bf16.msra.mxu0 0
        %2598 = vmatprep.subr.bf16.mxu0 0
        %2599 = vmatpush1.bf16.msra.mxu0 0
        %2600 = vmatprep.subr.bf16.mxu0 0
        %2601 = vmatpush1.bf16.msra.mxu0 0
        %2602 = vmatprep.subr.bf16.mxu0 0
        %2603 = vmatpush1.bf16.msra.mxu0 0
        %2604 = vmatprep.subr.bf16.mxu0 0
        %2605 = vmatpush1.bf16.msra.mxu0 0
        %2606 = vmatprep.subr.bf16.mxu0 0
        %2607 = vmatpush1.bf16.msra.mxu0 0
        %2608 = vmatprep.subr.bf16.mxu0 0
        %2609 = vmatpush1.bf16.msra.mxu0 0
        %2610 = vmatprep.subr.bf16.mxu0 0
        %2611 = vmatpush1.bf16.msra.mxu0 0
        %2612 = vmatprep.subr.bf16.mxu0 0
        %2613 = vmatpush1.bf16.msra.mxu0 0
        %2614 = vmatprep.subr.bf16.mxu0 0
        %2615 = vmatpush1.bf16.msra.mxu0 0
        %2616 = vmatprep.subr.bf16.mxu0 0
        %2617 = vmatpush1.bf16.msra.mxu0 0
        %2618 = vmatprep.subr.bf16.mxu0 0
        %2619 = vmatpush1.bf16.msra.mxu0 0
        %2620 = vmatprep.mubr.bf16.mxu0 0
        %2621 = vmatmul.mubr.bf16.gmra.mrb[0].mxu0 %v2583
        %v2622 = vpop.f32.mrb[0].mxu0
        %v2623 = vadd.f32 0.0, %v2622
        %v2624 = vpop.f32.mrb[0].mxu0
        %v2625 = vpop.f32.mrb[0].mxu0
        %v2626 = vpop.f32.mrb[0].mxu0
        %2627 = vdwg.mxu0
        %2628 = vrot.lane.b32.xlu0 %v853, 40
        %v2629 = vpop.permute.xlu0 %2628
        %v2631 = vsel %vm708, %v2483, 0
        %v2634 = vsel %vm961, %v2629, 0
        %2636 = vmatprep.subr.bf16.mxu0 0
        %2637 = vmatpush1.bf16.msra.mxu0 %v2634
        %2638 = vmatprep.subr.bf16.mxu0 0
        %2639 = vmatpush1.bf16.msra.mxu0 0
        %2640 = vmatprep.subr.bf16.mxu0 0
        %2641 = vmatpush1.bf16.msra.mxu0 0
        %2642 = vmatprep.subr.bf16.mxu0 0
        %2643 = vmatpush1.bf16.msra.mxu0 0
        %2644 = vmatprep.subr.bf16.mxu0 0
        %2645 = vmatpush1.bf16.msra.mxu0 0
        %2646 = vmatprep.subr.bf16.mxu0 0
        %2647 = vmatpush1.bf16.msra.mxu0 0
        %2648 = vmatprep.subr.bf16.mxu0 0
        %2649 = vmatpush1.bf16.msra.mxu0 0
        %2650 = vmatprep.subr.bf16.mxu0 0
        %2651 = vmatpush1.bf16.msra.mxu0 0
        %2652 = vmatprep.subr.bf16.mxu0 0
        %2653 = vmatpush1.bf16.msra.mxu0 0
        %2654 = vmatprep.subr.bf16.mxu0 0
        %2655 = vmatpush1.bf16.msra.mxu0 0
        %2656 = vmatprep.subr.bf16.mxu0 0
        %2657 = vmatpush1.bf16.msra.mxu0 0
        %2658 = vmatprep.subr.bf16.mxu0 0
        %2659 = vmatpush1.bf16.msra.mxu0 0
        %2660 = vmatprep.subr.bf16.mxu0 0
        %2661 = vmatpush1.bf16.msra.mxu0 0
        %2662 = vmatprep.subr.bf16.mxu0 0
        %2663 = vmatpush1.bf16.msra.mxu0 0
        %2664 = vmatprep.subr.bf16.mxu0 0
        %2665 = vmatpush1.bf16.msra.mxu0 0
        %2666 = vmatprep.subr.bf16.mxu0 0
        %2667 = vmatpush1.bf16.msra.mxu0 0
        %2668 = vmatprep.mubr.bf16.mxu0 0
        %2669 = vmatmul.mubr.bf16.gmra.mrb[0].mxu0 %v2631
        %v2670 = vpop.f32.mrb[0].mxu0
        %v2671 = vadd.f32 0.0, %v2670
        %v2672 = vpop.f32.mrb[0].mxu0
        %v2673 = vpop.f32.mrb[0].mxu0
        %v2674 = vpop.f32.mrb[0].mxu0
        %2675 = vdwg.mxu0
        %v2676 = vpack.c.bf16 %v2575, %v2527
        %v2677 = vpack.c.bf16 %v2671, %v2623
        %v2678 = vld [vmem:[#allocation8 + $0xc] sm:$0xf]
        %v2680 = vsel %vm708, %v2676, 0
        %v2683 = vsel %vm708, %v2677, 0
        %v2686 = vsel %vm961, %v2678, 0
        %2688 = vmatprep.subr.bf16.mxu0 0
        %2689 = vmatpush1.bf16.msra.mxu0 %v2686
        %2690 = vmatprep.subr.bf16.mxu0 0
        %2691 = vmatpush1.bf16.msra.mxu0 0
        %2692 = vmatprep.subr.bf16.mxu0 0
        %2693 = vmatpush1.bf16.msra.mxu0 0
        %2694 = vmatprep.subr.bf16.mxu0 0
        %2695 = vmatpush1.bf16.msra.mxu0 0
        %2696 = vmatprep.subr.bf16.mxu0 0
        %2697 = vmatpush1.bf16.msra.mxu0 0
        %2698 = vmatprep.subr.bf16.mxu0 0
        %2699 = vmatpush1.bf16.msra.mxu0 0
        %2700 = vmatprep.subr.bf16.mxu0 0
        %2701 = vmatpush1.bf16.msra.mxu0 0
        %2702 = vmatprep.subr.bf16.mxu0 0
        %2703 = vmatpush1.bf16.msra.mxu0 0
        %2704 = vmatprep.subr.bf16.mxu0 0
        %2705 = vmatpush1.bf16.msra.mxu0 0
        %2706 = vmatprep.subr.bf16.mxu0 0
        %2707 = vmatpush1.bf16.msra.mxu0 0
        %2708 = vmatprep.subr.bf16.mxu0 0
        %2709 = vmatpush1.bf16.msra.mxu0 0
        %2710 = vmatprep.subr.bf16.mxu0 0
        %2711 = vmatpush1.bf16.msra.mxu0 0
        %2712 = vmatprep.subr.bf16.mxu0 0
        %2713 = vmatpush1.bf16.msra.mxu0 0
        %2714 = vmatprep.subr.bf16.mxu0 0
        %2715 = vmatpush1.bf16.msra.mxu0 0
        %2716 = vmatprep.subr.bf16.mxu0 0
        %2717 = vmatpush1.bf16.msra.mxu0 0
        %2718 = vmatprep.subr.bf16.mxu0 0
        %2719 = vmatpush1.bf16.msra.mxu0 0
        %2720 = vmatprep.mubr.bf16.mxu0 0
        %2721 = vmatmul.mubr.bf16.gmra.mrb[0].mxu0 %v2680
        %v2722 = vpop.f32.mrb[0].mxu0
        %v2723 = vadd.f32 0.0, %v2722
        %v2724 = vpop.f32.mrb[0].mxu0
        %v2725 = vpop.f32.mrb[0].mxu0
        %v2726 = vadd.f32 0.0, %v2725
        %v2727 = vpop.f32.mrb[0].mxu0
        %2728 = vmatprep.mubr.bf16.mxu0 0
        %2729 = vmatmul.mubr.bf16.gmra.mrb[0].mxu0 %v2683
        %v2730 = vpop.f32.mrb[0].mxu0
        %v2731 = vadd.f32 0.0, %v2730
        %v2732 = vpop.f32.mrb[0].mxu0
        %v2733 = vpop.f32.mrb[0].mxu0
        %v2734 = vadd.f32 0.0, %v2733
        %v2735 = vpop.f32.mrb[0].mxu0
        %2736 = vdwg.mxu0
        %v2737 = vadd.f32 %v2228, %v2723
        %v2738 = vadd.f32 %v2229, %v2726
        %v2739 = vadd.f32 %v2230, %v2731
        %v2740 = vadd.f32 %v2231, %v2734
        %v2741 = vadd.f32 %v508, %v2737
        %v2742 = vadd.f32 %v509, %v2738
        %v2743 = vadd.f32 %v510, %v2739
        %v2744 = vadd.f32 %v511, %v2740
        %v2745 = vld [vmem:[#allocation2] sm:$0x1]
        %v2746 = vld [vmem:[#allocation5] sm:$0x1]
        %v2747 = vsel %vm514, %v2741, 0.0
        %2748 = vadd.xlane.f32.xlu0 %v2747
        %v2749 = vpop.xlane.xlu0 %2748
        %v2750 = vsel %vm514, %v2742, 0.0
        %2751 = vadd.xlane.f32.xlu0 %v2750
        %v2752 = vpop.xlane.xlu0 %2751
        %v2753 = vsel %vm514, %v2743, 0.0
        %2754 = vadd.xlane.f32.xlu0 %v2753
        %v2755 = vpop.xlane.xlu0 %2754
        %v2756 = vsel %vm514, %v2744, 0.0
        %2757 = vadd.xlane.f32.xlu0 %v2756
        %v2758 = vpop.xlane.xlu0 %2757
        %v2759 = vmul.f32 %v2749, %v527
        %v2760 = vmul.f32 %v2752, %v527
        %v2761 = vmul.f32 %v2755, %v527
        %v2762 = vmul.f32 %v2758, %v527
        %v2763 = vsub.f32 %v2741, %v2759
        %v2764 = vsub.f32 %v2742, %v2760
        %v2765 = vsub.f32 %v2743, %v2761
        %v2766 = vsub.f32 %v2744, %v2762
        %v2767 = vmul.f32 %v2763, %v2763
        %v2768 = vmul.f32 %v2764, %v2764
        %v2769 = vmul.f32 %v2765, %v2765
        %v2770 = vmul.f32 %v2766, %v2766
        %v2771 = vsel %vm514, %v2767, 0.0
        %2772 = vadd.xlane.f32.xlu0 %v2771
        %v2773 = vpop.xlane.xlu0 %2772
        %v2774 = vsel %vm514, %v2768, 0.0
        %2775 = vadd.xlane.f32.xlu0 %v2774
        %v2776 = vpop.xlane.xlu0 %2775
        %v2777 = vsel %vm514, %v2769, 0.0
        %2778 = vadd.xlane.f32.xlu0 %v2777
        %v2779 = vpop.xlane.xlu0 %2778
        %v2780 = vsel %vm514, %v2770, 0.0
        %2781 = vadd.xlane.f32.xlu0 %v2780
        %v2782 = vpop.xlane.xlu0 %2781
        %v2783 = vmul.f32 %v2773, %v527
        %v2784 = vmul.f32 %v2776, %v527
        %v2785 = vmul.f32 %v2779, %v527
        %v2786 = vmul.f32 %v2782, %v527
        %v2787 = vadd.f32 %v2783, 1e-05
        %v2788 = vadd.f32 %v2784, 1e-05
        %v2789 = vadd.f32 %v2785, 1e-05
        %v2790 = vadd.f32 %v2786, 1e-05
        %v2791 = vrsqrt.pop %v2787
        %v2792 = vrsqrt.pop %v2788
        %v2793 = vrsqrt.pop %v2789
        %v2794 = vrsqrt.pop %v2790
        %v2795 = vmul.f32 %v2763, %v2791
        %v2796 = vmul.f32 %v2764, %v2792
        %v2797 = vmul.f32 %v2765, %v2793
        %v2798 = vmul.f32 %v2766, %v2794
        %v2800 = vlaneseq
        %v2801 = vshrl.u32 %v2800, 7
        %v2802 = vsub.s32 0, %v2801
        %v2803 = vrot.slane %v2745, %v2802
        %v2805 = vmul.f32 %v2795, %v2803
        %v2806 = vmul.f32 %v2796, %v2803
        %v2807 = vmul.f32 %v2797, %v2803
        %v2808 = vmul.f32 %v2798, %v2803
        %v2810 = vlaneseq
        %v2811 = vshrl.u32 %v2810, 7
        %v2812 = vsub.s32 0, %v2811
        %v2813 = vrot.slane %v2746, %v2812
        %v2815 = vadd.f32 %v2805, %v2813
        %v2816 = vadd.f32 %v2806, %v2813
        %v2817 = vadd.f32 %v2807, %v2813
        %v2818 = vadd.f32 %v2808, %v2813
        %v2819 = vpack.c.bf16 %v2816, %v2815
        %v2820 = vpack.c.bf16 %v2818, %v2817
        %v2821 = vld [vmem:[%s12] sm:$0x1]
        %v2823 = vlaneseq
        %v2824 = vshrl.u32 %v2823, 7
        %v2825 = vsub.s32 0, %v2824
        %v2826 = vrot.slane %v2821, %v2825
        %v2828 = vadd.f32 %v2826, 0.0
        %v2829 = vld [vmem:[%s9] sm:$0xf]
        %v2830 = vld [vmem:[%s9 + $0x4] sm:$0xf]
        %v2831 = vld [vmem:[%s9 + $0x8] sm:$0xf]
        %v2832 = vld [vmem:[%s9 + $0xc] sm:$0xf]
        %v2833 = vld [vmem:[%s10] sm:$0x1]
        %v2835 = vlaneseq
        %v2836 = vshrl.u32 %v2835, 7
        %v2837 = vsub.s32 0, %v2836
        %v2838 = vrot.slane %v2833, %v2837
        %v2844 = vunpack.c.l.b16 %v2829
        %v2845 = vunpack.c.l.b16 %v2830
        %v2846 = vunpack.c.l.b16 %v2831
        %v2847 = vunpack.c.l.b16 %v2832
        %v2848 = vpack.c.b16 %v2845, %v2844
        %v2849 = vpack.c.b16 %v2847, %v2846
        %v2853 = vsel %vm514, %v2819, 0
        %v2856 = vsel %vm514, %v2820, 0
        %2858 = vmatprep.subr.bf16.mxu0 0
        %2859 = vmatpush1.bf16.msra.mxu0 %v2848
        %2860 = vmatprep.subr.bf16.mxu0 0
        %2861 = vmatpush1.bf16.msra.mxu0 %v2849
        %2862 = vmatprep.subr.bf16.mxu0 0
        %2863 = vmatpush1.bf16.msra.mxu0 0
        %2864 = vmatprep.subr.bf16.mxu0 0
        %2865 = vmatpush1.bf16.msra.mxu0 0
        %2866 = vmatprep.subr.bf16.mxu0 0
        %2867 = vmatpush1.bf16.msra.mxu0 0
        %2868 = vmatprep.subr.bf16.mxu0 0
        %2869 = vmatpush1.bf16.msra.mxu0 0
        %2870 = vmatprep.subr.bf16.mxu0 0
        %2871 = vmatpush1.bf16.msra.mxu0 0
        %2872 = vmatprep.subr.bf16.mxu0 0
        %2873 = vmatpush1.bf16.msra.mxu0 0
        %2874 = vmatprep.subr.bf16.mxu0 0
        %2875 = vmatpush1.bf16.msra.mxu0 0
        %2876 = vmatprep.subr.bf16.mxu0 0
        %2877 = vmatpush1.bf16.msra.mxu0 0
        %2878 = vmatprep.subr.bf16.mxu0 0
        %2879 = vmatpush1.bf16.msra.mxu0 0
        %2880 = vmatprep.subr.bf16.mxu0 0
        %2881 = vmatpush1.bf16.msra.mxu0 0
        %2882 = vmatprep.subr.bf16.mxu0 0
        %2883 = vmatpush1.bf16.msra.mxu0 0
        %2884 = vmatprep.subr.bf16.mxu0 0
        %2885 = vmatpush1.bf16.msra.mxu0 0
        %2886 = vmatprep.subr.bf16.mxu0 0
        %2887 = vmatpush1.bf16.msra.mxu0 0
        %2888 = vmatprep.subr.bf16.mxu0 0
        %2889 = vmatpush1.bf16.msra.mxu0 0
        %2890 = vmatprep.mubr.bf16.mxu0 0
        %2891 = vmatmul.mubr.bf16.gmra.mrb[0].mxu0 %v2853
        %v2892 = vpop.f32.mrb[0].mxu0
        %v2893 = vadd.f32 %v2838, %v2892
        %v2894 = vpop.f32.mrb[0].mxu0
        %v2895 = vpop.f32.mrb[0].mxu0
        %v2896 = vadd.f32 %v2838, %v2895
        %v2897 = vpop.f32.mrb[0].mxu0
        %2898 = vmatprep.mubr.bf16.mxu0 0
        %2899 = vmatmul.mubr.bf16.gmra.mrb[0].mxu0 %v2856
        %v2900 = vpop.f32.mrb[0].mxu0
        %v2901 = vadd.f32 %v2838, %v2900
        %v2902 = vpop.f32.mrb[0].mxu0
        %v2903 = vpop.f32.mrb[0].mxu0
        %v2904 = vadd.f32 %v2838, %v2903
        %v2905 = vpop.f32.mrb[0].mxu0
        %2906 = vdwg.mxu0
        %v2907 = vmul.f32 %v2893, 1.782
        %v2908 = vmul.f32 %v2896, 1.782
        %v2909 = vmul.f32 %v2901, 1.782
        %v2910 = vmul.f32 %v2904, 1.782
        %v2911 = vxor.u32 %v2907, 2147483648
        %v2912 = vxor.u32 %v2908, 2147483648
        %v2913 = vxor.u32 %v2909, 2147483648
        %v2914 = vxor.u32 %v2910, 2147483648
        %v2915 = vmul.f32 %v2911, 1.442695
        %v2916 = vpow.pop %v2915
        %v2917 = vmul.f32 %v2912, 1.442695
        %v2918 = vpow.pop %v2917
        %v2919 = vmul.f32 %v2913, 1.442695
        %v2920 = vpow.pop %v2919
        %v2921 = vmul.f32 %v2914, 1.442695
        %v2922 = vpow.pop %v2921
        %v2923 = vadd.f32 %v2916, 1.0
        %v2924 = vadd.f32 %v2918, 1.0
        %v2925 = vadd.f32 %v2920, 1.0
        %v2926 = vadd.f32 %v2922, 1.0
        %v2927 = vrcp.pop %v2923
        %v2928 = vmul.f32 1.0, %v2927
        %v2929 = vrcp.pop %v2924
        %v2930 = vmul.f32 1.0, %v2929
        %v2931 = vrcp.pop %v2925
        %v2932 = vmul.f32 1.0, %v2931
        %v2933 = vrcp.pop %v2926
        %v2934 = vmul.f32 1.0, %v2933
        %v2935 = vmul.f32 %v2893, %v2928
        %v2936 = vmul.f32 %v2896, %v2930
        %v2937 = vmul.f32 %v2901, %v2932
        %v2938 = vmul.f32 %v2904, %v2934
        %v2939 = vpack.c.bf16 %v2936, %v2935
        %v2940 = vpack.c.bf16 %v2938, %v2937
        %v2941 = vld [vmem:[%s11] sm:$0xf]
        %v2942 = vld [vmem:[%s11 + $0x4] sm:$0xf]
        %v2943 = vld [vmem:[%s11 + $0x8] sm:$0xf]
        %v2944 = vld [vmem:[%s11 + $0xc] sm:$0xf]
        %v2945 = vld [vmem:[%s11 + $0x10] sm:$0xf]
        %v2946 = vld [vmem:[%s11 + $0x14] sm:$0xf]
        %v2947 = vld [vmem:[%s11 + $0x18] sm:$0xf]
        %v2948 = vld [vmem:[%s11 + $0x1c] sm:$0xf]
        %v2949 = vld [vmem:[%s11 + $0x20] sm:$0xf]
        %v2950 = vld [vmem:[%s11 + $0x24] sm:$0xf]
        %v2951 = vld [vmem:[%s11 + $0x28] sm:$0xf]
        %v2952 = vld [vmem:[%s11 + $0x2c] sm:$0xf]
        %v2953 = vld [vmem:[%s11 + $0x30] sm:$0xf]
        %v2954 = vld [vmem:[%s11 + $0x34] sm:$0xf]
        %v2955 = vld [vmem:[%s11 + $0x38] sm:$0xf]
        %v2956 = vld [vmem:[%s11 + $0x3c] sm:$0xf]
        %v2973 = vunpack.c.l.b16 %v2941
        %v2974 = vunpack.c.l.b16 %v2942
        %v2975 = vunpack.c.l.b16 %v2943
        %v2976 = vunpack.c.l.b16 %v2944
        %v2977 = vunpack.c.l.b16 %v2945
        %v2978 = vunpack.c.l.b16 %v2946
        %v2979 = vunpack.c.l.b16 %v2947
        %v2980 = vunpack.c.l.b16 %v2948
        %v2981 = vunpack.c.l.b16 %v2949
        %v2982 = vunpack.c.l.b16 %v2950
        %v2983 = vunpack.c.l.b16 %v2951
        %v2984 = vunpack.c.l.b16 %v2952
        %v2985 = vunpack.c.l.b16 %v2953
        %v2986 = vunpack.c.l.b16 %v2954
        %v2987 = vunpack.c.l.b16 %v2955
        %v2988 = vunpack.c.l.b16 %v2956
        %v2989 = vpack.c.b16 %v2974, %v2973
        %v2990 = vpack.c.b16 %v2976, %v2975
        %v2991 = vpack.c.b16 %v2978, %v2977
        %v2992 = vpack.c.b16 %v2980, %v2979
        %v2993 = vpack.c.b16 %v2982, %v2981
        %v2994 = vpack.c.b16 %v2984, %v2983
        %v2995 = vpack.c.b16 %v2986, %v2985
        %v2996 = vpack.c.b16 %v2988, %v2987
        %3005 = vmatprep.subr.bf16.mxu0 0
        %3006 = vmatpush1.bf16.msra.mxu0 %v2989
        %3007 = vmatprep.subr.bf16.mxu0 0
        %3008 = vmatpush1.bf16.msra.mxu0 %v2990
        %3009 = vmatprep.subr.bf16.mxu0 0
        %3010 = vmatpush1.bf16.msra.mxu0 %v2991
        %3011 = vmatprep.subr.bf16.mxu0 0
        %3012 = vmatpush1.bf16.msra.mxu0 %v2992
        %3013 = vmatprep.subr.bf16.mxu0 0
        %3014 = vmatpush1.bf16.msra.mxu0 %v2993
        %3015 = vmatprep.subr.bf16.mxu0 0
        %3016 = vmatpush1.bf16.msra.mxu0 %v2994
        %3017 = vmatprep.subr.bf16.mxu0 0
        %3018 = vmatpush1.bf16.msra.mxu0 %v2995
        %3019 = vmatprep.subr.bf16.mxu0 0
        %3020 = vmatpush1.bf16.msra.mxu0 %v2996
        %3021 = vmatprep.subr.bf16.mxu0 0
        %3022 = vmatpush1.bf16.msra.mxu0 0
        %3023 = vmatprep.subr.bf16.mxu0 0
        %3024 = vmatpush1.bf16.msra.mxu0 0
        %3025 = vmatprep.subr.bf16.mxu0 0
        %3026 = vmatpush1.bf16.msra.mxu0 0
        %3027 = vmatprep.subr.bf16.mxu0 0
        %3028 = vmatpush1.bf16.msra.mxu0 0
        %3029 = vmatprep.subr.bf16.mxu0 0
        %3030 = vmatpush1.bf16.msra.mxu0 0
        %3031 = vmatprep.subr.bf16.mxu0 0
        %3032 = vmatpush1.bf16.msra.mxu0 0
        %3033 = vmatprep.subr.bf16.mxu0 0
        %3034 = vmatpush1.bf16.msra.mxu0 0
        %3035 = vmatprep.subr.bf16.mxu0 0
        %3036 = vmatpush1.bf16.msra.mxu0 0
        %3037 = vmatprep.mubr.bf16.mxu0 0
        %3038 = vmatmul.mubr.bf16.gmra.mrb[0].mxu0 %v2939
        %v3039 = vpop.f32.mrb[0].mxu0
        %v3040 = vadd.f32 0.0, %v3039
        %v3041 = vpop.f32.mrb[0].mxu0
        %v3042 = vpop.f32.mrb[0].mxu0
        %v3043 = vadd.f32 0.0, %v3042
        %v3044 = vpop.f32.mrb[0].mxu0
        %3045 = vmatprep.mubr.bf16.mxu0 0
        %3046 = vmatmul.mubr.bf16.gmra.mrb[0].mxu0 %v2940
        %v3047 = vpop.f32.mrb[0].mxu0
        %v3048 = vadd.f32 0.0, %v3047
        %v3049 = vpop.f32.mrb[0].mxu0
        %v3050 = vpop.f32.mrb[0].mxu0
        %v3051 = vadd.f32 0.0, %v3050
        %v3052 = vpop.f32.mrb[0].mxu0
        %3053 = vdwg.mxu0
        %v3054 = vadd.f32 %v2828, %v3040
        %v3055 = vadd.f32 %v2828, %v3043
        %v3056 = vadd.f32 %v2828, %v3048
        %v3057 = vadd.f32 %v2828, %v3051
        %v3058 = vadd.f32 %v2741, %v3054
        %v3059 = vadd.f32 %v2742, %v3055
        %v3060 = vadd.f32 %v2743, %v3056
        %v3061 = vadd.f32 %v2744, %v3057
        %3062 = vst.msk [vmem:[%s499] sm:$0xff] %vm514, %v3058
        %3063 = vst.msk [vmem:[%s499 + $0x8] sm:$0xff] %vm514, %v3059
        %3064 = vst.msk [vmem:[%s499 + $0x10] sm:$0xff] %vm514, %v3060
        %3065 = vst.msk [vmem:[%s499 + $0x18] sm:$0xff] %vm514, %v3061
        %s3066 = sand.u32 %s316, 1
        %s3067 = scalar_lea.sflag [#allocation4], %s3066
        %s3068 = sand.u32 %s316, 1
        %s3069 = smul.addr %s3068, 32
        %s3070 = scalar_lea.vmem [#allocation11], %s3069
        // Predicated region
        $region93: #{tpu_custom_call.1} parent=71 // pred_check
          %p3071 = pneg %p326
        $region94: #{tpu_custom_call.1} parent=71 // pred_check_branch
          %3073 = sbr.rel (%p3071) target = $region96
        $region95: #{tpu_custom_call.1} parent=71 // pred_region
          %s3074 = smul.u32 4, %s30
          %s3076 = ssub.s32 512, 512
          %3077 = vsyncadd %s3067, %s3076
          %s3078 = smul.addr %s3074, 128
          %s3079 = scalar_lea.hbm %s13, %s3078
          %s3080 = sshll.u32 %s3070, 4
          %s3081 = int_to_ptr.vmem [resolvable:$true] %s3080
          %3086 = dma.vmem_to_hbm [thread:$0]  %s3081, 512, %s3079, %s3067, 128, 128, 8
        $region96: #{tpu_custom_call.1} parent=71 // pred_fallthru
          _
      $region72: #{tpu_custom_call.1} parent=5 // pred_fallthru
        _
      %p3087 = scmp.le.s32.totalorder 2, %s25
      // Predicated region
      $region97: #{tpu_custom_call.1} parent=5 // pred_check
        %p3088 = pneg %p3087
      $region98: #{tpu_custom_call.1} parent=5 // pred_check_branch
        %3090 = sbr.rel (%p3088) target = $region100
      $region99: #{tpu_custom_call.1} parent=5 // pred_region
        %s3091 = ssub.s32 %s25, 2
        // Predicated region
        $region101: #{tpu_custom_call.1} parent=99 // pred_check
          %p3092 = pneg %p332
        $region102: #{tpu_custom_call.1} parent=99 // pred_check_branch
          %3094 = sbr.rel (%p3092) target = $region104
        $region103: #{tpu_custom_call.1} parent=99 // pred_region
          %s3095 = sand.u32 %s317, 1
          %s3096 = scalar_lea.sflag [#allocation4], %s3095
          %s3097 = sand.u32 %s317, 1
          %s3098 = smul.addr %s3097, 32
          %s3099 = scalar_lea.vmem [#allocation11], %s3098
          %3100 = dma.done %s3096, 512
        $region104: #{tpu_custom_call.1} parent=99 // pred_fallthru
          _
      $region100: #{tpu_custom_call.1} parent=5 // pred_fallthru
        _
    $region6: #{tpu_custom_call.1} parent=1 // loop_footer
      %s29 = sadd.s32 1, %s25
    $region7: #{tpu_custom_call.1} parent=1 // loop_footer_branch
      %24 = sbr.rel target = $region3
    $region8: #{tpu_custom_call.1} parent=1 // loop_exit
      _
    %3101 = vsyncpa [#allocation3], 1
    %s3102 = scalar_lea.sflag [#allocation3], 1
    %3103 = vsyncpa %s3102, 1
    %3104 = vsyncpa [#allocation6], 1
    %3105 = vsyncpa [#allocation9], 1
    %3106 = vsyncpa [#allocation4], 1
    %s3107 = scalar_lea.sflag [#allocation4], 1
    %3108 = vsyncpa %s3107, 1

// kernel: tpu_custom_call.1
$region0: #{tpu_custom_call.1}
  #allocation0 [shape = 'u32[]', space=smem, size = 0x4, offset = 0x4, fixed_abs, tag = 'smem constant byte address 0x4 - core index']
  #allocation1 [shape = 'u32[144,128]{1,0:T(1,128)}', space=vmem, size = 0x12000, scoped, tag = 'internal scratch']
  %s0 = inlined_call_operand.vmem [shape: f32[8,8,32], index: 0, kind: input, shape index: {}]
  %s1 = inlined_call_operand.vmem [shape: f32[1,32], index: 1, kind: input, shape index: {}]
  %s2 = inlined_call_operand.vmem [shape: f32[1,32], index: 2, kind: input, shape index: {}]
  %s3 = inlined_call_operand.hbm [shape: f32[1,32], index: 3, kind: input, shape index: {}]
  %s4 = inlined_call_operand.hbm [shape: f32[1,32], index: 4, kind: input, shape index: {}]
  %s5 = inlined_call_operand.vmem [shape: bf16[32,96], index: 5, kind: input, shape index: {}]
  %s6 = inlined_call_operand.hbm [shape: f32[1,96], index: 6, kind: input, shape index: {}]
  %s7 = inlined_call_operand.hbm [shape: bf16[32,32], index: 7, kind: input, shape index: {}]
  %s8 = inlined_call_operand.hbm [shape: f32[1,32], index: 8, kind: input, shape index: {}]
  %s9 = inlined_call_operand.vmem [shape: bf16[32,128], index: 9, kind: input, shape index: {}]
  %s10 = inlined_call_operand.vmem [shape: f32[1,128], index: 10, kind: input, shape index: {}]
  %s11 = inlined_call_operand.vmem [shape: bf16[128,32], index: 11, kind: input, shape index: {}]
  %s12 = inlined_call_operand.vmem [shape: f32[1,32], index: 12, kind: input, shape index: {}]
  %s13 = inlined_call_operand.hbm [shape: f32[8,8,32], index: 13, kind: output, shape index: {}]
  %s14 = sld [smem:[#allocation0]]
  $region105: #{tpu_custom_call.1} parent=0
    _
  %s16 = ssub.s32 1, %s14
  %s17 = scalar_select 0, %s16, %s14
  $region1: #{tpu_custom_call.1} parent=0
    #allocation2 [shape = 'u8[512]{0}', space=vmem, size = 0x400, scoped, tag = 'input window, operand 3, single buffered']
    #allocation3 [shape = 's32[2]{0}', space=sflag, size = 0x8, scoped, tag = 'scoped memory for tpu_custom_call.1']
    #allocation4 [shape = 's32[2]{0}', space=sflag, size = 0x8, scoped, tag = 'scoped memory for tpu_custom_call.1']
    #allocation5 [shape = 'u8[512]{0}', space=vmem, size = 0x400, scoped, tag = 'input window, operand 4, single buffered']
    #allocation6 [shape = 's32[1]{0}', space=sflag, size = 0x4, scoped, tag = 'scoped memory for tpu_custom_call.1']
    #allocation7 [shape = 'u8[512]{0}', space=vmem, size = 0x400, scoped, tag = 'input window, operand 6, single buffered']
    #allocation8 [shape = 'u8[8192]{0}', space=vmem, size = 0x2000, scoped, tag = 'input window, operand 7, single buffered']
    #allocation9 [shape = 's32[1]{0}', space=sflag, size = 0x4, scoped, tag = 'scoped memory for tpu_custom_call.1']
    #allocation10 [shape = 'u8[512]{0}', space=vmem, size = 0x400, scoped, tag = 'input window, operand 8, single buffered']
    #allocation11 [shape = 'u8[32768]{0}', space=vmem, size = 0x8000, scoped, tag = 'output window, operand 0']
    %18 = vsyncpa [#allocation3], 0
    %19 = vsyncpa [#allocation6], 0
    %20 = vsyncpa [#allocation9], 0
    %21 = vsyncpa [#allocation4], 0
    %s22 = scalar_lea.sflag [#allocation4], 1
    %23 = vsyncpa %s22, 0
    loop: start=0, step=1, limit=4
    $region2: #{tpu_custom_call.1} parent=1 // loop_pre_header
      _
    $region3: #{tpu_custom_call.1} parent=1 // loop_header
      %s25 = sphi 0, %s29
      %p26 = scmp.ge.s32.totalorder %s25, 4
      %s35 = sphi 0, %s37
      %s38 = sphi 0, %s35
      %s39 = sphi 0, %s38
      %s55 = sphi 0, %s39
      %s59 = sphi 0, %s59
      %s61 = sphi 0, %s59
      %s62 = sphi 0, %s61
      %s76 = sphi 0, %s62
      %s80 = sphi 0, %s80
      %s82 = sphi 0, %s80
      %s83 = sphi 0, %s82
      %s97 = sphi 0, %s83
      %s101 = sphi 0, %s101
      %s103 = sphi 0, %s101
      %s104 = sphi 0, %s103
      %s118 = sphi 0, %s104
      %s122 = sphi 0, %s122
      %s124 = sphi 0, %s122
      %s125 = sphi 0, %s124
      %s139 = sphi 0, %s125
      %s143 = sphi 0, %s143
      %s145 = sphi 0, %s143
      %s146 = sphi 0, %s145
      %s160 = sphi 0, %s146
      %s164 = sphi 0, %s164
      %s166 = sphi 0, %s164
      %s167 = sphi 0, %s166
      %s181 = sphi 0, %s167
      %s185 = sphi 0, %s185
      %s187 = sphi 0, %s185
      %s188 = sphi 0, %s187
      %s202 = sphi 0, %s188
      %s206 = sphi 0, %s206
      %s208 = sphi 0, %s206
      %s209 = sphi 0, %s208
      %s223 = sphi 0, %s209
      %s227 = sphi 0, %s227
      %s229 = sphi 0, %s227
      %s230 = sphi 0, %s229
      %s244 = sphi 0, %s230
      %s248 = sphi 0, %s248
      %s250 = sphi 0, %s248
      %s251 = sphi 0, %s250
      %s265 = sphi 0, %s251
      %s269 = sphi 0, %s269
      %s271 = sphi 0, %s269
      %s272 = sphi 0, %s271
      %s286 = sphi 0, %s272
      %s290 = sphi 0, %s290
      %s292 = sphi 0, %s290
      %s293 = sphi 0, %s292
      %s307 = sphi 0, %s293
      %s313 = sphi 0, %s315
      %s316 = sphi 0, %s313
      %s317 = sphi 0, %s316
      %s333 = sphi 0, %s317
    $region4: #{tpu_custom_call.1} parent=1 // loop_header_branch
      %28 = sbr.rel (%p26) target = $region8
    $region5: #{tpu_custom_call.1} parent=1 // loop_body
      %s30 = ssub.s32 %s25, 1
      %s31 = ssub.s32 %s25, 2
      %s32 = sadd.s32 %s25, 1
      %s33 = ssub.s32 %s25, %s32
      %p34 = scmp.eq.s32.totalorder %s33, 0
      %s36 = sadd.s32 %s35, 1
      %s37 = scalar_select %p34, %s35, %s36
      %p40 = pneg %p34
      %p41 = scmp.eq.s32.totalorder %s25, 1
      %p42 = por %p40, %p41
      %p43 = scmp.ne.s32.totalorder %s35, %s38
      %p44 = scmp.eq.s32.totalorder %s25, 0
      %p45 = por %p43, %p44
      %p46 = scmp.ne.s32.totalorder %s35, %s38
      %p47 = scmp.eq.s32.totalorder %s30, 1
      %p48 = por %p46, %p47
      %p49 = scmp.ne.s32.totalorder %s38, %s39
      %p50 = scmp.eq.s32.totalorder %s30, 0
      %p51 = por %p49, %p50
      %p52 = scmp.ne.s32.totalorder %s38, %s39
      %p53 = scmp.eq.s32.totalorder %s31, 1
      %p54 = por %p52, %p53
      %p56 = scmp.ne.s32.totalorder %s39, %s55
      %p57 = scmp.eq.s32.totalorder %s31, 0
      %p58 = por %p56, %p57
      %s60 = sadd.s32 %s59, 1
      %p63 = scmp.eq.s32.totalorder %s25, 1
      %p64 = scmp.ne.s32.totalorder %s59, %s61
      %p65 = scmp.eq.s32.totalorder %s25, 0
      %p66 = por %p64, %p65
      %p67 = scmp.ne.s32.totalorder %s59, %s61
      %p68 = scmp.eq.s32.totalorder %s30, 1
      %p69 = por %p67, %p68
      %p70 = scmp.ne.s32.totalorder %s61, %s62
      %p71 = scmp.eq.s32.totalorder %s30, 0
      %p72 = por %p70, %p71
      %p73 = scmp.ne.s32.totalorder %s61, %s62
      %p74 = scmp.eq.s32.totalorder %s31, 1
      %p75 = por %p73, %p74
      %p77 = scmp.ne.s32.totalorder %s62, %s76
      %p78 = scmp.eq.s32.totalorder %s31, 0
      %p79 = por %p77, %p78
      %s81 = sadd.s32 %s80, 1
      %p84 = scmp.eq.s32.totalorder %s25, 1
      %p85 = scmp.ne.s32.totalorder %s80, %s82
      %p86 = scmp.eq.s32.totalorder %s25, 0
      %p87 = por %p85, %p86
      %p88 = scmp.ne.s32.totalorder %s80, %s82
      %p89 = scmp.eq.s32.totalorder %s30, 1
      %p90 = por %p88, %p89
      %p91 = scmp.ne.s32.totalorder %s82, %s83
      %p92 = scmp.eq.s32.totalorder %s30, 0
      %p93 = por %p91, %p92
      %p94 = scmp.ne.s32.totalorder %s82, %s83
      %p95 = scmp.eq.s32.totalorder %s31, 1
      %p96 = por %p94, %p95
      %p98 = scmp.ne.s32.totalorder %s83, %s97
      %p99 = scmp.eq.s32.totalorder %s31, 0
      %p100 = por %p98, %p99
      %s102 = sadd.s32 %s101, 1
      %p105 = scmp.eq.s32.totalorder %s25, 1
      %p106 = scmp.ne.s32.totalorder %s101, %s103
      %p107 = scmp.eq.s32.totalorder %s25, 0
      %p108 = por %p106, %p107
      %p109 = scmp.ne.s32.totalorder %s101, %s103
      %p110 = scmp.eq.s32.totalorder %s30, 1
      %p111 = por %p109, %p110
      %p112 = scmp.ne.s32.totalorder %s103, %s104
      %p113 = scmp.eq.s32.totalorder %s30, 0
      %p114 = por %p112, %p113
      %p115 = scmp.ne.s32.totalorder %s103, %s104
      %p116 = scmp.eq.s32.totalorder %s31, 1
      %p117 = por %p115, %p116
      %p119 = scmp.ne.s32.totalorder %s104, %s118
      %p120 = scmp.eq.s32.totalorder %s31, 0
      %p121 = por %p119, %p120
      %s123 = sadd.s32 %s122, 1
      %p126 = scmp.eq.s32.totalorder %s25, 1
      %p127 = scmp.ne.s32.totalorder %s122, %s124
      %p128 = scmp.eq.s32.totalorder %s25, 0
      %p129 = por %p127, %p128
      %p130 = scmp.ne.s32.totalorder %s122, %s124
      %p131 = scmp.eq.s32.totalorder %s30, 1
      %p132 = por %p130, %p131
      %p133 = scmp.ne.s32.totalorder %s124, %s125
      %p134 = scmp.eq.s32.totalorder %s30, 0
      %p135 = por %p133, %p134
      %p136 = scmp.ne.s32.totalorder %s124, %s125
      %p137 = scmp.eq.s32.totalorder %s31, 1
      %p138 = por %p136, %p137
      %p140 = scmp.ne.s32.totalorder %s125, %s139
      %p141 = scmp.eq.s32.totalorder %s31, 0
      %p142 = por %p140, %p141
      %s144 = sadd.s32 %s143, 1
      %p147 = scmp.eq.s32.totalorder %s25, 1
      %p148 = scmp.ne.s32.totalorder %s143, %s145
      %p149 = scmp.eq.s32.totalorder %s25, 0
      %p150 = por %p148, %p149
      %p151 = scmp.ne.s32.totalorder %s143, %s145
      %p152 = scmp.eq.s32.totalorder %s30, 1
      %p153 = por %p151, %p152
      %p154 = scmp.ne.s32.totalorder %s145, %s146
      %p155 = scmp.eq.s32.totalorder %s30, 0
      %p156 = por %p154, %p155
      %p157 = scmp.ne.s32.totalorder %s145, %s146
      %p158 = scmp.eq.s32.totalorder %s31, 1
      %p159 = por %p157, %p158
      %p161 = scmp.ne.s32.totalorder %s146, %s160
      %p162 = scmp.eq.s32.totalorder %s31, 0
      %p163 = por %p161, %p162
      %s165 = sadd.s32 %s164, 1
      %p168 = scmp.eq.s32.totalorder %s25, 1
      %p169 = scmp.ne.s32.totalorder %s164, %s166
      %p170 = scmp.eq.s32.totalorder %s25, 0
      %p171 = por %p169, %p170
      %p172 = scmp.ne.s32.totalorder %s164, %s166
      %p173 = scmp.eq.s32.totalorder %s30, 1
      %p174 = por %p172, %p173
      %p175 = scmp.ne.s32.totalorder %s166, %s167
      %p176 = scmp.eq.s32.totalorder %s30, 0
      %p177 = por %p175, %p176
      %p178 = scmp.ne.s32.totalorder %s166, %s167
      %p179 = scmp.eq.s32.totalorder %s31, 1
      %p180 = por %p178, %p179
      %p182 = scmp.ne.s32.totalorder %s167, %s181
      %p183 = scmp.eq.s32.totalorder %s31, 0
      %p184 = por %p182, %p183
      %s186 = sadd.s32 %s185, 1
      %p189 = scmp.eq.s32.totalorder %s25, 1
      %p190 = scmp.ne.s32.totalorder %s185, %s187
      %p191 = scmp.eq.s32.totalorder %s25, 0
      %p192 = por %p190, %p191
      %p193 = scmp.ne.s32.totalorder %s185, %s187
      %p194 = scmp.eq.s32.totalorder %s30, 1
      %p195 = por %p193, %p194
      %p196 = scmp.ne.s32.totalorder %s187, %s188
      %p197 = scmp.eq.s32.totalorder %s30, 0
      %p198 = por %p196, %p197
      %p199 = scmp.ne.s32.totalorder %s187, %s188
      %p200 = scmp.eq.s32.totalorder %s31, 1
      %p201 = por %p199, %p200
      %p203 = scmp.ne.s32.totalorder %s188, %s202
      %p204 = scmp.eq.s32.totalorder %s31, 0
      %p205 = por %p203, %p204
      %s207 = sadd.s32 %s206, 1
      %p210 = scmp.eq.s32.totalorder %s25, 1
      %p211 = scmp.ne.s32.totalorder %s206, %s208
      %p212 = scmp.eq.s32.totalorder %s25, 0
      %p213 = por %p211, %p212
      %p214 = scmp.ne.s32.totalorder %s206, %s208
      %p215 = scmp.eq.s32.totalorder %s30, 1
      %p216 = por %p214, %p215
      %p217 = scmp.ne.s32.totalorder %s208, %s209
      %p218 = scmp.eq.s32.totalorder %s30, 0
      %p219 = por %p217, %p218
      %p220 = scmp.ne.s32.totalorder %s208, %s209
      %p221 = scmp.eq.s32.totalorder %s31, 1
      %p222 = por %p220, %p221
      %p224 = scmp.ne.s32.totalorder %s209, %s223
      %p225 = scmp.eq.s32.totalorder %s31, 0
      %p226 = por %p224, %p225
      %s228 = sadd.s32 %s227, 1
      %p231 = scmp.eq.s32.totalorder %s25, 1
      %p232 = scmp.ne.s32.totalorder %s227, %s229
      %p233 = scmp.eq.s32.totalorder %s25, 0
      %p234 = por %p232, %p233
      %p235 = scmp.ne.s32.totalorder %s227, %s229
      %p236 = scmp.eq.s32.totalorder %s30, 1
      %p237 = por %p235, %p236
      %p238 = scmp.ne.s32.totalorder %s229, %s230
      %p239 = scmp.eq.s32.totalorder %s30, 0
      %p240 = por %p238, %p239
      %p241 = scmp.ne.s32.totalorder %s229, %s230
      %p242 = scmp.eq.s32.totalorder %s31, 1
      %p243 = por %p241, %p242
      %p245 = scmp.ne.s32.totalorder %s230, %s244
      %p246 = scmp.eq.s32.totalorder %s31, 0
      %p247 = por %p245, %p246
      %s249 = sadd.s32 %s248, 1
      %p252 = scmp.eq.s32.totalorder %s25, 1
      %p253 = scmp.ne.s32.totalorder %s248, %s250
      %p254 = scmp.eq.s32.totalorder %s25, 0
      %p255 = por %p253, %p254
      %p256 = scmp.ne.s32.totalorder %s248, %s250
      %p257 = scmp.eq.s32.totalorder %s30, 1
      %p258 = por %p256, %p257
      %p259 = scmp.ne.s32.totalorder %s250, %s251
      %p260 = scmp.eq.s32.totalorder %s30, 0
      %p261 = por %p259, %p260
      %p262 = scmp.ne.s32.totalorder %s250, %s251
      %p263 = scmp.eq.s32.totalorder %s31, 1
      %p264 = por %p262, %p263
      %p266 = scmp.ne.s32.totalorder %s251, %s265
      %p267 = scmp.eq.s32.totalorder %s31, 0
      %p268 = por %p266, %p267
      %s270 = sadd.s32 %s269, 1
      %p273 = scmp.eq.s32.totalorder %s25, 1
      %p274 = scmp.ne.s32.totalorder %s269, %s271
      %p275 = scmp.eq.s32.totalorder %s25, 0
      %p276 = por %p274, %p275
      %p277 = scmp.ne.s32.totalorder %s269, %s271
      %p278 = scmp.eq.s32.totalorder %s30, 1
      %p279 = por %p277, %p278
      %p280 = scmp.ne.s32.totalorder %s271, %s272
      %p281 = scmp.eq.s32.totalorder %s30, 0
      %p282 = por %p280, %p281
      %p283 = scmp.ne.s32.totalorder %s271, %s272
      %p284 = scmp.eq.s32.totalorder %s31, 1
      %p285 = por %p283, %p284
      %p287 = scmp.ne.s32.totalorder %s272, %s286
      %p288 = scmp.eq.s32.totalorder %s31, 0
      %p289 = por %p287, %p288
      %s291 = sadd.s32 %s290, 1
      %p294 = scmp.eq.s32.totalorder %s25, 1
      %p295 = scmp.ne.s32.totalorder %s290, %s292
      %p296 = scmp.eq.s32.totalorder %s25, 0
      %p297 = por %p295, %p296
      %p298 = scmp.ne.s32.totalorder %s290, %s292
      %p299 = scmp.eq.s32.totalorder %s30, 1
      %p300 = por %p298, %p299
      %p301 = scmp.ne.s32.totalorder %s292, %s293
      %p302 = scmp.eq.s32.totalorder %s30, 0
      %p303 = por %p301, %p302
      %p304 = scmp.ne.s32.totalorder %s292, %s293
      %p305 = scmp.eq.s32.totalorder %s31, 1
      %p306 = por %p304, %p305
      %p308 = scmp.ne.s32.totalorder %s293, %s307
      %p309 = scmp.eq.s32.totalorder %s31, 0
      %p310 = por %p308, %p309
      %s311 = ssub.s32 %s25, %s32
      %p312 = scmp.eq.s32.totalorder %s311, 0
      %s314 = sadd.s32 %s313, 1
      %s315 = scalar_select %p312, %s313, %s314
      %p318 = pneg %p312
      %p319 = scmp.eq.s32.totalorder %s25, 1
      %p320 = por %p318, %p319
      %p321 = scmp.ne.s32.totalorder %s313, %s316
      %p322 = scmp.eq.s32.totalorder %s25, 0
      %p323 = por %p321, %p322
      %p324 = scmp.ne.s32.totalorder %s313, %s316
      %p325 = scmp.eq.s32.totalorder %s30, 1
      %p326 = por %p324, %p325
      %p327 = scmp.ne.s32.totalorder %s316, %s317
      %p328 = scmp.eq.s32.totalorder %s30, 0
      %p329 = por %p327, %p328
      %p330 = scmp.ne.s32.totalorder %s316, %s317
      %p331 = scmp.eq.s32.totalorder %s31, 1
      %p332 = por %p330, %p331
      %p334 = scmp.ne.s32.totalorder %s317, %s333
      %p335 = scmp.eq.s32.totalorder %s31, 0
      %p336 = por %p334, %p335
      %p337 = scmp.le.s32.totalorder 1, %s25
      %p338 = scmp.lt.s32.totalorder %s25, 3
      %p339 = pnand %p337, %p338
      %p340 = pneg %p339
      // Predicated region
      $region9: #{tpu_custom_call.1} parent=5 // pred_check
        _
      $region10: #{tpu_custom_call.1} parent=5 // pred_check_branch
        %342 = sbr.rel (%p339) target = $region12
      $region11: #{tpu_custom_call.1} parent=5 // pred_region
        %s343 = ssub.s32 %s25, 1
        // Predicated region
        $region13: #{tpu_custom_call.1} parent=11 // pred_check
          %p344 = pneg %p72
        $region14: #{tpu_custom_call.1} parent=11 // pred_check_branch
          %346 = sbr.rel (%p344) target = $region16
        $region15: #{tpu_custom_call.1} parent=11 // pred_region
          _
        $region16: #{tpu_custom_call.1} parent=11 // pred_fallthru
          _
        // Predicated region
        $region17: #{tpu_custom_call.1} parent=11 // pred_check
          %p347 = pneg %p93
        $region18: #{tpu_custom_call.1} parent=11 // pred_check_branch
          %349 = sbr.rel (%p347) target = $region20
        $region19: #{tpu_custom_call.1} parent=11 // pred_region
          _
        $region20: #{tpu_custom_call.1} parent=11 // pred_fallthru
          _
        // Predicated region
        $region21: #{tpu_custom_call.1} parent=11 // pred_check
          %p350 = pneg %p114
        $region22: #{tpu_custom_call.1} parent=11 // pred_check_branch
          %352 = sbr.rel (%p350) target = $region24
        $region23: #{tpu_custom_call.1} parent=11 // pred_region
          %s354 = ssub.s32 16, 16
          %355 = vsyncadd [#allocation3], %s354
          %s357 = sshll.u32 [#allocation2], 4
          %s358 = int_to_ptr.vmem [resolvable:$true] %s357
          %360 = dma.hbm_to_vmem [thread:$0]  %s3, 16, %s358, [#allocation3]
        $region24: #{tpu_custom_call.1} parent=11 // pred_fallthru
          _
        // Predicated region
        $region25: #{tpu_custom_call.1} parent=11 // pred_check
          %p361 = pneg %p135
        $region26: #{tpu_custom_call.1} parent=11 // pred_check_branch
          %363 = sbr.rel (%p361) target = $region28
        $region27: #{tpu_custom_call.1} parent=11 // pred_region
          %s365 = ssub.s32 16, 16
          %366 = vsyncadd [#allocation6], %s365
          %s368 = sshll.u32 [#allocation5], 4
          %s369 = int_to_ptr.vmem [resolvable:$true] %s368
          %371 = dma.hbm_to_vmem [thread:$0]  %s4, 16, %s369, [#allocation6]
        $region28: #{tpu_custom_call.1} parent=11 // pred_fallthru
          _
        // Predicated region
        $region29: #{tpu_custom_call.1} parent=11 // pred_check
          %p372 = pneg %p156
        $region30: #{tpu_custom_call.1} parent=11 // pred_check_branch
          %374 = sbr.rel (%p372) target = $region32
        $region31: #{tpu_custom_call.1} parent=11 // pred_region
          _
        $region32: #{tpu_custom_call.1} parent=11 // pred_fallthru
          _
        // Predicated region
        $region33: #{tpu_custom_call.1} parent=11 // pred_check
          %p375 = pneg %p177
        $region34: #{tpu_custom_call.1} parent=11 // pred_check_branch
          %377 = sbr.rel (%p375) target = $region36
        $region35: #{tpu_custom_call.1} parent=11 // pred_region
          %s379 = ssub.s32 16, 16
          %380 = vsyncadd [#allocation6], %s379
          %s382 = sshll.u32 [#allocation7], 4
          %s383 = int_to_ptr.vmem [resolvable:$true] %s382
          %385 = dma.hbm_to_vmem [thread:$0]  %s6, 16, %s383, [#allocation6]
        $region36: #{tpu_custom_call.1} parent=11 // pred_fallthru
          _
        // Predicated region
        $region37: #{tpu_custom_call.1} parent=11 // pred_check
          %p386 = pneg %p198
        $region38: #{tpu_custom_call.1} parent=11 // pred_check_branch
          %388 = sbr.rel (%p386) target = $region40
        $region39: #{tpu_custom_call.1} parent=11 // pred_region
          %s390 = ssub.s32 256, 256
          %391 = vsyncadd [#allocation9], %s390
          %s392 = sshll.u32 [#allocation8], 4
          %s393 = int_to_ptr.vmem [resolvable:$true] %s392
          %398 = dma.hbm_to_vmem [thread:$0]  %s7, 256, %s393, [#allocation9], 64, 64, 4
        $region40: #{tpu_custom_call.1} parent=11 // pred_fallthru
          _
        // Predicated region
        $region41: #{tpu_custom_call.1} parent=11 // pred_check
          %p399 = pneg %p219
        $region42: #{tpu_custom_call.1} parent=11 // pred_check_branch
          %401 = sbr.rel (%p399) target = $region44
        $region43: #{tpu_custom_call.1} parent=11 // pred_region
          %s403 = ssub.s32 16, 16
          %404 = vsyncadd [#allocation9], %s403
          %s406 = sshll.u32 [#allocation10], 4
          %s407 = int_to_ptr.vmem [resolvable:$true] %s406
          %409 = dma.hbm_to_vmem [thread:$0]  %s8, 16, %s407, [#allocation9]
        $region44: #{tpu_custom_call.1} parent=11 // pred_fallthru
          _
        // Predicated region
        $region45: #{tpu_custom_call.1} parent=11 // pred_check
          %p410 = pneg %p240
        $region46: #{tpu_custom_call.1} parent=11 // pred_check_branch
          %412 = sbr.rel (%p410) target = $region48
        $region47: #{tpu_custom_call.1} parent=11 // pred_region
          _
        $region48: #{tpu_custom_call.1} parent=11 // pred_fallthru
          _
        // Predicated region
        $region49: #{tpu_custom_call.1} parent=11 // pred_check
          %p413 = pneg %p261
        $region50: #{tpu_custom_call.1} parent=11 // pred_check_branch
          %415 = sbr.rel (%p413) target = $region52
        $region51: #{tpu_custom_call.1} parent=11 // pred_region
          _
        $region52: #{tpu_custom_call.1} parent=11 // pred_fallthru
          _
        // Predicated region
        $region53: #{tpu_custom_call.1} parent=11 // pred_check
          %p416 = pneg %p282
        $region54: #{tpu_custom_call.1} parent=11 // pred_check_branch
          %418 = sbr.rel (%p416) target = $region56
        $region55: #{tpu_custom_call.1} parent=11 // pred_region
          _
        $region56: #{tpu_custom_call.1} parent=11 // pred_fallthru
          _
        // Predicated region
        $region57: #{tpu_custom_call.1} parent=11 // pred_check
          %p419 = pneg %p303
        $region58: #{tpu_custom_call.1} parent=11 // pred_check_branch
          %421 = sbr.rel (%p419) target = $region60
        $region59: #{tpu_custom_call.1} parent=11 // pred_region
          _
        $region60: #{tpu_custom_call.1} parent=11 // pred_fallthru
          _
      $region12: #{tpu_custom_call.1} parent=5 // pred_fallthru
        _
      %p422 = scmp.lt.s32.totalorder %s25, 2
      // Predicated region
      $region61: #{tpu_custom_call.1} parent=5 // pred_check
        %p423 = pneg %p422
      $region62: #{tpu_custom_call.1} parent=5 // pred_check_branch
        %425 = sbr.rel (%p423) target = $region64
      $region63: #{tpu_custom_call.1} parent=5 // pred_region
        // Predicated region
        $region65: #{tpu_custom_call.1} parent=63 // pred_check
          %p426 = pneg %p45
        $region66: #{tpu_custom_call.1} parent=63 // pred_check_branch
          %428 = sbr.rel (%p426) target = $region68
        $region67: #{tpu_custom_call.1} parent=63 // pred_region
          %s429 = smul.u32 4, %s25
          %p430 = scmp.lt.s32.totalorder %s429, 7
          %s431 = scalar_select %p430, %s429, 7
          %s432 = smul.addr %s431, 8
          %s433 = scalar_lea.vmem %s0, %s432
          %s434 = smul.u32 4, %s25
        $region68: #{tpu_custom_call.1} parent=63 // pred_fallthru
          _
      $region64: #{tpu_custom_call.1} parent=5 // pred_fallthru
        _
      %p435 = scmp.le.s32.totalorder 1, %s25
      %p436 = scmp.lt.s32.totalorder %s25, 3
      %p437 = pnand %p435, %p436
      %p438 = pneg %p437
      // Predicated region
      $region69: #{tpu_custom_call.1} parent=5 // pred_check
        _
      $region70: #{tpu_custom_call.1} parent=5 // pred_check_branch
        %440 = sbr.rel (%p437) target = $region72
      $region71: #{tpu_custom_call.1} parent=5 // pred_region
        %s441 = ssub.s32 %s25, 1
        // Predicated region
        $region73: #{tpu_custom_call.1} parent=71 // pred_check
          %p442 = pneg %p114
        $region74: #{tpu_custom_call.1} parent=71 // pred_check_branch
          %444 = sbr.rel (%p442) target = $region76
        $region75: #{tpu_custom_call.1} parent=71 // pred_region
          %445 = dma.done [#allocation3], 16
        $region76: #{tpu_custom_call.1} parent=71 // pred_fallthru
          _
        // Predicated region
        $region77: #{tpu_custom_call.1} parent=71 // pred_check
          %p446 = pneg %p135
        $region78: #{tpu_custom_call.1} parent=71 // pred_check_branch
          %448 = sbr.rel (%p446) target = $region80
        $region79: #{tpu_custom_call.1} parent=71 // pred_region
          %449 = dma.done [#allocation6], 16
        $region80: #{tpu_custom_call.1} parent=71 // pred_fallthru
          _
        // Predicated region
        $region81: #{tpu_custom_call.1} parent=71 // pred_check
          %p450 = pneg %p177
        $region82: #{tpu_custom_call.1} parent=71 // pred_check_branch
          %452 = sbr.rel (%p450) target = $region84
        $region83: #{tpu_custom_call.1} parent=71 // pred_region
          %453 = dma.done [#allocation6], 16
        $region84: #{tpu_custom_call.1} parent=71 // pred_fallthru
          _
        // Predicated region
        $region85: #{tpu_custom_call.1} parent=71 // pred_check
          %p454 = pneg %p198
        $region86: #{tpu_custom_call.1} parent=71 // pred_check_branch
          %456 = sbr.rel (%p454) target = $region88
        $region87: #{tpu_custom_call.1} parent=71 // pred_region
          %457 = dma.done [#allocation9], 256
        $region88: #{tpu_custom_call.1} parent=71 // pred_fallthru
          _
        // Predicated region
        $region89: #{tpu_custom_call.1} parent=71 // pred_check
          %p458 = pneg %p219
        $region90: #{tpu_custom_call.1} parent=71 // pred_check_branch
          %460 = sbr.rel (%p458) target = $region92
        $region91: #{tpu_custom_call.1} parent=71 // pred_region
          %461 = dma.done [#allocation9], 16
        $region92: #{tpu_custom_call.1} parent=71 // pred_fallthru
          _
        %s462 = smul.u32 4, %s30
        %p463 = scmp.lt.s32.totalorder %s462, 7
        %s464 = scalar_select %p463, %s462, 7
        %s465 = smul.addr %s464, 8
        %s466 = scalar_lea.vmem %s0, %s465
        %p467 = pneg %p51
        %p468 = pneg %p48
        %p469 = pneg %p72
        %p470 = pneg %p69
        %p471 = pneg %p93
        %p472 = pneg %p90
        %p473 = pneg %p114
        %p474 = pneg %p111
        %p475 = pneg %p135
        %p476 = pneg %p132
        %p477 = pneg %p156
        %p478 = pneg %p153
        %p479 = pneg %p177
        %p480 = pneg %p174
        %p481 = pneg %p198
        %p482 = pneg %p195
        %p483 = pneg %p219
        %p484 = pneg %p216
        %p485 = pneg %p240
        %p486 = pneg %p237
        %p487 = pneg %p261
        %p488 = pneg %p258
        %p489 = pneg %p282
        %p490 = pneg %p279
        %p491 = pneg %p303
        %p492 = pneg %p300
        %p493 = pneg %p329
        %p494 = pneg %p326
        %s495 = sand.u32 %s316, 1
        %s496 = scalar_lea.sflag [#allocation4], %s495
        %s497 = sand.u32 %s316, 1
        %s498 = smul.addr %s497, 32
        %s499 = scalar_lea.vmem [#allocation11], %s498
        %s500 = smul.u32 4, %s30
        %p501 = scmp.lt.s32.totalorder %s500, 7
        %s502 = scalar_select %p501, %s500, 7
        %s503 = smul.addr %s502, 8
        %s504 = scalar_lea.vmem %s0, %s503
        %s505 = smul.u32 4, %s30
        %s506 = smul.u32 4, %s30
        %v508 = vld [vmem:[%s504] sm:$0xff]
        %v509 = vld [vmem:[%s504 + $0x8] sm:$0xff]
        %v510 = vld [vmem:[%s504 + $0x10] sm:$0xff]
        %v511 = vld [vmem:[%s504 + $0x18] sm:$0xff]
        %v512 = vld [vmem:[%s1] sm:$0x1]
        %v513 = vld [vmem:[%s2] sm:$0x1]
        %vm514 = vcmask 261120
        %v515 = vsel %vm514, %v508, 0.0
        %516 = vadd.xlane.f32.xlu0 %v515
        %v517 = vpop.xlane.xlu0 %516
        %v518 = vsel %vm514, %v509, 0.0
        %519 = vadd.xlane.f32.xlu0 %v518
        %v520 = vpop.xlane.xlu0 %519
        %v521 = vsel %vm514, %v510, 0.0
        %522 = vadd.xlane.f32.xlu0 %v521
        %v523 = vpop.xlane.xlu0 %522
        %v524 = vsel %vm514, %v511, 0.0
        %525 = vadd.xlane.f32.xlu0 %v524
        %v526 = vpop.xlane.xlu0 %525
        %v527 = vrcp.pop 32.0
        %v528 = vmul.f32 %v517, %v527
        %v529 = vmul.f32 %v520, %v527
        %v530 = vmul.f32 %v523, %v527
        %v531 = vmul.f32 %v526, %v527
        %v532 = vsub.f32 %v508, %v528
        %v533 = vsub.f32 %v509, %v529
        %v534 = vsub.f32 %v510, %v530
        %v535 = vsub.f32 %v511, %v531
        %v536 = vmul.f32 %v532, %v532
        %v537 = vmul.f32 %v533, %v533
        %v538 = vmul.f32 %v534, %v534
        %v539 = vmul.f32 %v535, %v535
        %v540 = vsel %vm514, %v536, 0.0
        %541 = vadd.xlane.f32.xlu0 %v540
        %v542 = vpop.xlane.xlu0 %541
        %v543 = vsel %vm514, %v537, 0.0
        %544 = vadd.xlane.f32.xlu0 %v543
        %v545 = vpop.xlane.xlu0 %544
        %v546 = vsel %vm514, %v538, 0.0
        %547 = vadd.xlane.f32.xlu0 %v546
        %v548 = vpop.xlane.xlu0 %547
        %v549 = vsel %vm514, %v539, 0.0
        %550 = vadd.xlane.f32.xlu0 %v549
        %v551 = vpop.xlane.xlu0 %550
        %v552 = vmul.f32 %v542, %v527
        %v553 = vmul.f32 %v545, %v527
        %v554 = vmul.f32 %v548, %v527
        %v555 = vmul.f32 %v551, %v527
        %v556 = vadd.f32 %v552, 1e-05
        %v557 = vadd.f32 %v553, 1e-05
        %v558 = vadd.f32 %v554, 1e-05
        %v559 = vadd.f32 %v555, 1e-05
        %v560 = vrsqrt.pop %v556
        %v561 = vrsqrt.pop %v557
        %v562 = vrsqrt.pop %v558
        %v563 = vrsqrt.pop %v559
        %v564 = vmul.f32 %v532, %v560
        %v565 = vmul.f32 %v533, %v561
        %v566 = vmul.f32 %v534, %v562
        %v567 = vmul.f32 %v535, %v563
        %v569 = vlaneseq
        %v570 = vshrl.u32 %v569, 7
        %v571 = vsub.s32 0, %v570
        %v572 = vrot.slane %v512, %v571
        %v574 = vmul.f32 %v564, %v572
        %v575 = vmul.f32 %v565, %v572
        %v576 = vmul.f32 %v566, %v572
        %v577 = vmul.f32 %v567, %v572
        %v579 = vlaneseq
        %v580 = vshrl.u32 %v579, 7
        %v581 = vsub.s32 0, %v580
        %v582 = vrot.slane %v513, %v581
        %v584 = vadd.f32 %v574, %v582
        %v585 = vadd.f32 %v575, %v582
        %v586 = vadd.f32 %v576, %v582
        %v587 = vadd.f32 %v577, %v582
        %v588 = vpack.c.bf16 %v585, %v584
        %v589 = vpack.c.bf16 %v587, %v586
        %v590 = vld [vmem:[%s5] sm:$0xf]
        %v591 = vld [vmem:[%s5 + $0x4] sm:$0xf]
        %v592 = vld [vmem:[%s5 + $0x8] sm:$0xf]
        %v593 = vld [vmem:[%s5 + $0xc] sm:$0xf]
        %v594 = vld [vmem:[#allocation7] sm:$0x1]
        %v596 = vlaneseq
        %v597 = vshrl.u32 %v596, 7
        %v598 = vsub.s32 0, %v597
        %v599 = vrot.slane %v594, %v598
        %v605 = vunpack.c.l.b16 %v590
        %v606 = vunpack.c.l.b16 %v591
        %v607 = vunpack.c.l.b16 %v592
        %v608 = vunpack.c.l.b16 %v593
        %v609 = vpack.c.b16 %v606, %v605
        %v610 = vpack.c.b16 %v608, %v607
        %v614 = vsel %vm514, %v588, 0
        %v617 = vsel %vm514, %v589, 0
        %619 = vmatprep.subr.bf16.mxu0 0
        %620 = vmatpush1.bf16.msra.mxu0 %v609
        %621 = vmatprep.subr.bf16.mxu0 0
        %622 = vmatpush1.bf16.msra.mxu0 %v610
        %623 = vmatprep.subr.bf16.mxu0 0
        %624 = vmatpush1.bf16.msra.mxu0 0
        %625 = vmatprep.subr.bf16.mxu0 0
        %626 = vmatpush1.bf16.msra.mxu0 0
        %627 = vmatprep.subr.bf16.mxu0 0
        %628 = vmatpush1.bf16.msra.mxu0 0
        %629 = vmatprep.subr.bf16.mxu0 0
        %630 = vmatpush1.bf16.msra.mxu0 0
        %631 = vmatprep.subr.bf16.mxu0 0
        %632 = vmatpush1.bf16.msra.mxu0 0
        %633 = vmatprep.subr.bf16.mxu0 0
        %634 = vmatpush1.bf16.msra.mxu0 0
        %635 = vmatprep.subr.bf16.mxu0 0
        %636 = vmatpush1.bf16.msra.mxu0 0
        %637 = vmatprep.subr.bf16.mxu0 0
        %638 = vmatpush1.bf16.msra.mxu0 0
        %639 = vmatprep.subr.bf16.mxu0 0
        %640 = vmatpush1.bf16.msra.mxu0 0
        %641 = vmatprep.subr.bf16.mxu0 0
        %642 = vmatpush1.bf16.msra.mxu0 0
        %643 = vmatprep.subr.bf16.mxu0 0
        %644 = vmatpush1.bf16.msra.mxu0 0
        %645 = vmatprep.subr.bf16.mxu0 0
        %646 = vmatpush1.bf16.msra.mxu0 0
        %647 = vmatprep.subr.bf16.mxu0 0
        %648 = vmatpush1.bf16.msra.mxu0 0
        %649 = vmatprep.subr.bf16.mxu0 0
        %650 = vmatpush1.bf16.msra.mxu0 0
        %651 = vmatprep.mubr.bf16.mxu0 0
        %652 = vmatmul.mubr.bf16.gmra.mrb[0].mxu0 %v614
        %v653 = vpop.f32.mrb[0].mxu0
        %v654 = vadd.f32 %v599, %v653
        %v655 = vpop.f32.mrb[0].mxu0
        %v656 = vpop.f32.mrb[0].mxu0
        %v657 = vadd.f32 %v599, %v656
        %v658 = vpop.f32.mrb[0].mxu0
        %659 = vmatprep.mubr.bf16.mxu0 0
        %660 = vmatmul.mubr.bf16.gmra.mrb[0].mxu0 %v617
        %v661 = vpop.f32.mrb[0].mxu0
        %v662 = vadd.f32 %v599, %v661
        %v663 = vpop.f32.mrb[0].mxu0
        %v664 = vpop.f32.mrb[0].mxu0
        %v665 = vadd.f32 %v599, %v664
        %v666 = vpop.f32.mrb[0].mxu0
        %667 = vdwg.mxu0
        %v668 = vmul.f32 %v654, 0.35355338
        %v669 = vmul.f32 %v657, 0.35355338
        %v670 = vmul.f32 %v662, 0.35355338
        %v671 = vmul.f32 %v665, 0.35355338
        %v672 = vpack.c.bf16 %v669, %v668
        %v673 = vpack.c.bf16 %v671, %v670
        %v674 = vpack.c.bf16 %v657, %v654
        %v675 = vpack.c.bf16 %v665, %v662
        %v676 = vlaneseq
        %v677 = vshrl.u32 %v676, 7
        %v678 = vlaneseq
        %v679 = vand.u32 %v678, 127
        %vm680 = vcmp.gt.s32.totalorder %v679, %v677
        %v681 = vld [vmem:[#allocation10] sm:$0x1]
        %v683 = vlaneseq
        %v684 = vshrl.u32 %v683, 7
        %v685 = vsub.s32 0, %v684
        %v686 = vrot.slane %v681, %v685
        %v688 = vadd.f32 %v686, 0.0
        %v691 = vunpack.c.l.b16 %v672
        %v692 = vunpack.c.h.b16 %v672
        %v693 = vunpack.c.l.b16 %v673
        %v694 = vunpack.c.h.b16 %v673
        %v695 = vpack.c.b16 %v691, %v691
        %v696 = vpack.c.b16 %v692, %v692
        %v697 = vpack.c.b16 %v693, %v693
        %v698 = vpack.c.b16 %v694, %v694
        %v701 = vunpack.c.l.b16 %v674
        %v702 = vunpack.c.h.b16 %v674
        %v703 = vunpack.c.l.b16 %v675
        %v704 = vunpack.c.h.b16 %v675
        %v705 = vpack.c.b16 %v701, %v701
        %706 = vrot.lane.b32.xlu0 %v705, 96
        %v707 = vpop.permute.xlu0 %706
        %vm708 = vcmask 64512
        %v710 = vsel %vm708, %v695, 0
        %v713 = vsel %vm708, %v707, 0
        %715 = vmatprep.subr.bf16.mxu0 0
        %716 = vmatpush1.bf16.xpose.msra.mxu0 %v713
        %717 = vmatprep.subr.bf16.mxu0 0
        %718 = vmatpush1.bf16.xpose.msra.mxu0 0
        %719 = vmatprep.subr.bf16.mxu0 0
        %720 = vmatpush1.bf16.xpose.msra.mxu0 0
        %721 = vmatprep.subr.bf16.mxu0 0
        %722 = vmatpush1.bf16.xpose.msra.mxu0 0
        %723 = vmatprep.subr.bf16.mxu0 0
        %724 = vmatpush1.bf16.xpose.msra.mxu0 0
        %725 = vmatprep.subr.bf16.mxu0 0
        %726 = vmatpush1.bf16.xpose.msra.mxu0 0
        %727 = vmatprep.subr.bf16.mxu0 0
        %728 = vmatpush1.bf16.xpose.msra.mxu0 0
        %729 = vmatprep.subr.bf16.mxu0 0
        %730 = vmatpush1.bf16.xpose.msra.mxu0 0
        %731 = vmatprep.subr.bf16.mxu0 0
        %732 = vmatpush1.bf16.xpose.msra.mxu0 0
        %733 = vmatprep.subr.bf16.mxu0 0
        %734 = vmatpush1.bf16.xpose.msra.mxu0 0
        %735 = vmatprep.subr.bf16.mxu0 0
        %736 = vmatpush1.bf16.xpose.msra.mxu0 0
        %737 = vmatprep.subr.bf16.mxu0 0
        %738 = vmatpush1.bf16.xpose.msra.mxu0 0
        %739 = vmatprep.subr.bf16.mxu0 0
        %740 = vmatpush1.bf16.xpose.msra.mxu0 0
        %741 = vmatprep.subr.bf16.mxu0 0
        %742 = vmatpush1.bf16.xpose.msra.mxu0 0
        %743 = vmatprep.subr.bf16.mxu0 0
        %744 = vmatpush1.bf16.xpose.msra.mxu0 0
        %745 = vmatprep.subr.bf16.mxu0 0
        %746 = vmatpush1.bf16.xpose.msra.mxu0 0
        %747 = vmatprep.mubr.bf16.mxu0 0
        %748 = vmatmul.mubr.bf16.gmra.mrb[0].mxu0 %v710
        %v749 = vpop.f32.mrb[0].mxu0
        %v750 = vadd.f32 0.0, %v749
        %v751 = vpop.f32.mrb[0].mxu0
        %v752 = vpop.f32.mrb[0].mxu0
        %v753 = vpop.f32.mrb[0].mxu0
        %754 = vdwg.mxu0
        %v755 = vpack.c.b16 %v702, %v702
        %756 = vrot.lane.b32.xlu0 %v755, 96
        %v757 = vpop.permute.xlu0 %756
        %v759 = vsel %vm708, %v696, 0
        %v762 = vsel %vm708, %v757, 0
        %764 = vmatprep.subr.bf16.mxu0 0
        %765 = vmatpush1.bf16.xpose.msra.mxu0 %v762
        %766 = vmatprep.subr.bf16.mxu0 0
        %767 = vmatpush1.bf16.xpose.msra.mxu0 0
        %768 = vmatprep.subr.bf16.mxu0 0
        %769 = vmatpush1.bf16.xpose.msra.mxu0 0
        %770 = vmatprep.subr.bf16.mxu0 0
        %771 = vmatpush1.bf16.xpose.msra.mxu0 0
        %772 = vmatprep.subr.bf16.mxu0 0
        %773 = vmatpush1.bf16.xpose.msra.mxu0 0
        %774 = vmatprep.subr.bf16.mxu0 0
        %775 = vmatpush1.bf16.xpose.msra.mxu0 0
        %776 = vmatprep.subr.bf16.mxu0 0
        %777 = vmatpush1.bf16.xpose.msra.mxu0 0
        %778 = vmatprep.subr.bf16.mxu0 0
        %779 = vmatpush1.bf16.xpose.msra.mxu0 0
        %780 = vmatprep.subr.bf16.mxu0 0
        %781 = vmatpush1.bf16.xpose.msra.mxu0 0
        %782 = vmatprep.subr.bf16.mxu0 0
        %783 = vmatpush1.bf16.xpose.msra.mxu0 0
        %784 = vmatprep.subr.bf16.mxu0 0
        %785 = vmatpush1.bf16.xpose.msra.mxu0 0
        %786 = vmatprep.subr.bf16.mxu0 0
        %787 = vmatpush1.bf16.xpose.msra.mxu0 0
        %788 = vmatprep.subr.bf16.mxu0 0
        %789 = vmatpush1.bf16.xpose.msra.mxu0 0
        %790 = vmatprep.subr.bf16.mxu0 0
        %791 = vmatpush1.bf16.xpose.msra.mxu0 0
        %792 = vmatprep.subr.bf16.mxu0 0
        %793 = vmatpush1.bf16.xpose.msra.mxu0 0
        %794 = vmatprep.subr.bf16.mxu0 0
        %795 = vmatpush1.bf16.xpose.msra.mxu0 0
        %796 = vmatprep.mubr.bf16.mxu0 0
        %797 = vmatmul.mubr.bf16.gmra.mrb[0].mxu0 %v759
        %v798 = vpop.f32.mrb[0].mxu0
        %v799 = vadd.f32 0.0, %v798
        %v800 = vpop.f32.mrb[0].mxu0
        %v801 = vpop.f32.mrb[0].mxu0
        %v802 = vpop.f32.mrb[0].mxu0
        %803 = vdwg.mxu0
        %v804 = vpack.c.b16 %v703, %v703
        %805 = vrot.lane.b32.xlu0 %v804, 96
        %v806 = vpop.permute.xlu0 %805
        %v808 = vsel %vm708, %v697, 0
        %v811 = vsel %vm708, %v806, 0
        %813 = vmatprep.subr.bf16.mxu0 0
        %814 = vmatpush1.bf16.xpose.msra.mxu0 %v811
        %815 = vmatprep.subr.bf16.mxu0 0
        %816 = vmatpush1.bf16.xpose.msra.mxu0 0
        %817 = vmatprep.subr.bf16.mxu0 0
        %818 = vmatpush1.bf16.xpose.msra.mxu0 0
        %819 = vmatprep.subr.bf16.mxu0 0
        %820 = vmatpush1.bf16.xpose.msra.mxu0 0
        %821 = vmatprep.subr.bf16.mxu0 0
        %822 = vmatpush1.bf16.xpose.msra.mxu0 0
        %823 = vmatprep.subr.bf16.mxu0 0
        %824 = vmatpush1.bf16.xpose.msra.mxu0 0
        %825 = vmatprep.subr.bf16.mxu0 0
        %826 = vmatpush1.bf16.xpose.msra.mxu0 0
        %827 = vmatprep.subr.bf16.mxu0 0
        %828 = vmatpush1.bf16.xpose.msra.mxu0 0
        %829 = vmatprep.subr.bf16.mxu0 0
        %830 = vmatpush1.bf16.xpose.msra.mxu0 0
        %831 = vmatprep.subr.bf16.mxu0 0
        %832 = vmatpush1.bf16.xpose.msra.mxu0 0
        %833 = vmatprep.subr.bf16.mxu0 0
        %834 = vmatpush1.bf16.xpose.msra.mxu0 0
        %835 = vmatprep.subr.bf16.mxu0 0
        %836 = vmatpush1.bf16.xpose.msra.mxu0 0
        %837 = vmatprep.subr.bf16.mxu0 0
        %838 = vmatpush1.bf16.xpose.msra.mxu0 0
        %839 = vmatprep.subr.bf16.mxu0 0
        %840 = vmatpush1.bf16.xpose.msra.mxu0 0
        %841 = vmatprep.subr.bf16.mxu0 0
        %842 = vmatpush1.bf16.xpose.msra.mxu0 0
        %843 = vmatprep.subr.bf16.mxu0 0
        %844 = vmatpush1.bf16.xpose.msra.mxu0 0
        %845 = vmatprep.mubr.bf16.mxu0 0
        %846 = vmatmul.mubr.bf16.gmra.mrb[0].mxu0 %v808
        %v847 = vpop.f32.mrb[0].mxu0
        %v848 = vadd.f32 0.0, %v847
        %v849 = vpop.f32.mrb[0].mxu0
        %v850 = vpop.f32.mrb[0].mxu0
        %v851 = vpop.f32.mrb[0].mxu0
        %852 = vdwg.mxu0
        %v853 = vpack.c.b16 %v704, %v704
        %854 = vrot.lane.b32.xlu0 %v853, 96
        %v855 = vpop.permute.xlu0 %854
        %v857 = vsel %vm708, %v698, 0
        %v860 = vsel %vm708, %v855, 0
        %862 = vmatprep.subr.bf16.mxu0 0
        %863 = vmatpush1.bf16.xpose.msra.mxu0 %v860
        %864 = vmatprep.subr.bf16.mxu0 0
        %865 = vmatpush1.bf16.xpose.msra.mxu0 0
        %866 = vmatprep.subr.bf16.mxu0 0
        %867 = vmatpush1.bf16.xpose.msra.mxu0 0
        %868 = vmatprep.subr.bf16.mxu0 0
        %869 = vmatpush1.bf16.xpose.msra.mxu0 0
        %870 = vmatprep.subr.bf16.mxu0 0
        %871 = vmatpush1.bf16.xpose.msra.mxu0 0
        %872 = vmatprep.subr.bf16.mxu0 0
        %873 = vmatpush1.bf16.xpose.msra.mxu0 0
        %874 = vmatprep.subr.bf16.mxu0 0
        %875 = vmatpush1.bf16.xpose.msra.mxu0 0
        %876 = vmatprep.subr.bf16.mxu0 0
        %877 = vmatpush1.bf16.xpose.msra.mxu0 0
        %878 = vmatprep.subr.bf16.mxu0 0
        %879 = vmatpush1.bf16.xpose.msra.mxu0 0
        %880 = vmatprep.subr.bf16.mxu0 0
        %881 = vmatpush1.bf16.xpose.msra.mxu0 0
        %882 = vmatprep.subr.bf16.mxu0 0
        %883 = vmatpush1.bf16.xpose.msra.mxu0 0
        %884 = vmatprep.subr.bf16.mxu0 0
        %885 = vmatpush1.bf16.xpose.msra.mxu0 0
        %886 = vmatprep.subr.bf16.mxu0 0
        %887 = vmatpush1.bf16.xpose.msra.mxu0 0
        %888 = vmatprep.subr.bf16.mxu0 0
        %889 = vmatpush1.bf16.xpose.msra.mxu0 0
        %890 = vmatprep.subr.bf16.mxu0 0
        %891 = vmatpush1.bf16.xpose.msra.mxu0 0
        %892 = vmatprep.subr.bf16.mxu0 0
        %893 = vmatpush1.bf16.xpose.msra.mxu0 0
        %894 = vmatprep.mubr.bf16.mxu0 0
        %895 = vmatmul.mubr.bf16.gmra.mrb[0].mxu0 %v857
        %v896 = vpop.f32.mrb[0].mxu0
        %v897 = vadd.f32 0.0, %v896
        %v898 = vpop.f32.mrb[0].mxu0
        %v899 = vpop.f32.mrb[0].mxu0
        %v900 = vpop.f32.mrb[0].mxu0
        %901 = vdwg.mxu0
        %v902 = vsel %vm680, 1, 0
        %vm903 = vcmp.eq.s32.totalorder %v902, 1
        %v904 = vsel %vm903, -inf, %v750
        %v905 = vsel %vm903, -inf, %v799
        %v906 = vsel %vm903, -inf, %v848
        %v907 = vsel %vm903, -inf, %v897
        %v908 = vsel %vm708, %v904, -inf
        %909 = vmax.xlane.f32.xlu0 %v908
        %v910 = vpop.xlane.xlu0 %909
        %v911 = vsel %vm708, %v905, -inf
        %912 = vmax.xlane.f32.xlu0 %v911
        %v913 = vpop.xlane.xlu0 %912
        %v914 = vsel %vm708, %v906, -inf
        %915 = vmax.xlane.f32.xlu0 %v914
        %v916 = vpop.xlane.xlu0 %915
        %v917 = vsel %vm708, %v907, -inf
        %918 = vmax.xlane.f32.xlu0 %v917
        %v919 = vpop.xlane.xlu0 %918
        %v920 = vsub.f32 %v904, %v910
        %v921 = vsub.f32 %v905, %v913
        %v922 = vsub.f32 %v906, %v916
        %v923 = vsub.f32 %v907, %v919
        %v924 = vmul.f32 %v920, 1.442695
        %v925 = vpow.pop %v924
        %v926 = vmul.f32 %v921, 1.442695
        %v927 = vpow.pop %v926
        %v928 = vmul.f32 %v922, 1.442695
        %v929 = vpow.pop %v928
        %v930 = vmul.f32 %v923, 1.442695
        %v931 = vpow.pop %v930
        %v932 = vsel %vm708, %v925, 0.0
        %933 = vadd.xlane.f32.xlu0 %v932
        %v934 = vpop.xlane.xlu0 %933
        %v935 = vsel %vm708, %v927, 0.0
        %936 = vadd.xlane.f32.xlu0 %v935
        %v937 = vpop.xlane.xlu0 %936
        %v938 = vsel %vm708, %v929, 0.0
        %939 = vadd.xlane.f32.xlu0 %v938
        %v940 = vpop.xlane.xlu0 %939
        %v941 = vsel %vm708, %v931, 0.0
        %942 = vadd.xlane.f32.xlu0 %v941
        %v943 = vpop.xlane.xlu0 %942
        %v944 = vrcp.pop %v934
        %v945 = vrcp.pop %v937
        %v946 = vrcp.pop %v940
        %v947 = vrcp.pop %v943
        %v948 = vmul.f32 %v925, %v944
        %v949 = vmul.f32 %v927, %v945
        %v950 = vmul.f32 %v929, %v946
        %v951 = vmul.f32 %v931, %v947
        %v952 = vpack.c.bf16 %v948, %v948
        %v953 = vpack.c.bf16 %v949, %v949
        %v954 = vpack.c.bf16 %v950, %v950
        %v955 = vpack.c.bf16 %v951, %v951
        %956 = vrot.lane.b32.xlu0 %v705, 64
        %v957 = vpop.permute.xlu0 %956
        %v959 = vsel %vm708, %v952, 0
        %vm961 = vcmask 1043456
        %v963 = vsel %vm961, %v957, 0
        %965 = vmatprep.subr.bf16.mxu0 0
        %966 = vmatpush1.bf16.msra.mxu0 %v963
        %967 = vmatprep.subr.bf16.mxu0 0
        %968 = vmatpush1.bf16.msra.mxu0 0
        %969 = vmatprep.subr.bf16.mxu0 0
        %970 = vmatpush1.bf16.msra.mxu0 0
        %971 = vmatprep.subr.bf16.mxu0 0
        %972 = vmatpush1.bf16.msra.mxu0 0
        %973 = vmatprep.subr.bf16.mxu0 0
        %974 = vmatpush1.bf16.msra.mxu0 0
        %975 = vmatprep.subr.bf16.mxu0 0
        %976 = vmatpush1.bf16.msra.mxu0 0
        %977 = vmatprep.subr.bf16.mxu0 0
        %978 = vmatpush1.bf16.msra.mxu0 0
        %979 = vmatprep.subr.bf16.mxu0 0
        %980 = vmatpush1.bf16.msra.mxu0 0
        %981 = vmatprep.subr.bf16.mxu0 0
        %982 = vmatpush1.bf16.msra.mxu0 0
        %983 = vmatprep.subr.bf16.mxu0 0
        %984 = vmatpush1.bf16.msra.mxu0 0
        %985 = vmatprep.subr.bf16.mxu0 0
        %986 = vmatpush1.bf16.msra.mxu0 0
        %987 = vmatprep.subr.bf16.mxu0 0
        %988 = vmatpush1.bf16.msra.mxu0 0
        %989 = vmatprep.subr.bf16.mxu0 0
        %990 = vmatpush1.bf16.msra.mxu0 0
        %991 = vmatprep.subr.bf16.mxu0 0
        %992 = vmatpush1.bf16.msra.mxu0 0
        %993 = vmatprep.subr.bf16.mxu0 0
        %994 = vmatpush1.bf16.msra.mxu0 0
        %995 = vmatprep.subr.bf16.mxu0 0
        %996 = vmatpush1.bf16.msra.mxu0 0
        %997 = vmatprep.mubr.bf16.mxu0 0
        %998 = vmatmul.mubr.bf16.gmra.mrb[0].mxu0 %v959
        %v999 = vpop.f32.mrb[0].mxu0
        %v1000 = vadd.f32 0.0, %v999
        %v1001 = vpop.f32.mrb[0].mxu0
        %v1002 = vpop.f32.mrb[0].mxu0
        %v1003 = vpop.f32.mrb[0].mxu0
        %1004 = vdwg.mxu0
        %1005 = vrot.lane.b32.xlu0 %v755, 64
        %v1006 = vpop.permute.xlu0 %1005
        %v1008 = vsel %vm708, %v953, 0
        %v1011 = vsel %vm961, %v1006, 0
        %1013 = vmatprep.subr.bf16.mxu0 0
        %1014 = vmatpush1.bf16.msra.mxu0 %v1011
        %1015 = vmatprep.subr.bf16.mxu0 0
        %1016 = vmatpush1.bf16.msra.mxu0 0
        %1017 = vmatprep.subr.bf16.mxu0 0
        %1018 = vmatpush1.bf16.msra.mxu0 0
        %1019 = vmatprep.subr.bf16.mxu0 0
        %1020 = vmatpush1.bf16.msra.mxu0 0
        %1021 = vmatprep.subr.bf16.mxu0 0
        %1022 = vmatpush1.bf16.msra.mxu0 0
        %1023 = vmatprep.subr.bf16.mxu0 0
        %1024 = vmatpush1.bf16.msra.mxu0 0
        %1025 = vmatprep.subr.bf16.mxu0 0
        %1026 = vmatpush1.bf16.msra.mxu0 0
        %1027 = vmatprep.subr.bf16.mxu0 0
        %1028 = vmatpush1.bf16.msra.mxu0 0
        %1029 = vmatprep.subr.bf16.mxu0 0
        %1030 = vmatpush1.bf16.msra.mxu0 0
        %1031 = vmatprep.subr.bf16.mxu0 0
        %1032 = vmatpush1.bf16.msra.mxu0 0
        %1033 = vmatprep.subr.bf16.mxu0 0
        %1034 = vmatpush1.bf16.msra.mxu0 0
        %1035 = vmatprep.subr.bf16.mxu0 0
        %1036 = vmatpush1.bf16.msra.mxu0 0
        %1037 = vmatprep.subr.bf16.mxu0 0
        %1038 = vmatpush1.bf16.msra.mxu0 0
        %1039 = vmatprep.subr.bf16.mxu0 0
        %1040 = vmatpush1.bf16.msra.mxu0 0
        %1041 = vmatprep.subr.bf16.mxu0 0
        %1042 = vmatpush1.bf16.msra.mxu0 0
        %1043 = vmatprep.subr.bf16.mxu0 0
        %1044 = vmatpush1.bf16.msra.mxu0 0
        %1045 = vmatprep.mubr.bf16.mxu0 0
        %1046 = vmatmul.mubr.bf16.gmra.mrb[0].mxu0 %v1008
        %v1047 = vpop.f32.mrb[0].mxu0
        %v1048 = vadd.f32 0.0, %v1047
        %v1049 = vpop.f32.mrb[0].mxu0
        %v1050 = vpop.f32.mrb[0].mxu0
        %v1051 = vpop.f32.mrb[0].mxu0
        %1052 = vdwg.mxu0
        %1053 = vrot.lane.b32.xlu0 %v804, 64
        %v1054 = vpop.permute.xlu0 %1053
        %v1056 = vsel %vm708, %v954, 0
        %v1059 = vsel %vm961, %v1054, 0
        %1061 = vmatprep.subr.bf16.mxu0 0
        %1062 = vmatpush1.bf16.msra.mxu0 %v1059
        %1063 = vmatprep.subr.bf16.mxu0 0
        %1064 = vmatpush1.bf16.msra.mxu0 0
        %1065 = vmatprep.subr.bf16.mxu0 0
        %1066 = vmatpush1.bf16.msra.mxu0 0
        %1067 = vmatprep.subr.bf16.mxu0 0
        %1068 = vmatpush1.bf16.msra.mxu0 0
        %1069 = vmatprep.subr.bf16.mxu0 0
        %1070 = vmatpush1.bf16.msra.mxu0 0
        %1071 = vmatprep.subr.bf16.mxu0 0
        %1072 = vmatpush1.bf16.msra.mxu0 0
        %1073 = vmatprep.subr.bf16.mxu0 0
        %1074 = vmatpush1.bf16.msra.mxu0 0
        %1075 = vmatprep.subr.bf16.mxu0 0
        %1076 = vmatpush1.bf16.msra.mxu0 0
        %1077 = vmatprep.subr.bf16.mxu0 0
        %1078 = vmatpush1.bf16.msra.mxu0 0
        %1079 = vmatprep.subr.bf16.mxu0 0
        %1080 = vmatpush1.bf16.msra.mxu0 0
        %1081 = vmatprep.subr.bf16.mxu0 0
        %1082 = vmatpush1.bf16.msra.mxu0 0
        %1083 = vmatprep.subr.bf16.mxu0 0
        %1084 = vmatpush1.bf16.msra.mxu0 0
        %1085 = vmatprep.subr.bf16.mxu0 0
        %1086 = vmatpush1.bf16.msra.mxu0 0
        %1087 = vmatprep.subr.bf16.mxu0 0
        %1088 = vmatpush1.bf16.msra.mxu0 0
        %1089 = vmatprep.subr.bf16.mxu0 0
        %1090 = vmatpush1.bf16.msra.mxu0 0
        %1091 = vmatprep.subr.bf16.mxu0 0
        %1092 = vmatpush1.bf16.msra.mxu0 0
        %1093 = vmatprep.mubr.bf16.mxu0 0
        %1094 = vmatmul.mubr.bf16.gmra.mrb[0].mxu0 %v1056
        %v1095 = vpop.f32.mrb[0].mxu0
        %v1096 = vadd.f32 0.0, %v1095
        %v1097 = vpop.f32.mrb[0].mxu0
        %v1098 = vpop.f32.mrb[0].mxu0
        %v1099 = vpop.f32.mrb[0].mxu0
        %1100 = vdwg.mxu0
        %1101 = vrot.lane.b32.xlu0 %v853, 64
        %v1102 = vpop.permute.xlu0 %1101
        %v1104 = vsel %vm708, %v955, 0
        %v1107 = vsel %vm961, %v1102, 0
        %1109 = vmatprep.subr.bf16.mxu0 0
        %1110 = vmatpush1.bf16.msra.mxu0 %v1107
        %1111 = vmatprep.subr.bf16.mxu0 0
        %1112 = vmatpush1.bf16.msra.mxu0 0
        %1113 = vmatprep.subr.bf16.mxu0 0
        %1114 = vmatpush1.bf16.msra.mxu0 0
        %1115 = vmatprep.subr.bf16.mxu0 0
        %1116 = vmatpush1.bf16.msra.mxu0 0
        %1117 = vmatprep.subr.bf16.mxu0 0
        %1118 = vmatpush1.bf16.msra.mxu0 0
        %1119 = vmatprep.subr.bf16.mxu0 0
        %1120 = vmatpush1.bf16.msra.mxu0 0
        %1121 = vmatprep.subr.bf16.mxu0 0
        %1122 = vmatpush1.bf16.msra.mxu0 0
        %1123 = vmatprep.subr.bf16.mxu0 0
        %1124 = vmatpush1.bf16.msra.mxu0 0
        %1125 = vmatprep.subr.bf16.mxu0 0
        %1126 = vmatpush1.bf16.msra.mxu0 0
        %1127 = vmatprep.subr.bf16.mxu0 0
        %1128 = vmatpush1.bf16.msra.mxu0 0
        %1129 = vmatprep.subr.bf16.mxu0 0
        %1130 = vmatpush1.bf16.msra.mxu0 0
        %1131 = vmatprep.subr.bf16.mxu0 0
        %1132 = vmatpush1.bf16.msra.mxu0 0
        %1133 = vmatprep.subr.bf16.mxu0 0
        %1134 = vmatpush1.bf16.msra.mxu0 0
        %1135 = vmatprep.subr.bf16.mxu0 0
        %1136 = vmatpush1.bf16.msra.mxu0 0
        %1137 = vmatprep.subr.bf16.mxu0 0
        %1138 = vmatpush1.bf16.msra.mxu0 0
        %1139 = vmatprep.subr.bf16.mxu0 0
        %1140 = vmatpush1.bf16.msra.mxu0 0
        %1141 = vmatprep.mubr.bf16.mxu0 0
        %1142 = vmatmul.mubr.bf16.gmra.mrb[0].mxu0 %v1104
        %v1143 = vpop.f32.mrb[0].mxu0
        %v1144 = vadd.f32 0.0, %v1143
        %v1145 = vpop.f32.mrb[0].mxu0
        %v1146 = vpop.f32.mrb[0].mxu0
        %v1147 = vpop.f32.mrb[0].mxu0
        %1148 = vdwg.mxu0
        %v1149 = vpack.c.bf16 %v1048, %v1000
        %v1150 = vpack.c.bf16 %v1144, %v1096
        %v1151 = vld [vmem:[#allocation8] sm:$0xf]
        %v1153 = vsel %vm708, %v1149, 0
        %v1156 = vsel %vm708, %v1150, 0
        %v1159 = vsel %vm961, %v1151, 0
        %1161 = vmatprep.subr.bf16.mxu0 0
        %1162 = vmatpush1.bf16.msra.mxu0 %v1159
        %1163 = vmatprep.subr.bf16.mxu0 0
        %1164 = vmatpush1.bf16.msra.mxu0 0
        %1165 = vmatprep.subr.bf16.mxu0 0
        %1166 = vmatpush1.bf16.msra.mxu0 0
        %1167 = vmatprep.subr.bf16.mxu0 0
        %1168 = vmatpush1.bf16.msra.mxu0 0
        %1169 = vmatprep.subr.bf16.mxu0 0
        %1170 = vmatpush1.bf16.msra.mxu0 0
        %1171 = vmatprep.subr.bf16.mxu0 0
        %1172 = vmatpush1.bf16.msra.mxu0 0
        %1173 = vmatprep.subr.bf16.mxu0 0
        %1174 = vmatpush1.bf16.msra.mxu0 0
        %1175 = vmatprep.subr.bf16.mxu0 0
        %1176 = vmatpush1.bf16.msra.mxu0 0
        %1177 = vmatprep.subr.bf16.mxu0 0
        %1178 = vmatpush1.bf16.msra.mxu0 0
        %1179 = vmatprep.subr.bf16.mxu0 0
        %1180 = vmatpush1.bf16.msra.mxu0 0
        %1181 = vmatprep.subr.bf16.mxu0 0
        %1182 = vmatpush1.bf16.msra.mxu0 0
        %1183 = vmatprep.subr.bf16.mxu0 0
        %1184 = vmatpush1.bf16.msra.mxu0 0
        %1185 = vmatprep.subr.bf16.mxu0 0
        %1186 = vmatpush1.bf16.msra.mxu0 0
        %1187 = vmatprep.subr.bf16.mxu0 0
        %1188 = vmatpush1.bf16.msra.mxu0 0
        %1189 = vmatprep.subr.bf16.mxu0 0
        %1190 = vmatpush1.bf16.msra.mxu0 0
        %1191 = vmatprep.subr.bf16.mxu0 0
        %1192 = vmatpush1.bf16.msra.mxu0 0
        %1193 = vmatprep.mubr.bf16.mxu0 0
        %1194 = vmatmul.mubr.bf16.gmra.mrb[0].mxu0 %v1153
        %v1195 = vpop.f32.mrb[0].mxu0
        %v1196 = vadd.f32 0.0, %v1195
        %v1197 = vpop.f32.mrb[0].mxu0
        %v1198 = vpop.f32.mrb[0].mxu0
        %v1199 = vadd.f32 0.0, %v1198
        %v1200 = vpop.f32.mrb[0].mxu0
        %1201 = vmatprep.mubr.bf16.mxu0 0
        %1202 = vmatmul.mubr.bf16.gmra.mrb[0].mxu0 %v1156
        %v1203 = vpop.f32.mrb[0].mxu0
        %v1204 = vadd.f32 0.0, %v1203
        %v1205 = vpop.f32.mrb[0].mxu0
        %v1206 = vpop.f32.mrb[0].mxu0
        %v1207 = vadd.f32 0.0, %v1206
        %v1208 = vpop.f32.mrb[0].mxu0
        %1209 = vdwg.mxu0
        %v1210 = vadd.f32 %v688, %v1196
        %v1211 = vadd.f32 %v688, %v1199
        %v1212 = vadd.f32 %v688, %v1204
        %v1213 = vadd.f32 %v688, %v1207
        %1214 = vrot.lane.b32.xlu0 %v695, 120
        %v1215 = vpop.permute.xlu0 %1214
        %1216 = vrot.lane.b32.xlu0 %v705, 88
        %v1217 = vpop.permute.xlu0 %1216
        %v1219 = vsel %vm708, %v1215, 0
        %v1222 = vsel %vm708, %v1217, 0
        %1224 = vmatprep.subr.bf16.mxu0 0
        %1225 = vmatpush1.bf16.xpose.msra.mxu0 %v1222
        %1226 = vmatprep.subr.bf16.mxu0 0
        %1227 = vmatpush1.bf16.xpose.msra.mxu0 0
        %1228 = vmatprep.subr.bf16.mxu0 0
        %1229 = vmatpush1.bf16.xpose.msra.mxu0 0
        %1230 = vmatprep.subr.bf16.mxu0 0
        %1231 = vmatpush1.bf16.xpose.msra.mxu0 0
        %1232 = vmatprep.subr.bf16.mxu0 0
        %1233 = vmatpush1.bf16.xpose.msra.mxu0 0
        %1234 = vmatprep.subr.bf16.mxu0 0
        %1235 = vmatpush1.bf16.xpose.msra.mxu0 0
        %1236 = vmatprep.subr.bf16.mxu0 0
        %1237 = vmatpush1.bf16.xpose.msra.mxu0 0
        %1238 = vmatprep.subr.bf16.mxu0 0
        %1239 = vmatpush1.bf16.xpose.msra.mxu0 0
        %1240 = vmatprep.subr.bf16.mxu0 0
        %1241 = vmatpush1.bf16.xpose.msra.mxu0 0
        %1242 = vmatprep.subr.bf16.mxu0 0
        %1243 = vmatpush1.bf16.xpose.msra.mxu0 0
        %1244 = vmatprep.subr.bf16.mxu0 0
        %1245 = vmatpush1.bf16.xpose.msra.mxu0 0
        %1246 = vmatprep.subr.bf16.mxu0 0
        %1247 = vmatpush1.bf16.xpose.msra.mxu0 0
        %1248 = vmatprep.subr.bf16.mxu0 0
        %1249 = vmatpush1.bf16.xpose.msra.mxu0 0
        %1250 = vmatprep.subr.bf16.mxu0 0
        %1251 = vmatpush1.bf16.xpose.msra.mxu0 0
        %1252 = vmatprep.subr.bf16.mxu0 0
        %1253 = vmatpush1.bf16.xpose.msra.mxu0 0
        %1254 = vmatprep.subr.bf16.mxu0 0
        %1255 = vmatpush1.bf16.xpose.msra.mxu0 0
        %1256 = vmatprep.mubr.bf16.mxu0 0
        %1257 = vmatmul.mubr.bf16.gmra.mrb[0].mxu0 %v1219
        %v1258 = vpop.f32.mrb[0].mxu0
        %v1259 = vadd.f32 0.0, %v1258
        %v1260 = vpop.f32.mrb[0].mxu0
        %v1261 = vpop.f32.mrb[0].mxu0
        %v1262 = vpop.f32.mrb[0].mxu0
        %1263 = vdwg.mxu0
        %1264 = vrot.lane.b32.xlu0 %v696, 120
        %v1265 = vpop.permute.xlu0 %1264
        %1266 = vrot.lane.b32.xlu0 %v755, 88
        %v1267 = vpop.permute.xlu0 %1266
        %v1269 = vsel %vm708, %v1265, 0
        %v1272 = vsel %vm708, %v1267, 0
        %1274 = vmatprep.subr.bf16.mxu0 0
        %1275 = vmatpush1.bf16.xpose.msra.mxu0 %v1272
        %1276 = vmatprep.subr.bf16.mxu0 0
        %1277 = vmatpush1.bf16.xpose.msra.mxu0 0
        %1278 = vmatprep.subr.bf16.mxu0 0
        %1279 = vmatpush1.bf16.xpose.msra.mxu0 0
        %1280 = vmatprep.subr.bf16.mxu0 0
        %1281 = vmatpush1.bf16.xpose.msra.mxu0 0
        %1282 = vmatprep.subr.bf16.mxu0 0
        %1283 = vmatpush1.bf16.xpose.msra.mxu0 0
        %1284 = vmatprep.subr.bf16.mxu0 0
        %1285 = vmatpush1.bf16.xpose.msra.mxu0 0
        %1286 = vmatprep.subr.bf16.mxu0 0
        %1287 = vmatpush1.bf16.xpose.msra.mxu0 0
        %1288 = vmatprep.subr.bf16.mxu0 0
        %1289 = vmatpush1.bf16.xpose.msra.mxu0 0
        %1290 = vmatprep.subr.bf16.mxu0 0
        %1291 = vmatpush1.bf16.xpose.msra.mxu0 0
        %1292 = vmatprep.subr.bf16.mxu0 0
        %1293 = vmatpush1.bf16.xpose.msra.mxu0 0
        %1294 = vmatprep.subr.bf16.mxu0 0
        %1295 = vmatpush1.bf16.xpose.msra.mxu0 0
        %1296 = vmatprep.subr.bf16.mxu0 0
        %1297 = vmatpush1.bf16.xpose.msra.mxu0 0
        %1298 = vmatprep.subr.bf16.mxu0 0
        %1299 = vmatpush1.bf16.xpose.msra.mxu0 0
        %1300 = vmatprep.subr.bf16.mxu0 0
        %1301 = vmatpush1.bf16.xpose.msra.mxu0 0
        %1302 = vmatprep.subr.bf16.mxu0 0
        %1303 = vmatpush1.bf16.xpose.msra.mxu0 0
        %1304 = vmatprep.subr.bf16.mxu0 0
        %1305 = vmatpush1.bf16.xpose.msra.mxu0 0
        %1306 = vmatprep.mubr.bf16.mxu0 0
        %1307 = vmatmul.mubr.bf16.gmra.mrb[0].mxu0 %v1269
        %v1308 = vpop.f32.mrb[0].mxu0
        %v1309 = vadd.f32 0.0, %v1308
        %v1310 = vpop.f32.mrb[0].mxu0
        %v1311 = vpop.f32.mrb[0].mxu0
        %v1312 = vpop.f32.mrb[0].mxu0
        %1313 = vdwg.mxu0
        %1314 = vrot.lane.b32.xlu0 %v697, 120
        %v1315 = vpop.permute.xlu0 %1314
        %1316 = vrot.lane.b32.xlu0 %v804, 88
        %v1317 = vpop.permute.xlu0 %1316
        %v1319 = vsel %vm708, %v1315, 0
        %v1322 = vsel %vm708, %v1317, 0
        %1324 = vmatprep.subr.bf16.mxu0 0
        %1325 = vmatpush1.bf16.xpose.msra.mxu0 %v1322
        %1326 = vmatprep.subr.bf16.mxu0 0
        %1327 = vmatpush1.bf16.xpose.msra.mxu0 0
        %1328 = vmatprep.subr.bf16.mxu0 0
        %1329 = vmatpush1.bf16.xpose.msra.mxu0 0
        %1330 = vmatprep.subr.bf16.mxu0 0
        %1331 = vmatpush1.bf16.xpose.msra.mxu0 0
        %1332 = vmatprep.subr.bf16.mxu0 0
        %1333 = vmatpush1.bf16.xpose.msra.mxu0 0
        %1334 = vmatprep.subr.bf16.mxu0 0
        %1335 = vmatpush1.bf16.xpose.msra.mxu0 0
        %1336 = vmatprep.subr.bf16.mxu0 0
        %1337 = vmatpush1.bf16.xpose.msra.mxu0 0
        %1338 = vmatprep.subr.bf16.mxu0 0
        %1339 = vmatpush1.bf16.xpose.msra.mxu0 0
        %1340 = vmatprep.subr.bf16.mxu0 0
        %1341 = vmatpush1.bf16.xpose.msra.mxu0 0
        %1342 = vmatprep.subr.bf16.mxu0 0
        %1343 = vmatpush1.bf16.xpose.msra.mxu0 0
        %1344 = vmatprep.subr.bf16.mxu0 0
        %1345 = vmatpush1.bf16.xpose.msra.mxu0 0
        %1346 = vmatprep.subr.bf16.mxu0 0
        %1347 = vmatpush1.bf16.xpose.msra.mxu0 0
        %1348 = vmatprep.subr.bf16.mxu0 0
        %1349 = vmatpush1.bf16.xpose.msra.mxu0 0
        %1350 = vmatprep.subr.bf16.mxu0 0
        %1351 = vmatpush1.bf16.xpose.msra.mxu0 0
        %1352 = vmatprep.subr.bf16.mxu0 0
        %1353 = vmatpush1.bf16.xpose.msra.mxu0 0
        %1354 = vmatprep.subr.bf16.mxu0 0
        %1355 = vmatpush1.bf16.xpose.msra.mxu0 0
        %1356 = vmatprep.mubr.bf16.mxu0 0
        %1357 = vmatmul.mubr.bf16.gmra.mrb[0].mxu0 %v1319
        %v1358 = vpop.f32.mrb[0].mxu0
        %v1359 = vadd.f32 0.0, %v1358
        %v1360 = vpop.f32.mrb[0].mxu0
        %v1361 = vpop.f32.mrb[0].mxu0
        %v1362 = vpop.f32.mrb[0].mxu0
        %1363 = vdwg.mxu0
        %1364 = vrot.lane.b32.xlu0 %v698, 120
        %v1365 = vpop.permute.xlu0 %1364
        %1366 = vrot.lane.b32.xlu0 %v853, 88
        %v1367 = vpop.permute.xlu0 %1366
        %v1369 = vsel %vm708, %v1365, 0
        %v1372 = vsel %vm708, %v1367, 0
        %1374 = vmatprep.subr.bf16.mxu0 0
        %1375 = vmatpush1.bf16.xpose.msra.mxu0 %v1372
        %1376 = vmatprep.subr.bf16.mxu0 0
        %1377 = vmatpush1.bf16.xpose.msra.mxu0 0
        %1378 = vmatprep.subr.bf16.mxu0 0
        %1379 = vmatpush1.bf16.xpose.msra.mxu0 0
        %1380 = vmatprep.subr.bf16.mxu0 0
        %1381 = vmatpush1.bf16.xpose.msra.mxu0 0
        %1382 = vmatprep.subr.bf16.mxu0 0
        %1383 = vmatpush1.bf16.xpose.msra.mxu0 0
        %1384 = vmatprep.subr.bf16.mxu0 0
        %1385 = vmatpush1.bf16.xpose.msra.mxu0 0
        %1386 = vmatprep.subr.bf16.mxu0 0
        %1387 = vmatpush1.bf16.xpose.msra.mxu0 0
        %1388 = vmatprep.subr.bf16.mxu0 0
        %1389 = vmatpush1.bf16.xpose.msra.mxu0 0
        %1390 = vmatprep.subr.bf16.mxu0 0
        %1391 = vmatpush1.bf16.xpose.msra.mxu0 0
        %1392 = vmatprep.subr.bf16.mxu0 0
        %1393 = vmatpush1.bf16.xpose.msra.mxu0 0
        %1394 = vmatprep.subr.bf16.mxu0 0
        %1395 = vmatpush1.bf16.xpose.msra.mxu0 0
        %1396 = vmatprep.subr.bf16.mxu0 0
        %1397 = vmatpush1.bf16.xpose.msra.mxu0 0
        %1398 = vmatprep.subr.bf16.mxu0 0
        %1399 = vmatpush1.bf16.xpose.msra.mxu0 0
        %1400 = vmatprep.subr.bf16.mxu0 0
        %1401 = vmatpush1.bf16.xpose.msra.mxu0 0
        %1402 = vmatprep.subr.bf16.mxu0 0
        %1403 = vmatpush1.bf16.xpose.msra.mxu0 0
        %1404 = vmatprep.subr.bf16.mxu0 0
        %1405 = vmatpush1.bf16.xpose.msra.mxu0 0
        %1406 = vmatprep.mubr.bf16.mxu0 0
        %1407 = vmatmul.mubr.bf16.gmra.mrb[0].mxu0 %v1369
        %v1408 = vpop.f32.mrb[0].mxu0
        %v1409 = vadd.f32 0.0, %v1408
        %v1410 = vpop.f32.mrb[0].mxu0
        %v1411 = vpop.f32.mrb[0].mxu0
        %v1412 = vpop.f32.mrb[0].mxu0
        %1413 = vdwg.mxu0
        %v1414 = vsel %vm903, -inf, %v1259
        %v1415 = vsel %vm903, -inf, %v1309
        %v1416 = vsel %vm903, -inf, %v1359
        %v1417 = vsel %vm903, -inf, %v1409
        %v1418 = vsel %vm708, %v1414, -inf
        %1419 = vmax.xlane.f32.xlu0 %v1418
        %v1420 = vpop.xlane.xlu0 %1419
        %v1421 = vsel %vm708, %v1415, -inf
        %1422 = vmax.xlane.f32.xlu0 %v1421
        %v1423 = vpop.xlane.xlu0 %1422
        %v1424 = vsel %vm708, %v1416, -inf
        %1425 = vmax.xlane.f32.xlu0 %v1424
        %v1426 = vpop.xlane.xlu0 %1425
        %v1427 = vsel %vm708, %v1417, -inf
        %1428 = vmax.xlane.f32.xlu0 %v1427
        %v1429 = vpop.xlane.xlu0 %1428
        %v1430 = vsub.f32 %v1414, %v1420
        %v1431 = vsub.f32 %v1415, %v1423
        %v1432 = vsub.f32 %v1416, %v1426
        %v1433 = vsub.f32 %v1417, %v1429
        %v1434 = vmul.f32 %v1430, 1.442695
        %v1435 = vpow.pop %v1434
        %v1436 = vmul.f32 %v1431, 1.442695
        %v1437 = vpow.pop %v1436
        %v1438 = vmul.f32 %v1432, 1.442695
        %v1439 = vpow.pop %v1438
        %v1440 = vmul.f32 %v1433, 1.442695
        %v1441 = vpow.pop %v1440
        %v1442 = vsel %vm708, %v1435, 0.0
        %1443 = vadd.xlane.f32.xlu0 %v1442
        %v1444 = vpop.xlane.xlu0 %1443
        %v1445 = vsel %vm708, %v1437, 0.0
        %1446 = vadd.xlane.f32.xlu0 %v1445
        %v1447 = vpop.xlane.xlu0 %1446
        %v1448 = vsel %vm708, %v1439, 0.0
        %1449 = vadd.xlane.f32.xlu0 %v1448
        %v1450 = vpop.xlane.xlu0 %1449
        %v1451 = vsel %vm708, %v1441, 0.0
        %1452 = vadd.xlane.f32.xlu0 %v1451
        %v1453 = vpop.xlane.xlu0 %1452
        %v1454 = vrcp.pop %v1444
        %v1455 = vrcp.pop %v1447
        %v1456 = vrcp.pop %v1450
        %v1457 = vrcp.pop %v1453
        %v1458 = vmul.f32 %v1435, %v1454
        %v1459 = vmul.f32 %v1437, %v1455
        %v1460 = vmul.f32 %v1439, %v1456
        %v1461 = vmul.f32 %v1441, %v1457
        %v1462 = vpack.c.bf16 %v1458, %v1458
        %v1463 = vpack.c.bf16 %v1459, %v1459
        %v1464 = vpack.c.bf16 %v1460, %v1460
        %v1465 = vpack.c.bf16 %v1461, %v1461
        %1466 = vrot.lane.b32.xlu0 %v705, 56
        %v1467 = vpop.permute.xlu0 %1466
        %v1469 = vsel %vm708, %v1462, 0
        %v1472 = vsel %vm961, %v1467, 0
        %1474 = vmatprep.subr.bf16.mxu0 0
        %1475 = vmatpush1.bf16.msra.mxu0 %v1472
        %1476 = vmatprep.subr.bf16.mxu0 0
        %1477 = vmatpush1.bf16.msra.mxu0 0
        %1478 = vmatprep.subr.bf16.mxu0 0
        %1479 = vmatpush1.bf16.msra.mxu0 0
        %1480 = vmatprep.subr.bf16.mxu0 0
        %1481 = vmatpush1.bf16.msra.mxu0 0
        %1482 = vmatprep.subr.bf16.mxu0 0
        %1483 = vmatpush1.bf16.msra.mxu0 0
        %1484 = vmatprep.subr.bf16.mxu0 0
        %1485 = vmatpush1.bf16.msra.mxu0 0
        %1486 = vmatprep.subr.bf16.mxu0 0
        %1487 = vmatpush1.bf16.msra.mxu0 0
        %1488 = vmatprep.subr.bf16.mxu0 0
        %1489 = vmatpush1.bf16.msra.mxu0 0
        %1490 = vmatprep.subr.bf16.mxu0 0
        %1491 = vmatpush1.bf16.msra.mxu0 0
        %1492 = vmatprep.subr.bf16.mxu0 0
        %1493 = vmatpush1.bf16.msra.mxu0 0
        %1494 = vmatprep.subr.bf16.mxu0 0
        %1495 = vmatpush1.bf16.msra.mxu0 0
        %1496 = vmatprep.subr.bf16.mxu0 0
        %1497 = vmatpush1.bf16.msra.mxu0 0
        %1498 = vmatprep.subr.bf16.mxu0 0
        %1499 = vmatpush1.bf16.msra.mxu0 0
        %1500 = vmatprep.subr.bf16.mxu0 0
        %1501 = vmatpush1.bf16.msra.mxu0 0
        %1502 = vmatprep.subr.bf16.mxu0 0
        %1503 = vmatpush1.bf16.msra.mxu0 0
        %1504 = vmatprep.subr.bf16.mxu0 0
        %1505 = vmatpush1.bf16.msra.mxu0 0
        %1506 = vmatprep.mubr.bf16.mxu0 0
        %1507 = vmatmul.mubr.bf16.gmra.mrb[0].mxu0 %v1469
        %v1508 = vpop.f32.mrb[0].mxu0
        %v1509 = vadd.f32 0.0, %v1508
        %v1510 = vpop.f32.mrb[0].mxu0
        %v1511 = vpop.f32.mrb[0].mxu0
        %v1512 = vpop.f32.mrb[0].mxu0
        %1513 = vdwg.mxu0
        %1514 = vrot.lane.b32.xlu0 %v755, 56
        %v1515 = vpop.permute.xlu0 %1514
        %v1517 = vsel %vm708, %v1463, 0
        %v1520 = vsel %vm961, %v1515, 0
        %1522 = vmatprep.subr.bf16.mxu0 0
        %1523 = vmatpush1.bf16.msra.mxu0 %v1520
        %1524 = vmatprep.subr.bf16.mxu0 0
        %1525 = vmatpush1.bf16.msra.mxu0 0
        %1526 = vmatprep.subr.bf16.mxu0 0
        %1527 = vmatpush1.bf16.msra.mxu0 0
        %1528 = vmatprep.subr.bf16.mxu0 0
        %1529 = vmatpush1.bf16.msra.mxu0 0
        %1530 = vmatprep.subr.bf16.mxu0 0
        %1531 = vmatpush1.bf16.msra.mxu0 0
        %1532 = vmatprep.subr.bf16.mxu0 0
        %1533 = vmatpush1.bf16.msra.mxu0 0
        %1534 = vmatprep.subr.bf16.mxu0 0
        %1535 = vmatpush1.bf16.msra.mxu0 0
        %1536 = vmatprep.subr.bf16.mxu0 0
        %1537 = vmatpush1.bf16.msra.mxu0 0
        %1538 = vmatprep.subr.bf16.mxu0 0
        %1539 = vmatpush1.bf16.msra.mxu0 0
        %1540 = vmatprep.subr.bf16.mxu0 0
        %1541 = vmatpush1.bf16.msra.mxu0 0
        %1542 = vmatprep.subr.bf16.mxu0 0
        %1543 = vmatpush1.bf16.msra.mxu0 0
        %1544 = vmatprep.subr.bf16.mxu0 0
        %1545 = vmatpush1.bf16.msra.mxu0 0
        %1546 = vmatprep.subr.bf16.mxu0 0
        %1547 = vmatpush1.bf16.msra.mxu0 0
        %1548 = vmatprep.subr.bf16.mxu0 0
        %1549 = vmatpush1.bf16.msra.mxu0 0
        %1550 = vmatprep.subr.bf16.mxu0 0
        %1551 = vmatpush1.bf16.msra.mxu0 0
        %1552 = vmatprep.subr.bf16.mxu0 0
        %1553 = vmatpush1.bf16.msra.mxu0 0
        %1554 = vmatprep.mubr.bf16.mxu0 0
        %1555 = vmatmul.mubr.bf16.gmra.mrb[0].mxu0 %v1517
        %v1556 = vpop.f32.mrb[0].mxu0
        %v1557 = vadd.f32 0.0, %v1556
        %v1558 = vpop.f32.mrb[0].mxu0
        %v1559 = vpop.f32.mrb[0].mxu0
        %v1560 = vpop.f32.mrb[0].mxu0
        %1561 = vdwg.mxu0
        %1562 = vrot.lane.b32.xlu0 %v804, 56
        %v1563 = vpop.permute.xlu0 %1562
        %v1565 = vsel %vm708, %v1464, 0
        %v1568 = vsel %vm961, %v1563, 0
        %1570 = vmatprep.subr.bf16.mxu0 0
        %1571 = vmatpush1.bf16.msra.mxu0 %v1568
        %1572 = vmatprep.subr.bf16.mxu0 0
        %1573 = vmatpush1.bf16.msra.mxu0 0
        %1574 = vmatprep.subr.bf16.mxu0 0
        %1575 = vmatpush1.bf16.msra.mxu0 0
        %1576 = vmatprep.subr.bf16.mxu0 0
        %1577 = vmatpush1.bf16.msra.mxu0 0
        %1578 = vmatprep.subr.bf16.mxu0 0
        %1579 = vmatpush1.bf16.msra.mxu0 0
        %1580 = vmatprep.subr.bf16.mxu0 0
        %1581 = vmatpush1.bf16.msra.mxu0 0
        %1582 = vmatprep.subr.bf16.mxu0 0
        %1583 = vmatpush1.bf16.msra.mxu0 0
        %1584 = vmatprep.subr.bf16.mxu0 0
        %1585 = vmatpush1.bf16.msra.mxu0 0
        %1586 = vmatprep.subr.bf16.mxu0 0
        %1587 = vmatpush1.bf16.msra.mxu0 0
        %1588 = vmatprep.subr.bf16.mxu0 0
        %1589 = vmatpush1.bf16.msra.mxu0 0
        %1590 = vmatprep.subr.bf16.mxu0 0
        %1591 = vmatpush1.bf16.msra.mxu0 0
        %1592 = vmatprep.subr.bf16.mxu0 0
        %1593 = vmatpush1.bf16.msra.mxu0 0
        %1594 = vmatprep.subr.bf16.mxu0 0
        %1595 = vmatpush1.bf16.msra.mxu0 0
        %1596 = vmatprep.subr.bf16.mxu0 0
        %1597 = vmatpush1.bf16.msra.mxu0 0
        %1598 = vmatprep.subr.bf16.mxu0 0
        %1599 = vmatpush1.bf16.msra.mxu0 0
        %1600 = vmatprep.subr.bf16.mxu0 0
        %1601 = vmatpush1.bf16.msra.mxu0 0
        %1602 = vmatprep.mubr.bf16.mxu0 0
        %1603 = vmatmul.mubr.bf16.gmra.mrb[0].mxu0 %v1565
        %v1604 = vpop.f32.mrb[0].mxu0
        %v1605 = vadd.f32 0.0, %v1604
        %v1606 = vpop.f32.mrb[0].mxu0
        %v1607 = vpop.f32.mrb[0].mxu0
        %v1608 = vpop.f32.mrb[0].mxu0
        %1609 = vdwg.mxu0
        %1610 = vrot.lane.b32.xlu0 %v853, 56
        %v1611 = vpop.permute.xlu0 %1610
        %v1613 = vsel %vm708, %v1465, 0
        %v1616 = vsel %vm961, %v1611, 0
        %1618 = vmatprep.subr.bf16.mxu0 0
        %1619 = vmatpush1.bf16.msra.mxu0 %v1616
        %1620 = vmatprep.subr.bf16.mxu0 0
        %1621 = vmatpush1.bf16.msra.mxu0 0
        %1622 = vmatprep.subr.bf16.mxu0 0
        %1623 = vmatpush1.bf16.msra.mxu0 0
        %1624 = vmatprep.subr.bf16.mxu0 0
        %1625 = vmatpush1.bf16.msra.mxu0 0
        %1626 = vmatprep.subr.bf16.mxu0 0
        %1627 = vmatpush1.bf16.msra.mxu0 0
        %1628 = vmatprep.subr.bf16.mxu0 0
        %1629 = vmatpush1.bf16.msra.mxu0 0
        %1630 = vmatprep.subr.bf16.mxu0 0
        %1631 = vmatpush1.bf16.msra.mxu0 0
        %1632 = vmatprep.subr.bf16.mxu0 0
        %1633 = vmatpush1.bf16.msra.mxu0 0
        %1634 = vmatprep.subr.bf16.mxu0 0
        %1635 = vmatpush1.bf16.msra.mxu0 0
        %1636 = vmatprep.subr.bf16.mxu0 0
        %1637 = vmatpush1.bf16.msra.mxu0 0
        %1638 = vmatprep.subr.bf16.mxu0 0
        %1639 = vmatpush1.bf16.msra.mxu0 0
        %1640 = vmatprep.subr.bf16.mxu0 0
        %1641 = vmatpush1.bf16.msra.mxu0 0
        %1642 = vmatprep.subr.bf16.mxu0 0
        %1643 = vmatpush1.bf16.msra.mxu0 0
        %1644 = vmatprep.subr.bf16.mxu0 0
        %1645 = vmatpush1.bf16.msra.mxu0 0
        %1646 = vmatprep.subr.bf16.mxu0 0
        %1647 = vmatpush1.bf16.msra.mxu0 0
        %1648 = vmatprep.subr.bf16.mxu0 0
        %1649 = vmatpush1.bf16.msra.mxu0 0
        %1650 = vmatprep.mubr.bf16.mxu0 0
        %1651 = vmatmul.mubr.bf16.gmra.mrb[0].mxu0 %v1613
        %v1652 = vpop.f32.mrb[0].mxu0
        %v1653 = vadd.f32 0.0, %v1652
        %v1654 = vpop.f32.mrb[0].mxu0
        %v1655 = vpop.f32.mrb[0].mxu0
        %v1656 = vpop.f32.mrb[0].mxu0
        %1657 = vdwg.mxu0
        %v1658 = vpack.c.bf16 %v1557, %v1509
        %v1659 = vpack.c.bf16 %v1653, %v1605
        %v1660 = vld [vmem:[#allocation8 + $0x4] sm:$0xf]
        %v1662 = vsel %vm708, %v1658, 0
        %v1665 = vsel %vm708, %v1659, 0
        %v1668 = vsel %vm961, %v1660, 0
        %1670 = vmatprep.subr.bf16.mxu0 0
        %1671 = vmatpush1.bf16.msra.mxu0 %v1668
        %1672 = vmatprep.subr.bf16.mxu0 0
        %1673 = vmatpush1.bf16.msra.mxu0 0
        %1674 = vmatprep.subr.bf16.mxu0 0
        %1675 = vmatpush1.bf16.msra.mxu0 0
        %1676 = vmatprep.subr.bf16.mxu0 0
        %1677 = vmatpush1.bf16.msra.mxu0 0
        %1678 = vmatprep.subr.bf16.mxu0 0
        %1679 = vmatpush1.bf16.msra.mxu0 0
        %1680 = vmatprep.subr.bf16.mxu0 0
        %1681 = vmatpush1.bf16.msra.mxu0 0
        %1682 = vmatprep.subr.bf16.mxu0 0
        %1683 = vmatpush1.bf16.msra.mxu0 0
        %1684 = vmatprep.subr.bf16.mxu0 0
        %1685 = vmatpush1.bf16.msra.mxu0 0
        %1686 = vmatprep.subr.bf16.mxu0 0
        %1687 = vmatpush1.bf16.msra.mxu0 0
        %1688 = vmatprep.subr.bf16.mxu0 0
        %1689 = vmatpush1.bf16.msra.mxu0 0
        %1690 = vmatprep.subr.bf16.mxu0 0
        %1691 = vmatpush1.bf16.msra.mxu0 0
        %1692 = vmatprep.subr.bf16.mxu0 0
        %1693 = vmatpush1.bf16.msra.mxu0 0
        %1694 = vmatprep.subr.bf16.mxu0 0
        %1695 = vmatpush1.bf16.msra.mxu0 0
        %1696 = vmatprep.subr.bf16.mxu0 0
        %1697 = vmatpush1.bf16.msra.mxu0 0
        %1698 = vmatprep.subr.bf16.mxu0 0
        %1699 = vmatpush1.bf16.msra.mxu0 0
        %1700 = vmatprep.subr.bf16.mxu0 0
        %1701 = vmatpush1.bf16.msra.mxu0 0
        %1702 = vmatprep.mubr.bf16.mxu0 0
        %1703 = vmatmul.mubr.bf16.gmra.mrb[0].mxu0 %v1662
        %v1704 = vpop.f32.mrb[0].mxu0
        %v1705 = vadd.f32 0.0, %v1704
        %v1706 = vpop.f32.mrb[0].mxu0
        %v1707 = vpop.f32.mrb[0].mxu0
        %v1708 = vadd.f32 0.0, %v1707
        %v1709 = vpop.f32.mrb[0].mxu0
        %1710 = vmatprep.mubr.bf16.mxu0 0
        %1711 = vmatmul.mubr.bf16.gmra.mrb[0].mxu0 %v1665
        %v1712 = vpop.f32.mrb[0].mxu0
        %v1713 = vadd.f32 0.0, %v1712
        %v1714 = vpop.f32.mrb[0].mxu0
        %v1715 = vpop.f32.mrb[0].mxu0
        %v1716 = vadd.f32 0.0, %v1715
        %v1717 = vpop.f32.mrb[0].mxu0
        %1718 = vdwg.mxu0
        %v1719 = vadd.f32 %v1210, %v1705
        %v1720 = vadd.f32 %v1211, %v1708
        %v1721 = vadd.f32 %v1212, %v1713
        %v1722 = vadd.f32 %v1213, %v1716
        %1723 = vrot.lane.b32.xlu0 %v695, 112
        %v1724 = vpop.permute.xlu0 %1723
        %1725 = vrot.lane.b32.xlu0 %v705, 80
        %v1726 = vpop.permute.xlu0 %1725
        %v1728 = vsel %vm708, %v1724, 0
        %v1731 = vsel %vm708, %v1726, 0
        %1733 = vmatprep.subr.bf16.mxu0 0
        %1734 = vmatpush1.bf16.xpose.msra.mxu0 %v1731
        %1735 = vmatprep.subr.bf16.mxu0 0
        %1736 = vmatpush1.bf16.xpose.msra.mxu0 0
        %1737 = vmatprep.subr.bf16.mxu0 0
        %1738 = vmatpush1.bf16.xpose.msra.mxu0 0
        %1739 = vmatprep.subr.bf16.mxu0 0
        %1740 = vmatpush1.bf16.xpose.msra.mxu0 0
        %1741 = vmatprep.subr.bf16.mxu0 0
        %1742 = vmatpush1.bf16.xpose.msra.mxu0 0
        %1743 = vmatprep.subr.bf16.mxu0 0
        %1744 = vmatpush1.bf16.xpose.msra.mxu0 0
        %1745 = vmatprep.subr.bf16.mxu0 0
        %1746 = vmatpush1.bf16.xpose.msra.mxu0 0
        %1747 = vmatprep.subr.bf16.mxu0 0
        %1748 = vmatpush1.bf16.xpose.msra.mxu0 0
        %1749 = vmatprep.subr.bf16.mxu0 0
        %1750 = vmatpush1.bf16.xpose.msra.mxu0 0
        %1751 = vmatprep.subr.bf16.mxu0 0
        %1752 = vmatpush1.bf16.xpose.msra.mxu0 0
        %1753 = vmatprep.subr.bf16.mxu0 0
        %1754 = vmatpush1.bf16.xpose.msra.mxu0 0
        %1755 = vmatprep.subr.bf16.mxu0 0
        %1756 = vmatpush1.bf16.xpose.msra.mxu0 0
        %1757 = vmatprep.subr.bf16.mxu0 0
        %1758 = vmatpush1.bf16.xpose.msra.mxu0 0
        %1759 = vmatprep.subr.bf16.mxu0 0
        %1760 = vmatpush1.bf16.xpose.msra.mxu0 0
        %1761 = vmatprep.subr.bf16.mxu0 0
        %1762 = vmatpush1.bf16.xpose.msra.mxu0 0
        %1763 = vmatprep.subr.bf16.mxu0 0
        %1764 = vmatpush1.bf16.xpose.msra.mxu0 0
        %1765 = vmatprep.mubr.bf16.mxu0 0
        %1766 = vmatmul.mubr.bf16.gmra.mrb[0].mxu0 %v1728
        %v1767 = vpop.f32.mrb[0].mxu0
        %v1768 = vadd.f32 0.0, %v1767
        %v1769 = vpop.f32.mrb[0].mxu0
        %v1770 = vpop.f32.mrb[0].mxu0
        %v1771 = vpop.f32.mrb[0].mxu0
        %1772 = vdwg.mxu0
        %1773 = vrot.lane.b32.xlu0 %v696, 112
        %v1774 = vpop.permute.xlu0 %1773
        %1775 = vrot.lane.b32.xlu0 %v755, 80
        %v1776 = vpop.permute.xlu0 %1775
        %v1778 = vsel %vm708, %v1774, 0
        %v1781 = vsel %vm708, %v1776, 0
        %1783 = vmatprep.subr.bf16.mxu0 0
        %1784 = vmatpush1.bf16.xpose.msra.mxu0 %v1781
        %1785 = vmatprep.subr.bf16.mxu0 0
        %1786 = vmatpush1.bf16.xpose.msra.mxu0 0
        %1787 = vmatprep.subr.bf16.mxu0 0
        %1788 = vmatpush1.bf16.xpose.msra.mxu0 0
        %1789 = vmatprep.subr.bf16.mxu0 0
        %1790 = vmatpush1.bf16.xpose.msra.mxu0 0
        %1791 = vmatprep.subr.bf16.mxu0 0
        %1792 = vmatpush1.bf16.xpose.msra.mxu0 0
        %1793 = vmatprep.subr.bf16.mxu0 0
        %1794 = vmatpush1.bf16.xpose.msra.mxu0 0
        %1795 = vmatprep.subr.bf16.mxu0 0
        %1796 = vmatpush1.bf16.xpose.msra.mxu0 0
        %1797 = vmatprep.subr.bf16.mxu0 0
        %1798 = vmatpush1.bf16.xpose.msra.mxu0 0
        %1799 = vmatprep.subr.bf16.mxu0 0
        %1800 = vmatpush1.bf16.xpose.msra.mxu0 0
        %1801 = vmatprep.subr.bf16.mxu0 0
        %1802 = vmatpush1.bf16.xpose.msra.mxu0 0
        %1803 = vmatprep.subr.bf16.mxu0 0
        %1804 = vmatpush1.bf16.xpose.msra.mxu0 0
        %1805 = vmatprep.subr.bf16.mxu0 0
        %1806 = vmatpush1.bf16.xpose.msra.mxu0 0
        %1807 = vmatprep.subr.bf16.mxu0 0
        %1808 = vmatpush1.bf16.xpose.msra.mxu0 0
        %1809 = vmatprep.subr.bf16.mxu0 0
        %1810 = vmatpush1.bf16.xpose.msra.mxu0 0
        %1811 = vmatprep.subr.bf16.mxu0 0
        %1812 = vmatpush1.bf16.xpose.msra.mxu0 0
        %1813 = vmatprep.subr.bf16.mxu0 0
        %1814 = vmatpush1.bf16.xpose.msra.mxu0 0
        %1815 = vmatprep.mubr.bf16.mxu0 0
        %1816 = vmatmul.mubr.bf16.gmra.mrb[0].mxu0 %v1778
        %v1817 = vpop.f32.mrb[0].mxu0
        %v1818 = vadd.f32 0.0, %v1817
        %v1819 = vpop.f32.mrb[0].mxu0
        %v1820 = vpop.f32.mrb[0].mxu0
        %v1821 = vpop.f32.mrb[0].mxu0
        %1822 = vdwg.mxu0
        %1823 = vrot.lane.b32.xlu0 %v697, 112
        %v1824 = vpop.permute.xlu0 %1823
        %1825 = vrot.lane.b32.xlu0 %v804, 80
        %v1826 = vpop.permute.xlu0 %1825
        %v1828 = vsel %vm708, %v1824, 0
        %v1831 = vsel %vm708, %v1826, 0
        %1833 = vmatprep.subr.bf16.mxu0 0
        %1834 = vmatpush1.bf16.xpose.msra.mxu0 %v1831
        %1835 = vmatprep.subr.bf16.mxu0 0
        %1836 = vmatpush1.bf16.xpose.msra.mxu0 0
        %1837 = vmatprep.subr.bf16.mxu0 0
        %1838 = vmatpush1.bf16.xpose.msra.mxu0 0
        %1839 = vmatprep.subr.bf16.mxu0 0
        %1840 = vmatpush1.bf16.xpose.msra.mxu0 0
        %1841 = vmatprep.subr.bf16.mxu0 0
        %1842 = vmatpush1.bf16.xpose.msra.mxu0 0
        %1843 = vmatprep.subr.bf16.mxu0 0
        %1844 = vmatpush1.bf16.xpose.msra.mxu0 0
        %1845 = vmatprep.subr.bf16.mxu0 0
        %1846 = vmatpush1.bf16.xpose.msra.mxu0 0
        %1847 = vmatprep.subr.bf16.mxu0 0
        %1848 = vmatpush1.bf16.xpose.msra.mxu0 0
        %1849 = vmatprep.subr.bf16.mxu0 0
        %1850 = vmatpush1.bf16.xpose.msra.mxu0 0
        %1851 = vmatprep.subr.bf16.mxu0 0
        %1852 = vmatpush1.bf16.xpose.msra.mxu0 0
        %1853 = vmatprep.subr.bf16.mxu0 0
        %1854 = vmatpush1.bf16.xpose.msra.mxu0 0
        %1855 = vmatprep.subr.bf16.mxu0 0
        %1856 = vmatpush1.bf16.xpose.msra.mxu0 0
        %1857 = vmatprep.subr.bf16.mxu0 0
        %1858 = vmatpush1.bf16.xpose.msra.mxu0 0
        %1859 = vmatprep.subr.bf16.mxu0 0
        %1860 = vmatpush1.bf16.xpose.msra.mxu0 0
        %1861 = vmatprep.subr.bf16.mxu0 0
        %1862 = vmatpush1.bf16.xpose.msra.mxu0 0
        %1863 = vmatprep.subr.bf16.mxu0 0
        %1864 = vmatpush1.bf16.xpose.msra.mxu0 0
        %1865 = vmatprep.mubr.bf16.mxu0 0
        %1866 = vmatmul.mubr.bf16.gmra.mrb[0].mxu0 %v1828
        %v1867 = vpop.f32.mrb[0].mxu0
        %v1868 = vadd.f32 0.0, %v1867
        %v1869 = vpop.f32.mrb[0].mxu0
        %v1870 = vpop.f32.mrb[0].mxu0
        %v1871 = vpop.f32.mrb[0].mxu0
        %1872 = vdwg.mxu0
        %1873 = vrot.lane.b32.xlu0 %v698, 112
        %v1874 = vpop.permute.xlu0 %1873
        %1875 = vrot.lane.b32.xlu0 %v853, 80
        %v1876 = vpop.permute.xlu0 %1875
        %v1878 = vsel %vm708, %v1874, 0
        %v1881 = vsel %vm708, %v1876, 0
        %1883 = vmatprep.subr.bf16.mxu0 0
        %1884 = vmatpush1.bf16.xpose.msra.mxu0 %v1881
        %1885 = vmatprep.subr.bf16.mxu0 0
        %1886 = vmatpush1.bf16.xpose.msra.mxu0 0
        %1887 = vmatprep.subr.bf16.mxu0 0
        %1888 = vmatpush1.bf16.xpose.msra.mxu0 0
        %1889 = vmatprep.subr.bf16.mxu0 0
        %1890 = vmatpush1.bf16.xpose.msra.mxu0 0
        %1891 = vmatprep.subr.bf16.mxu0 0
        %1892 = vmatpush1.bf16.xpose.msra.mxu0 0
        %1893 = vmatprep.subr.bf16.mxu0 0
        %1894 = vmatpush1.bf16.xpose.msra.mxu0 0
        %1895 = vmatprep.subr.bf16.mxu0 0
        %1896 = vmatpush1.bf16.xpose.msra.mxu0 0
        %1897 = vmatprep.subr.bf16.mxu0 0
        %1898 = vmatpush1.bf16.xpose.msra.mxu0 0
        %1899 = vmatprep.subr.bf16.mxu0 0
        %1900 = vmatpush1.bf16.xpose.msra.mxu0 0
        %1901 = vmatprep.subr.bf16.mxu0 0
        %1902 = vmatpush1.bf16.xpose.msra.mxu0 0
        %1903 = vmatprep.subr.bf16.mxu0 0
        %1904 = vmatpush1.bf16.xpose.msra.mxu0 0
        %1905 = vmatprep.subr.bf16.mxu0 0
        %1906 = vmatpush1.bf16.xpose.msra.mxu0 0
        %1907 = vmatprep.subr.bf16.mxu0 0
        %1908 = vmatpush1.bf16.xpose.msra.mxu0 0
        %1909 = vmatprep.subr.bf16.mxu0 0
        %1910 = vmatpush1.bf16.xpose.msra.mxu0 0
        %1911 = vmatprep.subr.bf16.mxu0 0
        %1912 = vmatpush1.bf16.xpose.msra.mxu0 0
        %1913 = vmatprep.subr.bf16.mxu0 0
        %1914 = vmatpush1.bf16.xpose.msra.mxu0 0
        %1915 = vmatprep.mubr.bf16.mxu0 0
        %1916 = vmatmul.mubr.bf16.gmra.mrb[0].mxu0 %v1878
        %v1917 = vpop.f32.mrb[0].mxu0
        %v1918 = vadd.f32 0.0, %v1917
        %v1919 = vpop.f32.mrb[0].mxu0
        %v1920 = vpop.f32.mrb[0].mxu0
        %v1921 = vpop.f32.mrb[0].mxu0
        %1922 = vdwg.mxu0
        %v1923 = vsel %vm903, -inf, %v1768
        %v1924 = vsel %vm903, -inf, %v1818
        %v1925 = vsel %vm903, -inf, %v1868
        %v1926 = vsel %vm903, -inf, %v1918
        %v1927 = vsel %vm708, %v1923, -inf
        %1928 = vmax.xlane.f32.xlu0 %v1927
        %v1929 = vpop.xlane.xlu0 %1928
        %v1930 = vsel %vm708, %v1924, -inf
        %1931 = vmax.xlane.f32.xlu0 %v1930
        %v1932 = vpop.xlane.xlu0 %1931
        %v1933 = vsel %vm708, %v1925, -inf
        %1934 = vmax.xlane.f32.xlu0 %v1933
        %v1935 = vpop.xlane.xlu0 %1934
        %v1936 = vsel %vm708, %v1926, -inf
        %1937 = vmax.xlane.f32.xlu0 %v1936
        %v1938 = vpop.xlane.xlu0 %1937
        %v1939 = vsub.f32 %v1923, %v1929
        %v1940 = vsub.f32 %v1924, %v1932
        %v1941 = vsub.f32 %v1925, %v1935
        %v1942 = vsub.f32 %v1926, %v1938
        %v1943 = vmul.f32 %v1939, 1.442695
        %v1944 = vpow.pop %v1943
        %v1945 = vmul.f32 %v1940, 1.442695
        %v1946 = vpow.pop %v1945
        %v1947 = vmul.f32 %v1941, 1.442695
        %v1948 = vpow.pop %v1947
        %v1949 = vmul.f32 %v1942, 1.442695
        %v1950 = vpow.pop %v1949
        %v1951 = vsel %vm708, %v1944, 0.0
        %1952 = vadd.xlane.f32.xlu0 %v1951
        %v1953 = vpop.xlane.xlu0 %1952
        %v1954 = vsel %vm708, %v1946, 0.0
        %1955 = vadd.xlane.f32.xlu0 %v1954
        %v1956 = vpop.xlane.xlu0 %1955
        %v1957 = vsel %vm708, %v1948, 0.0
        %1958 = vadd.xlane.f32.xlu0 %v1957
        %v1959 = vpop.xlane.xlu0 %1958
        %v1960 = vsel %vm708, %v1950, 0.0
        %1961 = vadd.xlane.f32.xlu0 %v1960
        %v1962 = vpop.xlane.xlu0 %1961
        %v1963 = vrcp.pop %v1953
        %v1964 = vrcp.pop %v1956
        %v1965 = vrcp.pop %v1959
        %v1966 = vrcp.pop %v1962
        %v1967 = vmul.f32 %v1944, %v1963
        %v1968 = vmul.f32 %v1946, %v1964
        %v1969 = vmul.f32 %v1948, %v1965
        %v1970 = vmul.f32 %v1950, %v1966
        %v1971 = vpack.c.bf16 %v1967, %v1967
        %v1972 = vpack.c.bf16 %v1968, %v1968
        %v1973 = vpack.c.bf16 %v1969, %v1969
        %v1974 = vpack.c.bf16 %v1970, %v1970
        %1975 = vrot.lane.b32.xlu0 %v705, 48
        %v1976 = vpop.permute.xlu0 %1975
        %v1978 = vsel %vm708, %v1971, 0
        %v1981 = vsel %vm961, %v1976, 0
        %1983 = vmatprep.subr.bf16.mxu0 0
        %1984 = vmatpush1.bf16.msra.mxu0 %v1981
        %1985 = vmatprep.subr.bf16.mxu0 0
        %1986 = vmatpush1.bf16.msra.mxu0 0
        %1987 = vmatprep.subr.bf16.mxu0 0
        %1988 = vmatpush1.bf16.msra.mxu0 0
        %1989 = vmatprep.subr.bf16.mxu0 0
        %1990 = vmatpush1.bf16.msra.mxu0 0
        %1991 = vmatprep.subr.bf16.mxu0 0
        %1992 = vmatpush1.bf16.msra.mxu0 0
        %1993 = vmatprep.subr.bf16.mxu0 0
        %1994 = vmatpush1.bf16.msra.mxu0 0
        %1995 = vmatprep.subr.bf16.mxu0 0
        %1996 = vmatpush1.bf16.msra.mxu0 0
        %1997 = vmatprep.subr.bf16.mxu0 0
        %1998 = vmatpush1.bf16.msra.mxu0 0
        %1999 = vmatprep.subr.bf16.mxu0 0
        %2000 = vmatpush1.bf16.msra.mxu0 0
        %2001 = vmatprep.subr.bf16.mxu0 0
        %2002 = vmatpush1.bf16.msra.mxu0 0
        %2003 = vmatprep.subr.bf16.mxu0 0
        %2004 = vmatpush1.bf16.msra.mxu0 0
        %2005 = vmatprep.subr.bf16.mxu0 0
        %2006 = vmatpush1.bf16.msra.mxu0 0
        %2007 = vmatprep.subr.bf16.mxu0 0
        %2008 = vmatpush1.bf16.msra.mxu0 0
        %2009 = vmatprep.subr.bf16.mxu0 0
        %2010 = vmatpush1.bf16.msra.mxu0 0
        %2011 = vmatprep.subr.bf16.mxu0 0
        %2012 = vmatpush1.bf16.msra.mxu0 0
        %2013 = vmatprep.subr.bf16.mxu0 0
        %2014 = vmatpush1.bf16.msra.mxu0 0
        %2015 = vmatprep.mubr.bf16.mxu0 0
        %2016 = vmatmul.mubr.bf16.gmra.mrb[0].mxu0 %v1978
        %v2017 = vpop.f32.mrb[0].mxu0
        %v2018 = vadd.f32 0.0, %v2017
        %v2019 = vpop.f32.mrb[0].mxu0
        %v2020 = vpop.f32.mrb[0].mxu0
        %v2021 = vpop.f32.mrb[0].mxu0
        %2022 = vdwg.mxu0
        %2023 = vrot.lane.b32.xlu0 %v755, 48
        %v2024 = vpop.permute.xlu0 %2023
        %v2026 = vsel %vm708, %v1972, 0
        %v2029 = vsel %vm961, %v2024, 0
        %2031 = vmatprep.subr.bf16.mxu0 0
        %2032 = vmatpush1.bf16.msra.mxu0 %v2029
        %2033 = vmatprep.subr.bf16.mxu0 0
        %2034 = vmatpush1.bf16.msra.mxu0 0
        %2035 = vmatprep.subr.bf16.mxu0 0
        %2036 = vmatpush1.bf16.msra.mxu0 0
        %2037 = vmatprep.subr.bf16.mxu0 0
        %2038 = vmatpush1.bf16.msra.mxu0 0
        %2039 = vmatprep.subr.bf16.mxu0 0
        %2040 = vmatpush1.bf16.msra.mxu0 0
        %2041 = vmatprep.subr.bf16.mxu0 0
        %2042 = vmatpush1.bf16.msra.mxu0 0
        %2043 = vmatprep.subr.bf16.mxu0 0
        %2044 = vmatpush1.bf16.msra.mxu0 0
        %2045 = vmatprep.subr.bf16.mxu0 0
        %2046 = vmatpush1.bf16.msra.mxu0 0
        %2047 = vmatprep.subr.bf16.mxu0 0
        %2048 = vmatpush1.bf16.msra.mxu0 0
        %2049 = vmatprep.subr.bf16.mxu0 0
        %2050 = vmatpush1.bf16.msra.mxu0 0
        %2051 = vmatprep.subr.bf16.mxu0 0
        %2052 = vmatpush1.bf16.msra.mxu0 0
        %2053 = vmatprep.subr.bf16.mxu0 0
        %2054 = vmatpush1.bf16.msra.mxu0 0
        %2055 = vmatprep.subr.bf16.mxu0 0
        %2056 = vmatpush1.bf16.msra.mxu0 0
        %2057 = vmatprep.subr.bf16.mxu0 0
        %2058 = vmatpush1.bf16.msra.mxu0 0
        %2059 = vmatprep.subr.bf16.mxu0 0
        %2060 = vmatpush1.bf16.msra.mxu0 0
        %2061 = vmatprep.subr.bf16.mxu0 0
        %2062 = vmatpush1.bf16.msra.mxu0 0
        %2063 = vmatprep.mubr.bf16.mxu0 0
        %2064 = vmatmul.mubr.bf16.gmra.mrb[0].mxu0 %v2026
        %v2065 = vpop.f32.mrb[0].mxu0
        %v2066 = vadd.f32 0.0, %v2065
        %v2067 = vpop.f32.mrb[0].mxu0
        %v2068 = vpop.f32.mrb[0].mxu0
        %v2069 = vpop.f32.mrb[0].mxu0
        %2070 = vdwg.mxu0
        %2071 = vrot.lane.b32.xlu0 %v804, 48
        %v2072 = vpop.permute.xlu0 %2071
        %v2074 = vsel %vm708, %v1973, 0
        %v2077 = vsel %vm961, %v2072, 0
        %2079 = vmatprep.subr.bf16.mxu0 0
        %2080 = vmatpush1.bf16.msra.mxu0 %v2077
        %2081 = vmatprep.subr.bf16.mxu0 0
        %2082 = vmatpush1.bf16.msra.mxu0 0
        %2083 = vmatprep.subr.bf16.mxu0 0
        %2084 = vmatpush1.bf16.msra.mxu0 0
        %2085 = vmatprep.subr.bf16.mxu0 0
        %2086 = vmatpush1.bf16.msra.mxu0 0
        %2087 = vmatprep.subr.bf16.mxu0 0
        %2088 = vmatpush1.bf16.msra.mxu0 0
        %2089 = vmatprep.subr.bf16.mxu0 0
        %2090 = vmatpush1.bf16.msra.mxu0 0
        %2091 = vmatprep.subr.bf16.mxu0 0
        %2092 = vmatpush1.bf16.msra.mxu0 0
        %2093 = vmatprep.subr.bf16.mxu0 0
        %2094 = vmatpush1.bf16.msra.mxu0 0
        %2095 = vmatprep.subr.bf16.mxu0 0
        %2096 = vmatpush1.bf16.msra.mxu0 0
        %2097 = vmatprep.subr.bf16.mxu0 0
        %2098 = vmatpush1.bf16.msra.mxu0 0
        %2099 = vmatprep.subr.bf16.mxu0 0
        %2100 = vmatpush1.bf16.msra.mxu0 0
        %2101 = vmatprep.subr.bf16.mxu0 0
        %2102 = vmatpush1.bf16.msra.mxu0 0
        %2103 = vmatprep.subr.bf16.mxu0 0
        %2104 = vmatpush1.bf16.msra.mxu0 0
        %2105 = vmatprep.subr.bf16.mxu0 0
        %2106 = vmatpush1.bf16.msra.mxu0 0
        %2107 = vmatprep.subr.bf16.mxu0 0
        %2108 = vmatpush1.bf16.msra.mxu0 0
        %2109 = vmatprep.subr.bf16.mxu0 0
        %2110 = vmatpush1.bf16.msra.mxu0 0
        %2111 = vmatprep.mubr.bf16.mxu0 0
        %2112 = vmatmul.mubr.bf16.gmra.mrb[0].mxu0 %v2074
        %v2113 = vpop.f32.mrb[0].mxu0
        %v2114 = vadd.f32 0.0, %v2113
        %v2115 = vpop.f32.mrb[0].mxu0
        %v2116 = vpop.f32.mrb[0].mxu0
        %v2117 = vpop.f32.mrb[0].mxu0
        %2118 = vdwg.mxu0
        %2119 = vrot.lane.b32.xlu0 %v853, 48
        %v2120 = vpop.permute.xlu0 %2119
        %v2122 = vsel %vm708, %v1974, 0
        %v2125 = vsel %vm961, %v2120, 0
        %2127 = vmatprep.subr.bf16.mxu0 0
        %2128 = vmatpush1.bf16.msra.mxu0 %v2125
        %2129 = vmatprep.subr.bf16.mxu0 0
        %2130 = vmatpush1.bf16.msra.mxu0 0
        %2131 = vmatprep.subr.bf16.mxu0 0
        %2132 = vmatpush1.bf16.msra.mxu0 0
        %2133 = vmatprep.subr.bf16.mxu0 0
        %2134 = vmatpush1.bf16.msra.mxu0 0
        %2135 = vmatprep.subr.bf16.mxu0 0
        %2136 = vmatpush1.bf16.msra.mxu0 0
        %2137 = vmatprep.subr.bf16.mxu0 0
        %2138 = vmatpush1.bf16.msra.mxu0 0
        %2139 = vmatprep.subr.bf16.mxu0 0
        %2140 = vmatpush1.bf16.msra.mxu0 0
        %2141 = vmatprep.subr.bf16.mxu0 0
        %2142 = vmatpush1.bf16.msra.mxu0 0
        %2143 = vmatprep.subr.bf16.mxu0 0
        %2144 = vmatpush1.bf16.msra.mxu0 0
        %2145 = vmatprep.subr.bf16.mxu0 0
        %2146 = vmatpush1.bf16.msra.mxu0 0
        %2147 = vmatprep.subr.bf16.mxu0 0
        %2148 = vmatpush1.bf16.msra.mxu0 0
        %2149 = vmatprep.subr.bf16.mxu0 0
        %2150 = vmatpush1.bf16.msra.mxu0 0
        %2151 = vmatprep.subr.bf16.mxu0 0
        %2152 = vmatpush1.bf16.msra.mxu0 0
        %2153 = vmatprep.subr.bf16.mxu0 0
        %2154 = vmatpush1.bf16.msra.mxu0 0
        %2155 = vmatprep.subr.bf16.mxu0 0
        %2156 = vmatpush1.bf16.msra.mxu0 0
        %2157 = vmatprep.subr.bf16.mxu0 0
        %2158 = vmatpush1.bf16.msra.mxu0 0
        %2159 = vmatprep.mubr.bf16.mxu0 0
        %2160 = vmatmul.mubr.bf16.gmra.mrb[0].mxu0 %v2122
        %v2161 = vpop.f32.mrb[0].mxu0
        %v2162 = vadd.f32 0.0, %v2161
        %v2163 = vpop.f32.mrb[0].mxu0
        %v2164 = vpop.f32.mrb[0].mxu0
        %v2165 = vpop.f32.mrb[0].mxu0
        %2166 = vdwg.mxu0
        %v2167 = vpack.c.bf16 %v2066, %v2018
        %v2168 = vpack.c.bf16 %v2162, %v2114
        %v2169 = vld [vmem:[#allocation8 + $0x8] sm:$0xf]
        %v2171 = vsel %vm708, %v2167, 0
        %v2174 = vsel %vm708, %v2168, 0
        %v2177 = vsel %vm961, %v2169, 0
        %2179 = vmatprep.subr.bf16.mxu0 0
        %2180 = vmatpush1.bf16.msra.mxu0 %v2177
        %2181 = vmatprep.subr.bf16.mxu0 0
        %2182 = vmatpush1.bf16.msra.mxu0 0
        %2183 = vmatprep.subr.bf16.mxu0 0
        %2184 = vmatpush1.bf16.msra.mxu0 0
        %2185 = vmatprep.subr.bf16.mxu0 0
        %2186 = vmatpush1.bf16.msra.mxu0 0
        %2187 = vmatprep.subr.bf16.mxu0 0
        %2188 = vmatpush1.bf16.msra.mxu0 0
        %2189 = vmatprep.subr.bf16.mxu0 0
        %2190 = vmatpush1.bf16.msra.mxu0 0
        %2191 = vmatprep.subr.bf16.mxu0 0
        %2192 = vmatpush1.bf16.msra.mxu0 0
        %2193 = vmatprep.subr.bf16.mxu0 0
        %2194 = vmatpush1.bf16.msra.mxu0 0
        %2195 = vmatprep.subr.bf16.mxu0 0
        %2196 = vmatpush1.bf16.msra.mxu0 0
        %2197 = vmatprep.subr.bf16.mxu0 0
        %2198 = vmatpush1.bf16.msra.mxu0 0
        %2199 = vmatprep.subr.bf16.mxu0 0
        %2200 = vmatpush1.bf16.msra.mxu0 0
        %2201 = vmatprep.subr.bf16.mxu0 0
        %2202 = vmatpush1.bf16.msra.mxu0 0
        %2203 = vmatprep.subr.bf16.mxu0 0
        %2204 = vmatpush1.bf16.msra.mxu0 0
        %2205 = vmatprep.subr.bf16.mxu0 0
        %2206 = vmatpush1.bf16.msra.mxu0 0
        %2207 = vmatprep.subr.bf16.mxu0 0
        %2208 = vmatpush1.bf16.msra.mxu0 0
        %2209 = vmatprep.subr.bf16.mxu0 0
        %2210 = vmatpush1.bf16.msra.mxu0 0
        %2211 = vmatprep.mubr.bf16.mxu0 0
        %2212 = vmatmul.mubr.bf16.gmra.mrb[0].mxu0 %v2171
        %v2213 = vpop.f32.mrb[0].mxu0
        %v2214 = vadd.f32 0.0, %v2213
        %v2215 = vpop.f32.mrb[0].mxu0
        %v2216 = vpop.f32.mrb[0].mxu0
        %v2217 = vadd.f32 0.0, %v2216
        %v2218 = vpop.f32.mrb[0].mxu0
        %2219 = vmatprep.mubr.bf16.mxu0 0
        %2220 = vmatmul.mubr.bf16.gmra.mrb[0].mxu0 %v2174
        %v2221 = vpop.f32.mrb[0].mxu0
        %v2222 = vadd.f32 0.0, %v2221
        %v2223 = vpop.f32.mrb[0].mxu0
        %v2224 = vpop.f32.mrb[0].mxu0
        %v2225 = vadd.f32 0.0, %v2224
        %v2226 = vpop.f32.mrb[0].mxu0
        %2227 = vdwg.mxu0
        %v2228 = vadd.f32 %v1719, %v2214
        %v2229 = vadd.f32 %v1720, %v2217
        %v2230 = vadd.f32 %v1721, %v2222
        %v2231 = vadd.f32 %v1722, %v2225
        %2232 = vrot.lane.b32.xlu0 %v695, 104
        %v2233 = vpop.permute.xlu0 %2232
        %2234 = vrot.lane.b32.xlu0 %v705, 72
        %v2235 = vpop.permute.xlu0 %2234
        %v2237 = vsel %vm708, %v2233, 0
        %v2240 = vsel %vm708, %v2235, 0
        %2242 = vmatprep.subr.bf16.mxu0 0
        %2243 = vmatpush1.bf16.xpose.msra.mxu0 %v2240
        %2244 = vmatprep.subr.bf16.mxu0 0
        %2245 = vmatpush1.bf16.xpose.msra.mxu0 0
        %2246 = vmatprep.subr.bf16.mxu0 0
        %2247 = vmatpush1.bf16.xpose.msra.mxu0 0
        %2248 = vmatprep.subr.bf16.mxu0 0
        %2249 = vmatpush1.bf16.xpose.msra.mxu0 0
        %2250 = vmatprep.subr.bf16.mxu0 0
        %2251 = vmatpush1.bf16.xpose.msra.mxu0 0
        %2252 = vmatprep.subr.bf16.mxu0 0
        %2253 = vmatpush1.bf16.xpose.msra.mxu0 0
        %2254 = vmatprep.subr.bf16.mxu0 0
        %2255 = vmatpush1.bf16.xpose.msra.mxu0 0
        %2256 = vmatprep.subr.bf16.mxu0 0
        %2257 = vmatpush1.bf16.xpose.msra.mxu0 0
        %2258 = vmatprep.subr.bf16.mxu0 0
        %2259 = vmatpush1.bf16.xpose.msra.mxu0 0
        %2260 = vmatprep.subr.bf16.mxu0 0
        %2261 = vmatpush1.bf16.xpose.msra.mxu0 0
        %2262 = vmatprep.subr.bf16.mxu0 0
        %2263 = vmatpush1.bf16.xpose.msra.mxu0 0
        %2264 = vmatprep.subr.bf16.mxu0 0
        %2265 = vmatpush1.bf16.xpose.msra.mxu0 0
        %2266 = vmatprep.subr.bf16.mxu0 0
        %2267 = vmatpush1.bf16.xpose.msra.mxu0 0
        %2268 = vmatprep.subr.bf16.mxu0 0
        %2269 = vmatpush1.bf16.xpose.msra.mxu0 0
        %2270 = vmatprep.subr.bf16.mxu0 0
        %2271 = vmatpush1.bf16.xpose.msra.mxu0 0
        %2272 = vmatprep.subr.bf16.mxu0 0
        %2273 = vmatpush1.bf16.xpose.msra.mxu0 0
        %2274 = vmatprep.mubr.bf16.mxu0 0
        %2275 = vmatmul.mubr.bf16.gmra.mrb[0].mxu0 %v2237
        %v2276 = vpop.f32.mrb[0].mxu0
        %v2277 = vadd.f32 0.0, %v2276
        %v2278 = vpop.f32.mrb[0].mxu0
        %v2279 = vpop.f32.mrb[0].mxu0
        %v2280 = vpop.f32.mrb[0].mxu0
        %2281 = vdwg.mxu0
        %2282 = vrot.lane.b32.xlu0 %v696, 104
        %v2283 = vpop.permute.xlu0 %2282
        %2284 = vrot.lane.b32.xlu0 %v755, 72
        %v2285 = vpop.permute.xlu0 %2284
        %v2287 = vsel %vm708, %v2283, 0
        %v2290 = vsel %vm708, %v2285, 0
        %2292 = vmatprep.subr.bf16.mxu0 0
        %2293 = vmatpush1.bf16.xpose.msra.mxu0 %v2290
        %2294 = vmatprep.subr.bf16.mxu0 0
        %2295 = vmatpush1.bf16.xpose.msra.mxu0 0
        %2296 = vmatprep.subr.bf16.mxu0 0
        %2297 = vmatpush1.bf16.xpose.msra.mxu0 0
        %2298 = vmatprep.subr.bf16.mxu0 0
        %2299 = vmatpush1.bf16.xpose.msra.mxu0 0
        %2300 = vmatprep.subr.bf16.mxu0 0
        %2301 = vmatpush1.bf16.xpose.msra.mxu0 0
        %2302 = vmatprep.subr.bf16.mxu0 0
        %2303 = vmatpush1.bf16.xpose.msra.mxu0 0
        %2304 = vmatprep.subr.bf16.mxu0 0
        %2305 = vmatpush1.bf16.xpose.msra.mxu0 0
        %2306 = vmatprep.subr.bf16.mxu0 0
        %2307 = vmatpush1.bf16.xpose.msra.mxu0 0
        %2308 = vmatprep.subr.bf16.mxu0 0
        %2309 = vmatpush1.bf16.xpose.msra.mxu0 0
        %2310 = vmatprep.subr.bf16.mxu0 0
        %2311 = vmatpush1.bf16.xpose.msra.mxu0 0
        %2312 = vmatprep.subr.bf16.mxu0 0
        %2313 = vmatpush1.bf16.xpose.msra.mxu0 0
        %2314 = vmatprep.subr.bf16.mxu0 0
        %2315 = vmatpush1.bf16.xpose.msra.mxu0 0
        %2316 = vmatprep.subr.bf16.mxu0 0
        %2317 = vmatpush1.bf16.xpose.msra.mxu0 0
        %2318 = vmatprep.subr.bf16.mxu0 0
        %2319 = vmatpush1.bf16.xpose.msra.mxu0 0
        %2320 = vmatprep.subr.bf16.mxu0 0
        %2321 = vmatpush1.bf16.xpose.msra.mxu0 0
        %2322 = vmatprep.subr.bf16.mxu0 0
        %2323 = vmatpush1.bf16.xpose.msra.mxu0 0
        %2324 = vmatprep.mubr.bf16.mxu0 0
        %2325 = vmatmul.mubr.bf16.gmra.mrb[0].mxu0 %v2287
        %v2326 = vpop.f32.mrb[0].mxu0
        %v2327 = vadd.f32 0.0, %v2326
        %v2328 = vpop.f32.mrb[0].mxu0
        %v2329 = vpop.f32.mrb[0].mxu0
        %v2330 = vpop.f32.mrb[0].mxu0
        %2331 = vdwg.mxu0
        %2332 = vrot.lane.b32.xlu0 %v697, 104
        %v2333 = vpop.permute.xlu0 %2332
        %2334 = vrot.lane.b32.xlu0 %v804, 72
        %v2335 = vpop.permute.xlu0 %2334
        %v2337 = vsel %vm708, %v2333, 0
        %v2340 = vsel %vm708, %v2335, 0
        %2342 = vmatprep.subr.bf16.mxu0 0
        %2343 = vmatpush1.bf16.xpose.msra.mxu0 %v2340
        %2344 = vmatprep.subr.bf16.mxu0 0
        %2345 = vmatpush1.bf16.xpose.msra.mxu0 0
        %2346 = vmatprep.subr.bf16.mxu0 0
        %2347 = vmatpush1.bf16.xpose.msra.mxu0 0
        %2348 = vmatprep.subr.bf16.mxu0 0
        %2349 = vmatpush1.bf16.xpose.msra.mxu0 0
        %2350 = vmatprep.subr.bf16.mxu0 0
        %2351 = vmatpush1.bf16.xpose.msra.mxu0 0
        %2352 = vmatprep.subr.bf16.mxu0 0
        %2353 = vmatpush1.bf16.xpose.msra.mxu0 0
        %2354 = vmatprep.subr.bf16.mxu0 0
        %2355 = vmatpush1.bf16.xpose.msra.mxu0 0
        %2356 = vmatprep.subr.bf16.mxu0 0
        %2357 = vmatpush1.bf16.xpose.msra.mxu0 0
        %2358 = vmatprep.subr.bf16.mxu0 0
        %2359 = vmatpush1.bf16.xpose.msra.mxu0 0
        %2360 = vmatprep.subr.bf16.mxu0 0
        %2361 = vmatpush1.bf16.xpose.msra.mxu0 0
        %2362 = vmatprep.subr.bf16.mxu0 0
        %2363 = vmatpush1.bf16.xpose.msra.mxu0 0
        %2364 = vmatprep.subr.bf16.mxu0 0
        %2365 = vmatpush1.bf16.xpose.msra.mxu0 0
        %2366 = vmatprep.subr.bf16.mxu0 0
        %2367 = vmatpush1.bf16.xpose.msra.mxu0 0
        %2368 = vmatprep.subr.bf16.mxu0 0
        %2369 = vmatpush1.bf16.xpose.msra.mxu0 0
        %2370 = vmatprep.subr.bf16.mxu0 0
        %2371 = vmatpush1.bf16.xpose.msra.mxu0 0
        %2372 = vmatprep.subr.bf16.mxu0 0
        %2373 = vmatpush1.bf16.xpose.msra.mxu0 0
        %2374 = vmatprep.mubr.bf16.mxu0 0
        %2375 = vmatmul.mubr.bf16.gmra.mrb[0].mxu0 %v2337
        %v2376 = vpop.f32.mrb[0].mxu0
        %v2377 = vadd.f32 0.0, %v2376
        %v2378 = vpop.f32.mrb[0].mxu0
        %v2379 = vpop.f32.mrb[0].mxu0
        %v2380 = vpop.f32.mrb[0].mxu0
        %2381 = vdwg.mxu0
        %2382 = vrot.lane.b32.xlu0 %v698, 104
        %v2383 = vpop.permute.xlu0 %2382
        %2384 = vrot.lane.b32.xlu0 %v853, 72
        %v2385 = vpop.permute.xlu0 %2384
        %v2387 = vsel %vm708, %v2383, 0
        %v2390 = vsel %vm708, %v2385, 0
        %2392 = vmatprep.subr.bf16.mxu0 0
        %2393 = vmatpush1.bf16.xpose.msra.mxu0 %v2390
        %2394 = vmatprep.subr.bf16.mxu0 0
        %2395 = vmatpush1.bf16.xpose.msra.mxu0 0
        %2396 = vmatprep.subr.bf16.mxu0 0
        %2397 = vmatpush1.bf16.xpose.msra.mxu0 0
        %2398 = vmatprep.subr.bf16.mxu0 0
        %2399 = vmatpush1.bf16.xpose.msra.mxu0 0
        %2400 = vmatprep.subr.bf16.mxu0 0
        %2401 = vmatpush1.bf16.xpose.msra.mxu0 0
        %2402 = vmatprep.subr.bf16.mxu0 0
        %2403 = vmatpush1.bf16.xpose.msra.mxu0 0
        %2404 = vmatprep.subr.bf16.mxu0 0
        %2405 = vmatpush1.bf16.xpose.msra.mxu0 0
        %2406 = vmatprep.subr.bf16.mxu0 0
        %2407 = vmatpush1.bf16.xpose.msra.mxu0 0
        %2408 = vmatprep.subr.bf16.mxu0 0
        %2409 = vmatpush1.bf16.xpose.msra.mxu0 0
        %2410 = vmatprep.subr.bf16.mxu0 0
        %2411 = vmatpush1.bf16.xpose.msra.mxu0 0
        %2412 = vmatprep.subr.bf16.mxu0 0
        %2413 = vmatpush1.bf16.xpose.msra.mxu0 0
        %2414 = vmatprep.subr.bf16.mxu0 0
        %2415 = vmatpush1.bf16.xpose.msra.mxu0 0
        %2416 = vmatprep.subr.bf16.mxu0 0
        %2417 = vmatpush1.bf16.xpose.msra.mxu0 0
        %2418 = vmatprep.subr.bf16.mxu0 0
        %2419 = vmatpush1.bf16.xpose.msra.mxu0 0
        %2420 = vmatprep.subr.bf16.mxu0 0
        %2421 = vmatpush1.bf16.xpose.msra.mxu0 0
        %2422 = vmatprep.subr.bf16.mxu0 0
        %2423 = vmatpush1.bf16.xpose.msra.mxu0 0
        %2424 = vmatprep.mubr.bf16.mxu0 0
        %2425 = vmatmul.mubr.bf16.gmra.mrb[0].mxu0 %v2387
        %v2426 = vpop.f32.mrb[0].mxu0
        %v2427 = vadd.f32 0.0, %v2426
        %v2428 = vpop.f32.mrb[0].mxu0
        %v2429 = vpop.f32.mrb[0].mxu0
        %v2430 = vpop.f32.mrb[0].mxu0
        %2431 = vdwg.mxu0
        %v2432 = vsel %vm903, -inf, %v2277
        %v2433 = vsel %vm903, -inf, %v2327
        %v2434 = vsel %vm903, -inf, %v2377
        %v2435 = vsel %vm903, -inf, %v2427
        %v2436 = vsel %vm708, %v2432, -inf
        %2437 = vmax.xlane.f32.xlu0 %v2436
        %v2438 = vpop.xlane.xlu0 %2437
        %v2439 = vsel %vm708, %v2433, -inf
        %2440 = vmax.xlane.f32.xlu0 %v2439
        %v2441 = vpop.xlane.xlu0 %2440
        %v2442 = vsel %vm708, %v2434, -inf
        %2443 = vmax.xlane.f32.xlu0 %v2442
        %v2444 = vpop.xlane.xlu0 %2443
        %v2445 = vsel %vm708, %v2435, -inf
        %2446 = vmax.xlane.f32.xlu0 %v2445
        %v2447 = vpop.xlane.xlu0 %2446
        %v2448 = vsub.f32 %v2432, %v2438
        %v2449 = vsub.f32 %v2433, %v2441
        %v2450 = vsub.f32 %v2434, %v2444
        %v2451 = vsub.f32 %v2435, %v2447
        %v2452 = vmul.f32 %v2448, 1.442695
        %v2453 = vpow.pop %v2452
        %v2454 = vmul.f32 %v2449, 1.442695
        %v2455 = vpow.pop %v2454
        %v2456 = vmul.f32 %v2450, 1.442695
        %v2457 = vpow.pop %v2456
        %v2458 = vmul.f32 %v2451, 1.442695
        %v2459 = vpow.pop %v2458
        %v2460 = vsel %vm708, %v2453, 0.0
        %2461 = vadd.xlane.f32.xlu0 %v2460
        %v2462 = vpop.xlane.xlu0 %2461
        %v2463 = vsel %vm708, %v2455, 0.0
        %2464 = vadd.xlane.f32.xlu0 %v2463
        %v2465 = vpop.xlane.xlu0 %2464
        %v2466 = vsel %vm708, %v2457, 0.0
        %2467 = vadd.xlane.f32.xlu0 %v2466
        %v2468 = vpop.xlane.xlu0 %2467
        %v2469 = vsel %vm708, %v2459, 0.0
        %2470 = vadd.xlane.f32.xlu0 %v2469
        %v2471 = vpop.xlane.xlu0 %2470
        %v2472 = vrcp.pop %v2462
        %v2473 = vrcp.pop %v2465
        %v2474 = vrcp.pop %v2468
        %v2475 = vrcp.pop %v2471
        %v2476 = vmul.f32 %v2453, %v2472
        %v2477 = vmul.f32 %v2455, %v2473
        %v2478 = vmul.f32 %v2457, %v2474
        %v2479 = vmul.f32 %v2459, %v2475
        %v2480 = vpack.c.bf16 %v2476, %v2476
        %v2481 = vpack.c.bf16 %v2477, %v2477
        %v2482 = vpack.c.bf16 %v2478, %v2478
        %v2483 = vpack.c.bf16 %v2479, %v2479
        %2484 = vrot.lane.b32.xlu0 %v705, 40
        %v2485 = vpop.permute.xlu0 %2484
        %v2487 = vsel %vm708, %v2480, 0
        %v2490 = vsel %vm961, %v2485, 0
        %2492 = vmatprep.subr.bf16.mxu0 0
        %2493 = vmatpush1.bf16.msra.mxu0 %v2490
        %2494 = vmatprep.subr.bf16.mxu0 0
        %2495 = vmatpush1.bf16.msra.mxu0 0
        %2496 = vmatprep.subr.bf16.mxu0 0
        %2497 = vmatpush1.bf16.msra.mxu0 0
        %2498 = vmatprep.subr.bf16.mxu0 0
        %2499 = vmatpush1.bf16.msra.mxu0 0
        %2500 = vmatprep.subr.bf16.mxu0 0
        %2501 = vmatpush1.bf16.msra.mxu0 0
        %2502 = vmatprep.subr.bf16.mxu0 0
        %2503 = vmatpush1.bf16.msra.mxu0 0
        %2504 = vmatprep.subr.bf16.mxu0 0
        %2505 = vmatpush1.bf16.msra.mxu0 0
        %2506 = vmatprep.subr.bf16.mxu0 0
        %2507 = vmatpush1.bf16.msra.mxu0 0
        %2508 = vmatprep.subr.bf16.mxu0 0
        %2509 = vmatpush1.bf16.msra.mxu0 0
        %2510 = vmatprep.subr.bf16.mxu0 0
        %2511 = vmatpush1.bf16.msra.mxu0 0
        %2512 = vmatprep.subr.bf16.mxu0 0
        %2513 = vmatpush1.bf16.msra.mxu0 0
        %2514 = vmatprep.subr.bf16.mxu0 0
        %2515 = vmatpush1.bf16.msra.mxu0 0
        %2516 = vmatprep.subr.bf16.mxu0 0
        %2517 = vmatpush1.bf16.msra.mxu0 0
        %2518 = vmatprep.subr.bf16.mxu0 0
        %2519 = vmatpush1.bf16.msra.mxu0 0
        %2520 = vmatprep.subr.bf16.mxu0 0
        %2521 = vmatpush1.bf16.msra.mxu0 0
        %2522 = vmatprep.subr.bf16.mxu0 0
        %2523 = vmatpush1.bf16.msra.mxu0 0
        %2524 = vmatprep.mubr.bf16.mxu0 0
        %2525 = vmatmul.mubr.bf16.gmra.mrb[0].mxu0 %v2487
        %v2526 = vpop.f32.mrb[0].mxu0
        %v2527 = vadd.f32 0.0, %v2526
        %v2528 = vpop.f32.mrb[0].mxu0
        %v2529 = vpop.f32.mrb[0].mxu0
        %v2530 = vpop.f32.mrb[0].mxu0
        %2531 = vdwg.mxu0
        %2532 = vrot.lane.b32.xlu0 %v755, 40
        %v2533 = vpop.permute.xlu0 %2532
        %v2535 = vsel %vm708, %v2481, 0
        %v2538 = vsel %vm961, %v2533, 0
        %2540 = vmatprep.subr.bf16.mxu0 0
        %2541 = vmatpush1.bf16.msra.mxu0 %v2538
        %2542 = vmatprep.subr.bf16.mxu0 0
        %2543 = vmatpush1.bf16.msra.mxu0 0
        %2544 = vmatprep.subr.bf16.mxu0 0
        %2545 = vmatpush1.bf16.msra.mxu0 0
        %2546 = vmatprep.subr.bf16.mxu0 0
        %2547 = vmatpush1.bf16.msra.mxu0 0
        %2548 = vmatprep.subr.bf16.mxu0 0
        %2549 = vmatpush1.bf16.msra.mxu0 0
        %2550 = vmatprep.subr.bf16.mxu0 0
        %2551 = vmatpush1.bf16.msra.mxu0 0
        %2552 = vmatprep.subr.bf16.mxu0 0
        %2553 = vmatpush1.bf16.msra.mxu0 0
        %2554 = vmatprep.subr.bf16.mxu0 0
        %2555 = vmatpush1.bf16.msra.mxu0 0
        %2556 = vmatprep.subr.bf16.mxu0 0
        %2557 = vmatpush1.bf16.msra.mxu0 0
        %2558 = vmatprep.subr.bf16.mxu0 0
        %2559 = vmatpush1.bf16.msra.mxu0 0
        %2560 = vmatprep.subr.bf16.mxu0 0
        %2561 = vmatpush1.bf16.msra.mxu0 0
        %2562 = vmatprep.subr.bf16.mxu0 0
        %2563 = vmatpush1.bf16.msra.mxu0 0
        %2564 = vmatprep.subr.bf16.mxu0 0
        %2565 = vmatpush1.bf16.msra.mxu0 0
        %2566 = vmatprep.subr.bf16.mxu0 0
        %2567 = vmatpush1.bf16.msra.mxu0 0
        %2568 = vmatprep.subr.bf16.mxu0 0
        %2569 = vmatpush1.bf16.msra.mxu0 0
        %2570 = vmatprep.subr.bf16.mxu0 0
        %2571 = vmatpush1.bf16.msra.mxu0 0
        %2572 = vmatprep.mubr.bf16.mxu0 0
        %2573 = vmatmul.mubr.bf16.gmra.mrb[0].mxu0 %v2535
        %v2574 = vpop.f32.mrb[0].mxu0
        %v2575 = vadd.f32 0.0, %v2574
        %v2576 = vpop.f32.mrb[0].mxu0
        %v2577 = vpop.f32.mrb[0].mxu0
        %v2578 = vpop.f32.mrb[0].mxu0
        %2579 = vdwg.mxu0
        %2580 = vrot.lane.b32.xlu0 %v804, 40
        %v2581 = vpop.permute.xlu0 %2580
        %v2583 = vsel %vm708, %v2482, 0
        %v2586 = vsel %vm961, %v2581, 0
        %2588 = vmatprep.subr.bf16.mxu0 0
        %2589 = vmatpush1.bf16.msra.mxu0 %v2586
        %2590 = vmatprep.subr.bf16.mxu0 0
        %2591 = vmatpush1.bf16.msra.mxu0 0
        %2592 = vmatprep.subr.bf16.mxu0 0
        %2593 = vmatpush1.bf16.msra.mxu0 0
        %2594 = vmatprep.subr.bf16.mxu0 0
        %2595 = vmatpush1.bf16.msra.mxu0 0
        %2596 = vmatprep.subr.bf16.mxu0 0
        %2597 = vmatpush1.bf16.msra.mxu0 0
        %2598 = vmatprep.subr.bf16.mxu0 0
        %2599 = vmatpush1.bf16.msra.mxu0 0
        %2600 = vmatprep.subr.bf16.mxu0 0
        %2601 = vmatpush1.bf16.msra.mxu0 0
        %2602 = vmatprep.subr.bf16.mxu0 0
        %2603 = vmatpush1.bf16.msra.mxu0 0
        %2604 = vmatprep.subr.bf16.mxu0 0
        %2605 = vmatpush1.bf16.msra.mxu0 0
        %2606 = vmatprep.subr.bf16.mxu0 0
        %2607 = vmatpush1.bf16.msra.mxu0 0
        %2608 = vmatprep.subr.bf16.mxu0 0
        %2609 = vmatpush1.bf16.msra.mxu0 0
        %2610 = vmatprep.subr.bf16.mxu0 0
        %2611 = vmatpush1.bf16.msra.mxu0 0
        %2612 = vmatprep.subr.bf16.mxu0 0
        %2613 = vmatpush1.bf16.msra.mxu0 0
        %2614 = vmatprep.subr.bf16.mxu0 0
        %2615 = vmatpush1.bf16.msra.mxu0 0
        %2616 = vmatprep.subr.bf16.mxu0 0
        %2617 = vmatpush1.bf16.msra.mxu0 0
        %2618 = vmatprep.subr.bf16.mxu0 0
        %2619 = vmatpush1.bf16.msra.mxu0 0
        %2620 = vmatprep.mubr.bf16.mxu0 0
        %2621 = vmatmul.mubr.bf16.gmra.mrb[0].mxu0 %v2583
        %v2622 = vpop.f32.mrb[0].mxu0
        %v2623 = vadd.f32 0.0, %v2622
        %v2624 = vpop.f32.mrb[0].mxu0
        %v2625 = vpop.f32.mrb[0].mxu0
        %v2626 = vpop.f32.mrb[0].mxu0
        %2627 = vdwg.mxu0
        %2628 = vrot.lane.b32.xlu0 %v853, 40
        %v2629 = vpop.permute.xlu0 %2628
        %v2631 = vsel %vm708, %v2483, 0
        %v2634 = vsel %vm961, %v2629, 0
        %2636 = vmatprep.subr.bf16.mxu0 0
        %2637 = vmatpush1.bf16.msra.mxu0 %v2634
        %2638 = vmatprep.subr.bf16.mxu0 0
        %2639 = vmatpush1.bf16.msra.mxu0 0
        %2640 = vmatprep.subr.bf16.mxu0 0
        %2641 = vmatpush1.bf16.msra.mxu0 0
        %2642 = vmatprep.subr.bf16.mxu0 0
        %2643 = vmatpush1.bf16.msra.mxu0 0
        %2644 = vmatprep.subr.bf16.mxu0 0
        %2645 = vmatpush1.bf16.msra.mxu0 0
        %2646 = vmatprep.subr.bf16.mxu0 0
        %2647 = vmatpush1.bf16.msra.mxu0 0
        %2648 = vmatprep.subr.bf16.mxu0 0
        %2649 = vmatpush1.bf16.msra.mxu0 0
        %2650 = vmatprep.subr.bf16.mxu0 0
        %2651 = vmatpush1.bf16.msra.mxu0 0
        %2652 = vmatprep.subr.bf16.mxu0 0
        %2653 = vmatpush1.bf16.msra.mxu0 0
        %2654 = vmatprep.subr.bf16.mxu0 0
        %2655 = vmatpush1.bf16.msra.mxu0 0
        %2656 = vmatprep.subr.bf16.mxu0 0
        %2657 = vmatpush1.bf16.msra.mxu0 0
        %2658 = vmatprep.subr.bf16.mxu0 0
        %2659 = vmatpush1.bf16.msra.mxu0 0
        %2660 = vmatprep.subr.bf16.mxu0 0
        %2661 = vmatpush1.bf16.msra.mxu0 0
        %2662 = vmatprep.subr.bf16.mxu0 0
        %2663 = vmatpush1.bf16.msra.mxu0 0
        %2664 = vmatprep.subr.bf16.mxu0 0
        %2665 = vmatpush1.bf16.msra.mxu0 0
        %2666 = vmatprep.subr.bf16.mxu0 0
        %2667 = vmatpush1.bf16.msra.mxu0 0
        %2668 = vmatprep.mubr.bf16.mxu0 0
        %2669 = vmatmul.mubr.bf16.gmra.mrb[0].mxu0 %v2631
        %v2670 = vpop.f32.mrb[0].mxu0
        %v2671 = vadd.f32 0.0, %v2670
        %v2672 = vpop.f32.mrb[0].mxu0
        %v2673 = vpop.f32.mrb[0].mxu0
        %v2674 = vpop.f32.mrb[0].mxu0
        %2675 = vdwg.mxu0
        %v2676 = vpack.c.bf16 %v2575, %v2527
        %v2677 = vpack.c.bf16 %v2671, %v2623
        %v2678 = vld [vmem:[#allocation8 + $0xc] sm:$0xf]
        %v2680 = vsel %vm708, %v2676, 0
        %v2683 = vsel %vm708, %v2677, 0
        %v2686 = vsel %vm961, %v2678, 0
        %2688 = vmatprep.subr.bf16.mxu0 0
        %2689 = vmatpush1.bf16.msra.mxu0 %v2686
        %2690 = vmatprep.subr.bf16.mxu0 0
        %2691 = vmatpush1.bf16.msra.mxu0 0
        %2692 = vmatprep.subr.bf16.mxu0 0
        %2693 = vmatpush1.bf16.msra.mxu0 0
        %2694 = vmatprep.subr.bf16.mxu0 0
        %2695 = vmatpush1.bf16.msra.mxu0 0
        %2696 = vmatprep.subr.bf16.mxu0 0
        %2697 = vmatpush1.bf16.msra.mxu0 0
        %2698 = vmatprep.subr.bf16.mxu0 0
        %2699 = vmatpush1.bf16.msra.mxu0 0
        %2700 = vmatprep.subr.bf16.mxu0 0
        %2701 = vmatpush1.bf16.msra.mxu0 0
        %2702 = vmatprep.subr.bf16.mxu0 0
        %2703 = vmatpush1.bf16.msra.mxu0 0
        %2704 = vmatprep.subr.bf16.mxu0 0
        %2705 = vmatpush1.bf16.msra.mxu0 0
        %2706 = vmatprep.subr.bf16.mxu0 0
        %2707 = vmatpush1.bf16.msra.mxu0 0
        %2708 = vmatprep.subr.bf16.mxu0 0
        %2709 = vmatpush1.bf16.msra.mxu0 0
        %2710 = vmatprep.subr.bf16.mxu0 0
        %2711 = vmatpush1.bf16.msra.mxu0 0
        %2712 = vmatprep.subr.bf16.mxu0 0
        %2713 = vmatpush1.bf16.msra.mxu0 0
        %2714 = vmatprep.subr.bf16.mxu0 0
        %2715 = vmatpush1.bf16.msra.mxu0 0
        %2716 = vmatprep.subr.bf16.mxu0 0
        %2717 = vmatpush1.bf16.msra.mxu0 0
        %2718 = vmatprep.subr.bf16.mxu0 0
        %2719 = vmatpush1.bf16.msra.mxu0 0
        %2720 = vmatprep.mubr.bf16.mxu0 0
        %2721 = vmatmul.mubr.bf16.gmra.mrb[0].mxu0 %v2680
        %v2722 = vpop.f32.mrb[0].mxu0
        %v2723 = vadd.f32 0.0, %v2722
        %v2724 = vpop.f32.mrb[0].mxu0
        %v2725 = vpop.f32.mrb[0].mxu0
        %v2726 = vadd.f32 0.0, %v2725
        %v2727 = vpop.f32.mrb[0].mxu0
        %2728 = vmatprep.mubr.bf16.mxu0 0
        %2729 = vmatmul.mubr.bf16.gmra.mrb[0].mxu0 %v2683
        %v2730 = vpop.f32.mrb[0].mxu0
        %v2731 = vadd.f32 0.0, %v2730
        %v2732 = vpop.f32.mrb[0].mxu0
        %v2733 = vpop.f32.mrb[0].mxu0
        %v2734 = vadd.f32 0.0, %v2733
        %v2735 = vpop.f32.mrb[0].mxu0
        %2736 = vdwg.mxu0
        %v2737 = vadd.f32 %v2228, %v2723
        %v2738 = vadd.f32 %v2229, %v2726
        %v2739 = vadd.f32 %v2230, %v2731
        %v2740 = vadd.f32 %v2231, %v2734
        %v2741 = vadd.f32 %v508, %v2737
        %v2742 = vadd.f32 %v509, %v2738
        %v2743 = vadd.f32 %v510, %v2739
        %v2744 = vadd.f32 %v511, %v2740
        %v2745 = vld [vmem:[#allocation2] sm:$0x1]
        %v2746 = vld [vmem:[#allocation5] sm:$0x1]
        %v2747 = vsel %vm514, %v2741, 0.0
        %2748 = vadd.xlane.f32.xlu0 %v2747
        %v2749 = vpop.xlane.xlu0 %2748
        %v2750 = vsel %vm514, %v2742, 0.0
        %2751 = vadd.xlane.f32.xlu0 %v2750
        %v2752 = vpop.xlane.xlu0 %2751
        %v2753 = vsel %vm514, %v2743, 0.0
        %2754 = vadd.xlane.f32.xlu0 %v2753
        %v2755 = vpop.xlane.xlu0 %2754
        %v2756 = vsel %vm514, %v2744, 0.0
        %2757 = vadd.xlane.f32.xlu0 %v2756
        %v2758 = vpop.xlane.xlu0 %2757
        %v2759 = vmul.f32 %v2749, %v527
        %v2760 = vmul.f32 %v2752, %v527
        %v2761 = vmul.f32 %v2755, %v527
        %v2762 = vmul.f32 %v2758, %v527
        %v2763 = vsub.f32 %v2741, %v2759
        %v2764 = vsub.f32 %v2742, %v2760
        %v2765 = vsub.f32 %v2743, %v2761
        %v2766 = vsub.f32 %v2744, %v2762
        %v2767 = vmul.f32 %v2763, %v2763
        %v2768 = vmul.f32 %v2764, %v2764
        %v2769 = vmul.f32 %v2765, %v2765
        %v2770 = vmul.f32 %v2766, %v2766
        %v2771 = vsel %vm514, %v2767, 0.0
        %2772 = vadd.xlane.f32.xlu0 %v2771
        %v2773 = vpop.xlane.xlu0 %2772
        %v2774 = vsel %vm514, %v2768, 0.0
        %2775 = vadd.xlane.f32.xlu0 %v2774
        %v2776 = vpop.xlane.xlu0 %2775
        %v2777 = vsel %vm514, %v2769, 0.0
        %2778 = vadd.xlane.f32.xlu0 %v2777
        %v2779 = vpop.xlane.xlu0 %2778
        %v2780 = vsel %vm514, %v2770, 0.0
        %2781 = vadd.xlane.f32.xlu0 %v2780
        %v2782 = vpop.xlane.xlu0 %2781
        %v2783 = vmul.f32 %v2773, %v527
        %v2784 = vmul.f32 %v2776, %v527
        %v2785 = vmul.f32 %v2779, %v527
        %v2786 = vmul.f32 %v2782, %v527
        %v2787 = vadd.f32 %v2783, 1e-05
        %v2788 = vadd.f32 %v2784, 1e-05
        %v2789 = vadd.f32 %v2785, 1e-05
        %v2790 = vadd.f32 %v2786, 1e-05
        %v2791 = vrsqrt.pop %v2787
        %v2792 = vrsqrt.pop %v2788
        %v2793 = vrsqrt.pop %v2789
        %v2794 = vrsqrt.pop %v2790
        %v2795 = vmul.f32 %v2763, %v2791
        %v2796 = vmul.f32 %v2764, %v2792
        %v2797 = vmul.f32 %v2765, %v2793
        %v2798 = vmul.f32 %v2766, %v2794
        %v2800 = vlaneseq
        %v2801 = vshrl.u32 %v2800, 7
        %v2802 = vsub.s32 0, %v2801
        %v2803 = vrot.slane %v2745, %v2802
        %v2805 = vmul.f32 %v2795, %v2803
        %v2806 = vmul.f32 %v2796, %v2803
        %v2807 = vmul.f32 %v2797, %v2803
        %v2808 = vmul.f32 %v2798, %v2803
        %v2810 = vlaneseq
        %v2811 = vshrl.u32 %v2810, 7
        %v2812 = vsub.s32 0, %v2811
        %v2813 = vrot.slane %v2746, %v2812
        %v2815 = vadd.f32 %v2805, %v2813
        %v2816 = vadd.f32 %v2806, %v2813
        %v2817 = vadd.f32 %v2807, %v2813
        %v2818 = vadd.f32 %v2808, %v2813
        %v2819 = vpack.c.bf16 %v2816, %v2815
        %v2820 = vpack.c.bf16 %v2818, %v2817
        %v2821 = vld [vmem:[%s12] sm:$0x1]
        %v2823 = vlaneseq
        %v2824 = vshrl.u32 %v2823, 7
        %v2825 = vsub.s32 0, %v2824
        %v2826 = vrot.slane %v2821, %v2825
        %v2828 = vadd.f32 %v2826, 0.0
        %v2829 = vld [vmem:[%s9] sm:$0xf]
        %v2830 = vld [vmem:[%s9 + $0x4] sm:$0xf]
        %v2831 = vld [vmem:[%s9 + $0x8] sm:$0xf]
        %v2832 = vld [vmem:[%s9 + $0xc] sm:$0xf]
        %v2833 = vld [vmem:[%s10] sm:$0x1]
        %v2835 = vlaneseq
        %v2836 = vshrl.u32 %v2835, 7
        %v2837 = vsub.s32 0, %v2836
        %v2838 = vrot.slane %v2833, %v2837
        %v2844 = vunpack.c.l.b16 %v2829
        %v2845 = vunpack.c.l.b16 %v2830
        %v2846 = vunpack.c.l.b16 %v2831
        %v2847 = vunpack.c.l.b16 %v2832
        %v2848 = vpack.c.b16 %v2845, %v2844
        %v2849 = vpack.c.b16 %v2847, %v2846
        %v2853 = vsel %vm514, %v2819, 0
        %v2856 = vsel %vm514, %v2820, 0
        %2858 = vmatprep.subr.bf16.mxu0 0
        %2859 = vmatpush1.bf16.msra.mxu0 %v2848
        %2860 = vmatprep.subr.bf16.mxu0 0
        %2861 = vmatpush1.bf16.msra.mxu0 %v2849
        %2862 = vmatprep.subr.bf16.mxu0 0
        %2863 = vmatpush1.bf16.msra.mxu0 0
        %2864 = vmatprep.subr.bf16.mxu0 0
        %2865 = vmatpush1.bf16.msra.mxu0 0
        %2866 = vmatprep.subr.bf16.mxu0 0
        %2867 = vmatpush1.bf16.msra.mxu0 0
        %2868 = vmatprep.subr.bf16.mxu0 0
        %2869 = vmatpush1.bf16.msra.mxu0 0
        %2870 = vmatprep.subr.bf16.mxu0 0
        %2871 = vmatpush1.bf16.msra.mxu0 0
        %2872 = vmatprep.subr.bf16.mxu0 0
        %2873 = vmatpush1.bf16.msra.mxu0 0
        %2874 = vmatprep.subr.bf16.mxu0 0
        %2875 = vmatpush1.bf16.msra.mxu0 0
        %2876 = vmatprep.subr.bf16.mxu0 0
        %2877 = vmatpush1.bf16.msra.mxu0 0
        %2878 = vmatprep.subr.bf16.mxu0 0
        %2879 = vmatpush1.bf16.msra.mxu0 0
        %2880 = vmatprep.subr.bf16.mxu0 0
        %2881 = vmatpush1.bf16.msra.mxu0 0
        %2882 = vmatprep.subr.bf16.mxu0 0
        %2883 = vmatpush1.bf16.msra.mxu0 0
        %2884 = vmatprep.subr.bf16.mxu0 0
        %2885 = vmatpush1.bf16.msra.mxu0 0
        %2886 = vmatprep.subr.bf16.mxu0 0
        %2887 = vmatpush1.bf16.msra.mxu0 0
        %2888 = vmatprep.subr.bf16.mxu0 0
        %2889 = vmatpush1.bf16.msra.mxu0 0
        %2890 = vmatprep.mubr.bf16.mxu0 0
        %2891 = vmatmul.mubr.bf16.gmra.mrb[0].mxu0 %v2853
        %v2892 = vpop.f32.mrb[0].mxu0
        %v2893 = vadd.f32 %v2838, %v2892
        %v2894 = vpop.f32.mrb[0].mxu0
        %v2895 = vpop.f32.mrb[0].mxu0
        %v2896 = vadd.f32 %v2838, %v2895
        %v2897 = vpop.f32.mrb[0].mxu0
        %2898 = vmatprep.mubr.bf16.mxu0 0
        %2899 = vmatmul.mubr.bf16.gmra.mrb[0].mxu0 %v2856
        %v2900 = vpop.f32.mrb[0].mxu0
        %v2901 = vadd.f32 %v2838, %v2900
        %v2902 = vpop.f32.mrb[0].mxu0
        %v2903 = vpop.f32.mrb[0].mxu0
        %v2904 = vadd.f32 %v2838, %v2903
        %v2905 = vpop.f32.mrb[0].mxu0
        %2906 = vdwg.mxu0
        %v2907 = vmul.f32 %v2893, 1.782
        %v2908 = vmul.f32 %v2896, 1.782
        %v2909 = vmul.f32 %v2901, 1.782
        %v2910 = vmul.f32 %v2904, 1.782
        %v2911 = vxor.u32 %v2907, 2147483648
        %v2912 = vxor.u32 %v2908, 2147483648
        %v2913 = vxor.u32 %v2909, 2147483648
        %v2914 = vxor.u32 %v2910, 2147483648
        %v2915 = vmul.f32 %v2911, 1.442695
        %v2916 = vpow.pop %v2915
        %v2917 = vmul.f32 %v2912, 1.442695
        %v2918 = vpow.pop %v2917
        %v2919 = vmul.f32 %v2913, 1.442695
        %v2920 = vpow.pop %v2919
        %v2921 = vmul.f32 %v2914, 1.442695
        %v2922 = vpow.pop %v2921
        %v2923 = vadd.f32 %v2916, 1.0
        %v2924 = vadd.f32 %v2918, 1.0
        %v2925 = vadd.f32 %v2920, 1.0
        %v2926 = vadd.f32 %v2922, 1.0
        %v2927 = vrcp.pop %v2923
        %v2928 = vmul.f32 1.0, %v2927
        %v2929 = vrcp.pop %v2924
        %v2930 = vmul.f32 1.0, %v2929
        %v2931 = vrcp.pop %v2925
        %v2932 = vmul.f32 1.0, %v2931
        %v2933 = vrcp.pop %v2926
        %v2934 = vmul.f32 1.0, %v2933
        %v2935 = vmul.f32 %v2893, %v2928
        %v2936 = vmul.f32 %v2896, %v2930
        %v2937 = vmul.f32 %v2901, %v2932
        %v2938 = vmul.f32 %v2904, %v2934
        %v2939 = vpack.c.bf16 %v2936, %v2935
        %v2940 = vpack.c.bf16 %v2938, %v2937
        %v2941 = vld [vmem:[%s11] sm:$0xf]
        %v2942 = vld [vmem:[%s11 + $0x4] sm:$0xf]
        %v2943 = vld [vmem:[%s11 + $0x8] sm:$0xf]
        %v2944 = vld [vmem:[%s11 + $0xc] sm:$0xf]
        %v2945 = vld [vmem:[%s11 + $0x10] sm:$0xf]
        %v2946 = vld [vmem:[%s11 + $0x14] sm:$0xf]
        %v2947 = vld [vmem:[%s11 + $0x18] sm:$0xf]
        %v2948 = vld [vmem:[%s11 + $0x1c] sm:$0xf]
        %v2949 = vld [vmem:[%s11 + $0x20] sm:$0xf]
        %v2950 = vld [vmem:[%s11 + $0x24] sm:$0xf]
        %v2951 = vld [vmem:[%s11 + $0x28] sm:$0xf]
        %v2952 = vld [vmem:[%s11 + $0x2c] sm:$0xf]
        %v2953 = vld [vmem:[%s11 + $0x30] sm:$0xf]
        %v2954 = vld [vmem:[%s11 + $0x34] sm:$0xf]
        %v2955 = vld [vmem:[%s11 + $0x38] sm:$0xf]
        %v2956 = vld [vmem:[%s11 + $0x3c] sm:$0xf]
        %v2973 = vunpack.c.l.b16 %v2941
        %v2974 = vunpack.c.l.b16 %v2942
        %v2975 = vunpack.c.l.b16 %v2943
        %v2976 = vunpack.c.l.b16 %v2944
        %v2977 = vunpack.c.l.b16 %v2945
        %v2978 = vunpack.c.l.b16 %v2946
        %v2979 = vunpack.c.l.b16 %v2947
        %v2980 = vunpack.c.l.b16 %v2948
        %v2981 = vunpack.c.l.b16 %v2949
        %v2982 = vunpack.c.l.b16 %v2950
        %v2983 = vunpack.c.l.b16 %v2951
        %v2984 = vunpack.c.l.b16 %v2952
        %v2985 = vunpack.c.l.b16 %v2953
        %v2986 = vunpack.c.l.b16 %v2954
        %v2987 = vunpack.c.l.b16 %v2955
        %v2988 = vunpack.c.l.b16 %v2956
        %v2989 = vpack.c.b16 %v2974, %v2973
        %v2990 = vpack.c.b16 %v2976, %v2975
        %v2991 = vpack.c.b16 %v2978, %v2977
        %v2992 = vpack.c.b16 %v2980, %v2979
        %v2993 = vpack.c.b16 %v2982, %v2981
        %v2994 = vpack.c.b16 %v2984, %v2983
        %v2995 = vpack.c.b16 %v2986, %v2985
        %v2996 = vpack.c.b16 %v2988, %v2987
        %3005 = vmatprep.subr.bf16.mxu0 0
        %3006 = vmatpush1.bf16.msra.mxu0 %v2989
        %3007 = vmatprep.subr.bf16.mxu0 0
        %3008 = vmatpush1.bf16.msra.mxu0 %v2990
        %3009 = vmatprep.subr.bf16.mxu0 0
        %3010 = vmatpush1.bf16.msra.mxu0 %v2991
        %3011 = vmatprep.subr.bf16.mxu0 0
        %3012 = vmatpush1.bf16.msra.mxu0 %v2992
        %3013 = vmatprep.subr.bf16.mxu0 0
        %3014 = vmatpush1.bf16.msra.mxu0 %v2993
        %3015 = vmatprep.subr.bf16.mxu0 0
        %3016 = vmatpush1.bf16.msra.mxu0 %v2994
        %3017 = vmatprep.subr.bf16.mxu0 0
        %3018 = vmatpush1.bf16.msra.mxu0 %v2995
        %3019 = vmatprep.subr.bf16.mxu0 0
        %3020 = vmatpush1.bf16.msra.mxu0 %v2996
        %3021 = vmatprep.subr.bf16.mxu0 0
        %3022 = vmatpush1.bf16.msra.mxu0 0
        %3023 = vmatprep.subr.bf16.mxu0 0
        %3024 = vmatpush1.bf16.msra.mxu0 0
        %3025 = vmatprep.subr.bf16.mxu0 0
        %3026 = vmatpush1.bf16.msra.mxu0 0
        %3027 = vmatprep.subr.bf16.mxu0 0
        %3028 = vmatpush1.bf16.msra.mxu0 0
        %3029 = vmatprep.subr.bf16.mxu0 0
        %3030 = vmatpush1.bf16.msra.mxu0 0
        %3031 = vmatprep.subr.bf16.mxu0 0
        %3032 = vmatpush1.bf16.msra.mxu0 0
        %3033 = vmatprep.subr.bf16.mxu0 0
        %3034 = vmatpush1.bf16.msra.mxu0 0
        %3035 = vmatprep.subr.bf16.mxu0 0
        %3036 = vmatpush1.bf16.msra.mxu0 0
        %3037 = vmatprep.mubr.bf16.mxu0 0
        %3038 = vmatmul.mubr.bf16.gmra.mrb[0].mxu0 %v2939
        %v3039 = vpop.f32.mrb[0].mxu0
        %v3040 = vadd.f32 0.0, %v3039
        %v3041 = vpop.f32.mrb[0].mxu0
        %v3042 = vpop.f32.mrb[0].mxu0
        %v3043 = vadd.f32 0.0, %v3042
        %v3044 = vpop.f32.mrb[0].mxu0
        %3045 = vmatprep.mubr.bf16.mxu0 0
        %3046 = vmatmul.mubr.bf16.gmra.mrb[0].mxu0 %v2940
        %v3047 = vpop.f32.mrb[0].mxu0
        %v3048 = vadd.f32 0.0, %v3047
        %v3049 = vpop.f32.mrb[0].mxu0
        %v3050 = vpop.f32.mrb[0].mxu0
        %v3051 = vadd.f32 0.0, %v3050
        %v3052 = vpop.f32.mrb[0].mxu0
        %3053 = vdwg.mxu0
        %v3054 = vadd.f32 %v2828, %v3040
        %v3055 = vadd.f32 %v2828, %v3043
        %v3056 = vadd.f32 %v2828, %v3048
        %v3057 = vadd.f32 %v2828, %v3051
        %v3058 = vadd.f32 %v2741, %v3054
        %v3059 = vadd.f32 %v2742, %v3055
        %v3060 = vadd.f32 %v2743, %v3056
        %v3061 = vadd.f32 %v2744, %v3057
        %3062 = vst.msk [vmem:[%s499] sm:$0xff] %vm514, %v3058
        %3063 = vst.msk [vmem:[%s499 + $0x8] sm:$0xff] %vm514, %v3059
        %3064 = vst.msk [vmem:[%s499 + $0x10] sm:$0xff] %vm514, %v3060
        %3065 = vst.msk [vmem:[%s499 + $0x18] sm:$0xff] %vm514, %v3061
        %s3066 = sand.u32 %s316, 1
        %s3067 = scalar_lea.sflag [#allocation4], %s3066
        %s3068 = sand.u32 %s316, 1
        %s3069 = smul.addr %s3068, 32
        %s3070 = scalar_lea.vmem [#allocation11], %s3069
        // Predicated region
        $region93: #{tpu_custom_call.1} parent=71 // pred_check
          %p3071 = pneg %p326
        $region94: #{tpu_custom_call.1} parent=71 // pred_check_branch
          %3073 = sbr.rel (%p3071) target = $region96
        $region95: #{tpu_custom_call.1} parent=71 // pred_region
          %s3074 = smul.u32 4, %s30
          %s3076 = ssub.s32 512, 512
          %3077 = vsyncadd %s3067, %s3076
          %s3078 = smul.addr %s3074, 128
          %s3079 = scalar_lea.hbm %s13, %s3078
          %s3080 = sshll.u32 %s3070, 4
          %s3081 = int_to_ptr.vmem [resolvable:$true] %s3080
          %3086 = dma.vmem_to_hbm [thread:$0]  %s3081, 512, %s3079, %s3067, 128, 128, 8
        $region96: #{tpu_custom_call.1} parent=71 // pred_fallthru
          _
      $region72: #{tpu_custom_call.1} parent=5 // pred_fallthru
        _
      %p3087 = scmp.le.s32.totalorder 2, %s25
      // Predicated region
      $region97: #{tpu_custom_call.1} parent=5 // pred_check
        %p3088 = pneg %p3087
      $region98: #{tpu_custom_call.1} parent=5 // pred_check_branch
        %3090 = sbr.rel (%p3088) target = $region100
      $region99: #{tpu_custom_call.1} parent=5 // pred_region
        %s3091 = ssub.s32 %s25, 2
        // Predicated region
        $region101: #{tpu_custom_call.1} parent=99 // pred_check
          %p3092 = pneg %p332
        $region102: #{tpu_custom_call.1} parent=99 // pred_check_branch
          %3094 = sbr.rel (%p3092) target = $region104
        $region103: #{tpu_custom_call.1} parent=99 // pred_region
          %s3095 = sand.u32 %s317, 1
          %s3096 = scalar_lea.sflag [#allocation4], %s3095
          %s3097 = sand.u32 %s317, 1
          %s3098 = smul.addr %s3097, 32
          %s3099 = scalar_lea.vmem [#allocation11], %s3098
          %3100 = dma.done %s3096, 512
        $region104: #{tpu_custom_call.1} parent=99 // pred_fallthru
          _
      $region100: #{tpu_custom_call.1} parent=5 // pred_fallthru
        _
    $region6: #{tpu_custom_call.1} parent=1 // loop_footer
      %s29 = sadd.s32 1, %s25
    $region7: #{tpu_custom_call.1} parent=1 // loop_footer_branch
      %24 = sbr.rel target = $region3
    $region8: #{tpu_custom_call.1} parent=1 // loop_exit
      _
    %3101 = vsyncpa [#allocation3], 1
    %s3102 = scalar_lea.sflag [#allocation3], 1
    %3103 = vsyncpa %s3102, 1
    %3104 = vsyncpa [#allocation6], 1
    %3105 = vsyncpa [#allocation9], 1
    %3106 = vsyncpa [#allocation4], 1
    %s3107 = scalar_lea.sflag [#allocation4], 1
    %3108 = vsyncpa %s3107, 1

</llo_original>
